<compile_context>
chip_gen: v7x
topology: tpu7x:2x2x1
jax: 0.10.0
libtpu: 0.0.40
codegen_flags: <defaults>
</compile_context>

<pallas_src>
import math
import numpy as np

import jax
import jax.numpy as jnp
from jax.experimental import pallas as pl
from jax.experimental.pallas import tpu as pltpu

# ---------------- model hyper-parameters (small, deterministic) -------------
NUM_COLS = 8                # number of columns
CAT_EMB = 2                 # cat_emb_channels
IN_CH = NUM_COLS * CAT_EMB  # in_channels = 16
SPLIT_FEAT = 16             # split_feat_channels
SPLIT_ATTN = 16             # split_attn_channels
HIDDEN = SPLIT_FEAT + SPLIT_ATTN   # 32
OUT_CH = 8                  # out_channels
NUM_LAYERS = 3              # num TabNet decision steps
NUM_DEP_GLU = 2             # num_dependent_glu_layers
GAMMA = 1.3
EPS = 1e-5
SQRT_HALF = math.sqrt(0.5)
VIRTUAL_BATCH = 512         # GhostBatchNorm1d virtual_batch_size (= batch tile)

B = 2 * VIRTUAL_BATCH       # demo batch: 2 virtual-batch tiles (grid = (2,))


# ------------------------------ main kernel ---------------------------------
# affine slab rows (each row is an (IN_CH, 1) column vector, broadcast on lanes):
#   0 bn_scale | 1 bn_shift | 2..4 abn_w | 5..7 abn_b | 8 b_out (zero-padded)
def tabnet_kernel(x_ref, aff_ref, ws0_ref, ws1_ref, wdep_ref, wattn_ref,
                  w_out_ref, out_ref):
    f32 = jnp.float32

    # Outer BatchNorm1d with pre-folded full-batch scale/shift (see wrapper).
    # Transposed layout: features on sublanes, batch on lanes.
    x = x_ref[...] * aff_ref[0] + aff_ref[1]                 # (IN_CH, Bt)

    # Shared GLU weights, hoisted: reused by all 4 feature transformers.
    ws0 = ws0_ref[...]                                       # (2*HIDDEN, IN_CH)
    ws1 = ws1_ref[...]                                       # (2*HIDDEN, HIDDEN)

    def glu(v, w):
        # One fused matmul for both GLU halves; the split lands on a sublane
        # boundary (row 32, multiple of 8) and is free.  Gate via the tanh
        # form of sigmoid: a single EUP transcendental per layer.
        z = jnp.dot(w, v, preferred_element_type=f32)        # (2*HIDDEN, Bt)
        a = z[:HIDDEN]
        g = z[HIDDEN:]
        return a * (0.5 * jnp.tanh(0.5 * g) + 0.5)           # == a * sigmoid(g)

    def feat_transformer(t, v):
        # shared GLU block (no_first_residual=True)
        v = glu(v, ws0)
        v = v * SQRT_HALF + glu(v, ws1)
        # dependent GLU block (residual on every layer)
        for l in range(NUM_DEP_GLU):
            v = v * SQRT_HALF + glu(v, wdep_ref[t, l])
        return v                                             # (HIDDEN, Bt)

    def ghost_bn(v, w, b):
        # One batch tile == one virtual batch; batch axis = lanes.
        mu = jnp.mean(v, axis=-1, keepdims=True)
        var = jnp.mean(jnp.square(v - mu), axis=-1, keepdims=True)
        return (v - mu) * jax.lax.rsqrt(var + EPS) * w + b

    def softmax_features(v):
        # softmax over the feature axis (sublanes).
        m = jnp.max(v, axis=0, keepdims=True)
        e = jnp.exp(v - m)
        return e * pl.reciprocal(jnp.sum(e, axis=0, keepdims=True), approx=True)

    attention_x = feat_transformer(0, x)[SPLIT_FEAT:]        # (SPLIT_ATTN, Bt)
    prior = jnp.ones_like(x)
    acc = jnp.zeros((SPLIT_FEAT, x.shape[1]), f32)

    for i in range(NUM_LAYERS):
        # AttentiveTransformer: lin -> ghost-BN -> prior * -> softmax
        a = jnp.dot(wattn_ref[i], attention_x,
                    preferred_element_type=f32)              # (IN_CH, Bt)
        a = ghost_bn(a, aff_ref[2 + i], aff_ref[2 + NUM_LAYERS + i])
        mask = softmax_features(prior * a)

        out = feat_transformer(i + 1, mask * x)              # (HIDDEN, Bt)
        acc = acc + jnp.maximum(out[:SPLIT_FEAT], 0.0)       # relu + sum
        attention_x = out[SPLIT_FEAT:]
        prior = (GAMMA - mask) * prior

    # Final Linear(split_feat_channels, out_channels); lane-dense (8, Bt) store.
    out_ref[...] = (jnp.dot(w_out_ref[...], acc, preferred_element_type=f32)
                    + aff_ref[2 + 2 * NUM_LAYERS][:OUT_CH])


# ------------------------------- wrapper -------------------------------------
def _resident_spec(shape):
    # Full-array block, constant index_map -> stays resident across batch tiles.
    return pl.BlockSpec(shape, lambda i: (0,) * len(shape))


def tabnet_forward(x, p):
    bn = x.shape[0]
    if bn > VIRTUAL_BATCH:
        assert bn % VIRTUAL_BATCH == 0, \
            "TODO(synk): ragged ghost-BN chunking for batch % 512 != 0"
        b_tile = VIRTUAL_BATCH
    else:
        b_tile = bn
    n_tiles = bn // b_tile

    # Outer BatchNorm1d (training mode, full-batch stats) folded into a single
    # per-feature scale/shift; tiny reduction, plain XLA (no extra pallas_call).
    mean = jnp.mean(x, axis=0)
    var = jnp.mean(jnp.square(x - mean), axis=0)        # biased, two-pass
    bn_scale = p["bn_w"] * jax.lax.rsqrt(var + EPS)
    bn_shift = p["bn_b"] - mean * bn_scale

    # Pack the small per-feature vectors into one (9, IN_CH, 1) slab.
    b_out_pad = jnp.zeros((IN_CH,), jnp.float32).at[:OUT_CH].set(p["b_out"])
    aff = jnp.concatenate(
        [bn_scale[None, :], bn_shift[None, :], p["abn_w"], p["abn_b"],
         b_out_pad[None, :]], axis=0)[:, :, None]        # (9, IN_CH, 1)

    # Transposed activation layout: batch on lanes, features on sublanes.
    xT = x.T                                             # (IN_CH, B)

    args = (xT, aff, p["ws0"], p["ws1"], p["wdep"], p["wattn"], p["w_out"])
    in_specs = [pl.BlockSpec((IN_CH, b_tile), lambda i: (0, i))]
    in_specs += [_resident_spec(a.shape) for a in args[1:]]

    outT = pl.pallas_call(
        tabnet_kernel,
        out_shape=jax.ShapeDtypeStruct((OUT_CH, bn), jnp.float32),
        grid=(n_tiles,),
        in_specs=in_specs,
        out_specs=pl.BlockSpec((OUT_CH, b_tile), lambda i: (0, i)),
        compiler_params=pltpu.CompilerParams(
            dimension_semantics=("parallel",)),          # megacore on v7x
    )(*args)
    return outT.T                                        # (B, OUT_CH)


# ---------------------------- pure-JAX reference ----------------------------
def tabnet_reference(x, p):
    # Outer BatchNorm1d: training mode, full-batch statistics.
    mu = jnp.mean(x, axis=0, keepdims=True)
    var = jnp.mean(jnp.square(x - mu), axis=0, keepdims=True)
    xb = (x - mu) * jax.lax.rsqrt(var + EPS) * p["bn_w"] + p["bn_b"]

    def ghost_bn(v, w, b):
        num_chunks = math.ceil(v.shape[0] / VIRTUAL_BATCH)
        outs = []
        for c in jnp.split(v, num_chunks, axis=0):
            m = jnp.mean(c, axis=0, keepdims=True)
            vv = jnp.mean(jnp.square(c - m), axis=0, keepdims=True)
            outs.append((c - m) * jax.lax.rsqrt(vv + EPS) * w + b)
        return jnp.concatenate(outs, axis=0)

    def glu(v, w):
        z = v @ w.T                                      # (B, 2*HIDDEN)
        return z[:, :HIDDEN] * jax.nn.sigmoid(z[:, HIDDEN:])

    def feat_transformer(t, v):
        v = glu(v, p["ws0"])
        v = v * SQRT_HALF + glu(v, p["ws1"])
        for l in range(NUM_DEP_GLU):
            v = v * SQRT_HALF + glu(v, p["wdep"][t, l])
        return v

    att = feat_transformer(0, xb)[:, SPLIT_FEAT:]
    prior = jnp.ones_like(xb)
    acc = jnp.zeros((xb.shape[0], SPLIT_FEAT), jnp.float32)
    for i in range(NUM_LAYERS):
        a = att @ p["wattn"][i].T
        a = ghost_bn(a, p["abn_w"][i], p["abn_b"][i])
        mask = jax.nn.softmax(prior * a, axis=-1)
        out = feat_transformer(i + 1, mask * xb)
        acc = acc + jax.nn.relu(out[:, :SPLIT_FEAT])
        att = out[:, SPLIT_FEAT:]
        prior = (GAMMA - mask) * prior
    return acc @ p["w_out"].T + p["b_out"]


# ------------------------------- params init --------------------------------
def init_params(key):
    ks = jax.random.split(key, 10)
    n = lambda k, shape, s=0.1: (s * jax.random.normal(k, shape)).astype(jnp.float32)
    return {
        # outer BatchNorm1d(in_channels) affine
        "bn_w": 1.0 + n(ks[0], (IN_CH,)),
        "bn_b": n(ks[1], (IN_CH,)),
        # shared GLU block (2 layers), fused halves, stored (out, in)
        "ws0": n(ks[2], (2 * HIDDEN, IN_CH), 0.2),
        "ws1": n(ks[3], (2 * HIDDEN, HIDDEN), 0.2),
        # dependent GLU blocks: (num_layers+1) transformers x 2 layers, fused
        "wdep": n(ks[4], (NUM_LAYERS + 1, NUM_DEP_GLU, 2 * HIDDEN, HIDDEN), 0.2),
        # attentive transformers: lin (no bias, stored (out, in)) + ghost-BN affine
        "wattn": n(ks[5], (NUM_LAYERS, IN_CH, SPLIT_ATTN), 0.2),
        "abn_w": 1.0 + n(ks[6], (NUM_LAYERS, IN_CH)),
        "abn_b": n(ks[7], (NUM_LAYERS, IN_CH)),
        # final Linear(split_feat_channels, out_channels), stored (out, in)
        "w_out": n(ks[8], (OUT_CH, SPLIT_FEAT), 0.2),
        "b_out": n(ks[9], (OUT_CH,)),
    }


if __name__ == "__main__":
    key = jax.random.PRNGKey(0)
    kx, kp = jax.random.split(key)
    params = init_params(kp)

    # encoded feature tensor [B, num_cols, cat_emb] -> flatten to [B, in_ch]
    x_enc = jax.random.normal(kx, (B, NUM_COLS, CAT_EMB), dtype=jnp.float32)
    x = x_enc.reshape(B, IN_CH)

    out = jax.block_until_ready(jax.jit(tabnet_forward)(x, params))
    ref = tabnet_reference(x, params)

    np.testing.assert_allclose(np.asarray(out), np.asarray(ref),
                               rtol=5e-2, atol=5e-2)
    assert out.shape == (B, OUT_CH)
    print("KERNEL_OK")
</pallas_src>

<mosaic_0001>
module attributes {stable_mosaic.version = 11 : i64} {
  func.func @tabnet_kernel(%arg0: i32, %arg1: memref<16x512xf32, #tpu.memory_space<vmem>>, %arg2: memref<9x16x1xf32, #tpu.memory_space<vmem>>, %arg3: memref<64x16xf32, #tpu.memory_space<vmem>>, %arg4: memref<64x32xf32, #tpu.memory_space<vmem>>, %arg5: memref<4x2x64x32xf32, #tpu.memory_space<vmem>>, %arg6: memref<3x16x16xf32, #tpu.memory_space<vmem>>, %arg7: memref<8x16xf32, #tpu.memory_space<vmem>>, %arg8: memref<8x512xf32, #tpu.memory_space<vmem>>) attributes {dimension_semantics = [#tpu.dimension_semantics<parallel>], iteration_bounds = array<i64: 2>, scalar_prefetch = 0 : i64, scratch_operands = 0 : i64, tpu.core_type = #tpu.core_type<tc>, window_params = [{transform_indices = @transform_0, window_bounds = array<i64: 16, 512>}, {pipeline_mode = #tpu.pipeline_mode<synchronous>, transform_indices = @transform_1, window_bounds = array<i64: 9, 16, 1>}, {pipeline_mode = #tpu.pipeline_mode<synchronous>, transform_indices = @transform_2, window_bounds = array<i64: 64, 16>}, {pipeline_mode = #tpu.pipeline_mode<synchronous>, transform_indices = @transform_3, window_bounds = array<i64: 64, 32>}, {pipeline_mode = #tpu.pipeline_mode<synchronous>, transform_indices = @transform_4, window_bounds = array<i64: 4, 2, 64, 32>}, {pipeline_mode = #tpu.pipeline_mode<synchronous>, transform_indices = @transform_5, window_bounds = array<i64: 3, 16, 16>}, {pipeline_mode = #tpu.pipeline_mode<synchronous>, transform_indices = @transform_6, window_bounds = array<i64: 8, 16>}, {transform_indices = @transform_7, window_bounds = array<i64: 8, 512>}]} {
    %c0 = arith.constant 0 : index
    %c0_0 = arith.constant 0 : index
    %0 = vector.load %arg1[%c0, %c0_0] : memref<16x512xf32, #tpu.memory_space<vmem>>, vector<16x512xf32>
    %c0_1 = arith.constant 0 : index
    %c0_2 = arith.constant 0 : index
    %c0_3 = arith.constant 0 : index
    %1 = vector.load %arg2[%c0_1, %c0_2, %c0_3] : memref<9x16x1xf32, #tpu.memory_space<vmem>>, vector<1x16x1xf32>
    %2 = vector.shape_cast %1 : vector<1x16x1xf32> to vector<16x1xf32>
    %3 = vector.broadcast %2 : vector<16x1xf32> to vector<16x512xf32>
    %4 = arith.mulf %0, %3 : vector<16x512xf32>
    %c1 = arith.constant 1 : index
    %c0_4 = arith.constant 0 : index
    %c0_5 = arith.constant 0 : index
    %5 = vector.load %arg2[%c1, %c0_4, %c0_5] : memref<9x16x1xf32, #tpu.memory_space<vmem>>, vector<1x16x1xf32>
    %6 = vector.shape_cast %5 : vector<1x16x1xf32> to vector<16x1xf32>
    %7 = vector.broadcast %6 : vector<16x1xf32> to vector<16x512xf32>
    %8 = arith.addf %4, %7 : vector<16x512xf32>
    %c0_6 = arith.constant 0 : index
    %c0_7 = arith.constant 0 : index
    %9 = vector.load %arg3[%c0_6, %c0_7] : memref<64x16xf32, #tpu.memory_space<vmem>>, vector<64x16xf32>
    %c0_8 = arith.constant 0 : index
    %c0_9 = arith.constant 0 : index
    %10 = vector.load %arg4[%c0_8, %c0_9] : memref<64x32xf32, #tpu.memory_space<vmem>>, vector<64x32xf32>
    %cst = arith.constant dense<0.000000e+00> : vector<64x512xf32>
    %11 = tpu.matmul %9, %8, %cst {dimension_numbers = #tpu.dot_dimension_numbers<[1], [0], [0], [1], [0, 0, 1, 1], [], []>} : vector<64x16xf32>, vector<16x512xf32>, vector<64x512xf32> -> vector<64x512xf32>
    %12 = vector.extract_strided_slice %11 {offsets = [0, 0], sizes = [32, 512], strides = [1, 1]} : vector<64x512xf32> to vector<32x512xf32>
    %13 = vector.extract_strided_slice %11 {offsets = [32, 0], sizes = [32, 512], strides = [1, 1]} : vector<64x512xf32> to vector<32x512xf32>
    %cst_10 = arith.constant 5.000000e-01 : f32
    %14 = vector.broadcast %cst_10 : f32 to vector<32x512xf32>
    %15 = arith.mulf %14, %13 : vector<32x512xf32>
    %16 = math.tanh %15 : vector<32x512xf32>
    %cst_11 = arith.constant 5.000000e-01 : f32
    %17 = vector.broadcast %cst_11 : f32 to vector<32x512xf32>
    %18 = arith.mulf %17, %16 : vector<32x512xf32>
    %cst_12 = arith.constant 5.000000e-01 : f32
    %19 = vector.broadcast %cst_12 : f32 to vector<32x512xf32>
    %20 = arith.addf %18, %19 : vector<32x512xf32>
    %21 = arith.mulf %12, %20 : vector<32x512xf32>
    %cst_13 = arith.constant 0.707106769 : f32
    %22 = vector.broadcast %cst_13 : f32 to vector<32x512xf32>
    %23 = arith.mulf %21, %22 : vector<32x512xf32>
    %cst_14 = arith.constant dense<0.000000e+00> : vector<64x512xf32>
    %24 = tpu.matmul %10, %21, %cst_14 {dimension_numbers = #tpu.dot_dimension_numbers<[1], [0], [0], [1], [0, 0, 1, 1], [], []>} : vector<64x32xf32>, vector<32x512xf32>, vector<64x512xf32> -> vector<64x512xf32>
    %25 = vector.extract_strided_slice %24 {offsets = [0, 0], sizes = [32, 512], strides = [1, 1]} : vector<64x512xf32> to vector<32x512xf32>
    %26 = vector.extract_strided_slice %24 {offsets = [32, 0], sizes = [32, 512], strides = [1, 1]} : vector<64x512xf32> to vector<32x512xf32>
    %cst_15 = arith.constant 5.000000e-01 : f32
    %27 = vector.broadcast %cst_15 : f32 to vector<32x512xf32>
    %28 = arith.mulf %27, %26 : vector<32x512xf32>
    %29 = math.tanh %28 : vector<32x512xf32>
    %cst_16 = arith.constant 5.000000e-01 : f32
    %30 = vector.broadcast %cst_16 : f32 to vector<32x512xf32>
    %31 = arith.mulf %30, %29 : vector<32x512xf32>
    %cst_17 = arith.constant 5.000000e-01 : f32
    %32 = vector.broadcast %cst_17 : f32 to vector<32x512xf32>
    %33 = arith.addf %31, %32 : vector<32x512xf32>
    %34 = arith.mulf %25, %33 : vector<32x512xf32>
    %35 = arith.addf %23, %34 : vector<32x512xf32>
    %cst_18 = arith.constant 0.707106769 : f32
    %36 = vector.broadcast %cst_18 : f32 to vector<32x512xf32>
    %37 = arith.mulf %35, %36 : vector<32x512xf32>
    %c0_19 = arith.constant 0 : index
    %c0_20 = arith.constant 0 : index
    %c0_21 = arith.constant 0 : index
    %c0_22 = arith.constant 0 : index
    %38 = vector.load %arg5[%c0_19, %c0_20, %c0_21, %c0_22] : memref<4x2x64x32xf32, #tpu.memory_space<vmem>>, vector<1x1x64x32xf32>
    %39 = vector.shape_cast %38 : vector<1x1x64x32xf32> to vector<64x32xf32>
    %cst_23 = arith.constant dense<0.000000e+00> : vector<64x512xf32>
    %40 = tpu.matmul %39, %35, %cst_23 {dimension_numbers = #tpu.dot_dimension_numbers<[1], [0], [0], [1], [0, 0, 1, 1], [], []>} : vector<64x32xf32>, vector<32x512xf32>, vector<64x512xf32> -> vector<64x512xf32>
    %41 = vector.extract_strided_slice %40 {offsets = [0, 0], sizes = [32, 512], strides = [1, 1]} : vector<64x512xf32> to vector<32x512xf32>
    %42 = vector.extract_strided_slice %40 {offsets = [32, 0], sizes = [32, 512], strides = [1, 1]} : vector<64x512xf32> to vector<32x512xf32>
    %cst_24 = arith.constant 5.000000e-01 : f32
    %43 = vector.broadcast %cst_24 : f32 to vector<32x512xf32>
    %44 = arith.mulf %43, %42 : vector<32x512xf32>
    %45 = math.tanh %44 : vector<32x512xf32>
    %cst_25 = arith.constant 5.000000e-01 : f32
    %46 = vector.broadcast %cst_25 : f32 to vector<32x512xf32>
    %47 = arith.mulf %46, %45 : vector<32x512xf32>
    %cst_26 = arith.constant 5.000000e-01 : f32
    %48 = vector.broadcast %cst_26 : f32 to vector<32x512xf32>
    %49 = arith.addf %47, %48 : vector<32x512xf32>
    %50 = arith.mulf %41, %49 : vector<32x512xf32>
    %51 = arith.addf %37, %50 : vector<32x512xf32>
    %cst_27 = arith.constant 0.707106769 : f32
    %52 = vector.broadcast %cst_27 : f32 to vector<32x512xf32>
    %53 = arith.mulf %51, %52 : vector<32x512xf32>
    %c0_28 = arith.constant 0 : index
    %c1_29 = arith.constant 1 : index
    %c0_30 = arith.constant 0 : index
    %c0_31 = arith.constant 0 : index
    %54 = vector.load %arg5[%c0_28, %c1_29, %c0_30, %c0_31] : memref<4x2x64x32xf32, #tpu.memory_space<vmem>>, vector<1x1x64x32xf32>
    %55 = vector.shape_cast %54 : vector<1x1x64x32xf32> to vector<64x32xf32>
    %cst_32 = arith.constant dense<0.000000e+00> : vector<64x512xf32>
    %56 = tpu.matmul %55, %51, %cst_32 {dimension_numbers = #tpu.dot_dimension_numbers<[1], [0], [0], [1], [0, 0, 1, 1], [], []>} : vector<64x32xf32>, vector<32x512xf32>, vector<64x512xf32> -> vector<64x512xf32>
    %57 = vector.extract_strided_slice %56 {offsets = [0, 0], sizes = [32, 512], strides = [1, 1]} : vector<64x512xf32> to vector<32x512xf32>
    %58 = vector.extract_strided_slice %56 {offsets = [32, 0], sizes = [32, 512], strides = [1, 1]} : vector<64x512xf32> to vector<32x512xf32>
    %cst_33 = arith.constant 5.000000e-01 : f32
    %59 = vector.broadcast %cst_33 : f32 to vector<32x512xf32>
    %60 = arith.mulf %59, %58 : vector<32x512xf32>
    %61 = math.tanh %60 : vector<32x512xf32>
    %cst_34 = arith.constant 5.000000e-01 : f32
    %62 = vector.broadcast %cst_34 : f32 to vector<32x512xf32>
    %63 = arith.mulf %62, %61 : vector<32x512xf32>
    %cst_35 = arith.constant 5.000000e-01 : f32
    %64 = vector.broadcast %cst_35 : f32 to vector<32x512xf32>
    %65 = arith.addf %63, %64 : vector<32x512xf32>
    %66 = arith.mulf %57, %65 : vector<32x512xf32>
    %67 = arith.addf %53, %66 : vector<32x512xf32>
    %68 = vector.extract_strided_slice %67 {offsets = [16, 0], sizes = [16, 512], strides = [1, 1]} : vector<32x512xf32> to vector<16x512xf32>
    %cst_36 = arith.constant 1.000000e+00 : f32
    %69 = vector.broadcast %cst_36 : f32 to vector<16x512xf32>
    %cst_37 = arith.constant 0.000000e+00 : f32
    %70 = vector.broadcast %cst_37 : f32 to vector<16x512xf32>
    %c0_38 = arith.constant 0 : index
    %c0_39 = arith.constant 0 : index
    %c0_40 = arith.constant 0 : index
    %71 = vector.load %arg6[%c0_38, %c0_39, %c0_40] : memref<3x16x16xf32, #tpu.memory_space<vmem>>, vector<1x16x16xf32>
    %72 = vector.shape_cast %71 : vector<1x16x16xf32> to vector<16x16xf32>
    %cst_41 = arith.constant dense<0.000000e+00> : vector<16x512xf32>
    %73 = tpu.matmul %72, %68, %cst_41 {dimension_numbers = #tpu.dot_dimension_numbers<[1], [0], [0], [1], [0, 0, 1, 1], [], []>} : vector<16x16xf32>, vector<16x512xf32>, vector<16x512xf32> -> vector<16x512xf32>
    %c2 = arith.constant 2 : index
    %c0_42 = arith.constant 0 : index
    %c0_43 = arith.constant 0 : index
    %74 = vector.load %arg2[%c2, %c0_42, %c0_43] : memref<9x16x1xf32, #tpu.memory_space<vmem>>, vector<1x16x1xf32>
    %75 = vector.shape_cast %74 : vector<1x16x1xf32> to vector<16x1xf32>
    %c5 = arith.constant 5 : index
    %c0_44 = arith.constant 0 : index
    %c0_45 = arith.constant 0 : index
    %76 = vector.load %arg2[%c5, %c0_44, %c0_45] : memref<9x16x1xf32, #tpu.memory_space<vmem>>, vector<1x16x1xf32>
    %77 = vector.shape_cast %76 : vector<1x16x1xf32> to vector<16x1xf32>
    %cst_46 = arith.constant dense<0.000000e+00> : vector<16xf32>
    %78 = vector.multi_reduction <add>, %73, %cst_46 [1] : vector<16x512xf32> to vector<16xf32>
    %79 = vector.shape_cast %78 : vector<16xf32> to vector<16x1xf32>
    %cst_47 = arith.constant 5.120000e+02 : f32
    %80 = vector.broadcast %cst_47 : f32 to vector<16x1xf32>
    %81 = arith.divf %79, %80 : vector<16x1xf32>
    %82 = vector.broadcast %81 : vector<16x1xf32> to vector<16x512xf32>
    %83 = arith.subf %73, %82 : vector<16x512xf32>
    %84 = arith.mulf %83, %83 : vector<16x512xf32>
    %cst_48 = arith.constant dense<0.000000e+00> : vector<16xf32>
    %85 = vector.multi_reduction <add>, %84, %cst_48 [1] : vector<16x512xf32> to vector<16xf32>
    %86 = vector.shape_cast %85 : vector<16xf32> to vector<16x1xf32>
    %cst_49 = arith.constant 5.120000e+02 : f32
    %87 = vector.broadcast %cst_49 : f32 to vector<16x1xf32>
    %88 = arith.divf %86, %87 : vector<16x1xf32>
    %89 = vector.broadcast %81 : vector<16x1xf32> to vector<16x512xf32>
    %90 = arith.subf %73, %89 : vector<16x512xf32>
    %cst_50 = arith.constant 9.99999974E-6 : f32
    %91 = vector.broadcast %cst_50 : f32 to vector<16x1xf32>
    %92 = arith.addf %88, %91 : vector<16x1xf32>
    %93 = math.rsqrt %92 : vector<16x1xf32>
    %94 = vector.broadcast %93 : vector<16x1xf32> to vector<16x512xf32>
    %95 = arith.mulf %90, %94 : vector<16x512xf32>
    %96 = vector.broadcast %75 : vector<16x1xf32> to vector<16x512xf32>
    %97 = arith.mulf %95, %96 : vector<16x512xf32>
    %98 = vector.broadcast %77 : vector<16x1xf32> to vector<16x512xf32>
    %99 = arith.addf %97, %98 : vector<16x512xf32>
    %100 = arith.mulf %69, %99 : vector<16x512xf32>
    %cst_51 = arith.constant dense<0xFF800000> : vector<512xf32>
    %101 = vector.multi_reduction <maximumf>, %100, %cst_51 [0] : vector<16x512xf32> to vector<512xf32>
    %102 = vector.shape_cast %101 : vector<512xf32> to vector<1x512xf32>
    %103 = vector.broadcast %102 : vector<1x512xf32> to vector<16x512xf32>
    %104 = arith.subf %100, %103 : vector<16x512xf32>
    %105 = math.exp %104 : vector<16x512xf32>
    %cst_52 = arith.constant dense<0.000000e+00> : vector<512xf32>
    %106 = vector.multi_reduction <add>, %105, %cst_52 [0] : vector<16x512xf32> to vector<512xf32>
    %107 = vector.shape_cast %106 : vector<512xf32> to vector<1x512xf32>
    %108 = tpu.reciprocal %107 {approx = true} : vector<1x512xf32> -> vector<1x512xf32>
    %109 = vector.broadcast %108 : vector<1x512xf32> to vector<16x512xf32>
    %110 = arith.mulf %105, %109 : vector<16x512xf32>
    %111 = arith.mulf %110, %8 : vector<16x512xf32>
    %cst_53 = arith.constant dense<0.000000e+00> : vector<64x512xf32>
    %112 = tpu.matmul %9, %111, %cst_53 {dimension_numbers = #tpu.dot_dimension_numbers<[1], [0], [0], [1], [0, 0, 1, 1], [], []>} : vector<64x16xf32>, vector<16x512xf32>, vector<64x512xf32> -> vector<64x512xf32>
    %113 = vector.extract_strided_slice %112 {offsets = [0, 0], sizes = [32, 512], strides = [1, 1]} : vector<64x512xf32> to vector<32x512xf32>
    %114 = vector.extract_strided_slice %112 {offsets = [32, 0], sizes = [32, 512], strides = [1, 1]} : vector<64x512xf32> to vector<32x512xf32>
    %cst_54 = arith.constant 5.000000e-01 : f32
    %115 = vector.broadcast %cst_54 : f32 to vector<32x512xf32>
    %116 = arith.mulf %115, %114 : vector<32x512xf32>
    %117 = math.tanh %116 : vector<32x512xf32>
    %cst_55 = arith.constant 5.000000e-01 : f32
    %118 = vector.broadcast %cst_55 : f32 to vector<32x512xf32>
    %119 = arith.mulf %118, %117 : vector<32x512xf32>
    %cst_56 = arith.constant 5.000000e-01 : f32
    %120 = vector.broadcast %cst_56 : f32 to vector<32x512xf32>
    %121 = arith.addf %119, %120 : vector<32x512xf32>
    %122 = arith.mulf %113, %121 : vector<32x512xf32>
    %cst_57 = arith.constant 0.707106769 : f32
    %123 = vector.broadcast %cst_57 : f32 to vector<32x512xf32>
    %124 = arith.mulf %122, %123 : vector<32x512xf32>
    %cst_58 = arith.constant dense<0.000000e+00> : vector<64x512xf32>
    %125 = tpu.matmul %10, %122, %cst_58 {dimension_numbers = #tpu.dot_dimension_numbers<[1], [0], [0], [1], [0, 0, 1, 1], [], []>} : vector<64x32xf32>, vector<32x512xf32>, vector<64x512xf32> -> vector<64x512xf32>
    %126 = vector.extract_strided_slice %125 {offsets = [0, 0], sizes = [32, 512], strides = [1, 1]} : vector<64x512xf32> to vector<32x512xf32>
    %127 = vector.extract_strided_slice %125 {offsets = [32, 0], sizes = [32, 512], strides = [1, 1]} : vector<64x512xf32> to vector<32x512xf32>
    %cst_59 = arith.constant 5.000000e-01 : f32
    %128 = vector.broadcast %cst_59 : f32 to vector<32x512xf32>
    %129 = arith.mulf %128, %127 : vector<32x512xf32>
    %130 = math.tanh %129 : vector<32x512xf32>
    %cst_60 = arith.constant 5.000000e-01 : f32
    %131 = vector.broadcast %cst_60 : f32 to vector<32x512xf32>
    %132 = arith.mulf %131, %130 : vector<32x512xf32>
    %cst_61 = arith.constant 5.000000e-01 : f32
    %133 = vector.broadcast %cst_61 : f32 to vector<32x512xf32>
    %134 = arith.addf %132, %133 : vector<32x512xf32>
    %135 = arith.mulf %126, %134 : vector<32x512xf32>
    %136 = arith.addf %124, %135 : vector<32x512xf32>
    %cst_62 = arith.constant 0.707106769 : f32
    %137 = vector.broadcast %cst_62 : f32 to vector<32x512xf32>
    %138 = arith.mulf %136, %137 : vector<32x512xf32>
    %c1_63 = arith.constant 1 : index
    %c0_64 = arith.constant 0 : index
    %c0_65 = arith.constant 0 : index
    %c0_66 = arith.constant 0 : index
    %139 = vector.load %arg5[%c1_63, %c0_64, %c0_65, %c0_66] : memref<4x2x64x32xf32, #tpu.memory_space<vmem>>, vector<1x1x64x32xf32>
    %140 = vector.shape_cast %139 : vector<1x1x64x32xf32> to vector<64x32xf32>
    %cst_67 = arith.constant dense<0.000000e+00> : vector<64x512xf32>
    %141 = tpu.matmul %140, %136, %cst_67 {dimension_numbers = #tpu.dot_dimension_numbers<[1], [0], [0], [1], [0, 0, 1, 1], [], []>} : vector<64x32xf32>, vector<32x512xf32>, vector<64x512xf32> -> vector<64x512xf32>
    %142 = vector.extract_strided_slice %141 {offsets = [0, 0], sizes = [32, 512], strides = [1, 1]} : vector<64x512xf32> to vector<32x512xf32>
    %143 = vector.extract_strided_slice %141 {offsets = [32, 0], sizes = [32, 512], strides = [1, 1]} : vector<64x512xf32> to vector<32x512xf32>
    %cst_68 = arith.constant 5.000000e-01 : f32
    %144 = vector.broadcast %cst_68 : f32 to vector<32x512xf32>
    %145 = arith.mulf %144, %143 : vector<32x512xf32>
    %146 = math.tanh %145 : vector<32x512xf32>
    %cst_69 = arith.constant 5.000000e-01 : f32
    %147 = vector.broadcast %cst_69 : f32 to vector<32x512xf32>
    %148 = arith.mulf %147, %146 : vector<32x512xf32>
    %cst_70 = arith.constant 5.000000e-01 : f32
    %149 = vector.broadcast %cst_70 : f32 to vector<32x512xf32>
    %150 = arith.addf %148, %149 : vector<32x512xf32>
    %151 = arith.mulf %142, %150 : vector<32x512xf32>
    %152 = arith.addf %138, %151 : vector<32x512xf32>
    %cst_71 = arith.constant 0.707106769 : f32
    %153 = vector.broadcast %cst_71 : f32 to vector<32x512xf32>
    %154 = arith.mulf %152, %153 : vector<32x512xf32>
    %c1_72 = arith.constant 1 : index
    %c1_73 = arith.constant 1 : index
    %c0_74 = arith.constant 0 : index
    %c0_75 = arith.constant 0 : index
    %155 = vector.load %arg5[%c1_72, %c1_73, %c0_74, %c0_75] : memref<4x2x64x32xf32, #tpu.memory_space<vmem>>, vector<1x1x64x32xf32>
    %156 = vector.shape_cast %155 : vector<1x1x64x32xf32> to vector<64x32xf32>
    %cst_76 = arith.constant dense<0.000000e+00> : vector<64x512xf32>
    %157 = tpu.matmul %156, %152, %cst_76 {dimension_numbers = #tpu.dot_dimension_numbers<[1], [0], [0], [1], [0, 0, 1, 1], [], []>} : vector<64x32xf32>, vector<32x512xf32>, vector<64x512xf32> -> vector<64x512xf32>
    %158 = vector.extract_strided_slice %157 {offsets = [0, 0], sizes = [32, 512], strides = [1, 1]} : vector<64x512xf32> to vector<32x512xf32>
    %159 = vector.extract_strided_slice %157 {offsets = [32, 0], sizes = [32, 512], strides = [1, 1]} : vector<64x512xf32> to vector<32x512xf32>
    %cst_77 = arith.constant 5.000000e-01 : f32
    %160 = vector.broadcast %cst_77 : f32 to vector<32x512xf32>
    %161 = arith.mulf %160, %159 : vector<32x512xf32>
    %162 = math.tanh %161 : vector<32x512xf32>
    %cst_78 = arith.constant 5.000000e-01 : f32
    %163 = vector.broadcast %cst_78 : f32 to vector<32x512xf32>
    %164 = arith.mulf %163, %162 : vector<32x512xf32>
    %cst_79 = arith.constant 5.000000e-01 : f32
    %165 = vector.broadcast %cst_79 : f32 to vector<32x512xf32>
    %166 = arith.addf %164, %165 : vector<32x512xf32>
    %167 = arith.mulf %158, %166 : vector<32x512xf32>
    %168 = arith.addf %154, %167 : vector<32x512xf32>
    %169 = vector.extract_strided_slice %168 {offsets = [0, 0], sizes = [16, 512], strides = [1, 1]} : vector<32x512xf32> to vector<16x512xf32>
    %cst_80 = arith.constant 0.000000e+00 : f32
    %170 = vector.broadcast %cst_80 : f32 to vector<16x512xf32>
    %171 = arith.maximumf %169, %170 : vector<16x512xf32>
    %172 = arith.addf %70, %171 : vector<16x512xf32>
    %173 = vector.extract_strided_slice %168 {offsets = [16, 0], sizes = [16, 512], strides = [1, 1]} : vector<32x512xf32> to vector<16x512xf32>
    %cst_81 = arith.constant 1.300000e+00 : f32
    %174 = vector.broadcast %cst_81 : f32 to vector<16x512xf32>
    %175 = arith.subf %174, %110 : vector<16x512xf32>
    %176 = arith.mulf %175, %69 : vector<16x512xf32>
    %c1_82 = arith.constant 1 : index
    %c0_83 = arith.constant 0 : index
    %c0_84 = arith.constant 0 : index
    %177 = vector.load %arg6[%c1_82, %c0_83, %c0_84] : memref<3x16x16xf32, #tpu.memory_space<vmem>>, vector<1x16x16xf32>
    %178 = vector.shape_cast %177 : vector<1x16x16xf32> to vector<16x16xf32>
    %cst_85 = arith.constant dense<0.000000e+00> : vector<16x512xf32>
    %179 = tpu.matmul %178, %173, %cst_85 {dimension_numbers = #tpu.dot_dimension_numbers<[1], [0], [0], [1], [0, 0, 1, 1], [], []>} : vector<16x16xf32>, vector<16x512xf32>, vector<16x512xf32> -> vector<16x512xf32>
    %c3 = arith.constant 3 : index
    %c0_86 = arith.constant 0 : index
    %c0_87 = arith.constant 0 : index
    %180 = vector.load %arg2[%c3, %c0_86, %c0_87] : memref<9x16x1xf32, #tpu.memory_space<vmem>>, vector<1x16x1xf32>
    %181 = vector.shape_cast %180 : vector<1x16x1xf32> to vector<16x1xf32>
    %c6 = arith.constant 6 : index
    %c0_88 = arith.constant 0 : index
    %c0_89 = arith.constant 0 : index
    %182 = vector.load %arg2[%c6, %c0_88, %c0_89] : memref<9x16x1xf32, #tpu.memory_space<vmem>>, vector<1x16x1xf32>
    %183 = vector.shape_cast %182 : vector<1x16x1xf32> to vector<16x1xf32>
    %cst_90 = arith.constant dense<0.000000e+00> : vector<16xf32>
    %184 = vector.multi_reduction <add>, %179, %cst_90 [1] : vector<16x512xf32> to vector<16xf32>
    %185 = vector.shape_cast %184 : vector<16xf32> to vector<16x1xf32>
    %cst_91 = arith.constant 5.120000e+02 : f32
    %186 = vector.broadcast %cst_91 : f32 to vector<16x1xf32>
    %187 = arith.divf %185, %186 : vector<16x1xf32>
    %188 = vector.broadcast %187 : vector<16x1xf32> to vector<16x512xf32>
    %189 = arith.subf %179, %188 : vector<16x512xf32>
    %190 = arith.mulf %189, %189 : vector<16x512xf32>
    %cst_92 = arith.constant dense<0.000000e+00> : vector<16xf32>
    %191 = vector.multi_reduction <add>, %190, %cst_92 [1] : vector<16x512xf32> to vector<16xf32>
    %192 = vector.shape_cast %191 : vector<16xf32> to vector<16x1xf32>
    %cst_93 = arith.constant 5.120000e+02 : f32
    %193 = vector.broadcast %cst_93 : f32 to vector<16x1xf32>
    %194 = arith.divf %192, %193 : vector<16x1xf32>
    %195 = vector.broadcast %187 : vector<16x1xf32> to vector<16x512xf32>
    %196 = arith.subf %179, %195 : vector<16x512xf32>
    %cst_94 = arith.constant 9.99999974E-6 : f32
    %197 = vector.broadcast %cst_94 : f32 to vector<16x1xf32>
    %198 = arith.addf %194, %197 : vector<16x1xf32>
    %199 = math.rsqrt %198 : vector<16x1xf32>
    %200 = vector.broadcast %199 : vector<16x1xf32> to vector<16x512xf32>
    %201 = arith.mulf %196, %200 : vector<16x512xf32>
    %202 = vector.broadcast %181 : vector<16x1xf32> to vector<16x512xf32>
    %203 = arith.mulf %201, %202 : vector<16x512xf32>
    %204 = vector.broadcast %183 : vector<16x1xf32> to vector<16x512xf32>
    %205 = arith.addf %203, %204 : vector<16x512xf32>
    %206 = arith.mulf %176, %205 : vector<16x512xf32>
    %cst_95 = arith.constant dense<0xFF800000> : vector<512xf32>
    %207 = vector.multi_reduction <maximumf>, %206, %cst_95 [0] : vector<16x512xf32> to vector<512xf32>
    %208 = vector.shape_cast %207 : vector<512xf32> to vector<1x512xf32>
    %209 = vector.broadcast %208 : vector<1x512xf32> to vector<16x512xf32>
    %210 = arith.subf %206, %209 : vector<16x512xf32>
    %211 = math.exp %210 : vector<16x512xf32>
    %cst_96 = arith.constant dense<0.000000e+00> : vector<512xf32>
    %212 = vector.multi_reduction <add>, %211, %cst_96 [0] : vector<16x512xf32> to vector<512xf32>
    %213 = vector.shape_cast %212 : vector<512xf32> to vector<1x512xf32>
    %214 = tpu.reciprocal %213 {approx = true} : vector<1x512xf32> -> vector<1x512xf32>
    %215 = vector.broadcast %214 : vector<1x512xf32> to vector<16x512xf32>
    %216 = arith.mulf %211, %215 : vector<16x512xf32>
    %217 = arith.mulf %216, %8 : vector<16x512xf32>
    %cst_97 = arith.constant dense<0.000000e+00> : vector<64x512xf32>
    %218 = tpu.matmul %9, %217, %cst_97 {dimension_numbers = #tpu.dot_dimension_numbers<[1], [0], [0], [1], [0, 0, 1, 1], [], []>} : vector<64x16xf32>, vector<16x512xf32>, vector<64x512xf32> -> vector<64x512xf32>
    %219 = vector.extract_strided_slice %218 {offsets = [0, 0], sizes = [32, 512], strides = [1, 1]} : vector<64x512xf32> to vector<32x512xf32>
    %220 = vector.extract_strided_slice %218 {offsets = [32, 0], sizes = [32, 512], strides = [1, 1]} : vector<64x512xf32> to vector<32x512xf32>
    %cst_98 = arith.constant 5.000000e-01 : f32
    %221 = vector.broadcast %cst_98 : f32 to vector<32x512xf32>
    %222 = arith.mulf %221, %220 : vector<32x512xf32>
    %223 = math.tanh %222 : vector<32x512xf32>
    %cst_99 = arith.constant 5.000000e-01 : f32
    %224 = vector.broadcast %cst_99 : f32 to vector<32x512xf32>
    %225 = arith.mulf %224, %223 : vector<32x512xf32>
    %cst_100 = arith.constant 5.000000e-01 : f32
    %226 = vector.broadcast %cst_100 : f32 to vector<32x512xf32>
    %227 = arith.addf %225, %226 : vector<32x512xf32>
    %228 = arith.mulf %219, %227 : vector<32x512xf32>
    %cst_101 = arith.constant 0.707106769 : f32
    %229 = vector.broadcast %cst_101 : f32 to vector<32x512xf32>
    %230 = arith.mulf %228, %229 : vector<32x512xf32>
    %cst_102 = arith.constant dense<0.000000e+00> : vector<64x512xf32>
    %231 = tpu.matmul %10, %228, %cst_102 {dimension_numbers = #tpu.dot_dimension_numbers<[1], [0], [0], [1], [0, 0, 1, 1], [], []>} : vector<64x32xf32>, vector<32x512xf32>, vector<64x512xf32> -> vector<64x512xf32>
    %232 = vector.extract_strided_slice %231 {offsets = [0, 0], sizes = [32, 512], strides = [1, 1]} : vector<64x512xf32> to vector<32x512xf32>
    %233 = vector.extract_strided_slice %231 {offsets = [32, 0], sizes = [32, 512], strides = [1, 1]} : vector<64x512xf32> to vector<32x512xf32>
    %cst_103 = arith.constant 5.000000e-01 : f32
    %234 = vector.broadcast %cst_103 : f32 to vector<32x512xf32>
    %235 = arith.mulf %234, %233 : vector<32x512xf32>
    %236 = math.tanh %235 : vector<32x512xf32>
    %cst_104 = arith.constant 5.000000e-01 : f32
    %237 = vector.broadcast %cst_104 : f32 to vector<32x512xf32>
    %238 = arith.mulf %237, %236 : vector<32x512xf32>
    %cst_105 = arith.constant 5.000000e-01 : f32
    %239 = vector.broadcast %cst_105 : f32 to vector<32x512xf32>
    %240 = arith.addf %238, %239 : vector<32x512xf32>
    %241 = arith.mulf %232, %240 : vector<32x512xf32>
    %242 = arith.addf %230, %241 : vector<32x512xf32>
    %cst_106 = arith.constant 0.707106769 : f32
    %243 = vector.broadcast %cst_106 : f32 to vector<32x512xf32>
    %244 = arith.mulf %242, %243 : vector<32x512xf32>
    %c2_107 = arith.constant 2 : index
    %c0_108 = arith.constant 0 : index
    %c0_109 = arith.constant 0 : index
    %c0_110 = arith.constant 0 : index
    %245 = vector.load %arg5[%c2_107, %c0_108, %c0_109, %c0_110] : memref<4x2x64x32xf32, #tpu.memory_space<vmem>>, vector<1x1x64x32xf32>
    %246 = vector.shape_cast %245 : vector<1x1x64x32xf32> to vector<64x32xf32>
    %cst_111 = arith.constant dense<0.000000e+00> : vector<64x512xf32>
    %247 = tpu.matmul %246, %242, %cst_111 {dimension_numbers = #tpu.dot_dimension_numbers<[1], [0], [0], [1], [0, 0, 1, 1], [], []>} : vector<64x32xf32>, vector<32x512xf32>, vector<64x512xf32> -> vector<64x512xf32>
    %248 = vector.extract_strided_slice %247 {offsets = [0, 0], sizes = [32, 512], strides = [1, 1]} : vector<64x512xf32> to vector<32x512xf32>
    %249 = vector.extract_strided_slice %247 {offsets = [32, 0], sizes = [32, 512], strides = [1, 1]} : vector<64x512xf32> to vector<32x512xf32>
    %cst_112 = arith.constant 5.000000e-01 : f32
    %250 = vector.broadcast %cst_112 : f32 to vector<32x512xf32>
    %251 = arith.mulf %250, %249 : vector<32x512xf32>
    %252 = math.tanh %251 : vector<32x512xf32>
    %cst_113 = arith.constant 5.000000e-01 : f32
    %253 = vector.broadcast %cst_113 : f32 to vector<32x512xf32>
    %254 = arith.mulf %253, %252 : vector<32x512xf32>
    %cst_114 = arith.constant 5.000000e-01 : f32
    %255 = vector.broadcast %cst_114 : f32 to vector<32x512xf32>
    %256 = arith.addf %254, %255 : vector<32x512xf32>
    %257 = arith.mulf %248, %256 : vector<32x512xf32>
    %258 = arith.addf %244, %257 : vector<32x512xf32>
    %cst_115 = arith.constant 0.707106769 : f32
    %259 = vector.broadcast %cst_115 : f32 to vector<32x512xf32>
    %260 = arith.mulf %258, %259 : vector<32x512xf32>
    %c2_116 = arith.constant 2 : index
    %c1_117 = arith.constant 1 : index
    %c0_118 = arith.constant 0 : index
    %c0_119 = arith.constant 0 : index
    %261 = vector.load %arg5[%c2_116, %c1_117, %c0_118, %c0_119] : memref<4x2x64x32xf32, #tpu.memory_space<vmem>>, vector<1x1x64x32xf32>
    %262 = vector.shape_cast %261 : vector<1x1x64x32xf32> to vector<64x32xf32>
    %cst_120 = arith.constant dense<0.000000e+00> : vector<64x512xf32>
    %263 = tpu.matmul %262, %258, %cst_120 {dimension_numbers = #tpu.dot_dimension_numbers<[1], [0], [0], [1], [0, 0, 1, 1], [], []>} : vector<64x32xf32>, vector<32x512xf32>, vector<64x512xf32> -> vector<64x512xf32>
    %264 = vector.extract_strided_slice %263 {offsets = [0, 0], sizes = [32, 512], strides = [1, 1]} : vector<64x512xf32> to vector<32x512xf32>
    %265 = vector.extract_strided_slice %263 {offsets = [32, 0], sizes = [32, 512], strides = [1, 1]} : vector<64x512xf32> to vector<32x512xf32>
    %cst_121 = arith.constant 5.000000e-01 : f32
    %266 = vector.broadcast %cst_121 : f32 to vector<32x512xf32>
    %267 = arith.mulf %266, %265 : vector<32x512xf32>
    %268 = math.tanh %267 : vector<32x512xf32>
    %cst_122 = arith.constant 5.000000e-01 : f32
    %269 = vector.broadcast %cst_122 : f32 to vector<32x512xf32>
    %270 = arith.mulf %269, %268 : vector<32x512xf32>
    %cst_123 = arith.constant 5.000000e-01 : f32
    %271 = vector.broadcast %cst_123 : f32 to vector<32x512xf32>
    %272 = arith.addf %270, %271 : vector<32x512xf32>
    %273 = arith.mulf %264, %272 : vector<32x512xf32>
    %274 = arith.addf %260, %273 : vector<32x512xf32>
    %275 = vector.extract_strided_slice %274 {offsets = [0, 0], sizes = [16, 512], strides = [1, 1]} : vector<32x512xf32> to vector<16x512xf32>
    %cst_124 = arith.constant 0.000000e+00 : f32
    %276 = vector.broadcast %cst_124 : f32 to vector<16x512xf32>
    %277 = arith.maximumf %275, %276 : vector<16x512xf32>
    %278 = arith.addf %172, %277 : vector<16x512xf32>
    %279 = vector.extract_strided_slice %274 {offsets = [16, 0], sizes = [16, 512], strides = [1, 1]} : vector<32x512xf32> to vector<16x512xf32>
    %cst_125 = arith.constant 1.300000e+00 : f32
    %280 = vector.broadcast %cst_125 : f32 to vector<16x512xf32>
    %281 = arith.subf %280, %216 : vector<16x512xf32>
    %282 = arith.mulf %281, %176 : vector<16x512xf32>
    %c2_126 = arith.constant 2 : index
    %c0_127 = arith.constant 0 : index
    %c0_128 = arith.constant 0 : index
    %283 = vector.load %arg6[%c2_126, %c0_127, %c0_128] : memref<3x16x16xf32, #tpu.memory_space<vmem>>, vector<1x16x16xf32>
    %284 = vector.shape_cast %283 : vector<1x16x16xf32> to vector<16x16xf32>
    %cst_129 = arith.constant dense<0.000000e+00> : vector<16x512xf32>
    %285 = tpu.matmul %284, %279, %cst_129 {dimension_numbers = #tpu.dot_dimension_numbers<[1], [0], [0], [1], [0, 0, 1, 1], [], []>} : vector<16x16xf32>, vector<16x512xf32>, vector<16x512xf32> -> vector<16x512xf32>
    %c4 = arith.constant 4 : index
    %c0_130 = arith.constant 0 : index
    %c0_131 = arith.constant 0 : index
    %286 = vector.load %arg2[%c4, %c0_130, %c0_131] : memref<9x16x1xf32, #tpu.memory_space<vmem>>, vector<1x16x1xf32>
    %287 = vector.shape_cast %286 : vector<1x16x1xf32> to vector<16x1xf32>
    %c7 = arith.constant 7 : index
    %c0_132 = arith.constant 0 : index
    %c0_133 = arith.constant 0 : index
    %288 = vector.load %arg2[%c7, %c0_132, %c0_133] : memref<9x16x1xf32, #tpu.memory_space<vmem>>, vector<1x16x1xf32>
    %289 = vector.shape_cast %288 : vector<1x16x1xf32> to vector<16x1xf32>
    %cst_134 = arith.constant dense<0.000000e+00> : vector<16xf32>
    %290 = vector.multi_reduction <add>, %285, %cst_134 [1] : vector<16x512xf32> to vector<16xf32>
    %291 = vector.shape_cast %290 : vector<16xf32> to vector<16x1xf32>
    %cst_135 = arith.constant 5.120000e+02 : f32
    %292 = vector.broadcast %cst_135 : f32 to vector<16x1xf32>
    %293 = arith.divf %291, %292 : vector<16x1xf32>
    %294 = vector.broadcast %293 : vector<16x1xf32> to vector<16x512xf32>
    %295 = arith.subf %285, %294 : vector<16x512xf32>
    %296 = arith.mulf %295, %295 : vector<16x512xf32>
    %cst_136 = arith.constant dense<0.000000e+00> : vector<16xf32>
    %297 = vector.multi_reduction <add>, %296, %cst_136 [1] : vector<16x512xf32> to vector<16xf32>
    %298 = vector.shape_cast %297 : vector<16xf32> to vector<16x1xf32>
    %cst_137 = arith.constant 5.120000e+02 : f32
    %299 = vector.broadcast %cst_137 : f32 to vector<16x1xf32>
    %300 = arith.divf %298, %299 : vector<16x1xf32>
    %301 = vector.broadcast %293 : vector<16x1xf32> to vector<16x512xf32>
    %302 = arith.subf %285, %301 : vector<16x512xf32>
    %cst_138 = arith.constant 9.99999974E-6 : f32
    %303 = vector.broadcast %cst_138 : f32 to vector<16x1xf32>
    %304 = arith.addf %300, %303 : vector<16x1xf32>
    %305 = math.rsqrt %304 : vector<16x1xf32>
    %306 = vector.broadcast %305 : vector<16x1xf32> to vector<16x512xf32>
    %307 = arith.mulf %302, %306 : vector<16x512xf32>
    %308 = vector.broadcast %287 : vector<16x1xf32> to vector<16x512xf32>
    %309 = arith.mulf %307, %308 : vector<16x512xf32>
    %310 = vector.broadcast %289 : vector<16x1xf32> to vector<16x512xf32>
    %311 = arith.addf %309, %310 : vector<16x512xf32>
    %312 = arith.mulf %282, %311 : vector<16x512xf32>
    %cst_139 = arith.constant dense<0xFF800000> : vector<512xf32>
    %313 = vector.multi_reduction <maximumf>, %312, %cst_139 [0] : vector<16x512xf32> to vector<512xf32>
    %314 = vector.shape_cast %313 : vector<512xf32> to vector<1x512xf32>
    %315 = vector.broadcast %314 : vector<1x512xf32> to vector<16x512xf32>
    %316 = arith.subf %312, %315 : vector<16x512xf32>
    %317 = math.exp %316 : vector<16x512xf32>
    %cst_140 = arith.constant dense<0.000000e+00> : vector<512xf32>
    %318 = vector.multi_reduction <add>, %317, %cst_140 [0] : vector<16x512xf32> to vector<512xf32>
    %319 = vector.shape_cast %318 : vector<512xf32> to vector<1x512xf32>
    %320 = tpu.reciprocal %319 {approx = true} : vector<1x512xf32> -> vector<1x512xf32>
    %321 = vector.broadcast %320 : vector<1x512xf32> to vector<16x512xf32>
    %322 = arith.mulf %317, %321 : vector<16x512xf32>
    %323 = arith.mulf %322, %8 : vector<16x512xf32>
    %cst_141 = arith.constant dense<0.000000e+00> : vector<64x512xf32>
    %324 = tpu.matmul %9, %323, %cst_141 {dimension_numbers = #tpu.dot_dimension_numbers<[1], [0], [0], [1], [0, 0, 1, 1], [], []>} : vector<64x16xf32>, vector<16x512xf32>, vector<64x512xf32> -> vector<64x512xf32>
    %325 = vector.extract_strided_slice %324 {offsets = [0, 0], sizes = [32, 512], strides = [1, 1]} : vector<64x512xf32> to vector<32x512xf32>
    %326 = vector.extract_strided_slice %324 {offsets = [32, 0], sizes = [32, 512], strides = [1, 1]} : vector<64x512xf32> to vector<32x512xf32>
    %cst_142 = arith.constant 5.000000e-01 : f32
    %327 = vector.broadcast %cst_142 : f32 to vector<32x512xf32>
    %328 = arith.mulf %327, %326 : vector<32x512xf32>
    %329 = math.tanh %328 : vector<32x512xf32>
    %cst_143 = arith.constant 5.000000e-01 : f32
    %330 = vector.broadcast %cst_143 : f32 to vector<32x512xf32>
    %331 = arith.mulf %330, %329 : vector<32x512xf32>
    %cst_144 = arith.constant 5.000000e-01 : f32
    %332 = vector.broadcast %cst_144 : f32 to vector<32x512xf32>
    %333 = arith.addf %331, %332 : vector<32x512xf32>
    %334 = arith.mulf %325, %333 : vector<32x512xf32>
    %cst_145 = arith.constant 0.707106769 : f32
    %335 = vector.broadcast %cst_145 : f32 to vector<32x512xf32>
    %336 = arith.mulf %334, %335 : vector<32x512xf32>
    %cst_146 = arith.constant dense<0.000000e+00> : vector<64x512xf32>
    %337 = tpu.matmul %10, %334, %cst_146 {dimension_numbers = #tpu.dot_dimension_numbers<[1], [0], [0], [1], [0, 0, 1, 1], [], []>} : vector<64x32xf32>, vector<32x512xf32>, vector<64x512xf32> -> vector<64x512xf32>
    %338 = vector.extract_strided_slice %337 {offsets = [0, 0], sizes = [32, 512], strides = [1, 1]} : vector<64x512xf32> to vector<32x512xf32>
    %339 = vector.extract_strided_slice %337 {offsets = [32, 0], sizes = [32, 512], strides = [1, 1]} : vector<64x512xf32> to vector<32x512xf32>
    %cst_147 = arith.constant 5.000000e-01 : f32
    %340 = vector.broadcast %cst_147 : f32 to vector<32x512xf32>
    %341 = arith.mulf %340, %339 : vector<32x512xf32>
    %342 = math.tanh %341 : vector<32x512xf32>
    %cst_148 = arith.constant 5.000000e-01 : f32
    %343 = vector.broadcast %cst_148 : f32 to vector<32x512xf32>
    %344 = arith.mulf %343, %342 : vector<32x512xf32>
    %cst_149 = arith.constant 5.000000e-01 : f32
    %345 = vector.broadcast %cst_149 : f32 to vector<32x512xf32>
    %346 = arith.addf %344, %345 : vector<32x512xf32>
    %347 = arith.mulf %338, %346 : vector<32x512xf32>
    %348 = arith.addf %336, %347 : vector<32x512xf32>
    %cst_150 = arith.constant 0.707106769 : f32
    %349 = vector.broadcast %cst_150 : f32 to vector<32x512xf32>
    %350 = arith.mulf %348, %349 : vector<32x512xf32>
    %c3_151 = arith.constant 3 : index
    %c0_152 = arith.constant 0 : index
    %c0_153 = arith.constant 0 : index
    %c0_154 = arith.constant 0 : index
    %351 = vector.load %arg5[%c3_151, %c0_152, %c0_153, %c0_154] : memref<4x2x64x32xf32, #tpu.memory_space<vmem>>, vector<1x1x64x32xf32>
    %352 = vector.shape_cast %351 : vector<1x1x64x32xf32> to vector<64x32xf32>
    %cst_155 = arith.constant dense<0.000000e+00> : vector<64x512xf32>
    %353 = tpu.matmul %352, %348, %cst_155 {dimension_numbers = #tpu.dot_dimension_numbers<[1], [0], [0], [1], [0, 0, 1, 1], [], []>} : vector<64x32xf32>, vector<32x512xf32>, vector<64x512xf32> -> vector<64x512xf32>
    %354 = vector.extract_strided_slice %353 {offsets = [0, 0], sizes = [32, 512], strides = [1, 1]} : vector<64x512xf32> to vector<32x512xf32>
    %355 = vector.extract_strided_slice %353 {offsets = [32, 0], sizes = [32, 512], strides = [1, 1]} : vector<64x512xf32> to vector<32x512xf32>
    %cst_156 = arith.constant 5.000000e-01 : f32
    %356 = vector.broadcast %cst_156 : f32 to vector<32x512xf32>
    %357 = arith.mulf %356, %355 : vector<32x512xf32>
    %358 = math.tanh %357 : vector<32x512xf32>
    %cst_157 = arith.constant 5.000000e-01 : f32
    %359 = vector.broadcast %cst_157 : f32 to vector<32x512xf32>
    %360 = arith.mulf %359, %358 : vector<32x512xf32>
    %cst_158 = arith.constant 5.000000e-01 : f32
    %361 = vector.broadcast %cst_158 : f32 to vector<32x512xf32>
    %362 = arith.addf %360, %361 : vector<32x512xf32>
    %363 = arith.mulf %354, %362 : vector<32x512xf32>
    %364 = arith.addf %350, %363 : vector<32x512xf32>
    %cst_159 = arith.constant 0.707106769 : f32
    %365 = vector.broadcast %cst_159 : f32 to vector<32x512xf32>
    %366 = arith.mulf %364, %365 : vector<32x512xf32>
    %c3_160 = arith.constant 3 : index
    %c1_161 = arith.constant 1 : index
    %c0_162 = arith.constant 0 : index
    %c0_163 = arith.constant 0 : index
    %367 = vector.load %arg5[%c3_160, %c1_161, %c0_162, %c0_163] : memref<4x2x64x32xf32, #tpu.memory_space<vmem>>, vector<1x1x64x32xf32>
    %368 = vector.shape_cast %367 : vector<1x1x64x32xf32> to vector<64x32xf32>
    %cst_164 = arith.constant dense<0.000000e+00> : vector<64x512xf32>
    %369 = tpu.matmul %368, %364, %cst_164 {dimension_numbers = #tpu.dot_dimension_numbers<[1], [0], [0], [1], [0, 0, 1, 1], [], []>} : vector<64x32xf32>, vector<32x512xf32>, vector<64x512xf32> -> vector<64x512xf32>
    %370 = vector.extract_strided_slice %369 {offsets = [0, 0], sizes = [32, 512], strides = [1, 1]} : vector<64x512xf32> to vector<32x512xf32>
    %371 = vector.extract_strided_slice %369 {offsets = [32, 0], sizes = [32, 512], strides = [1, 1]} : vector<64x512xf32> to vector<32x512xf32>
    %cst_165 = arith.constant 5.000000e-01 : f32
    %372 = vector.broadcast %cst_165 : f32 to vector<32x512xf32>
    %373 = arith.mulf %372, %371 : vector<32x512xf32>
    %374 = math.tanh %373 : vector<32x512xf32>
    %cst_166 = arith.constant 5.000000e-01 : f32
    %375 = vector.broadcast %cst_166 : f32 to vector<32x512xf32>
    %376 = arith.mulf %375, %374 : vector<32x512xf32>
    %cst_167 = arith.constant 5.000000e-01 : f32
    %377 = vector.broadcast %cst_167 : f32 to vector<32x512xf32>
    %378 = arith.addf %376, %377 : vector<32x512xf32>
    %379 = arith.mulf %370, %378 : vector<32x512xf32>
    %380 = arith.addf %366, %379 : vector<32x512xf32>
    %381 = vector.extract_strided_slice %380 {offsets = [0, 0], sizes = [16, 512], strides = [1, 1]} : vector<32x512xf32> to vector<16x512xf32>
    %cst_168 = arith.constant 0.000000e+00 : f32
    %382 = vector.broadcast %cst_168 : f32 to vector<16x512xf32>
    %383 = arith.maximumf %381, %382 : vector<16x512xf32>
    %384 = arith.addf %278, %383 : vector<16x512xf32>
    %c0_169 = arith.constant 0 : index
    %c0_170 = arith.constant 0 : index
    %385 = vector.load %arg7[%c0_169, %c0_170] : memref<8x16xf32, #tpu.memory_space<vmem>>, vector<8x16xf32>
    %cst_171 = arith.constant dense<0.000000e+00> : vector<8x512xf32>
    %386 = tpu.matmul %385, %384, %cst_171 {dimension_numbers = #tpu.dot_dimension_numbers<[1], [0], [0], [1], [0, 0, 1, 1], [], []>} : vector<8x16xf32>, vector<16x512xf32>, vector<8x512xf32> -> vector<8x512xf32>
    %c8 = arith.constant 8 : index
    %c0_172 = arith.constant 0 : index
    %c0_173 = arith.constant 0 : index
    %387 = vector.load %arg2[%c8, %c0_172, %c0_173] : memref<9x16x1xf32, #tpu.memory_space<vmem>>, vector<1x16x1xf32>
    %388 = vector.shape_cast %387 : vector<1x16x1xf32> to vector<16x1xf32>
    %389 = vector.extract_strided_slice %388 {offsets = [0, 0], sizes = [8, 1], strides = [1, 1]} : vector<16x1xf32> to vector<8x1xf32>
    %390 = vector.broadcast %389 : vector<8x1xf32> to vector<8x512xf32>
    %391 = arith.addf %386, %390 : vector<8x512xf32>
    %c0_174 = arith.constant 0 : index
    %c0_175 = arith.constant 0 : index
    %392 = vector.load %arg8[%c0_174, %c0_175] : memref<8x512xf32, #tpu.memory_space<vmem>>, vector<8x512xf32>
    tpu.vector_store %arg8[%c0_174, %c0_175], %391 {strides = array<i32>} : memref<8x512xf32, #tpu.memory_space<vmem>>, vector<8x512xf32>,
    return
  }
  func.func @transform_0(%arg0: i32) -> (i32, i32) {
    %c0_i32 = arith.constant 0 : i32
    %c0_i32_0 = arith.constant 0 : i32
    return %c0_i32, %arg0 : i32, i32
  }
  func.func @transform_1(%arg0: i32) -> (i32, i32, i32) {
    %c0_i32 = arith.constant 0 : i32
    %c0_i32_0 = arith.constant 0 : i32
    %c0_i32_1 = arith.constant 0 : i32
    %c0_i32_2 = arith.constant 0 : i32
    return %c0_i32, %c0_i32_0, %c0_i32_1 : i32, i32, i32
  }
  func.func @transform_2(%arg0: i32) -> (i32, i32) {
    %c0_i32 = arith.constant 0 : i32
    %c0_i32_0 = arith.constant 0 : i32
    %c0_i32_1 = arith.constant 0 : i32
    return %c0_i32, %c0_i32_0 : i32, i32
  }
  func.func @transform_3(%arg0: i32) -> (i32, i32) {
    %c0_i32 = arith.constant 0 : i32
    %c0_i32_0 = arith.constant 0 : i32
    %c0_i32_1 = arith.constant 0 : i32
    return %c0_i32, %c0_i32_0 : i32, i32
  }
  func.func @transform_4(%arg0: i32) -> (i32, i32, i32, i32) {
    %c0_i32 = arith.constant 0 : i32
    %c0_i32_0 = arith.constant 0 : i32
    %c0_i32_1 = arith.constant 0 : i32
    %c0_i32_2 = arith.constant 0 : i32
    %c0_i32_3 = arith.constant 0 : i32
    return %c0_i32, %c0_i32_0, %c0_i32_1, %c0_i32_2 : i32, i32, i32, i32
  }
  func.func @transform_5(%arg0: i32) -> (i32, i32, i32) {
    %c0_i32 = arith.constant 0 : i32
    %c0_i32_0 = arith.constant 0 : i32
    %c0_i32_1 = arith.constant 0 : i32
    %c0_i32_2 = arith.constant 0 : i32
    return %c0_i32, %c0_i32_0, %c0_i32_1 : i32, i32, i32
  }
  func.func @transform_6(%arg0: i32) -> (i32, i32) {
    %c0_i32 = arith.constant 0 : i32
    %c0_i32_0 = arith.constant 0 : i32
    %c0_i32_1 = arith.constant 0 : i32
    return %c0_i32, %c0_i32_0 : i32, i32
  }
  func.func @transform_7(%arg0: i32) -> (i32, i32) {
    %c0_i32 = arith.constant 0 : i32
    %c0_i32_0 = arith.constant 0 : i32
    return %c0_i32, %arg0 : i32, i32
  }
}

</mosaic_0001>

<llo_original>
// kernel: tabnet_forward.1
$region0: #{tabnet_forward.1}
  #allocation0 [shape = 'u32[]', space=smem, size = 0x4, offset = 0x4, fixed_abs, tag = 'smem constant byte address 0x4 - core index']
  #allocation1 [shape = 'u32[144,128]{1,0:T(1,128)}', space=vmem, size = 0x12000, scoped, tag = 'internal scratch']
  %s0 = inlined_call_operand.vmem [shape: f32[16,1024], index: 0, kind: input, shape index: {}]
  %s1 = inlined_call_operand.vmem [shape: f32[9,16,1], index: 1, kind: input, shape index: {}]
  %s2 = inlined_call_operand.vmem [shape: f32[64,16], index: 2, kind: input, shape index: {}]
  %s3 = inlined_call_operand.vmem [shape: f32[64,32], index: 3, kind: input, shape index: {}]
  %s4 = inlined_call_operand.vmem [shape: f32[4,2,64,32], index: 4, kind: input, shape index: {}]
  %s5 = inlined_call_operand.vmem [shape: f32[3,16,16], index: 5, kind: input, shape index: {}]
  %s6 = inlined_call_operand.vmem [shape: f32[8,16], index: 6, kind: input, shape index: {}]
  %s7 = inlined_call_operand.hbm [shape: f32[8,1024], index: 7, kind: output, shape index: {}]
  %s8 = sld [smem:[#allocation0]]
  $region84: #{tabnet_forward.1} parent=0
    _
  %s10 = ssub.s32 1, %s8
  %s11 = scalar_select 0, %s10, %s8
  $region1: #{tabnet_forward.1} parent=0
    #allocation2 [shape = 'u8[65536]{0}', space=vmem, size = 0x10000, scoped, tag = 'input window, operand 0']
    #allocation3 [shape = 'u8[32768]{0}', space=vmem, size = 0x8000, scoped, tag = 'output window, operand 0']
    #allocation4 [shape = 's32[2]{0}', space=sflag, size = 0x8, scoped, tag = 'scoped memory for tabnet_forward.1']
    %12 = vsyncpa [#allocation4], 0
    %s13 = scalar_lea.sflag [#allocation4], 1
    %14 = vsyncpa %s13, 0
    loop: start=0, step=1, limit=4
    $region2: #{tabnet_forward.1} parent=1 // loop_pre_header
      _
    $region3: #{tabnet_forward.1} parent=1 // loop_header
      %s16 = sphi 0, %s20
      %p17 = scmp.ge.s32.totalorder %s16, 4
      %s26 = sphi 0, %s28
      %s29 = sphi 0, %s26
      %s30 = sphi 0, %s29
      %s46 = sphi 0, %s30
      %s50 = sphi 0, %s50
      %s52 = sphi 0, %s50
      %s53 = sphi 0, %s52
      %s67 = sphi 0, %s53
      %s71 = sphi 0, %s71
      %s73 = sphi 0, %s71
      %s74 = sphi 0, %s73
      %s88 = sphi 0, %s74
      %s92 = sphi 0, %s92
      %s94 = sphi 0, %s92
      %s95 = sphi 0, %s94
      %s109 = sphi 0, %s95
      %s113 = sphi 0, %s113
      %s115 = sphi 0, %s113
      %s116 = sphi 0, %s115
      %s130 = sphi 0, %s116
      %s134 = sphi 0, %s134
      %s136 = sphi 0, %s134
      %s137 = sphi 0, %s136
      %s151 = sphi 0, %s137
      %s155 = sphi 0, %s155
      %s157 = sphi 0, %s155
      %s158 = sphi 0, %s157
      %s172 = sphi 0, %s158
      %s178 = sphi 0, %s180
      %s181 = sphi 0, %s178
      %s182 = sphi 0, %s181
      %s198 = sphi 0, %s182
    $region4: #{tabnet_forward.1} parent=1 // loop_header_branch
      %19 = sbr.rel (%p17) target = $region8
    $region5: #{tabnet_forward.1} parent=1 // loop_body
      %s21 = ssub.s32 %s16, 1
      %s22 = ssub.s32 %s16, 2
      %s23 = sadd.s32 %s16, 1
      %s24 = ssub.s32 %s16, %s23
      %p25 = scmp.eq.s32.totalorder %s24, 0
      %s27 = sadd.s32 %s26, 1
      %s28 = scalar_select %p25, %s26, %s27
      %p31 = pneg %p25
      %p32 = scmp.eq.s32.totalorder %s16, 1
      %p33 = por %p31, %p32
      %p34 = scmp.ne.s32.totalorder %s26, %s29
      %p35 = scmp.eq.s32.totalorder %s16, 0
      %p36 = por %p34, %p35
      %p37 = scmp.ne.s32.totalorder %s26, %s29
      %p38 = scmp.eq.s32.totalorder %s21, 1
      %p39 = por %p37, %p38
      %p40 = scmp.ne.s32.totalorder %s29, %s30
      %p41 = scmp.eq.s32.totalorder %s21, 0
      %p42 = por %p40, %p41
      %p43 = scmp.ne.s32.totalorder %s29, %s30
      %p44 = scmp.eq.s32.totalorder %s22, 1
      %p45 = por %p43, %p44
      %p47 = scmp.ne.s32.totalorder %s30, %s46
      %p48 = scmp.eq.s32.totalorder %s22, 0
      %p49 = por %p47, %p48
      %s51 = sadd.s32 %s50, 1
      %p54 = scmp.eq.s32.totalorder %s16, 1
      %p55 = scmp.ne.s32.totalorder %s50, %s52
      %p56 = scmp.eq.s32.totalorder %s16, 0
      %p57 = por %p55, %p56
      %p58 = scmp.ne.s32.totalorder %s50, %s52
      %p59 = scmp.eq.s32.totalorder %s21, 1
      %p60 = por %p58, %p59
      %p61 = scmp.ne.s32.totalorder %s52, %s53
      %p62 = scmp.eq.s32.totalorder %s21, 0
      %p63 = por %p61, %p62
      %p64 = scmp.ne.s32.totalorder %s52, %s53
      %p65 = scmp.eq.s32.totalorder %s22, 1
      %p66 = por %p64, %p65
      %p68 = scmp.ne.s32.totalorder %s53, %s67
      %p69 = scmp.eq.s32.totalorder %s22, 0
      %p70 = por %p68, %p69
      %s72 = sadd.s32 %s71, 1
      %p75 = scmp.eq.s32.totalorder %s16, 1
      %p76 = scmp.ne.s32.totalorder %s71, %s73
      %p77 = scmp.eq.s32.totalorder %s16, 0
      %p78 = por %p76, %p77
      %p79 = scmp.ne.s32.totalorder %s71, %s73
      %p80 = scmp.eq.s32.totalorder %s21, 1
      %p81 = por %p79, %p80
      %p82 = scmp.ne.s32.totalorder %s73, %s74
      %p83 = scmp.eq.s32.totalorder %s21, 0
      %p84 = por %p82, %p83
      %p85 = scmp.ne.s32.totalorder %s73, %s74
      %p86 = scmp.eq.s32.totalorder %s22, 1
      %p87 = por %p85, %p86
      %p89 = scmp.ne.s32.totalorder %s74, %s88
      %p90 = scmp.eq.s32.totalorder %s22, 0
      %p91 = por %p89, %p90
      %s93 = sadd.s32 %s92, 1
      %p96 = scmp.eq.s32.totalorder %s16, 1
      %p97 = scmp.ne.s32.totalorder %s92, %s94
      %p98 = scmp.eq.s32.totalorder %s16, 0
      %p99 = por %p97, %p98
      %p100 = scmp.ne.s32.totalorder %s92, %s94
      %p101 = scmp.eq.s32.totalorder %s21, 1
      %p102 = por %p100, %p101
      %p103 = scmp.ne.s32.totalorder %s94, %s95
      %p104 = scmp.eq.s32.totalorder %s21, 0
      %p105 = por %p103, %p104
      %p106 = scmp.ne.s32.totalorder %s94, %s95
      %p107 = scmp.eq.s32.totalorder %s22, 1
      %p108 = por %p106, %p107
      %p110 = scmp.ne.s32.totalorder %s95, %s109
      %p111 = scmp.eq.s32.totalorder %s22, 0
      %p112 = por %p110, %p111
      %s114 = sadd.s32 %s113, 1
      %p117 = scmp.eq.s32.totalorder %s16, 1
      %p118 = scmp.ne.s32.totalorder %s113, %s115
      %p119 = scmp.eq.s32.totalorder %s16, 0
      %p120 = por %p118, %p119
      %p121 = scmp.ne.s32.totalorder %s113, %s115
      %p122 = scmp.eq.s32.totalorder %s21, 1
      %p123 = por %p121, %p122
      %p124 = scmp.ne.s32.totalorder %s115, %s116
      %p125 = scmp.eq.s32.totalorder %s21, 0
      %p126 = por %p124, %p125
      %p127 = scmp.ne.s32.totalorder %s115, %s116
      %p128 = scmp.eq.s32.totalorder %s22, 1
      %p129 = por %p127, %p128
      %p131 = scmp.ne.s32.totalorder %s116, %s130
      %p132 = scmp.eq.s32.totalorder %s22, 0
      %p133 = por %p131, %p132
      %s135 = sadd.s32 %s134, 1
      %p138 = scmp.eq.s32.totalorder %s16, 1
      %p139 = scmp.ne.s32.totalorder %s134, %s136
      %p140 = scmp.eq.s32.totalorder %s16, 0
      %p141 = por %p139, %p140
      %p142 = scmp.ne.s32.totalorder %s134, %s136
      %p143 = scmp.eq.s32.totalorder %s21, 1
      %p144 = por %p142, %p143
      %p145 = scmp.ne.s32.totalorder %s136, %s137
      %p146 = scmp.eq.s32.totalorder %s21, 0
      %p147 = por %p145, %p146
      %p148 = scmp.ne.s32.totalorder %s136, %s137
      %p149 = scmp.eq.s32.totalorder %s22, 1
      %p150 = por %p148, %p149
      %p152 = scmp.ne.s32.totalorder %s137, %s151
      %p153 = scmp.eq.s32.totalorder %s22, 0
      %p154 = por %p152, %p153
      %s156 = sadd.s32 %s155, 1
      %p159 = scmp.eq.s32.totalorder %s16, 1
      %p160 = scmp.ne.s32.totalorder %s155, %s157
      %p161 = scmp.eq.s32.totalorder %s16, 0
      %p162 = por %p160, %p161
      %p163 = scmp.ne.s32.totalorder %s155, %s157
      %p164 = scmp.eq.s32.totalorder %s21, 1
      %p165 = por %p163, %p164
      %p166 = scmp.ne.s32.totalorder %s157, %s158
      %p167 = scmp.eq.s32.totalorder %s21, 0
      %p168 = por %p166, %p167
      %p169 = scmp.ne.s32.totalorder %s157, %s158
      %p170 = scmp.eq.s32.totalorder %s22, 1
      %p171 = por %p169, %p170
      %p173 = scmp.ne.s32.totalorder %s158, %s172
      %p174 = scmp.eq.s32.totalorder %s22, 0
      %p175 = por %p173, %p174
      %s176 = ssub.s32 %s16, %s23
      %p177 = scmp.eq.s32.totalorder %s176, 0
      %s179 = sadd.s32 %s178, 1
      %s180 = scalar_select %p177, %s178, %s179
      %p183 = pneg %p177
      %p184 = scmp.eq.s32.totalorder %s16, 1
      %p185 = por %p183, %p184
      %p186 = scmp.ne.s32.totalorder %s178, %s181
      %p187 = scmp.eq.s32.totalorder %s16, 0
      %p188 = por %p186, %p187
      %p189 = scmp.ne.s32.totalorder %s178, %s181
      %p190 = scmp.eq.s32.totalorder %s21, 1
      %p191 = por %p189, %p190
      %p192 = scmp.ne.s32.totalorder %s181, %s182
      %p193 = scmp.eq.s32.totalorder %s21, 0
      %p194 = por %p192, %p193
      %p195 = scmp.ne.s32.totalorder %s181, %s182
      %p196 = scmp.eq.s32.totalorder %s22, 1
      %p197 = por %p195, %p196
      %p199 = scmp.ne.s32.totalorder %s182, %s198
      %p200 = scmp.eq.s32.totalorder %s22, 0
      %p201 = por %p199, %p200
      %p202 = scmp.le.s32.totalorder 1, %s16
      %p203 = scmp.lt.s32.totalorder %s16, 3
      %p204 = pnand %p202, %p203
      %p205 = pneg %p204
      // Predicated region
      $region9: #{tabnet_forward.1} parent=5 // pred_check
        _
      $region10: #{tabnet_forward.1} parent=5 // pred_check_branch
        %207 = sbr.rel (%p204) target = $region12
      $region11: #{tabnet_forward.1} parent=5 // pred_region
        %s208 = ssub.s32 %s16, 1
        // Predicated region
        $region13: #{tabnet_forward.1} parent=11 // pred_check
          %p209 = pneg %p63
        $region14: #{tabnet_forward.1} parent=11 // pred_check_branch
          %211 = sbr.rel (%p209) target = $region16
        $region15: #{tabnet_forward.1} parent=11 // pred_region
          _
        $region16: #{tabnet_forward.1} parent=11 // pred_fallthru
          _
        // Predicated region
        $region17: #{tabnet_forward.1} parent=11 // pred_check
          %p212 = pneg %p84
        $region18: #{tabnet_forward.1} parent=11 // pred_check_branch
          %214 = sbr.rel (%p212) target = $region20
        $region19: #{tabnet_forward.1} parent=11 // pred_region
          _
        $region20: #{tabnet_forward.1} parent=11 // pred_fallthru
          _
        // Predicated region
        $region21: #{tabnet_forward.1} parent=11 // pred_check
          %p215 = pneg %p105
        $region22: #{tabnet_forward.1} parent=11 // pred_check_branch
          %217 = sbr.rel (%p215) target = $region24
        $region23: #{tabnet_forward.1} parent=11 // pred_region
          _
        $region24: #{tabnet_forward.1} parent=11 // pred_fallthru
          _
        // Predicated region
        $region25: #{tabnet_forward.1} parent=11 // pred_check
          %p218 = pneg %p126
        $region26: #{tabnet_forward.1} parent=11 // pred_check_branch
          %220 = sbr.rel (%p218) target = $region28
        $region27: #{tabnet_forward.1} parent=11 // pred_region
          _
        $region28: #{tabnet_forward.1} parent=11 // pred_fallthru
          _
        // Predicated region
        $region29: #{tabnet_forward.1} parent=11 // pred_check
          %p221 = pneg %p147
        $region30: #{tabnet_forward.1} parent=11 // pred_check_branch
          %223 = sbr.rel (%p221) target = $region32
        $region31: #{tabnet_forward.1} parent=11 // pred_region
          _
        $region32: #{tabnet_forward.1} parent=11 // pred_fallthru
          _
        // Predicated region
        $region33: #{tabnet_forward.1} parent=11 // pred_check
          %p224 = pneg %p168
        $region34: #{tabnet_forward.1} parent=11 // pred_check_branch
          %226 = sbr.rel (%p224) target = $region36
        $region35: #{tabnet_forward.1} parent=11 // pred_region
          _
        $region36: #{tabnet_forward.1} parent=11 // pred_fallthru
          _
      $region12: #{tabnet_forward.1} parent=5 // pred_fallthru
        _
      %p227 = scmp.lt.s32.totalorder %s16, 2
      // Predicated region
      $region37: #{tabnet_forward.1} parent=5 // pred_check
        %p228 = pneg %p227
      $region38: #{tabnet_forward.1} parent=5 // pred_check_branch
        %230 = sbr.rel (%p228) target = $region40
      $region39: #{tabnet_forward.1} parent=5 // pred_region
        // Predicated region
        $region41: #{tabnet_forward.1} parent=39 // pred_check
          %p231 = pneg %p36
        $region42: #{tabnet_forward.1} parent=39 // pred_check_branch
          %233 = sbr.rel (%p231) target = $region44
        $region43: #{tabnet_forward.1} parent=39 // pred_region
          %s234 = sand.u32 %s26, 1
          %s235 = sand.u32 %s26, 1
          %s236 = smul.addr %s235, 64
          %s237 = scalar_lea.vmem [#allocation2], %s236
          %s238 = smul.u32 4, %s16
          %s239 = smul.addr %s238, 8
          %s240 = scalar_lea.vmem %s0, %s239
          // Predicated region
          $region45: #{tabnet_forward.1} parent=43 // pred_check
            _
          $region46: #{tabnet_forward.1} parent=43 // pred_check_branch
            %242 = sbr.rel (0) target = $region48
          $region47: #{tabnet_forward.1} parent=43 // pred_region
            // Predicated region
            $region49: #{tabnet_forward.1} parent=47 // pred_check
              _
            $region50: #{tabnet_forward.1} parent=47 // pred_check_branch
              %244 = sbr.rel (0) target = $region52
            $region51: #{tabnet_forward.1} parent=47 // pred_region
              loop: start=0, step=1, limit=1
              $region53: #{tabnet_forward.1} parent=51 // loop_pre_header
                _
              $region54: #{tabnet_forward.1} parent=51 // loop_header
                %s246 = sphi 0, %s250
                %p247 = scmp.ge.s32.totalorder %s246, 1
                %s251 = sphi %s240, %s240
                %s252 = sphi %s237, %s237
              $region55: #{tabnet_forward.1} parent=51 // loop_header_branch
                %249 = sbr.rel (%p247) target = $region59
              $region56: #{tabnet_forward.1} parent=51 // loop_body
                %v253 = vld [vmem:[%s251] sm:$0xff]
                %254 = vst [vmem:[%s252] sm:$0xff] %v253
                %v255 = vld [vmem:[%s251 + $0x8] sm:$0xff]
                %256 = vst [vmem:[%s252 + $0x8] sm:$0xff] %v255
                %v257 = vld [vmem:[%s251 + $0x10] sm:$0xff]
                %258 = vst [vmem:[%s252 + $0x10] sm:$0xff] %v257
                %v259 = vld [vmem:[%s251 + $0x18] sm:$0xff]
                %260 = vst [vmem:[%s252 + $0x18] sm:$0xff] %v259
                %v261 = vld [vmem:[%s251 + $0x40] sm:$0xff]
                %262 = vst [vmem:[%s252 + $0x20] sm:$0xff] %v261
                %v263 = vld [vmem:[%s251 + $0x48] sm:$0xff]
                %264 = vst [vmem:[%s252 + $0x28] sm:$0xff] %v263
                %v265 = vld [vmem:[%s251 + $0x50] sm:$0xff]
                %266 = vst [vmem:[%s252 + $0x30] sm:$0xff] %v265
                %v267 = vld [vmem:[%s251 + $0x58] sm:$0xff]
                %268 = vst [vmem:[%s252 + $0x38] sm:$0xff] %v267
              $region57: #{tabnet_forward.1} parent=51 // loop_footer
                %s250 = sadd.s32 1, %s246
              $region58: #{tabnet_forward.1} parent=51 // loop_footer_branch
                %245 = sbr.rel target = $region54
              $region59: #{tabnet_forward.1} parent=51 // loop_exit
                _
            $region52: #{tabnet_forward.1} parent=47 // pred_fallthru
              _
            // Predicated region
            $region60: #{tabnet_forward.1} parent=47 // pred_check
              _
            $region61: #{tabnet_forward.1} parent=47 // pred_check_branch
              %270 = sbr.rel target = $region63
            $region62: #{tabnet_forward.1} parent=47 // pred_region
              _
            $region63: #{tabnet_forward.1} parent=47 // pred_fallthru
              _
          $region48: #{tabnet_forward.1} parent=43 // pred_fallthru
            _
          %271 = vnop
        $region44: #{tabnet_forward.1} parent=39 // pred_fallthru
          _
      $region40: #{tabnet_forward.1} parent=5 // pred_fallthru
        _
      %p272 = scmp.le.s32.totalorder 1, %s16
      %p273 = scmp.lt.s32.totalorder %s16, 3
      %p274 = pnand %p272, %p273
      %p275 = pneg %p274
      // Predicated region
      $region64: #{tabnet_forward.1} parent=5 // pred_check
        _
      $region65: #{tabnet_forward.1} parent=5 // pred_check_branch
        %277 = sbr.rel (%p274) target = $region67
      $region66: #{tabnet_forward.1} parent=5 // pred_region
        %s278 = ssub.s32 %s16, 1
        %s279 = sand.u32 %s29, 1
        %s280 = sand.u32 %s29, 1
        %s281 = smul.addr %s280, 64
        %s282 = scalar_lea.vmem [#allocation2], %s281
        // Predicated region
        $region68: #{tabnet_forward.1} parent=66 // pred_check
          %p283 = pneg %p42
        $region69: #{tabnet_forward.1} parent=66 // pred_check_branch
          %285 = sbr.rel (%p283) target = $region71
        $region70: #{tabnet_forward.1} parent=66 // pred_region
          _
        $region71: #{tabnet_forward.1} parent=66 // pred_fallthru
          _
        %s286 = sand.u32 %s29, 1
        %s287 = sand.u32 %s29, 1
        %s288 = smul.addr %s287, 64
        %s289 = scalar_lea.vmem [#allocation2], %s288
        %p290 = pneg %p42
        %p291 = pneg %p39
        %p292 = pneg %p63
        %p293 = pneg %p60
        %p294 = pneg %p84
        %p295 = pneg %p81
        %p296 = pneg %p105
        %p297 = pneg %p102
        %p298 = pneg %p126
        %p299 = pneg %p123
        %p300 = pneg %p147
        %p301 = pneg %p144
        %p302 = pneg %p168
        %p303 = pneg %p165
        %p304 = pneg %p194
        %p305 = pneg %p191
        %s306 = sand.u32 %s181, 1
        %s307 = scalar_lea.sflag [#allocation4], %s306
        %s308 = sand.u32 %s181, 1
        %s309 = smul.addr %s308, 32
        %s310 = scalar_lea.vmem [#allocation3], %s309
        %s311 = smul.u32 4, %s21
        %s312 = smul.u32 4, %s21
        %v313 = vld [vmem:[%s282] sm:$0xff]
        %v314 = vld [vmem:[%s282 + $0x8] sm:$0xff]
        %v315 = vld [vmem:[%s282 + $0x10] sm:$0xff]
        %v316 = vld [vmem:[%s282 + $0x18] sm:$0xff]
        %v317 = vld [vmem:[%s282 + $0x20] sm:$0xff]
        %v318 = vld [vmem:[%s282 + $0x28] sm:$0xff]
        %v319 = vld [vmem:[%s282 + $0x30] sm:$0xff]
        %v320 = vld [vmem:[%s282 + $0x38] sm:$0xff]
        %v321 = vld [vmem:[%s1] sm:$0xff]
        %v322 = vld [vmem:[%s1 + $0x8] sm:$0xff]
        %324 = vset.pattern.permute.xlu0 0
        %325 = vperm.xlu0 %324, %v321
        %v326 = vpop.permute.xlu0 %325
        %329 = vset.pattern.permute.xlu0 0
        %330 = vperm.xlu0 %329, %v322
        %v331 = vpop.permute.xlu0 %330
        %v333 = vmul.f32 %v313, %v326
        %v334 = vmul.f32 %v314, %v326
        %v335 = vmul.f32 %v315, %v326
        %v336 = vmul.f32 %v316, %v326
        %v337 = vmul.f32 %v317, %v331
        %v338 = vmul.f32 %v318, %v331
        %v339 = vmul.f32 %v319, %v331
        %v340 = vmul.f32 %v320, %v331
        %s341 = scalar_lea.vmem %s1, 16
        %v342 = vld [vmem:[%s341] sm:$0xff]
        %v343 = vld [vmem:[%s341 + $0x8] sm:$0xff]
        %345 = vset.pattern.permute.xlu0 0
        %346 = vperm.xlu0 %345, %v342
        %v347 = vpop.permute.xlu0 %346
        %350 = vset.pattern.permute.xlu0 0
        %351 = vperm.xlu0 %350, %v343
        %v352 = vpop.permute.xlu0 %351
        %v354 = vadd.f32 %v333, %v347
        %v355 = vadd.f32 %v334, %v347
        %v356 = vadd.f32 %v335, %v347
        %v357 = vadd.f32 %v336, %v347
        %v358 = vadd.f32 %v337, %v352
        %v359 = vadd.f32 %v338, %v352
        %v360 = vadd.f32 %v339, %v352
        %v361 = vadd.f32 %v340, %v352
        %v362 = vld [vmem:[%s2] sm:$0xff]
        %v363 = vld [vmem:[%s2 + $0x8] sm:$0xff]
        %v364 = vld [vmem:[%s2 + $0x10] sm:$0xff]
        %v365 = vld [vmem:[%s2 + $0x18] sm:$0xff]
        %v366 = vld [vmem:[%s2 + $0x20] sm:$0xff]
        %v367 = vld [vmem:[%s2 + $0x28] sm:$0xff]
        %v368 = vld [vmem:[%s2 + $0x30] sm:$0xff]
        %v369 = vld [vmem:[%s2 + $0x38] sm:$0xff]
        %v370 = vld [vmem:[%s3] sm:$0xff]
        %v371 = vld [vmem:[%s3 + $0x8] sm:$0xff]
        %v372 = vld [vmem:[%s3 + $0x10] sm:$0xff]
        %v373 = vld [vmem:[%s3 + $0x18] sm:$0xff]
        %v374 = vld [vmem:[%s3 + $0x20] sm:$0xff]
        %v375 = vld [vmem:[%s3 + $0x28] sm:$0xff]
        %v376 = vld [vmem:[%s3 + $0x30] sm:$0xff]
        %v377 = vld [vmem:[%s3 + $0x38] sm:$0xff]
        %vm378 = vcmask 130048
        %v380 = vsel %vm378, %v362, 0
        %v383 = vsel %vm378, %v363, 0
        %v386 = vsel %vm378, %v364, 0
        %v389 = vsel %vm378, %v365, 0
        %v392 = vsel %vm378, %v366, 0
        %v395 = vsel %vm378, %v367, 0
        %v398 = vsel %vm378, %v368, 0
        %v401 = vsel %vm378, %v369, 0
        %403 = vmatprep.subr.mxu0 %v355
        %404 = vmatpush1.msra.mxu0 %v354
        %405 = vmatprep.subr.mxu0 %v359
        %406 = vmatpush1.msra.mxu0 %v358
        %407 = vmatprep.subr.mxu0 0.0
        %408 = vmatpush1.msra.mxu0 0.0
        %409 = vmatprep.subr.mxu0 0.0
        %410 = vmatpush1.msra.mxu0 0.0
        %411 = vmatprep.subr.mxu0 0.0
        %412 = vmatpush1.msra.mxu0 0.0
        %413 = vmatprep.subr.mxu0 0.0
        %414 = vmatpush1.msra.mxu0 0.0
        %415 = vmatprep.subr.mxu0 0.0
        %416 = vmatpush1.msra.mxu0 0.0
        %417 = vmatprep.subr.mxu0 0.0
        %418 = vmatpush1.msra.mxu0 0.0
        %419 = vmatprep.subr.mxu0 0.0
        %420 = vmatpush1.msra.mxu0 0.0
        %421 = vmatprep.subr.mxu0 0.0
        %422 = vmatpush1.msra.mxu0 0.0
        %423 = vmatprep.subr.mxu0 0.0
        %424 = vmatpush1.msra.mxu0 0.0
        %425 = vmatprep.subr.mxu0 0.0
        %426 = vmatpush1.msra.mxu0 0.0
        %427 = vmatprep.subr.mxu0 0.0
        %428 = vmatpush1.msra.mxu0 0.0
        %429 = vmatprep.subr.mxu0 0.0
        %430 = vmatpush1.msra.mxu0 0.0
        %431 = vmatprep.subr.mxu0 0.0
        %432 = vmatpush1.msra.mxu0 0.0
        %433 = vmatprep.subr.mxu0 0.0
        %434 = vmatpush1.msra.mxu0 0.0
        %435 = vmatprep.subr.mxu0 0.0
        %436 = vmatpush1.msra.mxu0 0.0
        %437 = vmatprep.subr.mxu0 0.0
        %438 = vmatpush1.msra.mxu0 0.0
        %439 = vmatprep.subr.mxu0 0.0
        %440 = vmatpush1.msra.mxu0 0.0
        %441 = vmatprep.subr.mxu0 0.0
        %442 = vmatpush1.msra.mxu0 0.0
        %443 = vmatprep.subr.mxu0 0.0
        %444 = vmatpush1.msra.mxu0 0.0
        %445 = vmatprep.subr.mxu0 0.0
        %446 = vmatpush1.msra.mxu0 0.0
        %447 = vmatprep.subr.mxu0 0.0
        %448 = vmatpush1.msra.mxu0 0.0
        %449 = vmatprep.subr.mxu0 0.0
        %450 = vmatpush1.msra.mxu0 0.0
        %451 = vmatprep.subr.mxu0 0.0
        %452 = vmatpush1.msra.mxu0 0.0
        %453 = vmatprep.subr.mxu0 0.0
        %454 = vmatpush1.msra.mxu0 0.0
        %455 = vmatprep.subr.mxu0 0.0
        %456 = vmatpush1.msra.mxu0 0.0
        %457 = vmatprep.subr.mxu0 0.0
        %458 = vmatpush1.msra.mxu0 0.0
        %459 = vmatprep.subr.mxu0 0.0
        %460 = vmatpush1.msra.mxu0 0.0
        %461 = vmatprep.subr.mxu0 0.0
        %462 = vmatpush1.msra.mxu0 0.0
        %463 = vmatprep.subr.mxu0 0.0
        %464 = vmatpush1.msra.mxu0 0.0
        %465 = vmatprep.subr.mxu0 0.0
        %466 = vmatpush1.msra.mxu0 0.0
        %467 = vmatprep.mubr.f32.mxu0 0.0
        %468 = vmatmul.mubr.f32.gmra.mrb[0].mxu0 %v380
        %v469 = vpop.f32.mrb[0].mxu0
        %v470 = vadd.f32 0.0, %v469
        %v471 = vpop.f32.mrb[0].mxu0
        %v472 = vadd.f32 0.0, %v471
        %473 = vmatprep.mubr.f32.mxu0 0.0
        %474 = vmatmul.mubr.f32.gmra.mrb[0].mxu0 %v383
        %v475 = vpop.f32.mrb[0].mxu0
        %v476 = vadd.f32 0.0, %v475
        %v477 = vpop.f32.mrb[0].mxu0
        %v478 = vadd.f32 0.0, %v477
        %479 = vmatprep.mubr.f32.mxu0 0.0
        %480 = vmatmul.mubr.f32.gmra.mrb[0].mxu0 %v386
        %v481 = vpop.f32.mrb[0].mxu0
        %v482 = vadd.f32 0.0, %v481
        %v483 = vpop.f32.mrb[0].mxu0
        %v484 = vadd.f32 0.0, %v483
        %485 = vmatprep.mubr.f32.mxu0 0.0
        %486 = vmatmul.mubr.f32.gmra.mrb[0].mxu0 %v389
        %v487 = vpop.f32.mrb[0].mxu0
        %v488 = vadd.f32 0.0, %v487
        %v489 = vpop.f32.mrb[0].mxu0
        %v490 = vadd.f32 0.0, %v489
        %491 = vmatprep.mubr.f32.mxu0 0.0
        %492 = vmatmul.mubr.f32.gmra.mrb[0].mxu0 %v392
        %v493 = vpop.f32.mrb[0].mxu0
        %v494 = vadd.f32 0.0, %v493
        %v495 = vpop.f32.mrb[0].mxu0
        %v496 = vadd.f32 0.0, %v495
        %497 = vmatprep.mubr.f32.mxu0 0.0
        %498 = vmatmul.mubr.f32.gmra.mrb[0].mxu0 %v395
        %v499 = vpop.f32.mrb[0].mxu0
        %v500 = vadd.f32 0.0, %v499
        %v501 = vpop.f32.mrb[0].mxu0
        %v502 = vadd.f32 0.0, %v501
        %503 = vmatprep.mubr.f32.mxu0 0.0
        %504 = vmatmul.mubr.f32.gmra.mrb[0].mxu0 %v398
        %v505 = vpop.f32.mrb[0].mxu0
        %v506 = vadd.f32 0.0, %v505
        %v507 = vpop.f32.mrb[0].mxu0
        %v508 = vadd.f32 0.0, %v507
        %509 = vmatprep.mubr.f32.mxu0 0.0
        %510 = vmatmul.mubr.f32.gmra.mrb[0].mxu0 %v401
        %v511 = vpop.f32.mrb[0].mxu0
        %v512 = vadd.f32 0.0, %v511
        %v513 = vpop.f32.mrb[0].mxu0
        %v514 = vadd.f32 0.0, %v513
        %515 = vdwg.mxu0
        %516 = vmatprep.subr.mxu0 %v357
        %517 = vmatpush1.msra.mxu0 %v356
        %518 = vmatprep.subr.mxu0 %v361
        %519 = vmatpush1.msra.mxu0 %v360
        %520 = vmatprep.subr.mxu0 0.0
        %521 = vmatpush1.msra.mxu0 0.0
        %522 = vmatprep.subr.mxu0 0.0
        %523 = vmatpush1.msra.mxu0 0.0
        %524 = vmatprep.subr.mxu0 0.0
        %525 = vmatpush1.msra.mxu0 0.0
        %526 = vmatprep.subr.mxu0 0.0
        %527 = vmatpush1.msra.mxu0 0.0
        %528 = vmatprep.subr.mxu0 0.0
        %529 = vmatpush1.msra.mxu0 0.0
        %530 = vmatprep.subr.mxu0 0.0
        %531 = vmatpush1.msra.mxu0 0.0
        %532 = vmatprep.subr.mxu0 0.0
        %533 = vmatpush1.msra.mxu0 0.0
        %534 = vmatprep.subr.mxu0 0.0
        %535 = vmatpush1.msra.mxu0 0.0
        %536 = vmatprep.subr.mxu0 0.0
        %537 = vmatpush1.msra.mxu0 0.0
        %538 = vmatprep.subr.mxu0 0.0
        %539 = vmatpush1.msra.mxu0 0.0
        %540 = vmatprep.subr.mxu0 0.0
        %541 = vmatpush1.msra.mxu0 0.0
        %542 = vmatprep.subr.mxu0 0.0
        %543 = vmatpush1.msra.mxu0 0.0
        %544 = vmatprep.subr.mxu0 0.0
        %545 = vmatpush1.msra.mxu0 0.0
        %546 = vmatprep.subr.mxu0 0.0
        %547 = vmatpush1.msra.mxu0 0.0
        %548 = vmatprep.subr.mxu0 0.0
        %549 = vmatpush1.msra.mxu0 0.0
        %550 = vmatprep.subr.mxu0 0.0
        %551 = vmatpush1.msra.mxu0 0.0
        %552 = vmatprep.subr.mxu0 0.0
        %553 = vmatpush1.msra.mxu0 0.0
        %554 = vmatprep.subr.mxu0 0.0
        %555 = vmatpush1.msra.mxu0 0.0
        %556 = vmatprep.subr.mxu0 0.0
        %557 = vmatpush1.msra.mxu0 0.0
        %558 = vmatprep.subr.mxu0 0.0
        %559 = vmatpush1.msra.mxu0 0.0
        %560 = vmatprep.subr.mxu0 0.0
        %561 = vmatpush1.msra.mxu0 0.0
        %562 = vmatprep.subr.mxu0 0.0
        %563 = vmatpush1.msra.mxu0 0.0
        %564 = vmatprep.subr.mxu0 0.0
        %565 = vmatpush1.msra.mxu0 0.0
        %566 = vmatprep.subr.mxu0 0.0
        %567 = vmatpush1.msra.mxu0 0.0
        %568 = vmatprep.subr.mxu0 0.0
        %569 = vmatpush1.msra.mxu0 0.0
        %570 = vmatprep.subr.mxu0 0.0
        %571 = vmatpush1.msra.mxu0 0.0
        %572 = vmatprep.subr.mxu0 0.0
        %573 = vmatpush1.msra.mxu0 0.0
        %574 = vmatprep.subr.mxu0 0.0
        %575 = vmatpush1.msra.mxu0 0.0
        %576 = vmatprep.subr.mxu0 0.0
        %577 = vmatpush1.msra.mxu0 0.0
        %578 = vmatprep.subr.mxu0 0.0
        %579 = vmatpush1.msra.mxu0 0.0
        %580 = vmatprep.mubr.f32.mxu0 0.0
        %581 = vmatmul.mubr.f32.gmra.mrb[0].mxu0 %v380
        %v582 = vpop.f32.mrb[0].mxu0
        %v583 = vadd.f32 0.0, %v582
        %v584 = vpop.f32.mrb[0].mxu0
        %v585 = vadd.f32 0.0, %v584
        %586 = vmatprep.mubr.f32.mxu0 0.0
        %587 = vmatmul.mubr.f32.gmra.mrb[0].mxu0 %v383
        %v588 = vpop.f32.mrb[0].mxu0
        %v589 = vadd.f32 0.0, %v588
        %v590 = vpop.f32.mrb[0].mxu0
        %v591 = vadd.f32 0.0, %v590
        %592 = vmatprep.mubr.f32.mxu0 0.0
        %593 = vmatmul.mubr.f32.gmra.mrb[0].mxu0 %v386
        %v594 = vpop.f32.mrb[0].mxu0
        %v595 = vadd.f32 0.0, %v594
        %v596 = vpop.f32.mrb[0].mxu0
        %v597 = vadd.f32 0.0, %v596
        %598 = vmatprep.mubr.f32.mxu0 0.0
        %599 = vmatmul.mubr.f32.gmra.mrb[0].mxu0 %v389
        %v600 = vpop.f32.mrb[0].mxu0
        %v601 = vadd.f32 0.0, %v600
        %v602 = vpop.f32.mrb[0].mxu0
        %v603 = vadd.f32 0.0, %v602
        %604 = vmatprep.mubr.f32.mxu0 0.0
        %605 = vmatmul.mubr.f32.gmra.mrb[0].mxu0 %v392
        %v606 = vpop.f32.mrb[0].mxu0
        %v607 = vadd.f32 0.0, %v606
        %v608 = vpop.f32.mrb[0].mxu0
        %v609 = vadd.f32 0.0, %v608
        %610 = vmatprep.mubr.f32.mxu0 0.0
        %611 = vmatmul.mubr.f32.gmra.mrb[0].mxu0 %v395
        %v612 = vpop.f32.mrb[0].mxu0
        %v613 = vadd.f32 0.0, %v612
        %v614 = vpop.f32.mrb[0].mxu0
        %v615 = vadd.f32 0.0, %v614
        %616 = vmatprep.mubr.f32.mxu0 0.0
        %617 = vmatmul.mubr.f32.gmra.mrb[0].mxu0 %v398
        %v618 = vpop.f32.mrb[0].mxu0
        %v619 = vadd.f32 0.0, %v618
        %v620 = vpop.f32.mrb[0].mxu0
        %v621 = vadd.f32 0.0, %v620
        %622 = vmatprep.mubr.f32.mxu0 0.0
        %623 = vmatmul.mubr.f32.gmra.mrb[0].mxu0 %v401
        %v624 = vpop.f32.mrb[0].mxu0
        %v625 = vadd.f32 0.0, %v624
        %v626 = vpop.f32.mrb[0].mxu0
        %v627 = vadd.f32 0.0, %v626
        %628 = vdwg.mxu0
        %v629 = vmul.f32 %v494, 0.5
        %v630 = vmul.f32 %v496, 0.5
        %v631 = vmul.f32 %v607, 0.5
        %v632 = vmul.f32 %v609, 0.5
        %v633 = vmul.f32 %v500, 0.5
        %v634 = vmul.f32 %v502, 0.5
        %v635 = vmul.f32 %v613, 0.5
        %v636 = vmul.f32 %v615, 0.5
        %v637 = vmul.f32 %v506, 0.5
        %v638 = vmul.f32 %v508, 0.5
        %v639 = vmul.f32 %v619, 0.5
        %v640 = vmul.f32 %v621, 0.5
        %v641 = vmul.f32 %v512, 0.5
        %v642 = vmul.f32 %v514, 0.5
        %v643 = vmul.f32 %v625, 0.5
        %v644 = vmul.f32 %v627, 0.5
        %v645 = vtanh.pop %v629
        %v646 = vtanh.pop %v630
        %v647 = vtanh.pop %v631
        %v648 = vtanh.pop %v632
        %v649 = vtanh.pop %v633
        %v650 = vtanh.pop %v634
        %v651 = vtanh.pop %v635
        %v652 = vtanh.pop %v636
        %v653 = vtanh.pop %v637
        %v654 = vtanh.pop %v638
        %v655 = vtanh.pop %v639
        %v656 = vtanh.pop %v640
        %v657 = vtanh.pop %v641
        %v658 = vtanh.pop %v642
        %v659 = vtanh.pop %v643
        %v660 = vtanh.pop %v644
        %v661 = vmul.f32 %v645, 0.5
        %v662 = vmul.f32 %v646, 0.5
        %v663 = vmul.f32 %v647, 0.5
        %v664 = vmul.f32 %v648, 0.5
        %v665 = vmul.f32 %v649, 0.5
        %v666 = vmul.f32 %v650, 0.5
        %v667 = vmul.f32 %v651, 0.5
        %v668 = vmul.f32 %v652, 0.5
        %v669 = vmul.f32 %v653, 0.5
        %v670 = vmul.f32 %v654, 0.5
        %v671 = vmul.f32 %v655, 0.5
        %v672 = vmul.f32 %v656, 0.5
        %v673 = vmul.f32 %v657, 0.5
        %v674 = vmul.f32 %v658, 0.5
        %v675 = vmul.f32 %v659, 0.5
        %v676 = vmul.f32 %v660, 0.5
        %v677 = vadd.f32 %v661, 0.5
        %v678 = vadd.f32 %v662, 0.5
        %v679 = vadd.f32 %v663, 0.5
        %v680 = vadd.f32 %v664, 0.5
        %v681 = vadd.f32 %v665, 0.5
        %v682 = vadd.f32 %v666, 0.5
        %v683 = vadd.f32 %v667, 0.5
        %v684 = vadd.f32 %v668, 0.5
        %v685 = vadd.f32 %v669, 0.5
        %v686 = vadd.f32 %v670, 0.5
        %v687 = vadd.f32 %v671, 0.5
        %v688 = vadd.f32 %v672, 0.5
        %v689 = vadd.f32 %v673, 0.5
        %v690 = vadd.f32 %v674, 0.5
        %v691 = vadd.f32 %v675, 0.5
        %v692 = vadd.f32 %v676, 0.5
        %v693 = vmul.f32 %v470, %v677
        %v694 = vmul.f32 %v472, %v678
        %v695 = vmul.f32 %v583, %v679
        %v696 = vmul.f32 %v585, %v680
        %v697 = vmul.f32 %v476, %v681
        %v698 = vmul.f32 %v478, %v682
        %v699 = vmul.f32 %v589, %v683
        %v700 = vmul.f32 %v591, %v684
        %v701 = vmul.f32 %v482, %v685
        %v702 = vmul.f32 %v484, %v686
        %v703 = vmul.f32 %v595, %v687
        %v704 = vmul.f32 %v597, %v688
        %v705 = vmul.f32 %v488, %v689
        %v706 = vmul.f32 %v490, %v690
        %v707 = vmul.f32 %v601, %v691
        %v708 = vmul.f32 %v603, %v692
        %v709 = vmul.f32 %v693, 0.70710677
        %v710 = vmul.f32 %v694, 0.70710677
        %v711 = vmul.f32 %v695, 0.70710677
        %v712 = vmul.f32 %v696, 0.70710677
        %v713 = vmul.f32 %v697, 0.70710677
        %v714 = vmul.f32 %v698, 0.70710677
        %v715 = vmul.f32 %v699, 0.70710677
        %v716 = vmul.f32 %v700, 0.70710677
        %v717 = vmul.f32 %v701, 0.70710677
        %v718 = vmul.f32 %v702, 0.70710677
        %v719 = vmul.f32 %v703, 0.70710677
        %v720 = vmul.f32 %v704, 0.70710677
        %v721 = vmul.f32 %v705, 0.70710677
        %v722 = vmul.f32 %v706, 0.70710677
        %v723 = vmul.f32 %v707, 0.70710677
        %v724 = vmul.f32 %v708, 0.70710677
        %vm725 = vcmask 261120
        %v727 = vsel %vm725, %v370, 0
        %v730 = vsel %vm725, %v371, 0
        %v733 = vsel %vm725, %v372, 0
        %v736 = vsel %vm725, %v373, 0
        %v739 = vsel %vm725, %v374, 0
        %v742 = vsel %vm725, %v375, 0
        %v745 = vsel %vm725, %v376, 0
        %v748 = vsel %vm725, %v377, 0
        %750 = vmatprep.subr.mxu0 %v694
        %751 = vmatpush1.msra.mxu0 %v693
        %752 = vmatprep.subr.mxu0 %v698
        %753 = vmatpush1.msra.mxu0 %v697
        %754 = vmatprep.subr.mxu0 %v702
        %755 = vmatpush1.msra.mxu0 %v701
        %756 = vmatprep.subr.mxu0 %v706
        %757 = vmatpush1.msra.mxu0 %v705
        %758 = vmatprep.subr.mxu0 0.0
        %759 = vmatpush1.msra.mxu0 0.0
        %760 = vmatprep.subr.mxu0 0.0
        %761 = vmatpush1.msra.mxu0 0.0
        %762 = vmatprep.subr.mxu0 0.0
        %763 = vmatpush1.msra.mxu0 0.0
        %764 = vmatprep.subr.mxu0 0.0
        %765 = vmatpush1.msra.mxu0 0.0
        %766 = vmatprep.subr.mxu0 0.0
        %767 = vmatpush1.msra.mxu0 0.0
        %768 = vmatprep.subr.mxu0 0.0
        %769 = vmatpush1.msra.mxu0 0.0
        %770 = vmatprep.subr.mxu0 0.0
        %771 = vmatpush1.msra.mxu0 0.0
        %772 = vmatprep.subr.mxu0 0.0
        %773 = vmatpush1.msra.mxu0 0.0
        %774 = vmatprep.subr.mxu0 0.0
        %775 = vmatpush1.msra.mxu0 0.0
        %776 = vmatprep.subr.mxu0 0.0
        %777 = vmatpush1.msra.mxu0 0.0
        %778 = vmatprep.subr.mxu0 0.0
        %779 = vmatpush1.msra.mxu0 0.0
        %780 = vmatprep.subr.mxu0 0.0
        %781 = vmatpush1.msra.mxu0 0.0
        %782 = vmatprep.subr.mxu0 0.0
        %783 = vmatpush1.msra.mxu0 0.0
        %784 = vmatprep.subr.mxu0 0.0
        %785 = vmatpush1.msra.mxu0 0.0
        %786 = vmatprep.subr.mxu0 0.0
        %787 = vmatpush1.msra.mxu0 0.0
        %788 = vmatprep.subr.mxu0 0.0
        %789 = vmatpush1.msra.mxu0 0.0
        %790 = vmatprep.subr.mxu0 0.0
        %791 = vmatpush1.msra.mxu0 0.0
        %792 = vmatprep.subr.mxu0 0.0
        %793 = vmatpush1.msra.mxu0 0.0
        %794 = vmatprep.subr.mxu0 0.0
        %795 = vmatpush1.msra.mxu0 0.0
        %796 = vmatprep.subr.mxu0 0.0
        %797 = vmatpush1.msra.mxu0 0.0
        %798 = vmatprep.subr.mxu0 0.0
        %799 = vmatpush1.msra.mxu0 0.0
        %800 = vmatprep.subr.mxu0 0.0
        %801 = vmatpush1.msra.mxu0 0.0
        %802 = vmatprep.subr.mxu0 0.0
        %803 = vmatpush1.msra.mxu0 0.0
        %804 = vmatprep.subr.mxu0 0.0
        %805 = vmatpush1.msra.mxu0 0.0
        %806 = vmatprep.subr.mxu0 0.0
        %807 = vmatpush1.msra.mxu0 0.0
        %808 = vmatprep.subr.mxu0 0.0
        %809 = vmatpush1.msra.mxu0 0.0
        %810 = vmatprep.subr.mxu0 0.0
        %811 = vmatpush1.msra.mxu0 0.0
        %812 = vmatprep.subr.mxu0 0.0
        %813 = vmatpush1.msra.mxu0 0.0
        %814 = vmatprep.mubr.f32.mxu0 0.0
        %815 = vmatmul.mubr.f32.gmra.mrb[0].mxu0 %v727
        %v816 = vpop.f32.mrb[0].mxu0
        %v817 = vadd.f32 0.0, %v816
        %v818 = vpop.f32.mrb[0].mxu0
        %v819 = vadd.f32 0.0, %v818
        %820 = vmatprep.mubr.f32.mxu0 0.0
        %821 = vmatmul.mubr.f32.gmra.mrb[0].mxu0 %v730
        %v822 = vpop.f32.mrb[0].mxu0
        %v823 = vadd.f32 0.0, %v822
        %v824 = vpop.f32.mrb[0].mxu0
        %v825 = vadd.f32 0.0, %v824
        %826 = vmatprep.mubr.f32.mxu0 0.0
        %827 = vmatmul.mubr.f32.gmra.mrb[0].mxu0 %v733
        %v828 = vpop.f32.mrb[0].mxu0
        %v829 = vadd.f32 0.0, %v828
        %v830 = vpop.f32.mrb[0].mxu0
        %v831 = vadd.f32 0.0, %v830
        %832 = vmatprep.mubr.f32.mxu0 0.0
        %833 = vmatmul.mubr.f32.gmra.mrb[0].mxu0 %v736
        %v834 = vpop.f32.mrb[0].mxu0
        %v835 = vadd.f32 0.0, %v834
        %v836 = vpop.f32.mrb[0].mxu0
        %v837 = vadd.f32 0.0, %v836
        %838 = vmatprep.mubr.f32.mxu0 0.0
        %839 = vmatmul.mubr.f32.gmra.mrb[0].mxu0 %v739
        %v840 = vpop.f32.mrb[0].mxu0
        %v841 = vadd.f32 0.0, %v840
        %v842 = vpop.f32.mrb[0].mxu0
        %v843 = vadd.f32 0.0, %v842
        %844 = vmatprep.mubr.f32.mxu0 0.0
        %845 = vmatmul.mubr.f32.gmra.mrb[0].mxu0 %v742
        %v846 = vpop.f32.mrb[0].mxu0
        %v847 = vadd.f32 0.0, %v846
        %v848 = vpop.f32.mrb[0].mxu0
        %v849 = vadd.f32 0.0, %v848
        %850 = vmatprep.mubr.f32.mxu0 0.0
        %851 = vmatmul.mubr.f32.gmra.mrb[0].mxu0 %v745
        %v852 = vpop.f32.mrb[0].mxu0
        %v853 = vadd.f32 0.0, %v852
        %v854 = vpop.f32.mrb[0].mxu0
        %v855 = vadd.f32 0.0, %v854
        %856 = vmatprep.mubr.f32.mxu0 0.0
        %857 = vmatmul.mubr.f32.gmra.mrb[0].mxu0 %v748
        %v858 = vpop.f32.mrb[0].mxu0
        %v859 = vadd.f32 0.0, %v858
        %v860 = vpop.f32.mrb[0].mxu0
        %v861 = vadd.f32 0.0, %v860
        %862 = vdwg.mxu0
        %863 = vmatprep.subr.mxu0 %v696
        %864 = vmatpush1.msra.mxu0 %v695
        %865 = vmatprep.subr.mxu0 %v700
        %866 = vmatpush1.msra.mxu0 %v699
        %867 = vmatprep.subr.mxu0 %v704
        %868 = vmatpush1.msra.mxu0 %v703
        %869 = vmatprep.subr.mxu0 %v708
        %870 = vmatpush1.msra.mxu0 %v707
        %871 = vmatprep.subr.mxu0 0.0
        %872 = vmatpush1.msra.mxu0 0.0
        %873 = vmatprep.subr.mxu0 0.0
        %874 = vmatpush1.msra.mxu0 0.0
        %875 = vmatprep.subr.mxu0 0.0
        %876 = vmatpush1.msra.mxu0 0.0
        %877 = vmatprep.subr.mxu0 0.0
        %878 = vmatpush1.msra.mxu0 0.0
        %879 = vmatprep.subr.mxu0 0.0
        %880 = vmatpush1.msra.mxu0 0.0
        %881 = vmatprep.subr.mxu0 0.0
        %882 = vmatpush1.msra.mxu0 0.0
        %883 = vmatprep.subr.mxu0 0.0
        %884 = vmatpush1.msra.mxu0 0.0
        %885 = vmatprep.subr.mxu0 0.0
        %886 = vmatpush1.msra.mxu0 0.0
        %887 = vmatprep.subr.mxu0 0.0
        %888 = vmatpush1.msra.mxu0 0.0
        %889 = vmatprep.subr.mxu0 0.0
        %890 = vmatpush1.msra.mxu0 0.0
        %891 = vmatprep.subr.mxu0 0.0
        %892 = vmatpush1.msra.mxu0 0.0
        %893 = vmatprep.subr.mxu0 0.0
        %894 = vmatpush1.msra.mxu0 0.0
        %895 = vmatprep.subr.mxu0 0.0
        %896 = vmatpush1.msra.mxu0 0.0
        %897 = vmatprep.subr.mxu0 0.0
        %898 = vmatpush1.msra.mxu0 0.0
        %899 = vmatprep.subr.mxu0 0.0
        %900 = vmatpush1.msra.mxu0 0.0
        %901 = vmatprep.subr.mxu0 0.0
        %902 = vmatpush1.msra.mxu0 0.0
        %903 = vmatprep.subr.mxu0 0.0
        %904 = vmatpush1.msra.mxu0 0.0
        %905 = vmatprep.subr.mxu0 0.0
        %906 = vmatpush1.msra.mxu0 0.0
        %907 = vmatprep.subr.mxu0 0.0
        %908 = vmatpush1.msra.mxu0 0.0
        %909 = vmatprep.subr.mxu0 0.0
        %910 = vmatpush1.msra.mxu0 0.0
        %911 = vmatprep.subr.mxu0 0.0
        %912 = vmatpush1.msra.mxu0 0.0
        %913 = vmatprep.subr.mxu0 0.0
        %914 = vmatpush1.msra.mxu0 0.0
        %915 = vmatprep.subr.mxu0 0.0
        %916 = vmatpush1.msra.mxu0 0.0
        %917 = vmatprep.subr.mxu0 0.0
        %918 = vmatpush1.msra.mxu0 0.0
        %919 = vmatprep.subr.mxu0 0.0
        %920 = vmatpush1.msra.mxu0 0.0
        %921 = vmatprep.subr.mxu0 0.0
        %922 = vmatpush1.msra.mxu0 0.0
        %923 = vmatprep.subr.mxu0 0.0
        %924 = vmatpush1.msra.mxu0 0.0
        %925 = vmatprep.subr.mxu0 0.0
        %926 = vmatpush1.msra.mxu0 0.0
        %927 = vmatprep.mubr.f32.mxu0 0.0
        %928 = vmatmul.mubr.f32.gmra.mrb[0].mxu0 %v727
        %v929 = vpop.f32.mrb[0].mxu0
        %v930 = vadd.f32 0.0, %v929
        %v931 = vpop.f32.mrb[0].mxu0
        %v932 = vadd.f32 0.0, %v931
        %933 = vmatprep.mubr.f32.mxu0 0.0
        %934 = vmatmul.mubr.f32.gmra.mrb[0].mxu0 %v730
        %v935 = vpop.f32.mrb[0].mxu0
        %v936 = vadd.f32 0.0, %v935
        %v937 = vpop.f32.mrb[0].mxu0
        %v938 = vadd.f32 0.0, %v937
        %939 = vmatprep.mubr.f32.mxu0 0.0
        %940 = vmatmul.mubr.f32.gmra.mrb[0].mxu0 %v733
        %v941 = vpop.f32.mrb[0].mxu0
        %v942 = vadd.f32 0.0, %v941
        %v943 = vpop.f32.mrb[0].mxu0
        %v944 = vadd.f32 0.0, %v943
        %945 = vmatprep.mubr.f32.mxu0 0.0
        %946 = vmatmul.mubr.f32.gmra.mrb[0].mxu0 %v736
        %v947 = vpop.f32.mrb[0].mxu0
        %v948 = vadd.f32 0.0, %v947
        %v949 = vpop.f32.mrb[0].mxu0
        %v950 = vadd.f32 0.0, %v949
        %951 = vmatprep.mubr.f32.mxu0 0.0
        %952 = vmatmul.mubr.f32.gmra.mrb[0].mxu0 %v739
        %v953 = vpop.f32.mrb[0].mxu0
        %v954 = vadd.f32 0.0, %v953
        %v955 = vpop.f32.mrb[0].mxu0
        %v956 = vadd.f32 0.0, %v955
        %957 = vmatprep.mubr.f32.mxu0 0.0
        %958 = vmatmul.mubr.f32.gmra.mrb[0].mxu0 %v742
        %v959 = vpop.f32.mrb[0].mxu0
        %v960 = vadd.f32 0.0, %v959
        %v961 = vpop.f32.mrb[0].mxu0
        %v962 = vadd.f32 0.0, %v961
        %963 = vmatprep.mubr.f32.mxu0 0.0
        %964 = vmatmul.mubr.f32.gmra.mrb[0].mxu0 %v745
        %v965 = vpop.f32.mrb[0].mxu0
        %v966 = vadd.f32 0.0, %v965
        %v967 = vpop.f32.mrb[0].mxu0
        %v968 = vadd.f32 0.0, %v967
        %969 = vmatprep.mubr.f32.mxu0 0.0
        %970 = vmatmul.mubr.f32.gmra.mrb[0].mxu0 %v748
        %v971 = vpop.f32.mrb[0].mxu0
        %v972 = vadd.f32 0.0, %v971
        %v973 = vpop.f32.mrb[0].mxu0
        %v974 = vadd.f32 0.0, %v973
        %975 = vdwg.mxu0
        %v976 = vmul.f32 %v841, 0.5
        %v977 = vmul.f32 %v843, 0.5
        %v978 = vmul.f32 %v954, 0.5
        %v979 = vmul.f32 %v956, 0.5
        %v980 = vmul.f32 %v847, 0.5
        %v981 = vmul.f32 %v849, 0.5
        %v982 = vmul.f32 %v960, 0.5
        %v983 = vmul.f32 %v962, 0.5
        %v984 = vmul.f32 %v853, 0.5
        %v985 = vmul.f32 %v855, 0.5
        %v986 = vmul.f32 %v966, 0.5
        %v987 = vmul.f32 %v968, 0.5
        %v988 = vmul.f32 %v859, 0.5
        %v989 = vmul.f32 %v861, 0.5
        %v990 = vmul.f32 %v972, 0.5
        %v991 = vmul.f32 %v974, 0.5
        %v992 = vtanh.pop %v976
        %v993 = vtanh.pop %v977
        %v994 = vtanh.pop %v978
        %v995 = vtanh.pop %v979
        %v996 = vtanh.pop %v980
        %v997 = vtanh.pop %v981
        %v998 = vtanh.pop %v982
        %v999 = vtanh.pop %v983
        %v1000 = vtanh.pop %v984
        %v1001 = vtanh.pop %v985
        %v1002 = vtanh.pop %v986
        %v1003 = vtanh.pop %v987
        %v1004 = vtanh.pop %v988
        %v1005 = vtanh.pop %v989
        %v1006 = vtanh.pop %v990
        %v1007 = vtanh.pop %v991
        %v1008 = vmul.f32 %v992, 0.5
        %v1009 = vmul.f32 %v993, 0.5
        %v1010 = vmul.f32 %v994, 0.5
        %v1011 = vmul.f32 %v995, 0.5
        %v1012 = vmul.f32 %v996, 0.5
        %v1013 = vmul.f32 %v997, 0.5
        %v1014 = vmul.f32 %v998, 0.5
        %v1015 = vmul.f32 %v999, 0.5
        %v1016 = vmul.f32 %v1000, 0.5
        %v1017 = vmul.f32 %v1001, 0.5
        %v1018 = vmul.f32 %v1002, 0.5
        %v1019 = vmul.f32 %v1003, 0.5
        %v1020 = vmul.f32 %v1004, 0.5
        %v1021 = vmul.f32 %v1005, 0.5
        %v1022 = vmul.f32 %v1006, 0.5
        %v1023 = vmul.f32 %v1007, 0.5
        %v1024 = vadd.f32 %v1008, 0.5
        %v1025 = vadd.f32 %v1009, 0.5
        %v1026 = vadd.f32 %v1010, 0.5
        %v1027 = vadd.f32 %v1011, 0.5
        %v1028 = vadd.f32 %v1012, 0.5
        %v1029 = vadd.f32 %v1013, 0.5
        %v1030 = vadd.f32 %v1014, 0.5
        %v1031 = vadd.f32 %v1015, 0.5
        %v1032 = vadd.f32 %v1016, 0.5
        %v1033 = vadd.f32 %v1017, 0.5
        %v1034 = vadd.f32 %v1018, 0.5
        %v1035 = vadd.f32 %v1019, 0.5
        %v1036 = vadd.f32 %v1020, 0.5
        %v1037 = vadd.f32 %v1021, 0.5
        %v1038 = vadd.f32 %v1022, 0.5
        %v1039 = vadd.f32 %v1023, 0.5
        %v1040 = vmul.f32 %v817, %v1024
        %v1041 = vmul.f32 %v819, %v1025
        %v1042 = vmul.f32 %v930, %v1026
        %v1043 = vmul.f32 %v932, %v1027
        %v1044 = vmul.f32 %v823, %v1028
        %v1045 = vmul.f32 %v825, %v1029
        %v1046 = vmul.f32 %v936, %v1030
        %v1047 = vmul.f32 %v938, %v1031
        %v1048 = vmul.f32 %v829, %v1032
        %v1049 = vmul.f32 %v831, %v1033
        %v1050 = vmul.f32 %v942, %v1034
        %v1051 = vmul.f32 %v944, %v1035
        %v1052 = vmul.f32 %v835, %v1036
        %v1053 = vmul.f32 %v837, %v1037
        %v1054 = vmul.f32 %v948, %v1038
        %v1055 = vmul.f32 %v950, %v1039
        %v1056 = vadd.f32 %v709, %v1040
        %v1057 = vadd.f32 %v710, %v1041
        %v1058 = vadd.f32 %v711, %v1042
        %v1059 = vadd.f32 %v712, %v1043
        %v1060 = vadd.f32 %v713, %v1044
        %v1061 = vadd.f32 %v714, %v1045
        %v1062 = vadd.f32 %v715, %v1046
        %v1063 = vadd.f32 %v716, %v1047
        %v1064 = vadd.f32 %v717, %v1048
        %v1065 = vadd.f32 %v718, %v1049
        %v1066 = vadd.f32 %v719, %v1050
        %v1067 = vadd.f32 %v720, %v1051
        %v1068 = vadd.f32 %v721, %v1052
        %v1069 = vadd.f32 %v722, %v1053
        %v1070 = vadd.f32 %v723, %v1054
        %v1071 = vadd.f32 %v724, %v1055
        %v1072 = vmul.f32 %v1056, 0.70710677
        %v1073 = vmul.f32 %v1057, 0.70710677
        %v1074 = vmul.f32 %v1058, 0.70710677
        %v1075 = vmul.f32 %v1059, 0.70710677
        %v1076 = vmul.f32 %v1060, 0.70710677
        %v1077 = vmul.f32 %v1061, 0.70710677
        %v1078 = vmul.f32 %v1062, 0.70710677
        %v1079 = vmul.f32 %v1063, 0.70710677
        %v1080 = vmul.f32 %v1064, 0.70710677
        %v1081 = vmul.f32 %v1065, 0.70710677
        %v1082 = vmul.f32 %v1066, 0.70710677
        %v1083 = vmul.f32 %v1067, 0.70710677
        %v1084 = vmul.f32 %v1068, 0.70710677
        %v1085 = vmul.f32 %v1069, 0.70710677
        %v1086 = vmul.f32 %v1070, 0.70710677
        %v1087 = vmul.f32 %v1071, 0.70710677
        %v1088 = vld [vmem:[%s4] sm:$0xff]
        %v1089 = vld [vmem:[%s4 + $0x8] sm:$0xff]
        %v1090 = vld [vmem:[%s4 + $0x10] sm:$0xff]
        %v1091 = vld [vmem:[%s4 + $0x18] sm:$0xff]
        %v1092 = vld [vmem:[%s4 + $0x20] sm:$0xff]
        %v1093 = vld [vmem:[%s4 + $0x28] sm:$0xff]
        %v1094 = vld [vmem:[%s4 + $0x30] sm:$0xff]
        %v1095 = vld [vmem:[%s4 + $0x38] sm:$0xff]
        %v1097 = vsel %vm725, %v1088, 0
        %v1100 = vsel %vm725, %v1089, 0
        %v1103 = vsel %vm725, %v1090, 0
        %v1106 = vsel %vm725, %v1091, 0
        %v1109 = vsel %vm725, %v1092, 0
        %v1112 = vsel %vm725, %v1093, 0
        %v1115 = vsel %vm725, %v1094, 0
        %v1118 = vsel %vm725, %v1095, 0
        %1120 = vmatprep.subr.mxu0 %v1057
        %1121 = vmatpush1.msra.mxu0 %v1056
        %1122 = vmatprep.subr.mxu0 %v1061
        %1123 = vmatpush1.msra.mxu0 %v1060
        %1124 = vmatprep.subr.mxu0 %v1065
        %1125 = vmatpush1.msra.mxu0 %v1064
        %1126 = vmatprep.subr.mxu0 %v1069
        %1127 = vmatpush1.msra.mxu0 %v1068
        %1128 = vmatprep.subr.mxu0 0.0
        %1129 = vmatpush1.msra.mxu0 0.0
        %1130 = vmatprep.subr.mxu0 0.0
        %1131 = vmatpush1.msra.mxu0 0.0
        %1132 = vmatprep.subr.mxu0 0.0
        %1133 = vmatpush1.msra.mxu0 0.0
        %1134 = vmatprep.subr.mxu0 0.0
        %1135 = vmatpush1.msra.mxu0 0.0
        %1136 = vmatprep.subr.mxu0 0.0
        %1137 = vmatpush1.msra.mxu0 0.0
        %1138 = vmatprep.subr.mxu0 0.0
        %1139 = vmatpush1.msra.mxu0 0.0
        %1140 = vmatprep.subr.mxu0 0.0
        %1141 = vmatpush1.msra.mxu0 0.0
        %1142 = vmatprep.subr.mxu0 0.0
        %1143 = vmatpush1.msra.mxu0 0.0
        %1144 = vmatprep.subr.mxu0 0.0
        %1145 = vmatpush1.msra.mxu0 0.0
        %1146 = vmatprep.subr.mxu0 0.0
        %1147 = vmatpush1.msra.mxu0 0.0
        %1148 = vmatprep.subr.mxu0 0.0
        %1149 = vmatpush1.msra.mxu0 0.0
        %1150 = vmatprep.subr.mxu0 0.0
        %1151 = vmatpush1.msra.mxu0 0.0
        %1152 = vmatprep.subr.mxu0 0.0
        %1153 = vmatpush1.msra.mxu0 0.0
        %1154 = vmatprep.subr.mxu0 0.0
        %1155 = vmatpush1.msra.mxu0 0.0
        %1156 = vmatprep.subr.mxu0 0.0
        %1157 = vmatpush1.msra.mxu0 0.0
        %1158 = vmatprep.subr.mxu0 0.0
        %1159 = vmatpush1.msra.mxu0 0.0
        %1160 = vmatprep.subr.mxu0 0.0
        %1161 = vmatpush1.msra.mxu0 0.0
        %1162 = vmatprep.subr.mxu0 0.0
        %1163 = vmatpush1.msra.mxu0 0.0
        %1164 = vmatprep.subr.mxu0 0.0
        %1165 = vmatpush1.msra.mxu0 0.0
        %1166 = vmatprep.subr.mxu0 0.0
        %1167 = vmatpush1.msra.mxu0 0.0
        %1168 = vmatprep.subr.mxu0 0.0
        %1169 = vmatpush1.msra.mxu0 0.0
        %1170 = vmatprep.subr.mxu0 0.0
        %1171 = vmatpush1.msra.mxu0 0.0
        %1172 = vmatprep.subr.mxu0 0.0
        %1173 = vmatpush1.msra.mxu0 0.0
        %1174 = vmatprep.subr.mxu0 0.0
        %1175 = vmatpush1.msra.mxu0 0.0
        %1176 = vmatprep.subr.mxu0 0.0
        %1177 = vmatpush1.msra.mxu0 0.0
        %1178 = vmatprep.subr.mxu0 0.0
        %1179 = vmatpush1.msra.mxu0 0.0
        %1180 = vmatprep.subr.mxu0 0.0
        %1181 = vmatpush1.msra.mxu0 0.0
        %1182 = vmatprep.subr.mxu0 0.0
        %1183 = vmatpush1.msra.mxu0 0.0
        %1184 = vmatprep.mubr.f32.mxu0 0.0
        %1185 = vmatmul.mubr.f32.gmra.mrb[0].mxu0 %v1097
        %v1186 = vpop.f32.mrb[0].mxu0
        %v1187 = vadd.f32 0.0, %v1186
        %v1188 = vpop.f32.mrb[0].mxu0
        %v1189 = vadd.f32 0.0, %v1188
        %1190 = vmatprep.mubr.f32.mxu0 0.0
        %1191 = vmatmul.mubr.f32.gmra.mrb[0].mxu0 %v1100
        %v1192 = vpop.f32.mrb[0].mxu0
        %v1193 = vadd.f32 0.0, %v1192
        %v1194 = vpop.f32.mrb[0].mxu0
        %v1195 = vadd.f32 0.0, %v1194
        %1196 = vmatprep.mubr.f32.mxu0 0.0
        %1197 = vmatmul.mubr.f32.gmra.mrb[0].mxu0 %v1103
        %v1198 = vpop.f32.mrb[0].mxu0
        %v1199 = vadd.f32 0.0, %v1198
        %v1200 = vpop.f32.mrb[0].mxu0
        %v1201 = vadd.f32 0.0, %v1200
        %1202 = vmatprep.mubr.f32.mxu0 0.0
        %1203 = vmatmul.mubr.f32.gmra.mrb[0].mxu0 %v1106
        %v1204 = vpop.f32.mrb[0].mxu0
        %v1205 = vadd.f32 0.0, %v1204
        %v1206 = vpop.f32.mrb[0].mxu0
        %v1207 = vadd.f32 0.0, %v1206
        %1208 = vmatprep.mubr.f32.mxu0 0.0
        %1209 = vmatmul.mubr.f32.gmra.mrb[0].mxu0 %v1109
        %v1210 = vpop.f32.mrb[0].mxu0
        %v1211 = vadd.f32 0.0, %v1210
        %v1212 = vpop.f32.mrb[0].mxu0
        %v1213 = vadd.f32 0.0, %v1212
        %1214 = vmatprep.mubr.f32.mxu0 0.0
        %1215 = vmatmul.mubr.f32.gmra.mrb[0].mxu0 %v1112
        %v1216 = vpop.f32.mrb[0].mxu0
        %v1217 = vadd.f32 0.0, %v1216
        %v1218 = vpop.f32.mrb[0].mxu0
        %v1219 = vadd.f32 0.0, %v1218
        %1220 = vmatprep.mubr.f32.mxu0 0.0
        %1221 = vmatmul.mubr.f32.gmra.mrb[0].mxu0 %v1115
        %v1222 = vpop.f32.mrb[0].mxu0
        %v1223 = vadd.f32 0.0, %v1222
        %v1224 = vpop.f32.mrb[0].mxu0
        %v1225 = vadd.f32 0.0, %v1224
        %1226 = vmatprep.mubr.f32.mxu0 0.0
        %1227 = vmatmul.mubr.f32.gmra.mrb[0].mxu0 %v1118
        %v1228 = vpop.f32.mrb[0].mxu0
        %v1229 = vadd.f32 0.0, %v1228
        %v1230 = vpop.f32.mrb[0].mxu0
        %v1231 = vadd.f32 0.0, %v1230
        %1232 = vdwg.mxu0
        %1233 = vmatprep.subr.mxu0 %v1059
        %1234 = vmatpush1.msra.mxu0 %v1058
        %1235 = vmatprep.subr.mxu0 %v1063
        %1236 = vmatpush1.msra.mxu0 %v1062
        %1237 = vmatprep.subr.mxu0 %v1067
        %1238 = vmatpush1.msra.mxu0 %v1066
        %1239 = vmatprep.subr.mxu0 %v1071
        %1240 = vmatpush1.msra.mxu0 %v1070
        %1241 = vmatprep.subr.mxu0 0.0
        %1242 = vmatpush1.msra.mxu0 0.0
        %1243 = vmatprep.subr.mxu0 0.0
        %1244 = vmatpush1.msra.mxu0 0.0
        %1245 = vmatprep.subr.mxu0 0.0
        %1246 = vmatpush1.msra.mxu0 0.0
        %1247 = vmatprep.subr.mxu0 0.0
        %1248 = vmatpush1.msra.mxu0 0.0
        %1249 = vmatprep.subr.mxu0 0.0
        %1250 = vmatpush1.msra.mxu0 0.0
        %1251 = vmatprep.subr.mxu0 0.0
        %1252 = vmatpush1.msra.mxu0 0.0
        %1253 = vmatprep.subr.mxu0 0.0
        %1254 = vmatpush1.msra.mxu0 0.0
        %1255 = vmatprep.subr.mxu0 0.0
        %1256 = vmatpush1.msra.mxu0 0.0
        %1257 = vmatprep.subr.mxu0 0.0
        %1258 = vmatpush1.msra.mxu0 0.0
        %1259 = vmatprep.subr.mxu0 0.0
        %1260 = vmatpush1.msra.mxu0 0.0
        %1261 = vmatprep.subr.mxu0 0.0
        %1262 = vmatpush1.msra.mxu0 0.0
        %1263 = vmatprep.subr.mxu0 0.0
        %1264 = vmatpush1.msra.mxu0 0.0
        %1265 = vmatprep.subr.mxu0 0.0
        %1266 = vmatpush1.msra.mxu0 0.0
        %1267 = vmatprep.subr.mxu0 0.0
        %1268 = vmatpush1.msra.mxu0 0.0
        %1269 = vmatprep.subr.mxu0 0.0
        %1270 = vmatpush1.msra.mxu0 0.0
        %1271 = vmatprep.subr.mxu0 0.0
        %1272 = vmatpush1.msra.mxu0 0.0
        %1273 = vmatprep.subr.mxu0 0.0
        %1274 = vmatpush1.msra.mxu0 0.0
        %1275 = vmatprep.subr.mxu0 0.0
        %1276 = vmatpush1.msra.mxu0 0.0
        %1277 = vmatprep.subr.mxu0 0.0
        %1278 = vmatpush1.msra.mxu0 0.0
        %1279 = vmatprep.subr.mxu0 0.0
        %1280 = vmatpush1.msra.mxu0 0.0
        %1281 = vmatprep.subr.mxu0 0.0
        %1282 = vmatpush1.msra.mxu0 0.0
        %1283 = vmatprep.subr.mxu0 0.0
        %1284 = vmatpush1.msra.mxu0 0.0
        %1285 = vmatprep.subr.mxu0 0.0
        %1286 = vmatpush1.msra.mxu0 0.0
        %1287 = vmatprep.subr.mxu0 0.0
        %1288 = vmatpush1.msra.mxu0 0.0
        %1289 = vmatprep.subr.mxu0 0.0
        %1290 = vmatpush1.msra.mxu0 0.0
        %1291 = vmatprep.subr.mxu0 0.0
        %1292 = vmatpush1.msra.mxu0 0.0
        %1293 = vmatprep.subr.mxu0 0.0
        %1294 = vmatpush1.msra.mxu0 0.0
        %1295 = vmatprep.subr.mxu0 0.0
        %1296 = vmatpush1.msra.mxu0 0.0
        %1297 = vmatprep.mubr.f32.mxu0 0.0
        %1298 = vmatmul.mubr.f32.gmra.mrb[0].mxu0 %v1097
        %v1299 = vpop.f32.mrb[0].mxu0
        %v1300 = vadd.f32 0.0, %v1299
        %v1301 = vpop.f32.mrb[0].mxu0
        %v1302 = vadd.f32 0.0, %v1301
        %1303 = vmatprep.mubr.f32.mxu0 0.0
        %1304 = vmatmul.mubr.f32.gmra.mrb[0].mxu0 %v1100
        %v1305 = vpop.f32.mrb[0].mxu0
        %v1306 = vadd.f32 0.0, %v1305
        %v1307 = vpop.f32.mrb[0].mxu0
        %v1308 = vadd.f32 0.0, %v1307
        %1309 = vmatprep.mubr.f32.mxu0 0.0
        %1310 = vmatmul.mubr.f32.gmra.mrb[0].mxu0 %v1103
        %v1311 = vpop.f32.mrb[0].mxu0
        %v1312 = vadd.f32 0.0, %v1311
        %v1313 = vpop.f32.mrb[0].mxu0
        %v1314 = vadd.f32 0.0, %v1313
        %1315 = vmatprep.mubr.f32.mxu0 0.0
        %1316 = vmatmul.mubr.f32.gmra.mrb[0].mxu0 %v1106
        %v1317 = vpop.f32.mrb[0].mxu0
        %v1318 = vadd.f32 0.0, %v1317
        %v1319 = vpop.f32.mrb[0].mxu0
        %v1320 = vadd.f32 0.0, %v1319
        %1321 = vmatprep.mubr.f32.mxu0 0.0
        %1322 = vmatmul.mubr.f32.gmra.mrb[0].mxu0 %v1109
        %v1323 = vpop.f32.mrb[0].mxu0
        %v1324 = vadd.f32 0.0, %v1323
        %v1325 = vpop.f32.mrb[0].mxu0
        %v1326 = vadd.f32 0.0, %v1325
        %1327 = vmatprep.mubr.f32.mxu0 0.0
        %1328 = vmatmul.mubr.f32.gmra.mrb[0].mxu0 %v1112
        %v1329 = vpop.f32.mrb[0].mxu0
        %v1330 = vadd.f32 0.0, %v1329
        %v1331 = vpop.f32.mrb[0].mxu0
        %v1332 = vadd.f32 0.0, %v1331
        %1333 = vmatprep.mubr.f32.mxu0 0.0
        %1334 = vmatmul.mubr.f32.gmra.mrb[0].mxu0 %v1115
        %v1335 = vpop.f32.mrb[0].mxu0
        %v1336 = vadd.f32 0.0, %v1335
        %v1337 = vpop.f32.mrb[0].mxu0
        %v1338 = vadd.f32 0.0, %v1337
        %1339 = vmatprep.mubr.f32.mxu0 0.0
        %1340 = vmatmul.mubr.f32.gmra.mrb[0].mxu0 %v1118
        %v1341 = vpop.f32.mrb[0].mxu0
        %v1342 = vadd.f32 0.0, %v1341
        %v1343 = vpop.f32.mrb[0].mxu0
        %v1344 = vadd.f32 0.0, %v1343
        %1345 = vdwg.mxu0
        %v1346 = vmul.f32 %v1211, 0.5
        %v1347 = vmul.f32 %v1213, 0.5
        %v1348 = vmul.f32 %v1324, 0.5
        %v1349 = vmul.f32 %v1326, 0.5
        %v1350 = vmul.f32 %v1217, 0.5
        %v1351 = vmul.f32 %v1219, 0.5
        %v1352 = vmul.f32 %v1330, 0.5
        %v1353 = vmul.f32 %v1332, 0.5
        %v1354 = vmul.f32 %v1223, 0.5
        %v1355 = vmul.f32 %v1225, 0.5
        %v1356 = vmul.f32 %v1336, 0.5
        %v1357 = vmul.f32 %v1338, 0.5
        %v1358 = vmul.f32 %v1229, 0.5
        %v1359 = vmul.f32 %v1231, 0.5
        %v1360 = vmul.f32 %v1342, 0.5
        %v1361 = vmul.f32 %v1344, 0.5
        %v1362 = vtanh.pop %v1346
        %v1363 = vtanh.pop %v1347
        %v1364 = vtanh.pop %v1348
        %v1365 = vtanh.pop %v1349
        %v1366 = vtanh.pop %v1350
        %v1367 = vtanh.pop %v1351
        %v1368 = vtanh.pop %v1352
        %v1369 = vtanh.pop %v1353
        %v1370 = vtanh.pop %v1354
        %v1371 = vtanh.pop %v1355
        %v1372 = vtanh.pop %v1356
        %v1373 = vtanh.pop %v1357
        %v1374 = vtanh.pop %v1358
        %v1375 = vtanh.pop %v1359
        %v1376 = vtanh.pop %v1360
        %v1377 = vtanh.pop %v1361
        %v1378 = vmul.f32 %v1362, 0.5
        %v1379 = vmul.f32 %v1363, 0.5
        %v1380 = vmul.f32 %v1364, 0.5
        %v1381 = vmul.f32 %v1365, 0.5
        %v1382 = vmul.f32 %v1366, 0.5
        %v1383 = vmul.f32 %v1367, 0.5
        %v1384 = vmul.f32 %v1368, 0.5
        %v1385 = vmul.f32 %v1369, 0.5
        %v1386 = vmul.f32 %v1370, 0.5
        %v1387 = vmul.f32 %v1371, 0.5
        %v1388 = vmul.f32 %v1372, 0.5
        %v1389 = vmul.f32 %v1373, 0.5
        %v1390 = vmul.f32 %v1374, 0.5
        %v1391 = vmul.f32 %v1375, 0.5
        %v1392 = vmul.f32 %v1376, 0.5
        %v1393 = vmul.f32 %v1377, 0.5
        %v1394 = vadd.f32 %v1378, 0.5
        %v1395 = vadd.f32 %v1379, 0.5
        %v1396 = vadd.f32 %v1380, 0.5
        %v1397 = vadd.f32 %v1381, 0.5
        %v1398 = vadd.f32 %v1382, 0.5
        %v1399 = vadd.f32 %v1383, 0.5
        %v1400 = vadd.f32 %v1384, 0.5
        %v1401 = vadd.f32 %v1385, 0.5
        %v1402 = vadd.f32 %v1386, 0.5
        %v1403 = vadd.f32 %v1387, 0.5
        %v1404 = vadd.f32 %v1388, 0.5
        %v1405 = vadd.f32 %v1389, 0.5
        %v1406 = vadd.f32 %v1390, 0.5
        %v1407 = vadd.f32 %v1391, 0.5
        %v1408 = vadd.f32 %v1392, 0.5
        %v1409 = vadd.f32 %v1393, 0.5
        %v1410 = vmul.f32 %v1187, %v1394
        %v1411 = vmul.f32 %v1189, %v1395
        %v1412 = vmul.f32 %v1300, %v1396
        %v1413 = vmul.f32 %v1302, %v1397
        %v1414 = vmul.f32 %v1193, %v1398
        %v1415 = vmul.f32 %v1195, %v1399
        %v1416 = vmul.f32 %v1306, %v1400
        %v1417 = vmul.f32 %v1308, %v1401
        %v1418 = vmul.f32 %v1199, %v1402
        %v1419 = vmul.f32 %v1201, %v1403
        %v1420 = vmul.f32 %v1312, %v1404
        %v1421 = vmul.f32 %v1314, %v1405
        %v1422 = vmul.f32 %v1205, %v1406
        %v1423 = vmul.f32 %v1207, %v1407
        %v1424 = vmul.f32 %v1318, %v1408
        %v1425 = vmul.f32 %v1320, %v1409
        %v1426 = vadd.f32 %v1072, %v1410
        %v1427 = vadd.f32 %v1073, %v1411
        %v1428 = vadd.f32 %v1074, %v1412
        %v1429 = vadd.f32 %v1075, %v1413
        %v1430 = vadd.f32 %v1076, %v1414
        %v1431 = vadd.f32 %v1077, %v1415
        %v1432 = vadd.f32 %v1078, %v1416
        %v1433 = vadd.f32 %v1079, %v1417
        %v1434 = vadd.f32 %v1080, %v1418
        %v1435 = vadd.f32 %v1081, %v1419
        %v1436 = vadd.f32 %v1082, %v1420
        %v1437 = vadd.f32 %v1083, %v1421
        %v1438 = vadd.f32 %v1084, %v1422
        %v1439 = vadd.f32 %v1085, %v1423
        %v1440 = vadd.f32 %v1086, %v1424
        %v1441 = vadd.f32 %v1087, %v1425
        %v1442 = vmul.f32 %v1434, 0.70710677
        %v1443 = vmul.f32 %v1435, 0.70710677
        %v1444 = vmul.f32 %v1436, 0.70710677
        %v1445 = vmul.f32 %v1437, 0.70710677
        %v1446 = vmul.f32 %v1438, 0.70710677
        %v1447 = vmul.f32 %v1439, 0.70710677
        %v1448 = vmul.f32 %v1440, 0.70710677
        %v1449 = vmul.f32 %v1441, 0.70710677
        %s1450 = scalar_lea.vmem %s4, 64
        %v1451 = vld [vmem:[%s1450] sm:$0xff]
        %v1452 = vld [vmem:[%s1450 + $0x8] sm:$0xff]
        %v1453 = vld [vmem:[%s1450 + $0x10] sm:$0xff]
        %v1454 = vld [vmem:[%s1450 + $0x18] sm:$0xff]
        %v1455 = vld [vmem:[%s1450 + $0x20] sm:$0xff]
        %v1456 = vld [vmem:[%s1450 + $0x28] sm:$0xff]
        %v1457 = vld [vmem:[%s1450 + $0x30] sm:$0xff]
        %v1458 = vld [vmem:[%s1450 + $0x38] sm:$0xff]
        %v1460 = vsel %vm725, %v1451, 0
        %v1463 = vsel %vm725, %v1452, 0
        %v1466 = vsel %vm725, %v1453, 0
        %v1469 = vsel %vm725, %v1454, 0
        %v1472 = vsel %vm725, %v1455, 0
        %v1475 = vsel %vm725, %v1456, 0
        %v1478 = vsel %vm725, %v1457, 0
        %v1481 = vsel %vm725, %v1458, 0
        %1483 = vmatprep.subr.mxu0 %v1427
        %1484 = vmatpush1.msra.mxu0 %v1426
        %1485 = vmatprep.subr.mxu0 %v1431
        %1486 = vmatpush1.msra.mxu0 %v1430
        %1487 = vmatprep.subr.mxu0 %v1435
        %1488 = vmatpush1.msra.mxu0 %v1434
        %1489 = vmatprep.subr.mxu0 %v1439
        %1490 = vmatpush1.msra.mxu0 %v1438
        %1491 = vmatprep.subr.mxu0 0.0
        %1492 = vmatpush1.msra.mxu0 0.0
        %1493 = vmatprep.subr.mxu0 0.0
        %1494 = vmatpush1.msra.mxu0 0.0
        %1495 = vmatprep.subr.mxu0 0.0
        %1496 = vmatpush1.msra.mxu0 0.0
        %1497 = vmatprep.subr.mxu0 0.0
        %1498 = vmatpush1.msra.mxu0 0.0
        %1499 = vmatprep.subr.mxu0 0.0
        %1500 = vmatpush1.msra.mxu0 0.0
        %1501 = vmatprep.subr.mxu0 0.0
        %1502 = vmatpush1.msra.mxu0 0.0
        %1503 = vmatprep.subr.mxu0 0.0
        %1504 = vmatpush1.msra.mxu0 0.0
        %1505 = vmatprep.subr.mxu0 0.0
        %1506 = vmatpush1.msra.mxu0 0.0
        %1507 = vmatprep.subr.mxu0 0.0
        %1508 = vmatpush1.msra.mxu0 0.0
        %1509 = vmatprep.subr.mxu0 0.0
        %1510 = vmatpush1.msra.mxu0 0.0
        %1511 = vmatprep.subr.mxu0 0.0
        %1512 = vmatpush1.msra.mxu0 0.0
        %1513 = vmatprep.subr.mxu0 0.0
        %1514 = vmatpush1.msra.mxu0 0.0
        %1515 = vmatprep.subr.mxu0 0.0
        %1516 = vmatpush1.msra.mxu0 0.0
        %1517 = vmatprep.subr.mxu0 0.0
        %1518 = vmatpush1.msra.mxu0 0.0
        %1519 = vmatprep.subr.mxu0 0.0
        %1520 = vmatpush1.msra.mxu0 0.0
        %1521 = vmatprep.subr.mxu0 0.0
        %1522 = vmatpush1.msra.mxu0 0.0
        %1523 = vmatprep.subr.mxu0 0.0
        %1524 = vmatpush1.msra.mxu0 0.0
        %1525 = vmatprep.subr.mxu0 0.0
        %1526 = vmatpush1.msra.mxu0 0.0
        %1527 = vmatprep.subr.mxu0 0.0
        %1528 = vmatpush1.msra.mxu0 0.0
        %1529 = vmatprep.subr.mxu0 0.0
        %1530 = vmatpush1.msra.mxu0 0.0
        %1531 = vmatprep.subr.mxu0 0.0
        %1532 = vmatpush1.msra.mxu0 0.0
        %1533 = vmatprep.subr.mxu0 0.0
        %1534 = vmatpush1.msra.mxu0 0.0
        %1535 = vmatprep.subr.mxu0 0.0
        %1536 = vmatpush1.msra.mxu0 0.0
        %1537 = vmatprep.subr.mxu0 0.0
        %1538 = vmatpush1.msra.mxu0 0.0
        %1539 = vmatprep.subr.mxu0 0.0
        %1540 = vmatpush1.msra.mxu0 0.0
        %1541 = vmatprep.subr.mxu0 0.0
        %1542 = vmatpush1.msra.mxu0 0.0
        %1543 = vmatprep.subr.mxu0 0.0
        %1544 = vmatpush1.msra.mxu0 0.0
        %1545 = vmatprep.subr.mxu0 0.0
        %1546 = vmatpush1.msra.mxu0 0.0
        %1547 = vmatprep.mubr.f32.mxu0 0.0
        %1548 = vmatmul.mubr.f32.gmra.mrb[0].mxu0 %v1460
        %v1549 = vpop.f32.mrb[0].mxu0
        %v1550 = vpop.f32.mrb[0].mxu0
        %1551 = vmatprep.mubr.f32.mxu0 0.0
        %1552 = vmatmul.mubr.f32.gmra.mrb[0].mxu0 %v1463
        %v1553 = vpop.f32.mrb[0].mxu0
        %v1554 = vpop.f32.mrb[0].mxu0
        %1555 = vmatprep.mubr.f32.mxu0 0.0
        %1556 = vmatmul.mubr.f32.gmra.mrb[0].mxu0 %v1466
        %v1557 = vpop.f32.mrb[0].mxu0
        %v1558 = vadd.f32 0.0, %v1557
        %v1559 = vpop.f32.mrb[0].mxu0
        %v1560 = vadd.f32 0.0, %v1559
        %1561 = vmatprep.mubr.f32.mxu0 0.0
        %1562 = vmatmul.mubr.f32.gmra.mrb[0].mxu0 %v1469
        %v1563 = vpop.f32.mrb[0].mxu0
        %v1564 = vadd.f32 0.0, %v1563
        %v1565 = vpop.f32.mrb[0].mxu0
        %v1566 = vadd.f32 0.0, %v1565
        %1567 = vmatprep.mubr.f32.mxu0 0.0
        %1568 = vmatmul.mubr.f32.gmra.mrb[0].mxu0 %v1472
        %v1569 = vpop.f32.mrb[0].mxu0
        %v1570 = vpop.f32.mrb[0].mxu0
        %1571 = vmatprep.mubr.f32.mxu0 0.0
        %1572 = vmatmul.mubr.f32.gmra.mrb[0].mxu0 %v1475
        %v1573 = vpop.f32.mrb[0].mxu0
        %v1574 = vpop.f32.mrb[0].mxu0
        %1575 = vmatprep.mubr.f32.mxu0 0.0
        %1576 = vmatmul.mubr.f32.gmra.mrb[0].mxu0 %v1478
        %v1577 = vpop.f32.mrb[0].mxu0
        %v1578 = vadd.f32 0.0, %v1577
        %v1579 = vpop.f32.mrb[0].mxu0
        %v1580 = vadd.f32 0.0, %v1579
        %1581 = vmatprep.mubr.f32.mxu0 0.0
        %1582 = vmatmul.mubr.f32.gmra.mrb[0].mxu0 %v1481
        %v1583 = vpop.f32.mrb[0].mxu0
        %v1584 = vadd.f32 0.0, %v1583
        %v1585 = vpop.f32.mrb[0].mxu0
        %v1586 = vadd.f32 0.0, %v1585
        %1587 = vdwg.mxu0
        %1588 = vmatprep.subr.mxu0 %v1429
        %1589 = vmatpush1.msra.mxu0 %v1428
        %1590 = vmatprep.subr.mxu0 %v1433
        %1591 = vmatpush1.msra.mxu0 %v1432
        %1592 = vmatprep.subr.mxu0 %v1437
        %1593 = vmatpush1.msra.mxu0 %v1436
        %1594 = vmatprep.subr.mxu0 %v1441
        %1595 = vmatpush1.msra.mxu0 %v1440
        %1596 = vmatprep.subr.mxu0 0.0
        %1597 = vmatpush1.msra.mxu0 0.0
        %1598 = vmatprep.subr.mxu0 0.0
        %1599 = vmatpush1.msra.mxu0 0.0
        %1600 = vmatprep.subr.mxu0 0.0
        %1601 = vmatpush1.msra.mxu0 0.0
        %1602 = vmatprep.subr.mxu0 0.0
        %1603 = vmatpush1.msra.mxu0 0.0
        %1604 = vmatprep.subr.mxu0 0.0
        %1605 = vmatpush1.msra.mxu0 0.0
        %1606 = vmatprep.subr.mxu0 0.0
        %1607 = vmatpush1.msra.mxu0 0.0
        %1608 = vmatprep.subr.mxu0 0.0
        %1609 = vmatpush1.msra.mxu0 0.0
        %1610 = vmatprep.subr.mxu0 0.0
        %1611 = vmatpush1.msra.mxu0 0.0
        %1612 = vmatprep.subr.mxu0 0.0
        %1613 = vmatpush1.msra.mxu0 0.0
        %1614 = vmatprep.subr.mxu0 0.0
        %1615 = vmatpush1.msra.mxu0 0.0
        %1616 = vmatprep.subr.mxu0 0.0
        %1617 = vmatpush1.msra.mxu0 0.0
        %1618 = vmatprep.subr.mxu0 0.0
        %1619 = vmatpush1.msra.mxu0 0.0
        %1620 = vmatprep.subr.mxu0 0.0
        %1621 = vmatpush1.msra.mxu0 0.0
        %1622 = vmatprep.subr.mxu0 0.0
        %1623 = vmatpush1.msra.mxu0 0.0
        %1624 = vmatprep.subr.mxu0 0.0
        %1625 = vmatpush1.msra.mxu0 0.0
        %1626 = vmatprep.subr.mxu0 0.0
        %1627 = vmatpush1.msra.mxu0 0.0
        %1628 = vmatprep.subr.mxu0 0.0
        %1629 = vmatpush1.msra.mxu0 0.0
        %1630 = vmatprep.subr.mxu0 0.0
        %1631 = vmatpush1.msra.mxu0 0.0
        %1632 = vmatprep.subr.mxu0 0.0
        %1633 = vmatpush1.msra.mxu0 0.0
        %1634 = vmatprep.subr.mxu0 0.0
        %1635 = vmatpush1.msra.mxu0 0.0
        %1636 = vmatprep.subr.mxu0 0.0
        %1637 = vmatpush1.msra.mxu0 0.0
        %1638 = vmatprep.subr.mxu0 0.0
        %1639 = vmatpush1.msra.mxu0 0.0
        %1640 = vmatprep.subr.mxu0 0.0
        %1641 = vmatpush1.msra.mxu0 0.0
        %1642 = vmatprep.subr.mxu0 0.0
        %1643 = vmatpush1.msra.mxu0 0.0
        %1644 = vmatprep.subr.mxu0 0.0
        %1645 = vmatpush1.msra.mxu0 0.0
        %1646 = vmatprep.subr.mxu0 0.0
        %1647 = vmatpush1.msra.mxu0 0.0
        %1648 = vmatprep.subr.mxu0 0.0
        %1649 = vmatpush1.msra.mxu0 0.0
        %1650 = vmatprep.subr.mxu0 0.0
        %1651 = vmatpush1.msra.mxu0 0.0
        %1652 = vmatprep.mubr.f32.mxu0 0.0
        %1653 = vmatmul.mubr.f32.gmra.mrb[0].mxu0 %v1460
        %v1654 = vpop.f32.mrb[0].mxu0
        %v1655 = vpop.f32.mrb[0].mxu0
        %1656 = vmatprep.mubr.f32.mxu0 0.0
        %1657 = vmatmul.mubr.f32.gmra.mrb[0].mxu0 %v1463
        %v1658 = vpop.f32.mrb[0].mxu0
        %v1659 = vpop.f32.mrb[0].mxu0
        %1660 = vmatprep.mubr.f32.mxu0 0.0
        %1661 = vmatmul.mubr.f32.gmra.mrb[0].mxu0 %v1466
        %v1662 = vpop.f32.mrb[0].mxu0
        %v1663 = vadd.f32 0.0, %v1662
        %v1664 = vpop.f32.mrb[0].mxu0
        %v1665 = vadd.f32 0.0, %v1664
        %1666 = vmatprep.mubr.f32.mxu0 0.0
        %1667 = vmatmul.mubr.f32.gmra.mrb[0].mxu0 %v1469
        %v1668 = vpop.f32.mrb[0].mxu0
        %v1669 = vadd.f32 0.0, %v1668
        %v1670 = vpop.f32.mrb[0].mxu0
        %v1671 = vadd.f32 0.0, %v1670
        %1672 = vmatprep.mubr.f32.mxu0 0.0
        %1673 = vmatmul.mubr.f32.gmra.mrb[0].mxu0 %v1472
        %v1674 = vpop.f32.mrb[0].mxu0
        %v1675 = vpop.f32.mrb[0].mxu0
        %1676 = vmatprep.mubr.f32.mxu0 0.0
        %1677 = vmatmul.mubr.f32.gmra.mrb[0].mxu0 %v1475
        %v1678 = vpop.f32.mrb[0].mxu0
        %v1679 = vpop.f32.mrb[0].mxu0
        %1680 = vmatprep.mubr.f32.mxu0 0.0
        %1681 = vmatmul.mubr.f32.gmra.mrb[0].mxu0 %v1478
        %v1682 = vpop.f32.mrb[0].mxu0
        %v1683 = vadd.f32 0.0, %v1682
        %v1684 = vpop.f32.mrb[0].mxu0
        %v1685 = vadd.f32 0.0, %v1684
        %1686 = vmatprep.mubr.f32.mxu0 0.0
        %1687 = vmatmul.mubr.f32.gmra.mrb[0].mxu0 %v1481
        %v1688 = vpop.f32.mrb[0].mxu0
        %v1689 = vadd.f32 0.0, %v1688
        %v1690 = vpop.f32.mrb[0].mxu0
        %v1691 = vadd.f32 0.0, %v1690
        %1692 = vdwg.mxu0
        %v1693 = vmul.f32 %v1578, 0.5
        %v1694 = vmul.f32 %v1580, 0.5
        %v1695 = vmul.f32 %v1683, 0.5
        %v1696 = vmul.f32 %v1685, 0.5
        %v1697 = vmul.f32 %v1584, 0.5
        %v1698 = vmul.f32 %v1586, 0.5
        %v1699 = vmul.f32 %v1689, 0.5
        %v1700 = vmul.f32 %v1691, 0.5
        %v1701 = vtanh.pop %v1693
        %v1702 = vtanh.pop %v1694
        %v1703 = vtanh.pop %v1695
        %v1704 = vtanh.pop %v1696
        %v1705 = vtanh.pop %v1697
        %v1706 = vtanh.pop %v1698
        %v1707 = vtanh.pop %v1699
        %v1708 = vtanh.pop %v1700
        %v1709 = vmul.f32 %v1701, 0.5
        %v1710 = vmul.f32 %v1702, 0.5
        %v1711 = vmul.f32 %v1703, 0.5
        %v1712 = vmul.f32 %v1704, 0.5
        %v1713 = vmul.f32 %v1705, 0.5
        %v1714 = vmul.f32 %v1706, 0.5
        %v1715 = vmul.f32 %v1707, 0.5
        %v1716 = vmul.f32 %v1708, 0.5
        %v1717 = vadd.f32 %v1709, 0.5
        %v1718 = vadd.f32 %v1710, 0.5
        %v1719 = vadd.f32 %v1711, 0.5
        %v1720 = vadd.f32 %v1712, 0.5
        %v1721 = vadd.f32 %v1713, 0.5
        %v1722 = vadd.f32 %v1714, 0.5
        %v1723 = vadd.f32 %v1715, 0.5
        %v1724 = vadd.f32 %v1716, 0.5
        %v1725 = vmul.f32 %v1558, %v1717
        %v1726 = vmul.f32 %v1560, %v1718
        %v1727 = vmul.f32 %v1663, %v1719
        %v1728 = vmul.f32 %v1665, %v1720
        %v1729 = vmul.f32 %v1564, %v1721
        %v1730 = vmul.f32 %v1566, %v1722
        %v1731 = vmul.f32 %v1669, %v1723
        %v1732 = vmul.f32 %v1671, %v1724
        %v1733 = vadd.f32 %v1442, %v1725
        %v1734 = vadd.f32 %v1443, %v1726
        %v1735 = vadd.f32 %v1444, %v1727
        %v1736 = vadd.f32 %v1445, %v1728
        %v1737 = vadd.f32 %v1446, %v1729
        %v1738 = vadd.f32 %v1447, %v1730
        %v1739 = vadd.f32 %v1448, %v1731
        %v1740 = vadd.f32 %v1449, %v1732
        %v1741 = vld [vmem:[%s5] sm:$0xff]
        %v1742 = vld [vmem:[%s5 + $0x8] sm:$0xff]
        %v1744 = vsel %vm378, %v1741, 0
        %v1747 = vsel %vm378, %v1742, 0
        %1749 = vmatprep.subr.mxu0 %v1734
        %1750 = vmatpush1.msra.mxu0 %v1733
        %1751 = vmatprep.subr.mxu0 %v1738
        %1752 = vmatpush1.msra.mxu0 %v1737
        %1753 = vmatprep.subr.mxu0 0.0
        %1754 = vmatpush1.msra.mxu0 0.0
        %1755 = vmatprep.subr.mxu0 0.0
        %1756 = vmatpush1.msra.mxu0 0.0
        %1757 = vmatprep.subr.mxu0 0.0
        %1758 = vmatpush1.msra.mxu0 0.0
        %1759 = vmatprep.subr.mxu0 0.0
        %1760 = vmatpush1.msra.mxu0 0.0
        %1761 = vmatprep.subr.mxu0 0.0
        %1762 = vmatpush1.msra.mxu0 0.0
        %1763 = vmatprep.subr.mxu0 0.0
        %1764 = vmatpush1.msra.mxu0 0.0
        %1765 = vmatprep.subr.mxu0 0.0
        %1766 = vmatpush1.msra.mxu0 0.0
        %1767 = vmatprep.subr.mxu0 0.0
        %1768 = vmatpush1.msra.mxu0 0.0
        %1769 = vmatprep.subr.mxu0 0.0
        %1770 = vmatpush1.msra.mxu0 0.0
        %1771 = vmatprep.subr.mxu0 0.0
        %1772 = vmatpush1.msra.mxu0 0.0
        %1773 = vmatprep.subr.mxu0 0.0
        %1774 = vmatpush1.msra.mxu0 0.0
        %1775 = vmatprep.subr.mxu0 0.0
        %1776 = vmatpush1.msra.mxu0 0.0
        %1777 = vmatprep.subr.mxu0 0.0
        %1778 = vmatpush1.msra.mxu0 0.0
        %1779 = vmatprep.subr.mxu0 0.0
        %1780 = vmatpush1.msra.mxu0 0.0
        %1781 = vmatprep.subr.mxu0 0.0
        %1782 = vmatpush1.msra.mxu0 0.0
        %1783 = vmatprep.subr.mxu0 0.0
        %1784 = vmatpush1.msra.mxu0 0.0
        %1785 = vmatprep.subr.mxu0 0.0
        %1786 = vmatpush1.msra.mxu0 0.0
        %1787 = vmatprep.subr.mxu0 0.0
        %1788 = vmatpush1.msra.mxu0 0.0
        %1789 = vmatprep.subr.mxu0 0.0
        %1790 = vmatpush1.msra.mxu0 0.0
        %1791 = vmatprep.subr.mxu0 0.0
        %1792 = vmatpush1.msra.mxu0 0.0
        %1793 = vmatprep.subr.mxu0 0.0
        %1794 = vmatpush1.msra.mxu0 0.0
        %1795 = vmatprep.subr.mxu0 0.0
        %1796 = vmatpush1.msra.mxu0 0.0
        %1797 = vmatprep.subr.mxu0 0.0
        %1798 = vmatpush1.msra.mxu0 0.0
        %1799 = vmatprep.subr.mxu0 0.0
        %1800 = vmatpush1.msra.mxu0 0.0
        %1801 = vmatprep.subr.mxu0 0.0
        %1802 = vmatpush1.msra.mxu0 0.0
        %1803 = vmatprep.subr.mxu0 0.0
        %1804 = vmatpush1.msra.mxu0 0.0
        %1805 = vmatprep.subr.mxu0 0.0
        %1806 = vmatpush1.msra.mxu0 0.0
        %1807 = vmatprep.subr.mxu0 0.0
        %1808 = vmatpush1.msra.mxu0 0.0
        %1809 = vmatprep.subr.mxu0 0.0
        %1810 = vmatpush1.msra.mxu0 0.0
        %1811 = vmatprep.subr.mxu0 0.0
        %1812 = vmatpush1.msra.mxu0 0.0
        %1813 = vmatprep.mubr.f32.mxu0 0.0
        %1814 = vmatmul.mubr.f32.gmra.mrb[0].mxu0 %v1744
        %v1815 = vpop.f32.mrb[0].mxu0
        %v1816 = vadd.f32 0.0, %v1815
        %v1817 = vpop.f32.mrb[0].mxu0
        %v1818 = vadd.f32 0.0, %v1817
        %1819 = vmatprep.mubr.f32.mxu0 0.0
        %1820 = vmatmul.mubr.f32.gmra.mrb[0].mxu0 %v1747
        %v1821 = vpop.f32.mrb[0].mxu0
        %v1822 = vadd.f32 0.0, %v1821
        %v1823 = vpop.f32.mrb[0].mxu0
        %v1824 = vadd.f32 0.0, %v1823
        %1825 = vdwg.mxu0
        %1826 = vmatprep.subr.mxu0 %v1736
        %1827 = vmatpush1.msra.mxu0 %v1735
        %1828 = vmatprep.subr.mxu0 %v1740
        %1829 = vmatpush1.msra.mxu0 %v1739
        %1830 = vmatprep.subr.mxu0 0.0
        %1831 = vmatpush1.msra.mxu0 0.0
        %1832 = vmatprep.subr.mxu0 0.0
        %1833 = vmatpush1.msra.mxu0 0.0
        %1834 = vmatprep.subr.mxu0 0.0
        %1835 = vmatpush1.msra.mxu0 0.0
        %1836 = vmatprep.subr.mxu0 0.0
        %1837 = vmatpush1.msra.mxu0 0.0
        %1838 = vmatprep.subr.mxu0 0.0
        %1839 = vmatpush1.msra.mxu0 0.0
        %1840 = vmatprep.subr.mxu0 0.0
        %1841 = vmatpush1.msra.mxu0 0.0
        %1842 = vmatprep.subr.mxu0 0.0
        %1843 = vmatpush1.msra.mxu0 0.0
        %1844 = vmatprep.subr.mxu0 0.0
        %1845 = vmatpush1.msra.mxu0 0.0
        %1846 = vmatprep.subr.mxu0 0.0
        %1847 = vmatpush1.msra.mxu0 0.0
        %1848 = vmatprep.subr.mxu0 0.0
        %1849 = vmatpush1.msra.mxu0 0.0
        %1850 = vmatprep.subr.mxu0 0.0
        %1851 = vmatpush1.msra.mxu0 0.0
        %1852 = vmatprep.subr.mxu0 0.0
        %1853 = vmatpush1.msra.mxu0 0.0
        %1854 = vmatprep.subr.mxu0 0.0
        %1855 = vmatpush1.msra.mxu0 0.0
        %1856 = vmatprep.subr.mxu0 0.0
        %1857 = vmatpush1.msra.mxu0 0.0
        %1858 = vmatprep.subr.mxu0 0.0
        %1859 = vmatpush1.msra.mxu0 0.0
        %1860 = vmatprep.subr.mxu0 0.0
        %1861 = vmatpush1.msra.mxu0 0.0
        %1862 = vmatprep.subr.mxu0 0.0
        %1863 = vmatpush1.msra.mxu0 0.0
        %1864 = vmatprep.subr.mxu0 0.0
        %1865 = vmatpush1.msra.mxu0 0.0
        %1866 = vmatprep.subr.mxu0 0.0
        %1867 = vmatpush1.msra.mxu0 0.0
        %1868 = vmatprep.subr.mxu0 0.0
        %1869 = vmatpush1.msra.mxu0 0.0
        %1870 = vmatprep.subr.mxu0 0.0
        %1871 = vmatpush1.msra.mxu0 0.0
        %1872 = vmatprep.subr.mxu0 0.0
        %1873 = vmatpush1.msra.mxu0 0.0
        %1874 = vmatprep.subr.mxu0 0.0
        %1875 = vmatpush1.msra.mxu0 0.0
        %1876 = vmatprep.subr.mxu0 0.0
        %1877 = vmatpush1.msra.mxu0 0.0
        %1878 = vmatprep.subr.mxu0 0.0
        %1879 = vmatpush1.msra.mxu0 0.0
        %1880 = vmatprep.subr.mxu0 0.0
        %1881 = vmatpush1.msra.mxu0 0.0
        %1882 = vmatprep.subr.mxu0 0.0
        %1883 = vmatpush1.msra.mxu0 0.0
        %1884 = vmatprep.subr.mxu0 0.0
        %1885 = vmatpush1.msra.mxu0 0.0
        %1886 = vmatprep.subr.mxu0 0.0
        %1887 = vmatpush1.msra.mxu0 0.0
        %1888 = vmatprep.subr.mxu0 0.0
        %1889 = vmatpush1.msra.mxu0 0.0
        %1890 = vmatprep.mubr.f32.mxu0 0.0
        %1891 = vmatmul.mubr.f32.gmra.mrb[0].mxu0 %v1744
        %v1892 = vpop.f32.mrb[0].mxu0
        %v1893 = vadd.f32 0.0, %v1892
        %v1894 = vpop.f32.mrb[0].mxu0
        %v1895 = vadd.f32 0.0, %v1894
        %1896 = vmatprep.mubr.f32.mxu0 0.0
        %1897 = vmatmul.mubr.f32.gmra.mrb[0].mxu0 %v1747
        %v1898 = vpop.f32.mrb[0].mxu0
        %v1899 = vadd.f32 0.0, %v1898
        %v1900 = vpop.f32.mrb[0].mxu0
        %v1901 = vadd.f32 0.0, %v1900
        %1902 = vdwg.mxu0
        %s1903 = scalar_lea.vmem %s1, 32
        %v1904 = vld [vmem:[%s1903] sm:$0xff]
        %v1905 = vld [vmem:[%s1903 + $0x8] sm:$0xff]
        %s1906 = scalar_lea.vmem %s1, 80
        %v1907 = vld [vmem:[%s1906] sm:$0xff]
        %v1908 = vld [vmem:[%s1906 + $0x8] sm:$0xff]
        %v1909 = vadd.f32 %v1816, %v1818
        %v1910 = vadd.f32 %v1909, %v1893
        %v1911 = vadd.f32 %v1910, %v1895
        %1912 = vadd.xlane.f32.xlu0 %v1911
        %v1913 = vpop.xlane.xlu0 %1912
        %v1914 = vadd.f32 %v1822, %v1824
        %v1915 = vadd.f32 %v1914, %v1899
        %v1916 = vadd.f32 %v1915, %v1901
        %1917 = vadd.xlane.f32.xlu0 %v1916
        %v1918 = vpop.xlane.xlu0 %1917
        %v1919 = vrcp.pop 512.0
        %v1920 = vmul.f32 %v1913, %v1919
        %v1921 = vmul.f32 %v1918, %v1919
        %v1922 = vsub.f32 %v1816, %v1920
        %v1923 = vsub.f32 %v1818, %v1920
        %v1924 = vsub.f32 %v1893, %v1920
        %v1925 = vsub.f32 %v1895, %v1920
        %v1926 = vsub.f32 %v1822, %v1921
        %v1927 = vsub.f32 %v1824, %v1921
        %v1928 = vsub.f32 %v1899, %v1921
        %v1929 = vsub.f32 %v1901, %v1921
        %v1930 = vmul.f32 %v1922, %v1922
        %v1931 = vmul.f32 %v1923, %v1923
        %v1932 = vmul.f32 %v1924, %v1924
        %v1933 = vmul.f32 %v1925, %v1925
        %v1934 = vmul.f32 %v1926, %v1926
        %v1935 = vmul.f32 %v1927, %v1927
        %v1936 = vmul.f32 %v1928, %v1928
        %v1937 = vmul.f32 %v1929, %v1929
        %v1938 = vadd.f32 %v1930, %v1931
        %v1939 = vadd.f32 %v1938, %v1932
        %v1940 = vadd.f32 %v1939, %v1933
        %1941 = vadd.xlane.f32.xlu0 %v1940
        %v1942 = vpop.xlane.xlu0 %1941
        %v1943 = vadd.f32 %v1934, %v1935
        %v1944 = vadd.f32 %v1943, %v1936
        %v1945 = vadd.f32 %v1944, %v1937
        %1946 = vadd.xlane.f32.xlu0 %v1945
        %v1947 = vpop.xlane.xlu0 %1946
        %v1948 = vmul.f32 %v1942, %v1919
        %v1949 = vmul.f32 %v1947, %v1919
        %v1950 = vadd.f32 %v1948, 1e-05
        %v1951 = vadd.f32 %v1949, 1e-05
        %v1952 = vrsqrt.pop %v1950
        %v1953 = vrsqrt.pop %v1951
        %v1954 = vmul.f32 %v1922, %v1952
        %v1955 = vmul.f32 %v1923, %v1952
        %v1956 = vmul.f32 %v1924, %v1952
        %v1957 = vmul.f32 %v1925, %v1952
        %v1958 = vmul.f32 %v1926, %v1953
        %v1959 = vmul.f32 %v1927, %v1953
        %v1960 = vmul.f32 %v1928, %v1953
        %v1961 = vmul.f32 %v1929, %v1953
        %1963 = vset.pattern.permute.xlu0 0
        %1964 = vperm.xlu0 %1963, %v1904
        %v1965 = vpop.permute.xlu0 %1964
        %1968 = vset.pattern.permute.xlu0 0
        %1969 = vperm.xlu0 %1968, %v1905
        %v1970 = vpop.permute.xlu0 %1969
        %v1972 = vmul.f32 %v1954, %v1965
        %v1973 = vmul.f32 %v1955, %v1965
        %v1974 = vmul.f32 %v1956, %v1965
        %v1975 = vmul.f32 %v1957, %v1965
        %v1976 = vmul.f32 %v1958, %v1970
        %v1977 = vmul.f32 %v1959, %v1970
        %v1978 = vmul.f32 %v1960, %v1970
        %v1979 = vmul.f32 %v1961, %v1970
        %1981 = vset.pattern.permute.xlu0 0
        %1982 = vperm.xlu0 %1981, %v1907
        %v1983 = vpop.permute.xlu0 %1982
        %1986 = vset.pattern.permute.xlu0 0
        %1987 = vperm.xlu0 %1986, %v1908
        %v1988 = vpop.permute.xlu0 %1987
        %v1990 = vadd.f32 %v1972, %v1983
        %v1991 = vadd.f32 %v1973, %v1983
        %v1992 = vadd.f32 %v1974, %v1983
        %v1993 = vadd.f32 %v1975, %v1983
        %v1994 = vadd.f32 %v1976, %v1988
        %v1995 = vadd.f32 %v1977, %v1988
        %v1996 = vadd.f32 %v1978, %v1988
        %v1997 = vadd.f32 %v1979, %v1988
        %v1998 = vmax.f32 %v1990, %v1994
        %v1999 = vrot.slane %v1998, 4
        %v2000 = vmax.f32 %v1998, %v1999
        %v2001 = vrot.slane %v2000, 2
        %v2002 = vmax.f32 %v2000, %v2001
        %v2003 = vrot.slane %v2002, 1
        %v2004 = vmax.f32 %v2002, %v2003
        %v2005 = vmax.f32 %v1991, %v1995
        %v2006 = vrot.slane %v2005, 4
        %v2007 = vmax.f32 %v2005, %v2006
        %v2008 = vrot.slane %v2007, 2
        %v2009 = vmax.f32 %v2007, %v2008
        %v2010 = vrot.slane %v2009, 1
        %v2011 = vmax.f32 %v2009, %v2010
        %v2012 = vmax.f32 %v1992, %v1996
        %v2013 = vrot.slane %v2012, 4
        %v2014 = vmax.f32 %v2012, %v2013
        %v2015 = vrot.slane %v2014, 2
        %v2016 = vmax.f32 %v2014, %v2015
        %v2017 = vrot.slane %v2016, 1
        %v2018 = vmax.f32 %v2016, %v2017
        %v2019 = vmax.f32 %v1993, %v1997
        %v2020 = vrot.slane %v2019, 4
        %v2021 = vmax.f32 %v2019, %v2020
        %v2022 = vrot.slane %v2021, 2
        %v2023 = vmax.f32 %v2021, %v2022
        %v2024 = vrot.slane %v2023, 1
        %v2025 = vmax.f32 %v2023, %v2024
        %v2026 = vsub.f32 %v1990, %v2004
        %v2027 = vsub.f32 %v1991, %v2011
        %v2028 = vsub.f32 %v1992, %v2018
        %v2029 = vsub.f32 %v1993, %v2025
        %v2030 = vsub.f32 %v1994, %v2004
        %v2031 = vsub.f32 %v1995, %v2011
        %v2032 = vsub.f32 %v1996, %v2018
        %v2033 = vsub.f32 %v1997, %v2025
        %v2034 = vmul.f32 %v2026, 1.442695
        %v2035 = vpow.pop %v2034
        %v2036 = vmul.f32 %v2027, 1.442695
        %v2037 = vpow.pop %v2036
        %v2038 = vmul.f32 %v2028, 1.442695
        %v2039 = vpow.pop %v2038
        %v2040 = vmul.f32 %v2029, 1.442695
        %v2041 = vpow.pop %v2040
        %v2042 = vmul.f32 %v2030, 1.442695
        %v2043 = vpow.pop %v2042
        %v2044 = vmul.f32 %v2031, 1.442695
        %v2045 = vpow.pop %v2044
        %v2046 = vmul.f32 %v2032, 1.442695
        %v2047 = vpow.pop %v2046
        %v2048 = vmul.f32 %v2033, 1.442695
        %v2049 = vpow.pop %v2048
        %v2050 = vadd.f32 %v2035, %v2043
        %v2051 = vrot.slane %v2050, 4
        %v2052 = vadd.f32 %v2050, %v2051
        %v2053 = vrot.slane %v2052, 2
        %v2054 = vadd.f32 %v2052, %v2053
        %v2055 = vrot.slane %v2054, 1
        %v2056 = vadd.f32 %v2054, %v2055
        %v2057 = vadd.f32 %v2037, %v2045
        %v2058 = vrot.slane %v2057, 4
        %v2059 = vadd.f32 %v2057, %v2058
        %v2060 = vrot.slane %v2059, 2
        %v2061 = vadd.f32 %v2059, %v2060
        %v2062 = vrot.slane %v2061, 1
        %v2063 = vadd.f32 %v2061, %v2062
        %v2064 = vadd.f32 %v2039, %v2047
        %v2065 = vrot.slane %v2064, 4
        %v2066 = vadd.f32 %v2064, %v2065
        %v2067 = vrot.slane %v2066, 2
        %v2068 = vadd.f32 %v2066, %v2067
        %v2069 = vrot.slane %v2068, 1
        %v2070 = vadd.f32 %v2068, %v2069
        %v2071 = vadd.f32 %v2041, %v2049
        %v2072 = vrot.slane %v2071, 4
        %v2073 = vadd.f32 %v2071, %v2072
        %v2074 = vrot.slane %v2073, 2
        %v2075 = vadd.f32 %v2073, %v2074
        %v2076 = vrot.slane %v2075, 1
        %v2077 = vadd.f32 %v2075, %v2076
        %v2078 = vrcp.pop %v2056
        %v2079 = vrcp.pop %v2063
        %v2080 = vrcp.pop %v2070
        %v2081 = vrcp.pop %v2077
        %v2082 = vmul.f32 %v2035, %v2078
        %v2083 = vmul.f32 %v2037, %v2079
        %v2084 = vmul.f32 %v2039, %v2080
        %v2085 = vmul.f32 %v2041, %v2081
        %v2086 = vmul.f32 %v2043, %v2078
        %v2087 = vmul.f32 %v2045, %v2079
        %v2088 = vmul.f32 %v2047, %v2080
        %v2089 = vmul.f32 %v2049, %v2081
        %v2090 = vmul.f32 %v2082, %v354
        %v2091 = vmul.f32 %v2083, %v355
        %v2092 = vmul.f32 %v2084, %v356
        %v2093 = vmul.f32 %v2085, %v357
        %v2094 = vmul.f32 %v2086, %v358
        %v2095 = vmul.f32 %v2087, %v359
        %v2096 = vmul.f32 %v2088, %v360
        %v2097 = vmul.f32 %v2089, %v361
        %2098 = vmatprep.subr.mxu0 %v2091
        %2099 = vmatpush1.msra.mxu0 %v2090
        %2100 = vmatprep.subr.mxu0 %v2095
        %2101 = vmatpush1.msra.mxu0 %v2094
        %2102 = vmatprep.subr.mxu0 0.0
        %2103 = vmatpush1.msra.mxu0 0.0
        %2104 = vmatprep.subr.mxu0 0.0
        %2105 = vmatpush1.msra.mxu0 0.0
        %2106 = vmatprep.subr.mxu0 0.0
        %2107 = vmatpush1.msra.mxu0 0.0
        %2108 = vmatprep.subr.mxu0 0.0
        %2109 = vmatpush1.msra.mxu0 0.0
        %2110 = vmatprep.subr.mxu0 0.0
        %2111 = vmatpush1.msra.mxu0 0.0
        %2112 = vmatprep.subr.mxu0 0.0
        %2113 = vmatpush1.msra.mxu0 0.0
        %2114 = vmatprep.subr.mxu0 0.0
        %2115 = vmatpush1.msra.mxu0 0.0
        %2116 = vmatprep.subr.mxu0 0.0
        %2117 = vmatpush1.msra.mxu0 0.0
        %2118 = vmatprep.subr.mxu0 0.0
        %2119 = vmatpush1.msra.mxu0 0.0
        %2120 = vmatprep.subr.mxu0 0.0
        %2121 = vmatpush1.msra.mxu0 0.0
        %2122 = vmatprep.subr.mxu0 0.0
        %2123 = vmatpush1.msra.mxu0 0.0
        %2124 = vmatprep.subr.mxu0 0.0
        %2125 = vmatpush1.msra.mxu0 0.0
        %2126 = vmatprep.subr.mxu0 0.0
        %2127 = vmatpush1.msra.mxu0 0.0
        %2128 = vmatprep.subr.mxu0 0.0
        %2129 = vmatpush1.msra.mxu0 0.0
        %2130 = vmatprep.subr.mxu0 0.0
        %2131 = vmatpush1.msra.mxu0 0.0
        %2132 = vmatprep.subr.mxu0 0.0
        %2133 = vmatpush1.msra.mxu0 0.0
        %2134 = vmatprep.subr.mxu0 0.0
        %2135 = vmatpush1.msra.mxu0 0.0
        %2136 = vmatprep.subr.mxu0 0.0
        %2137 = vmatpush1.msra.mxu0 0.0
        %2138 = vmatprep.subr.mxu0 0.0
        %2139 = vmatpush1.msra.mxu0 0.0
        %2140 = vmatprep.subr.mxu0 0.0
        %2141 = vmatpush1.msra.mxu0 0.0
        %2142 = vmatprep.subr.mxu0 0.0
        %2143 = vmatpush1.msra.mxu0 0.0
        %2144 = vmatprep.subr.mxu0 0.0
        %2145 = vmatpush1.msra.mxu0 0.0
        %2146 = vmatprep.subr.mxu0 0.0
        %2147 = vmatpush1.msra.mxu0 0.0
        %2148 = vmatprep.subr.mxu0 0.0
        %2149 = vmatpush1.msra.mxu0 0.0
        %2150 = vmatprep.subr.mxu0 0.0
        %2151 = vmatpush1.msra.mxu0 0.0
        %2152 = vmatprep.subr.mxu0 0.0
        %2153 = vmatpush1.msra.mxu0 0.0
        %2154 = vmatprep.subr.mxu0 0.0
        %2155 = vmatpush1.msra.mxu0 0.0
        %2156 = vmatprep.subr.mxu0 0.0
        %2157 = vmatpush1.msra.mxu0 0.0
        %2158 = vmatprep.subr.mxu0 0.0
        %2159 = vmatpush1.msra.mxu0 0.0
        %2160 = vmatprep.subr.mxu0 0.0
        %2161 = vmatpush1.msra.mxu0 0.0
        %2162 = vmatprep.mubr.f32.mxu0 0.0
        %2163 = vmatmul.mubr.f32.gmra.mrb[0].mxu0 %v380
        %v2164 = vpop.f32.mrb[0].mxu0
        %v2165 = vadd.f32 0.0, %v2164
        %v2166 = vpop.f32.mrb[0].mxu0
        %v2167 = vadd.f32 0.0, %v2166
        %2168 = vmatprep.mubr.f32.mxu0 0.0
        %2169 = vmatmul.mubr.f32.gmra.mrb[0].mxu0 %v383
        %v2170 = vpop.f32.mrb[0].mxu0
        %v2171 = vadd.f32 0.0, %v2170
        %v2172 = vpop.f32.mrb[0].mxu0
        %v2173 = vadd.f32 0.0, %v2172
        %2174 = vmatprep.mubr.f32.mxu0 0.0
        %2175 = vmatmul.mubr.f32.gmra.mrb[0].mxu0 %v386
        %v2176 = vpop.f32.mrb[0].mxu0
        %v2177 = vadd.f32 0.0, %v2176
        %v2178 = vpop.f32.mrb[0].mxu0
        %v2179 = vadd.f32 0.0, %v2178
        %2180 = vmatprep.mubr.f32.mxu0 0.0
        %2181 = vmatmul.mubr.f32.gmra.mrb[0].mxu0 %v389
        %v2182 = vpop.f32.mrb[0].mxu0
        %v2183 = vadd.f32 0.0, %v2182
        %v2184 = vpop.f32.mrb[0].mxu0
        %v2185 = vadd.f32 0.0, %v2184
        %2186 = vmatprep.mubr.f32.mxu0 0.0
        %2187 = vmatmul.mubr.f32.gmra.mrb[0].mxu0 %v392
        %v2188 = vpop.f32.mrb[0].mxu0
        %v2189 = vadd.f32 0.0, %v2188
        %v2190 = vpop.f32.mrb[0].mxu0
        %v2191 = vadd.f32 0.0, %v2190
        %2192 = vmatprep.mubr.f32.mxu0 0.0
        %2193 = vmatmul.mubr.f32.gmra.mrb[0].mxu0 %v395
        %v2194 = vpop.f32.mrb[0].mxu0
        %v2195 = vadd.f32 0.0, %v2194
        %v2196 = vpop.f32.mrb[0].mxu0
        %v2197 = vadd.f32 0.0, %v2196
        %2198 = vmatprep.mubr.f32.mxu0 0.0
        %2199 = vmatmul.mubr.f32.gmra.mrb[0].mxu0 %v398
        %v2200 = vpop.f32.mrb[0].mxu0
        %v2201 = vadd.f32 0.0, %v2200
        %v2202 = vpop.f32.mrb[0].mxu0
        %v2203 = vadd.f32 0.0, %v2202
        %2204 = vmatprep.mubr.f32.mxu0 0.0
        %2205 = vmatmul.mubr.f32.gmra.mrb[0].mxu0 %v401
        %v2206 = vpop.f32.mrb[0].mxu0
        %v2207 = vadd.f32 0.0, %v2206
        %v2208 = vpop.f32.mrb[0].mxu0
        %v2209 = vadd.f32 0.0, %v2208
        %2210 = vdwg.mxu0
        %2211 = vmatprep.subr.mxu0 %v2093
        %2212 = vmatpush1.msra.mxu0 %v2092
        %2213 = vmatprep.subr.mxu0 %v2097
        %2214 = vmatpush1.msra.mxu0 %v2096
        %2215 = vmatprep.subr.mxu0 0.0
        %2216 = vmatpush1.msra.mxu0 0.0
        %2217 = vmatprep.subr.mxu0 0.0
        %2218 = vmatpush1.msra.mxu0 0.0
        %2219 = vmatprep.subr.mxu0 0.0
        %2220 = vmatpush1.msra.mxu0 0.0
        %2221 = vmatprep.subr.mxu0 0.0
        %2222 = vmatpush1.msra.mxu0 0.0
        %2223 = vmatprep.subr.mxu0 0.0
        %2224 = vmatpush1.msra.mxu0 0.0
        %2225 = vmatprep.subr.mxu0 0.0
        %2226 = vmatpush1.msra.mxu0 0.0
        %2227 = vmatprep.subr.mxu0 0.0
        %2228 = vmatpush1.msra.mxu0 0.0
        %2229 = vmatprep.subr.mxu0 0.0
        %2230 = vmatpush1.msra.mxu0 0.0
        %2231 = vmatprep.subr.mxu0 0.0
        %2232 = vmatpush1.msra.mxu0 0.0
        %2233 = vmatprep.subr.mxu0 0.0
        %2234 = vmatpush1.msra.mxu0 0.0
        %2235 = vmatprep.subr.mxu0 0.0
        %2236 = vmatpush1.msra.mxu0 0.0
        %2237 = vmatprep.subr.mxu0 0.0
        %2238 = vmatpush1.msra.mxu0 0.0
        %2239 = vmatprep.subr.mxu0 0.0
        %2240 = vmatpush1.msra.mxu0 0.0
        %2241 = vmatprep.subr.mxu0 0.0
        %2242 = vmatpush1.msra.mxu0 0.0
        %2243 = vmatprep.subr.mxu0 0.0
        %2244 = vmatpush1.msra.mxu0 0.0
        %2245 = vmatprep.subr.mxu0 0.0
        %2246 = vmatpush1.msra.mxu0 0.0
        %2247 = vmatprep.subr.mxu0 0.0
        %2248 = vmatpush1.msra.mxu0 0.0
        %2249 = vmatprep.subr.mxu0 0.0
        %2250 = vmatpush1.msra.mxu0 0.0
        %2251 = vmatprep.subr.mxu0 0.0
        %2252 = vmatpush1.msra.mxu0 0.0
        %2253 = vmatprep.subr.mxu0 0.0
        %2254 = vmatpush1.msra.mxu0 0.0
        %2255 = vmatprep.subr.mxu0 0.0
        %2256 = vmatpush1.msra.mxu0 0.0
        %2257 = vmatprep.subr.mxu0 0.0
        %2258 = vmatpush1.msra.mxu0 0.0
        %2259 = vmatprep.subr.mxu0 0.0
        %2260 = vmatpush1.msra.mxu0 0.0
        %2261 = vmatprep.subr.mxu0 0.0
        %2262 = vmatpush1.msra.mxu0 0.0
        %2263 = vmatprep.subr.mxu0 0.0
        %2264 = vmatpush1.msra.mxu0 0.0
        %2265 = vmatprep.subr.mxu0 0.0
        %2266 = vmatpush1.msra.mxu0 0.0
        %2267 = vmatprep.subr.mxu0 0.0
        %2268 = vmatpush1.msra.mxu0 0.0
        %2269 = vmatprep.subr.mxu0 0.0
        %2270 = vmatpush1.msra.mxu0 0.0
        %2271 = vmatprep.subr.mxu0 0.0
        %2272 = vmatpush1.msra.mxu0 0.0
        %2273 = vmatprep.subr.mxu0 0.0
        %2274 = vmatpush1.msra.mxu0 0.0
        %2275 = vmatprep.mubr.f32.mxu0 0.0
        %2276 = vmatmul.mubr.f32.gmra.mrb[0].mxu0 %v380
        %v2277 = vpop.f32.mrb[0].mxu0
        %v2278 = vadd.f32 0.0, %v2277
        %v2279 = vpop.f32.mrb[0].mxu0
        %v2280 = vadd.f32 0.0, %v2279
        %2281 = vmatprep.mubr.f32.mxu0 0.0
        %2282 = vmatmul.mubr.f32.gmra.mrb[0].mxu0 %v383
        %v2283 = vpop.f32.mrb[0].mxu0
        %v2284 = vadd.f32 0.0, %v2283
        %v2285 = vpop.f32.mrb[0].mxu0
        %v2286 = vadd.f32 0.0, %v2285
        %2287 = vmatprep.mubr.f32.mxu0 0.0
        %2288 = vmatmul.mubr.f32.gmra.mrb[0].mxu0 %v386
        %v2289 = vpop.f32.mrb[0].mxu0
        %v2290 = vadd.f32 0.0, %v2289
        %v2291 = vpop.f32.mrb[0].mxu0
        %v2292 = vadd.f32 0.0, %v2291
        %2293 = vmatprep.mubr.f32.mxu0 0.0
        %2294 = vmatmul.mubr.f32.gmra.mrb[0].mxu0 %v389
        %v2295 = vpop.f32.mrb[0].mxu0
        %v2296 = vadd.f32 0.0, %v2295
        %v2297 = vpop.f32.mrb[0].mxu0
        %v2298 = vadd.f32 0.0, %v2297
        %2299 = vmatprep.mubr.f32.mxu0 0.0
        %2300 = vmatmul.mubr.f32.gmra.mrb[0].mxu0 %v392
        %v2301 = vpop.f32.mrb[0].mxu0
        %v2302 = vadd.f32 0.0, %v2301
        %v2303 = vpop.f32.mrb[0].mxu0
        %v2304 = vadd.f32 0.0, %v2303
        %2305 = vmatprep.mubr.f32.mxu0 0.0
        %2306 = vmatmul.mubr.f32.gmra.mrb[0].mxu0 %v395
        %v2307 = vpop.f32.mrb[0].mxu0
        %v2308 = vadd.f32 0.0, %v2307
        %v2309 = vpop.f32.mrb[0].mxu0
        %v2310 = vadd.f32 0.0, %v2309
        %2311 = vmatprep.mubr.f32.mxu0 0.0
        %2312 = vmatmul.mubr.f32.gmra.mrb[0].mxu0 %v398
        %v2313 = vpop.f32.mrb[0].mxu0
        %v2314 = vadd.f32 0.0, %v2313
        %v2315 = vpop.f32.mrb[0].mxu0
        %v2316 = vadd.f32 0.0, %v2315
        %2317 = vmatprep.mubr.f32.mxu0 0.0
        %2318 = vmatmul.mubr.f32.gmra.mrb[0].mxu0 %v401
        %v2319 = vpop.f32.mrb[0].mxu0
        %v2320 = vadd.f32 0.0, %v2319
        %v2321 = vpop.f32.mrb[0].mxu0
        %v2322 = vadd.f32 0.0, %v2321
        %2323 = vdwg.mxu0
        %v2324 = vmul.f32 %v2189, 0.5
        %v2325 = vmul.f32 %v2191, 0.5
        %v2326 = vmul.f32 %v2302, 0.5
        %v2327 = vmul.f32 %v2304, 0.5
        %v2328 = vmul.f32 %v2195, 0.5
        %v2329 = vmul.f32 %v2197, 0.5
        %v2330 = vmul.f32 %v2308, 0.5
        %v2331 = vmul.f32 %v2310, 0.5
        %v2332 = vmul.f32 %v2201, 0.5
        %v2333 = vmul.f32 %v2203, 0.5
        %v2334 = vmul.f32 %v2314, 0.5
        %v2335 = vmul.f32 %v2316, 0.5
        %v2336 = vmul.f32 %v2207, 0.5
        %v2337 = vmul.f32 %v2209, 0.5
        %v2338 = vmul.f32 %v2320, 0.5
        %v2339 = vmul.f32 %v2322, 0.5
        %v2340 = vtanh.pop %v2324
        %v2341 = vtanh.pop %v2325
        %v2342 = vtanh.pop %v2326
        %v2343 = vtanh.pop %v2327
        %v2344 = vtanh.pop %v2328
        %v2345 = vtanh.pop %v2329
        %v2346 = vtanh.pop %v2330
        %v2347 = vtanh.pop %v2331
        %v2348 = vtanh.pop %v2332
        %v2349 = vtanh.pop %v2333
        %v2350 = vtanh.pop %v2334
        %v2351 = vtanh.pop %v2335
        %v2352 = vtanh.pop %v2336
        %v2353 = vtanh.pop %v2337
        %v2354 = vtanh.pop %v2338
        %v2355 = vtanh.pop %v2339
        %v2356 = vmul.f32 %v2340, 0.5
        %v2357 = vmul.f32 %v2341, 0.5
        %v2358 = vmul.f32 %v2342, 0.5
        %v2359 = vmul.f32 %v2343, 0.5
        %v2360 = vmul.f32 %v2344, 0.5
        %v2361 = vmul.f32 %v2345, 0.5
        %v2362 = vmul.f32 %v2346, 0.5
        %v2363 = vmul.f32 %v2347, 0.5
        %v2364 = vmul.f32 %v2348, 0.5
        %v2365 = vmul.f32 %v2349, 0.5
        %v2366 = vmul.f32 %v2350, 0.5
        %v2367 = vmul.f32 %v2351, 0.5
        %v2368 = vmul.f32 %v2352, 0.5
        %v2369 = vmul.f32 %v2353, 0.5
        %v2370 = vmul.f32 %v2354, 0.5
        %v2371 = vmul.f32 %v2355, 0.5
        %v2372 = vadd.f32 %v2356, 0.5
        %v2373 = vadd.f32 %v2357, 0.5
        %v2374 = vadd.f32 %v2358, 0.5
        %v2375 = vadd.f32 %v2359, 0.5
        %v2376 = vadd.f32 %v2360, 0.5
        %v2377 = vadd.f32 %v2361, 0.5
        %v2378 = vadd.f32 %v2362, 0.5
        %v2379 = vadd.f32 %v2363, 0.5
        %v2380 = vadd.f32 %v2364, 0.5
        %v2381 = vadd.f32 %v2365, 0.5
        %v2382 = vadd.f32 %v2366, 0.5
        %v2383 = vadd.f32 %v2367, 0.5
        %v2384 = vadd.f32 %v2368, 0.5
        %v2385 = vadd.f32 %v2369, 0.5
        %v2386 = vadd.f32 %v2370, 0.5
        %v2387 = vadd.f32 %v2371, 0.5
        %v2388 = vmul.f32 %v2165, %v2372
        %v2389 = vmul.f32 %v2167, %v2373
        %v2390 = vmul.f32 %v2278, %v2374
        %v2391 = vmul.f32 %v2280, %v2375
        %v2392 = vmul.f32 %v2171, %v2376
        %v2393 = vmul.f32 %v2173, %v2377
        %v2394 = vmul.f32 %v2284, %v2378
        %v2395 = vmul.f32 %v2286, %v2379
        %v2396 = vmul.f32 %v2177, %v2380
        %v2397 = vmul.f32 %v2179, %v2381
        %v2398 = vmul.f32 %v2290, %v2382
        %v2399 = vmul.f32 %v2292, %v2383
        %v2400 = vmul.f32 %v2183, %v2384
        %v2401 = vmul.f32 %v2185, %v2385
        %v2402 = vmul.f32 %v2296, %v2386
        %v2403 = vmul.f32 %v2298, %v2387
        %v2404 = vmul.f32 %v2388, 0.70710677
        %v2405 = vmul.f32 %v2389, 0.70710677
        %v2406 = vmul.f32 %v2390, 0.70710677
        %v2407 = vmul.f32 %v2391, 0.70710677
        %v2408 = vmul.f32 %v2392, 0.70710677
        %v2409 = vmul.f32 %v2393, 0.70710677
        %v2410 = vmul.f32 %v2394, 0.70710677
        %v2411 = vmul.f32 %v2395, 0.70710677
        %v2412 = vmul.f32 %v2396, 0.70710677
        %v2413 = vmul.f32 %v2397, 0.70710677
        %v2414 = vmul.f32 %v2398, 0.70710677
        %v2415 = vmul.f32 %v2399, 0.70710677
        %v2416 = vmul.f32 %v2400, 0.70710677
        %v2417 = vmul.f32 %v2401, 0.70710677
        %v2418 = vmul.f32 %v2402, 0.70710677
        %v2419 = vmul.f32 %v2403, 0.70710677
        %2420 = vmatprep.subr.mxu0 %v2389
        %2421 = vmatpush1.msra.mxu0 %v2388
        %2422 = vmatprep.subr.mxu0 %v2393
        %2423 = vmatpush1.msra.mxu0 %v2392
        %2424 = vmatprep.subr.mxu0 %v2397
        %2425 = vmatpush1.msra.mxu0 %v2396
        %2426 = vmatprep.subr.mxu0 %v2401
        %2427 = vmatpush1.msra.mxu0 %v2400
        %2428 = vmatprep.subr.mxu0 0.0
        %2429 = vmatpush1.msra.mxu0 0.0
        %2430 = vmatprep.subr.mxu0 0.0
        %2431 = vmatpush1.msra.mxu0 0.0
        %2432 = vmatprep.subr.mxu0 0.0
        %2433 = vmatpush1.msra.mxu0 0.0
        %2434 = vmatprep.subr.mxu0 0.0
        %2435 = vmatpush1.msra.mxu0 0.0
        %2436 = vmatprep.subr.mxu0 0.0
        %2437 = vmatpush1.msra.mxu0 0.0
        %2438 = vmatprep.subr.mxu0 0.0
        %2439 = vmatpush1.msra.mxu0 0.0
        %2440 = vmatprep.subr.mxu0 0.0
        %2441 = vmatpush1.msra.mxu0 0.0
        %2442 = vmatprep.subr.mxu0 0.0
        %2443 = vmatpush1.msra.mxu0 0.0
        %2444 = vmatprep.subr.mxu0 0.0
        %2445 = vmatpush1.msra.mxu0 0.0
        %2446 = vmatprep.subr.mxu0 0.0
        %2447 = vmatpush1.msra.mxu0 0.0
        %2448 = vmatprep.subr.mxu0 0.0
        %2449 = vmatpush1.msra.mxu0 0.0
        %2450 = vmatprep.subr.mxu0 0.0
        %2451 = vmatpush1.msra.mxu0 0.0
        %2452 = vmatprep.subr.mxu0 0.0
        %2453 = vmatpush1.msra.mxu0 0.0
        %2454 = vmatprep.subr.mxu0 0.0
        %2455 = vmatpush1.msra.mxu0 0.0
        %2456 = vmatprep.subr.mxu0 0.0
        %2457 = vmatpush1.msra.mxu0 0.0
        %2458 = vmatprep.subr.mxu0 0.0
        %2459 = vmatpush1.msra.mxu0 0.0
        %2460 = vmatprep.subr.mxu0 0.0
        %2461 = vmatpush1.msra.mxu0 0.0
        %2462 = vmatprep.subr.mxu0 0.0
        %2463 = vmatpush1.msra.mxu0 0.0
        %2464 = vmatprep.subr.mxu0 0.0
        %2465 = vmatpush1.msra.mxu0 0.0
        %2466 = vmatprep.subr.mxu0 0.0
        %2467 = vmatpush1.msra.mxu0 0.0
        %2468 = vmatprep.subr.mxu0 0.0
        %2469 = vmatpush1.msra.mxu0 0.0
        %2470 = vmatprep.subr.mxu0 0.0
        %2471 = vmatpush1.msra.mxu0 0.0
        %2472 = vmatprep.subr.mxu0 0.0
        %2473 = vmatpush1.msra.mxu0 0.0
        %2474 = vmatprep.subr.mxu0 0.0
        %2475 = vmatpush1.msra.mxu0 0.0
        %2476 = vmatprep.subr.mxu0 0.0
        %2477 = vmatpush1.msra.mxu0 0.0
        %2478 = vmatprep.subr.mxu0 0.0
        %2479 = vmatpush1.msra.mxu0 0.0
        %2480 = vmatprep.subr.mxu0 0.0
        %2481 = vmatpush1.msra.mxu0 0.0
        %2482 = vmatprep.subr.mxu0 0.0
        %2483 = vmatpush1.msra.mxu0 0.0
        %2484 = vmatprep.mubr.f32.mxu0 0.0
        %2485 = vmatmul.mubr.f32.gmra.mrb[0].mxu0 %v727
        %v2486 = vpop.f32.mrb[0].mxu0
        %v2487 = vadd.f32 0.0, %v2486
        %v2488 = vpop.f32.mrb[0].mxu0
        %v2489 = vadd.f32 0.0, %v2488
        %2490 = vmatprep.mubr.f32.mxu0 0.0
        %2491 = vmatmul.mubr.f32.gmra.mrb[0].mxu0 %v730
        %v2492 = vpop.f32.mrb[0].mxu0
        %v2493 = vadd.f32 0.0, %v2492
        %v2494 = vpop.f32.mrb[0].mxu0
        %v2495 = vadd.f32 0.0, %v2494
        %2496 = vmatprep.mubr.f32.mxu0 0.0
        %2497 = vmatmul.mubr.f32.gmra.mrb[0].mxu0 %v733
        %v2498 = vpop.f32.mrb[0].mxu0
        %v2499 = vadd.f32 0.0, %v2498
        %v2500 = vpop.f32.mrb[0].mxu0
        %v2501 = vadd.f32 0.0, %v2500
        %2502 = vmatprep.mubr.f32.mxu0 0.0
        %2503 = vmatmul.mubr.f32.gmra.mrb[0].mxu0 %v736
        %v2504 = vpop.f32.mrb[0].mxu0
        %v2505 = vadd.f32 0.0, %v2504
        %v2506 = vpop.f32.mrb[0].mxu0
        %v2507 = vadd.f32 0.0, %v2506
        %2508 = vmatprep.mubr.f32.mxu0 0.0
        %2509 = vmatmul.mubr.f32.gmra.mrb[0].mxu0 %v739
        %v2510 = vpop.f32.mrb[0].mxu0
        %v2511 = vadd.f32 0.0, %v2510
        %v2512 = vpop.f32.mrb[0].mxu0
        %v2513 = vadd.f32 0.0, %v2512
        %2514 = vmatprep.mubr.f32.mxu0 0.0
        %2515 = vmatmul.mubr.f32.gmra.mrb[0].mxu0 %v742
        %v2516 = vpop.f32.mrb[0].mxu0
        %v2517 = vadd.f32 0.0, %v2516
        %v2518 = vpop.f32.mrb[0].mxu0
        %v2519 = vadd.f32 0.0, %v2518
        %2520 = vmatprep.mubr.f32.mxu0 0.0
        %2521 = vmatmul.mubr.f32.gmra.mrb[0].mxu0 %v745
        %v2522 = vpop.f32.mrb[0].mxu0
        %v2523 = vadd.f32 0.0, %v2522
        %v2524 = vpop.f32.mrb[0].mxu0
        %v2525 = vadd.f32 0.0, %v2524
        %2526 = vmatprep.mubr.f32.mxu0 0.0
        %2527 = vmatmul.mubr.f32.gmra.mrb[0].mxu0 %v748
        %v2528 = vpop.f32.mrb[0].mxu0
        %v2529 = vadd.f32 0.0, %v2528
        %v2530 = vpop.f32.mrb[0].mxu0
        %v2531 = vadd.f32 0.0, %v2530
        %2532 = vdwg.mxu0
        %2533 = vmatprep.subr.mxu0 %v2391
        %2534 = vmatpush1.msra.mxu0 %v2390
        %2535 = vmatprep.subr.mxu0 %v2395
        %2536 = vmatpush1.msra.mxu0 %v2394
        %2537 = vmatprep.subr.mxu0 %v2399
        %2538 = vmatpush1.msra.mxu0 %v2398
        %2539 = vmatprep.subr.mxu0 %v2403
        %2540 = vmatpush1.msra.mxu0 %v2402
        %2541 = vmatprep.subr.mxu0 0.0
        %2542 = vmatpush1.msra.mxu0 0.0
        %2543 = vmatprep.subr.mxu0 0.0
        %2544 = vmatpush1.msra.mxu0 0.0
        %2545 = vmatprep.subr.mxu0 0.0
        %2546 = vmatpush1.msra.mxu0 0.0
        %2547 = vmatprep.subr.mxu0 0.0
        %2548 = vmatpush1.msra.mxu0 0.0
        %2549 = vmatprep.subr.mxu0 0.0
        %2550 = vmatpush1.msra.mxu0 0.0
        %2551 = vmatprep.subr.mxu0 0.0
        %2552 = vmatpush1.msra.mxu0 0.0
        %2553 = vmatprep.subr.mxu0 0.0
        %2554 = vmatpush1.msra.mxu0 0.0
        %2555 = vmatprep.subr.mxu0 0.0
        %2556 = vmatpush1.msra.mxu0 0.0
        %2557 = vmatprep.subr.mxu0 0.0
        %2558 = vmatpush1.msra.mxu0 0.0
        %2559 = vmatprep.subr.mxu0 0.0
        %2560 = vmatpush1.msra.mxu0 0.0
        %2561 = vmatprep.subr.mxu0 0.0
        %2562 = vmatpush1.msra.mxu0 0.0
        %2563 = vmatprep.subr.mxu0 0.0
        %2564 = vmatpush1.msra.mxu0 0.0
        %2565 = vmatprep.subr.mxu0 0.0
        %2566 = vmatpush1.msra.mxu0 0.0
        %2567 = vmatprep.subr.mxu0 0.0
        %2568 = vmatpush1.msra.mxu0 0.0
        %2569 = vmatprep.subr.mxu0 0.0
        %2570 = vmatpush1.msra.mxu0 0.0
        %2571 = vmatprep.subr.mxu0 0.0
        %2572 = vmatpush1.msra.mxu0 0.0
        %2573 = vmatprep.subr.mxu0 0.0
        %2574 = vmatpush1.msra.mxu0 0.0
        %2575 = vmatprep.subr.mxu0 0.0
        %2576 = vmatpush1.msra.mxu0 0.0
        %2577 = vmatprep.subr.mxu0 0.0
        %2578 = vmatpush1.msra.mxu0 0.0
        %2579 = vmatprep.subr.mxu0 0.0
        %2580 = vmatpush1.msra.mxu0 0.0
        %2581 = vmatprep.subr.mxu0 0.0
        %2582 = vmatpush1.msra.mxu0 0.0
        %2583 = vmatprep.subr.mxu0 0.0
        %2584 = vmatpush1.msra.mxu0 0.0
        %2585 = vmatprep.subr.mxu0 0.0
        %2586 = vmatpush1.msra.mxu0 0.0
        %2587 = vmatprep.subr.mxu0 0.0
        %2588 = vmatpush1.msra.mxu0 0.0
        %2589 = vmatprep.subr.mxu0 0.0
        %2590 = vmatpush1.msra.mxu0 0.0
        %2591 = vmatprep.subr.mxu0 0.0
        %2592 = vmatpush1.msra.mxu0 0.0
        %2593 = vmatprep.subr.mxu0 0.0
        %2594 = vmatpush1.msra.mxu0 0.0
        %2595 = vmatprep.subr.mxu0 0.0
        %2596 = vmatpush1.msra.mxu0 0.0
        %2597 = vmatprep.mubr.f32.mxu0 0.0
        %2598 = vmatmul.mubr.f32.gmra.mrb[0].mxu0 %v727
        %v2599 = vpop.f32.mrb[0].mxu0
        %v2600 = vadd.f32 0.0, %v2599
        %v2601 = vpop.f32.mrb[0].mxu0
        %v2602 = vadd.f32 0.0, %v2601
        %2603 = vmatprep.mubr.f32.mxu0 0.0
        %2604 = vmatmul.mubr.f32.gmra.mrb[0].mxu0 %v730
        %v2605 = vpop.f32.mrb[0].mxu0
        %v2606 = vadd.f32 0.0, %v2605
        %v2607 = vpop.f32.mrb[0].mxu0
        %v2608 = vadd.f32 0.0, %v2607
        %2609 = vmatprep.mubr.f32.mxu0 0.0
        %2610 = vmatmul.mubr.f32.gmra.mrb[0].mxu0 %v733
        %v2611 = vpop.f32.mrb[0].mxu0
        %v2612 = vadd.f32 0.0, %v2611
        %v2613 = vpop.f32.mrb[0].mxu0
        %v2614 = vadd.f32 0.0, %v2613
        %2615 = vmatprep.mubr.f32.mxu0 0.0
        %2616 = vmatmul.mubr.f32.gmra.mrb[0].mxu0 %v736
        %v2617 = vpop.f32.mrb[0].mxu0
        %v2618 = vadd.f32 0.0, %v2617
        %v2619 = vpop.f32.mrb[0].mxu0
        %v2620 = vadd.f32 0.0, %v2619
        %2621 = vmatprep.mubr.f32.mxu0 0.0
        %2622 = vmatmul.mubr.f32.gmra.mrb[0].mxu0 %v739
        %v2623 = vpop.f32.mrb[0].mxu0
        %v2624 = vadd.f32 0.0, %v2623
        %v2625 = vpop.f32.mrb[0].mxu0
        %v2626 = vadd.f32 0.0, %v2625
        %2627 = vmatprep.mubr.f32.mxu0 0.0
        %2628 = vmatmul.mubr.f32.gmra.mrb[0].mxu0 %v742
        %v2629 = vpop.f32.mrb[0].mxu0
        %v2630 = vadd.f32 0.0, %v2629
        %v2631 = vpop.f32.mrb[0].mxu0
        %v2632 = vadd.f32 0.0, %v2631
        %2633 = vmatprep.mubr.f32.mxu0 0.0
        %2634 = vmatmul.mubr.f32.gmra.mrb[0].mxu0 %v745
        %v2635 = vpop.f32.mrb[0].mxu0
        %v2636 = vadd.f32 0.0, %v2635
        %v2637 = vpop.f32.mrb[0].mxu0
        %v2638 = vadd.f32 0.0, %v2637
        %2639 = vmatprep.mubr.f32.mxu0 0.0
        %2640 = vmatmul.mubr.f32.gmra.mrb[0].mxu0 %v748
        %v2641 = vpop.f32.mrb[0].mxu0
        %v2642 = vadd.f32 0.0, %v2641
        %v2643 = vpop.f32.mrb[0].mxu0
        %v2644 = vadd.f32 0.0, %v2643
        %2645 = vdwg.mxu0
        %v2646 = vmul.f32 %v2511, 0.5
        %v2647 = vmul.f32 %v2513, 0.5
        %v2648 = vmul.f32 %v2624, 0.5
        %v2649 = vmul.f32 %v2626, 0.5
        %v2650 = vmul.f32 %v2517, 0.5
        %v2651 = vmul.f32 %v2519, 0.5
        %v2652 = vmul.f32 %v2630, 0.5
        %v2653 = vmul.f32 %v2632, 0.5
        %v2654 = vmul.f32 %v2523, 0.5
        %v2655 = vmul.f32 %v2525, 0.5
        %v2656 = vmul.f32 %v2636, 0.5
        %v2657 = vmul.f32 %v2638, 0.5
        %v2658 = vmul.f32 %v2529, 0.5
        %v2659 = vmul.f32 %v2531, 0.5
        %v2660 = vmul.f32 %v2642, 0.5
        %v2661 = vmul.f32 %v2644, 0.5
        %v2662 = vtanh.pop %v2646
        %v2663 = vtanh.pop %v2647
        %v2664 = vtanh.pop %v2648
        %v2665 = vtanh.pop %v2649
        %v2666 = vtanh.pop %v2650
        %v2667 = vtanh.pop %v2651
        %v2668 = vtanh.pop %v2652
        %v2669 = vtanh.pop %v2653
        %v2670 = vtanh.pop %v2654
        %v2671 = vtanh.pop %v2655
        %v2672 = vtanh.pop %v2656
        %v2673 = vtanh.pop %v2657
        %v2674 = vtanh.pop %v2658
        %v2675 = vtanh.pop %v2659
        %v2676 = vtanh.pop %v2660
        %v2677 = vtanh.pop %v2661
        %v2678 = vmul.f32 %v2662, 0.5
        %v2679 = vmul.f32 %v2663, 0.5
        %v2680 = vmul.f32 %v2664, 0.5
        %v2681 = vmul.f32 %v2665, 0.5
        %v2682 = vmul.f32 %v2666, 0.5
        %v2683 = vmul.f32 %v2667, 0.5
        %v2684 = vmul.f32 %v2668, 0.5
        %v2685 = vmul.f32 %v2669, 0.5
        %v2686 = vmul.f32 %v2670, 0.5
        %v2687 = vmul.f32 %v2671, 0.5
        %v2688 = vmul.f32 %v2672, 0.5
        %v2689 = vmul.f32 %v2673, 0.5
        %v2690 = vmul.f32 %v2674, 0.5
        %v2691 = vmul.f32 %v2675, 0.5
        %v2692 = vmul.f32 %v2676, 0.5
        %v2693 = vmul.f32 %v2677, 0.5
        %v2694 = vadd.f32 %v2678, 0.5
        %v2695 = vadd.f32 %v2679, 0.5
        %v2696 = vadd.f32 %v2680, 0.5
        %v2697 = vadd.f32 %v2681, 0.5
        %v2698 = vadd.f32 %v2682, 0.5
        %v2699 = vadd.f32 %v2683, 0.5
        %v2700 = vadd.f32 %v2684, 0.5
        %v2701 = vadd.f32 %v2685, 0.5
        %v2702 = vadd.f32 %v2686, 0.5
        %v2703 = vadd.f32 %v2687, 0.5
        %v2704 = vadd.f32 %v2688, 0.5
        %v2705 = vadd.f32 %v2689, 0.5
        %v2706 = vadd.f32 %v2690, 0.5
        %v2707 = vadd.f32 %v2691, 0.5
        %v2708 = vadd.f32 %v2692, 0.5
        %v2709 = vadd.f32 %v2693, 0.5
        %v2710 = vmul.f32 %v2487, %v2694
        %v2711 = vmul.f32 %v2489, %v2695
        %v2712 = vmul.f32 %v2600, %v2696
        %v2713 = vmul.f32 %v2602, %v2697
        %v2714 = vmul.f32 %v2493, %v2698
        %v2715 = vmul.f32 %v2495, %v2699
        %v2716 = vmul.f32 %v2606, %v2700
        %v2717 = vmul.f32 %v2608, %v2701
        %v2718 = vmul.f32 %v2499, %v2702
        %v2719 = vmul.f32 %v2501, %v2703
        %v2720 = vmul.f32 %v2612, %v2704
        %v2721 = vmul.f32 %v2614, %v2705
        %v2722 = vmul.f32 %v2505, %v2706
        %v2723 = vmul.f32 %v2507, %v2707
        %v2724 = vmul.f32 %v2618, %v2708
        %v2725 = vmul.f32 %v2620, %v2709
        %v2726 = vadd.f32 %v2404, %v2710
        %v2727 = vadd.f32 %v2405, %v2711
        %v2728 = vadd.f32 %v2406, %v2712
        %v2729 = vadd.f32 %v2407, %v2713
        %v2730 = vadd.f32 %v2408, %v2714
        %v2731 = vadd.f32 %v2409, %v2715
        %v2732 = vadd.f32 %v2410, %v2716
        %v2733 = vadd.f32 %v2411, %v2717
        %v2734 = vadd.f32 %v2412, %v2718
        %v2735 = vadd.f32 %v2413, %v2719
        %v2736 = vadd.f32 %v2414, %v2720
        %v2737 = vadd.f32 %v2415, %v2721
        %v2738 = vadd.f32 %v2416, %v2722
        %v2739 = vadd.f32 %v2417, %v2723
        %v2740 = vadd.f32 %v2418, %v2724
        %v2741 = vadd.f32 %v2419, %v2725
        %v2742 = vmul.f32 %v2726, 0.70710677
        %v2743 = vmul.f32 %v2727, 0.70710677
        %v2744 = vmul.f32 %v2728, 0.70710677
        %v2745 = vmul.f32 %v2729, 0.70710677
        %v2746 = vmul.f32 %v2730, 0.70710677
        %v2747 = vmul.f32 %v2731, 0.70710677
        %v2748 = vmul.f32 %v2732, 0.70710677
        %v2749 = vmul.f32 %v2733, 0.70710677
        %v2750 = vmul.f32 %v2734, 0.70710677
        %v2751 = vmul.f32 %v2735, 0.70710677
        %v2752 = vmul.f32 %v2736, 0.70710677
        %v2753 = vmul.f32 %v2737, 0.70710677
        %v2754 = vmul.f32 %v2738, 0.70710677
        %v2755 = vmul.f32 %v2739, 0.70710677
        %v2756 = vmul.f32 %v2740, 0.70710677
        %v2757 = vmul.f32 %v2741, 0.70710677
        %s2758 = scalar_lea.vmem %s4, 128
        %v2759 = vld [vmem:[%s2758] sm:$0xff]
        %v2760 = vld [vmem:[%s2758 + $0x8] sm:$0xff]
        %v2761 = vld [vmem:[%s2758 + $0x10] sm:$0xff]
        %v2762 = vld [vmem:[%s2758 + $0x18] sm:$0xff]
        %v2763 = vld [vmem:[%s2758 + $0x20] sm:$0xff]
        %v2764 = vld [vmem:[%s2758 + $0x28] sm:$0xff]
        %v2765 = vld [vmem:[%s2758 + $0x30] sm:$0xff]
        %v2766 = vld [vmem:[%s2758 + $0x38] sm:$0xff]
        %v2768 = vsel %vm725, %v2759, 0
        %v2771 = vsel %vm725, %v2760, 0
        %v2774 = vsel %vm725, %v2761, 0
        %v2777 = vsel %vm725, %v2762, 0
        %v2780 = vsel %vm725, %v2763, 0
        %v2783 = vsel %vm725, %v2764, 0
        %v2786 = vsel %vm725, %v2765, 0
        %v2789 = vsel %vm725, %v2766, 0
        %2791 = vmatprep.subr.mxu0 %v2727
        %2792 = vmatpush1.msra.mxu0 %v2726
        %2793 = vmatprep.subr.mxu0 %v2731
        %2794 = vmatpush1.msra.mxu0 %v2730
        %2795 = vmatprep.subr.mxu0 %v2735
        %2796 = vmatpush1.msra.mxu0 %v2734
        %2797 = vmatprep.subr.mxu0 %v2739
        %2798 = vmatpush1.msra.mxu0 %v2738
        %2799 = vmatprep.subr.mxu0 0.0
        %2800 = vmatpush1.msra.mxu0 0.0
        %2801 = vmatprep.subr.mxu0 0.0
        %2802 = vmatpush1.msra.mxu0 0.0
        %2803 = vmatprep.subr.mxu0 0.0
        %2804 = vmatpush1.msra.mxu0 0.0
        %2805 = vmatprep.subr.mxu0 0.0
        %2806 = vmatpush1.msra.mxu0 0.0
        %2807 = vmatprep.subr.mxu0 0.0
        %2808 = vmatpush1.msra.mxu0 0.0
        %2809 = vmatprep.subr.mxu0 0.0
        %2810 = vmatpush1.msra.mxu0 0.0
        %2811 = vmatprep.subr.mxu0 0.0
        %2812 = vmatpush1.msra.mxu0 0.0
        %2813 = vmatprep.subr.mxu0 0.0
        %2814 = vmatpush1.msra.mxu0 0.0
        %2815 = vmatprep.subr.mxu0 0.0
        %2816 = vmatpush1.msra.mxu0 0.0
        %2817 = vmatprep.subr.mxu0 0.0
        %2818 = vmatpush1.msra.mxu0 0.0
        %2819 = vmatprep.subr.mxu0 0.0
        %2820 = vmatpush1.msra.mxu0 0.0
        %2821 = vmatprep.subr.mxu0 0.0
        %2822 = vmatpush1.msra.mxu0 0.0
        %2823 = vmatprep.subr.mxu0 0.0
        %2824 = vmatpush1.msra.mxu0 0.0
        %2825 = vmatprep.subr.mxu0 0.0
        %2826 = vmatpush1.msra.mxu0 0.0
        %2827 = vmatprep.subr.mxu0 0.0
        %2828 = vmatpush1.msra.mxu0 0.0
        %2829 = vmatprep.subr.mxu0 0.0
        %2830 = vmatpush1.msra.mxu0 0.0
        %2831 = vmatprep.subr.mxu0 0.0
        %2832 = vmatpush1.msra.mxu0 0.0
        %2833 = vmatprep.subr.mxu0 0.0
        %2834 = vmatpush1.msra.mxu0 0.0
        %2835 = vmatprep.subr.mxu0 0.0
        %2836 = vmatpush1.msra.mxu0 0.0
        %2837 = vmatprep.subr.mxu0 0.0
        %2838 = vmatpush1.msra.mxu0 0.0
        %2839 = vmatprep.subr.mxu0 0.0
        %2840 = vmatpush1.msra.mxu0 0.0
        %2841 = vmatprep.subr.mxu0 0.0
        %2842 = vmatpush1.msra.mxu0 0.0
        %2843 = vmatprep.subr.mxu0 0.0
        %2844 = vmatpush1.msra.mxu0 0.0
        %2845 = vmatprep.subr.mxu0 0.0
        %2846 = vmatpush1.msra.mxu0 0.0
        %2847 = vmatprep.subr.mxu0 0.0
        %2848 = vmatpush1.msra.mxu0 0.0
        %2849 = vmatprep.subr.mxu0 0.0
        %2850 = vmatpush1.msra.mxu0 0.0
        %2851 = vmatprep.subr.mxu0 0.0
        %2852 = vmatpush1.msra.mxu0 0.0
        %2853 = vmatprep.subr.mxu0 0.0
        %2854 = vmatpush1.msra.mxu0 0.0
        %2855 = vmatprep.mubr.f32.mxu0 0.0
        %2856 = vmatmul.mubr.f32.gmra.mrb[0].mxu0 %v2768
        %v2857 = vpop.f32.mrb[0].mxu0
        %v2858 = vadd.f32 0.0, %v2857
        %v2859 = vpop.f32.mrb[0].mxu0
        %v2860 = vadd.f32 0.0, %v2859
        %2861 = vmatprep.mubr.f32.mxu0 0.0
        %2862 = vmatmul.mubr.f32.gmra.mrb[0].mxu0 %v2771
        %v2863 = vpop.f32.mrb[0].mxu0
        %v2864 = vadd.f32 0.0, %v2863
        %v2865 = vpop.f32.mrb[0].mxu0
        %v2866 = vadd.f32 0.0, %v2865
        %2867 = vmatprep.mubr.f32.mxu0 0.0
        %2868 = vmatmul.mubr.f32.gmra.mrb[0].mxu0 %v2774
        %v2869 = vpop.f32.mrb[0].mxu0
        %v2870 = vadd.f32 0.0, %v2869
        %v2871 = vpop.f32.mrb[0].mxu0
        %v2872 = vadd.f32 0.0, %v2871
        %2873 = vmatprep.mubr.f32.mxu0 0.0
        %2874 = vmatmul.mubr.f32.gmra.mrb[0].mxu0 %v2777
        %v2875 = vpop.f32.mrb[0].mxu0
        %v2876 = vadd.f32 0.0, %v2875
        %v2877 = vpop.f32.mrb[0].mxu0
        %v2878 = vadd.f32 0.0, %v2877
        %2879 = vmatprep.mubr.f32.mxu0 0.0
        %2880 = vmatmul.mubr.f32.gmra.mrb[0].mxu0 %v2780
        %v2881 = vpop.f32.mrb[0].mxu0
        %v2882 = vadd.f32 0.0, %v2881
        %v2883 = vpop.f32.mrb[0].mxu0
        %v2884 = vadd.f32 0.0, %v2883
        %2885 = vmatprep.mubr.f32.mxu0 0.0
        %2886 = vmatmul.mubr.f32.gmra.mrb[0].mxu0 %v2783
        %v2887 = vpop.f32.mrb[0].mxu0
        %v2888 = vadd.f32 0.0, %v2887
        %v2889 = vpop.f32.mrb[0].mxu0
        %v2890 = vadd.f32 0.0, %v2889
        %2891 = vmatprep.mubr.f32.mxu0 0.0
        %2892 = vmatmul.mubr.f32.gmra.mrb[0].mxu0 %v2786
        %v2893 = vpop.f32.mrb[0].mxu0
        %v2894 = vadd.f32 0.0, %v2893
        %v2895 = vpop.f32.mrb[0].mxu0
        %v2896 = vadd.f32 0.0, %v2895
        %2897 = vmatprep.mubr.f32.mxu0 0.0
        %2898 = vmatmul.mubr.f32.gmra.mrb[0].mxu0 %v2789
        %v2899 = vpop.f32.mrb[0].mxu0
        %v2900 = vadd.f32 0.0, %v2899
        %v2901 = vpop.f32.mrb[0].mxu0
        %v2902 = vadd.f32 0.0, %v2901
        %2903 = vdwg.mxu0
        %2904 = vmatprep.subr.mxu0 %v2729
        %2905 = vmatpush1.msra.mxu0 %v2728
        %2906 = vmatprep.subr.mxu0 %v2733
        %2907 = vmatpush1.msra.mxu0 %v2732
        %2908 = vmatprep.subr.mxu0 %v2737
        %2909 = vmatpush1.msra.mxu0 %v2736
        %2910 = vmatprep.subr.mxu0 %v2741
        %2911 = vmatpush1.msra.mxu0 %v2740
        %2912 = vmatprep.subr.mxu0 0.0
        %2913 = vmatpush1.msra.mxu0 0.0
        %2914 = vmatprep.subr.mxu0 0.0
        %2915 = vmatpush1.msra.mxu0 0.0
        %2916 = vmatprep.subr.mxu0 0.0
        %2917 = vmatpush1.msra.mxu0 0.0
        %2918 = vmatprep.subr.mxu0 0.0
        %2919 = vmatpush1.msra.mxu0 0.0
        %2920 = vmatprep.subr.mxu0 0.0
        %2921 = vmatpush1.msra.mxu0 0.0
        %2922 = vmatprep.subr.mxu0 0.0
        %2923 = vmatpush1.msra.mxu0 0.0
        %2924 = vmatprep.subr.mxu0 0.0
        %2925 = vmatpush1.msra.mxu0 0.0
        %2926 = vmatprep.subr.mxu0 0.0
        %2927 = vmatpush1.msra.mxu0 0.0
        %2928 = vmatprep.subr.mxu0 0.0
        %2929 = vmatpush1.msra.mxu0 0.0
        %2930 = vmatprep.subr.mxu0 0.0
        %2931 = vmatpush1.msra.mxu0 0.0
        %2932 = vmatprep.subr.mxu0 0.0
        %2933 = vmatpush1.msra.mxu0 0.0
        %2934 = vmatprep.subr.mxu0 0.0
        %2935 = vmatpush1.msra.mxu0 0.0
        %2936 = vmatprep.subr.mxu0 0.0
        %2937 = vmatpush1.msra.mxu0 0.0
        %2938 = vmatprep.subr.mxu0 0.0
        %2939 = vmatpush1.msra.mxu0 0.0
        %2940 = vmatprep.subr.mxu0 0.0
        %2941 = vmatpush1.msra.mxu0 0.0
        %2942 = vmatprep.subr.mxu0 0.0
        %2943 = vmatpush1.msra.mxu0 0.0
        %2944 = vmatprep.subr.mxu0 0.0
        %2945 = vmatpush1.msra.mxu0 0.0
        %2946 = vmatprep.subr.mxu0 0.0
        %2947 = vmatpush1.msra.mxu0 0.0
        %2948 = vmatprep.subr.mxu0 0.0
        %2949 = vmatpush1.msra.mxu0 0.0
        %2950 = vmatprep.subr.mxu0 0.0
        %2951 = vmatpush1.msra.mxu0 0.0
        %2952 = vmatprep.subr.mxu0 0.0
        %2953 = vmatpush1.msra.mxu0 0.0
        %2954 = vmatprep.subr.mxu0 0.0
        %2955 = vmatpush1.msra.mxu0 0.0
        %2956 = vmatprep.subr.mxu0 0.0
        %2957 = vmatpush1.msra.mxu0 0.0
        %2958 = vmatprep.subr.mxu0 0.0
        %2959 = vmatpush1.msra.mxu0 0.0
        %2960 = vmatprep.subr.mxu0 0.0
        %2961 = vmatpush1.msra.mxu0 0.0
        %2962 = vmatprep.subr.mxu0 0.0
        %2963 = vmatpush1.msra.mxu0 0.0
        %2964 = vmatprep.subr.mxu0 0.0
        %2965 = vmatpush1.msra.mxu0 0.0
        %2966 = vmatprep.subr.mxu0 0.0
        %2967 = vmatpush1.msra.mxu0 0.0
        %2968 = vmatprep.mubr.f32.mxu0 0.0
        %2969 = vmatmul.mubr.f32.gmra.mrb[0].mxu0 %v2768
        %v2970 = vpop.f32.mrb[0].mxu0
        %v2971 = vadd.f32 0.0, %v2970
        %v2972 = vpop.f32.mrb[0].mxu0
        %v2973 = vadd.f32 0.0, %v2972
        %2974 = vmatprep.mubr.f32.mxu0 0.0
        %2975 = vmatmul.mubr.f32.gmra.mrb[0].mxu0 %v2771
        %v2976 = vpop.f32.mrb[0].mxu0
        %v2977 = vadd.f32 0.0, %v2976
        %v2978 = vpop.f32.mrb[0].mxu0
        %v2979 = vadd.f32 0.0, %v2978
        %2980 = vmatprep.mubr.f32.mxu0 0.0
        %2981 = vmatmul.mubr.f32.gmra.mrb[0].mxu0 %v2774
        %v2982 = vpop.f32.mrb[0].mxu0
        %v2983 = vadd.f32 0.0, %v2982
        %v2984 = vpop.f32.mrb[0].mxu0
        %v2985 = vadd.f32 0.0, %v2984
        %2986 = vmatprep.mubr.f32.mxu0 0.0
        %2987 = vmatmul.mubr.f32.gmra.mrb[0].mxu0 %v2777
        %v2988 = vpop.f32.mrb[0].mxu0
        %v2989 = vadd.f32 0.0, %v2988
        %v2990 = vpop.f32.mrb[0].mxu0
        %v2991 = vadd.f32 0.0, %v2990
        %2992 = vmatprep.mubr.f32.mxu0 0.0
        %2993 = vmatmul.mubr.f32.gmra.mrb[0].mxu0 %v2780
        %v2994 = vpop.f32.mrb[0].mxu0
        %v2995 = vadd.f32 0.0, %v2994
        %v2996 = vpop.f32.mrb[0].mxu0
        %v2997 = vadd.f32 0.0, %v2996
        %2998 = vmatprep.mubr.f32.mxu0 0.0
        %2999 = vmatmul.mubr.f32.gmra.mrb[0].mxu0 %v2783
        %v3000 = vpop.f32.mrb[0].mxu0
        %v3001 = vadd.f32 0.0, %v3000
        %v3002 = vpop.f32.mrb[0].mxu0
        %v3003 = vadd.f32 0.0, %v3002
        %3004 = vmatprep.mubr.f32.mxu0 0.0
        %3005 = vmatmul.mubr.f32.gmra.mrb[0].mxu0 %v2786
        %v3006 = vpop.f32.mrb[0].mxu0
        %v3007 = vadd.f32 0.0, %v3006
        %v3008 = vpop.f32.mrb[0].mxu0
        %v3009 = vadd.f32 0.0, %v3008
        %3010 = vmatprep.mubr.f32.mxu0 0.0
        %3011 = vmatmul.mubr.f32.gmra.mrb[0].mxu0 %v2789
        %v3012 = vpop.f32.mrb[0].mxu0
        %v3013 = vadd.f32 0.0, %v3012
        %v3014 = vpop.f32.mrb[0].mxu0
        %v3015 = vadd.f32 0.0, %v3014
        %3016 = vdwg.mxu0
        %v3017 = vmul.f32 %v2882, 0.5
        %v3018 = vmul.f32 %v2884, 0.5
        %v3019 = vmul.f32 %v2995, 0.5
        %v3020 = vmul.f32 %v2997, 0.5
        %v3021 = vmul.f32 %v2888, 0.5
        %v3022 = vmul.f32 %v2890, 0.5
        %v3023 = vmul.f32 %v3001, 0.5
        %v3024 = vmul.f32 %v3003, 0.5
        %v3025 = vmul.f32 %v2894, 0.5
        %v3026 = vmul.f32 %v2896, 0.5
        %v3027 = vmul.f32 %v3007, 0.5
        %v3028 = vmul.f32 %v3009, 0.5
        %v3029 = vmul.f32 %v2900, 0.5
        %v3030 = vmul.f32 %v2902, 0.5
        %v3031 = vmul.f32 %v3013, 0.5
        %v3032 = vmul.f32 %v3015, 0.5
        %v3033 = vtanh.pop %v3017
        %v3034 = vtanh.pop %v3018
        %v3035 = vtanh.pop %v3019
        %v3036 = vtanh.pop %v3020
        %v3037 = vtanh.pop %v3021
        %v3038 = vtanh.pop %v3022
        %v3039 = vtanh.pop %v3023
        %v3040 = vtanh.pop %v3024
        %v3041 = vtanh.pop %v3025
        %v3042 = vtanh.pop %v3026
        %v3043 = vtanh.pop %v3027
        %v3044 = vtanh.pop %v3028
        %v3045 = vtanh.pop %v3029
        %v3046 = vtanh.pop %v3030
        %v3047 = vtanh.pop %v3031
        %v3048 = vtanh.pop %v3032
        %v3049 = vmul.f32 %v3033, 0.5
        %v3050 = vmul.f32 %v3034, 0.5
        %v3051 = vmul.f32 %v3035, 0.5
        %v3052 = vmul.f32 %v3036, 0.5
        %v3053 = vmul.f32 %v3037, 0.5
        %v3054 = vmul.f32 %v3038, 0.5
        %v3055 = vmul.f32 %v3039, 0.5
        %v3056 = vmul.f32 %v3040, 0.5
        %v3057 = vmul.f32 %v3041, 0.5
        %v3058 = vmul.f32 %v3042, 0.5
        %v3059 = vmul.f32 %v3043, 0.5
        %v3060 = vmul.f32 %v3044, 0.5
        %v3061 = vmul.f32 %v3045, 0.5
        %v3062 = vmul.f32 %v3046, 0.5
        %v3063 = vmul.f32 %v3047, 0.5
        %v3064 = vmul.f32 %v3048, 0.5
        %v3065 = vadd.f32 %v3049, 0.5
        %v3066 = vadd.f32 %v3050, 0.5
        %v3067 = vadd.f32 %v3051, 0.5
        %v3068 = vadd.f32 %v3052, 0.5
        %v3069 = vadd.f32 %v3053, 0.5
        %v3070 = vadd.f32 %v3054, 0.5
        %v3071 = vadd.f32 %v3055, 0.5
        %v3072 = vadd.f32 %v3056, 0.5
        %v3073 = vadd.f32 %v3057, 0.5
        %v3074 = vadd.f32 %v3058, 0.5
        %v3075 = vadd.f32 %v3059, 0.5
        %v3076 = vadd.f32 %v3060, 0.5
        %v3077 = vadd.f32 %v3061, 0.5
        %v3078 = vadd.f32 %v3062, 0.5
        %v3079 = vadd.f32 %v3063, 0.5
        %v3080 = vadd.f32 %v3064, 0.5
        %v3081 = vmul.f32 %v2858, %v3065
        %v3082 = vmul.f32 %v2860, %v3066
        %v3083 = vmul.f32 %v2971, %v3067
        %v3084 = vmul.f32 %v2973, %v3068
        %v3085 = vmul.f32 %v2864, %v3069
        %v3086 = vmul.f32 %v2866, %v3070
        %v3087 = vmul.f32 %v2977, %v3071
        %v3088 = vmul.f32 %v2979, %v3072
        %v3089 = vmul.f32 %v2870, %v3073
        %v3090 = vmul.f32 %v2872, %v3074
        %v3091 = vmul.f32 %v2983, %v3075
        %v3092 = vmul.f32 %v2985, %v3076
        %v3093 = vmul.f32 %v2876, %v3077
        %v3094 = vmul.f32 %v2878, %v3078
        %v3095 = vmul.f32 %v2989, %v3079
        %v3096 = vmul.f32 %v2991, %v3080
        %v3097 = vadd.f32 %v2742, %v3081
        %v3098 = vadd.f32 %v2743, %v3082
        %v3099 = vadd.f32 %v2744, %v3083
        %v3100 = vadd.f32 %v2745, %v3084
        %v3101 = vadd.f32 %v2746, %v3085
        %v3102 = vadd.f32 %v2747, %v3086
        %v3103 = vadd.f32 %v2748, %v3087
        %v3104 = vadd.f32 %v2749, %v3088
        %v3105 = vadd.f32 %v2750, %v3089
        %v3106 = vadd.f32 %v2751, %v3090
        %v3107 = vadd.f32 %v2752, %v3091
        %v3108 = vadd.f32 %v2753, %v3092
        %v3109 = vadd.f32 %v2754, %v3093
        %v3110 = vadd.f32 %v2755, %v3094
        %v3111 = vadd.f32 %v2756, %v3095
        %v3112 = vadd.f32 %v2757, %v3096
        %v3113 = vmul.f32 %v3097, 0.70710677
        %v3114 = vmul.f32 %v3098, 0.70710677
        %v3115 = vmul.f32 %v3099, 0.70710677
        %v3116 = vmul.f32 %v3100, 0.70710677
        %v3117 = vmul.f32 %v3101, 0.70710677
        %v3118 = vmul.f32 %v3102, 0.70710677
        %v3119 = vmul.f32 %v3103, 0.70710677
        %v3120 = vmul.f32 %v3104, 0.70710677
        %v3121 = vmul.f32 %v3105, 0.70710677
        %v3122 = vmul.f32 %v3106, 0.70710677
        %v3123 = vmul.f32 %v3107, 0.70710677
        %v3124 = vmul.f32 %v3108, 0.70710677
        %v3125 = vmul.f32 %v3109, 0.70710677
        %v3126 = vmul.f32 %v3110, 0.70710677
        %v3127 = vmul.f32 %v3111, 0.70710677
        %v3128 = vmul.f32 %v3112, 0.70710677
        %s3129 = scalar_lea.vmem %s4, 192
        %v3130 = vld [vmem:[%s3129] sm:$0xff]
        %v3131 = vld [vmem:[%s3129 + $0x8] sm:$0xff]
        %v3132 = vld [vmem:[%s3129 + $0x10] sm:$0xff]
        %v3133 = vld [vmem:[%s3129 + $0x18] sm:$0xff]
        %v3134 = vld [vmem:[%s3129 + $0x20] sm:$0xff]
        %v3135 = vld [vmem:[%s3129 + $0x28] sm:$0xff]
        %v3136 = vld [vmem:[%s3129 + $0x30] sm:$0xff]
        %v3137 = vld [vmem:[%s3129 + $0x38] sm:$0xff]
        %v3139 = vsel %vm725, %v3130, 0
        %v3142 = vsel %vm725, %v3131, 0
        %v3145 = vsel %vm725, %v3132, 0
        %v3148 = vsel %vm725, %v3133, 0
        %v3151 = vsel %vm725, %v3134, 0
        %v3154 = vsel %vm725, %v3135, 0
        %v3157 = vsel %vm725, %v3136, 0
        %v3160 = vsel %vm725, %v3137, 0
        %3162 = vmatprep.subr.mxu0 %v3098
        %3163 = vmatpush1.msra.mxu0 %v3097
        %3164 = vmatprep.subr.mxu0 %v3102
        %3165 = vmatpush1.msra.mxu0 %v3101
        %3166 = vmatprep.subr.mxu0 %v3106
        %3167 = vmatpush1.msra.mxu0 %v3105
        %3168 = vmatprep.subr.mxu0 %v3110
        %3169 = vmatpush1.msra.mxu0 %v3109
        %3170 = vmatprep.subr.mxu0 0.0
        %3171 = vmatpush1.msra.mxu0 0.0
        %3172 = vmatprep.subr.mxu0 0.0
        %3173 = vmatpush1.msra.mxu0 0.0
        %3174 = vmatprep.subr.mxu0 0.0
        %3175 = vmatpush1.msra.mxu0 0.0
        %3176 = vmatprep.subr.mxu0 0.0
        %3177 = vmatpush1.msra.mxu0 0.0
        %3178 = vmatprep.subr.mxu0 0.0
        %3179 = vmatpush1.msra.mxu0 0.0
        %3180 = vmatprep.subr.mxu0 0.0
        %3181 = vmatpush1.msra.mxu0 0.0
        %3182 = vmatprep.subr.mxu0 0.0
        %3183 = vmatpush1.msra.mxu0 0.0
        %3184 = vmatprep.subr.mxu0 0.0
        %3185 = vmatpush1.msra.mxu0 0.0
        %3186 = vmatprep.subr.mxu0 0.0
        %3187 = vmatpush1.msra.mxu0 0.0
        %3188 = vmatprep.subr.mxu0 0.0
        %3189 = vmatpush1.msra.mxu0 0.0
        %3190 = vmatprep.subr.mxu0 0.0
        %3191 = vmatpush1.msra.mxu0 0.0
        %3192 = vmatprep.subr.mxu0 0.0
        %3193 = vmatpush1.msra.mxu0 0.0
        %3194 = vmatprep.subr.mxu0 0.0
        %3195 = vmatpush1.msra.mxu0 0.0
        %3196 = vmatprep.subr.mxu0 0.0
        %3197 = vmatpush1.msra.mxu0 0.0
        %3198 = vmatprep.subr.mxu0 0.0
        %3199 = vmatpush1.msra.mxu0 0.0
        %3200 = vmatprep.subr.mxu0 0.0
        %3201 = vmatpush1.msra.mxu0 0.0
        %3202 = vmatprep.subr.mxu0 0.0
        %3203 = vmatpush1.msra.mxu0 0.0
        %3204 = vmatprep.subr.mxu0 0.0
        %3205 = vmatpush1.msra.mxu0 0.0
        %3206 = vmatprep.subr.mxu0 0.0
        %3207 = vmatpush1.msra.mxu0 0.0
        %3208 = vmatprep.subr.mxu0 0.0
        %3209 = vmatpush1.msra.mxu0 0.0
        %3210 = vmatprep.subr.mxu0 0.0
        %3211 = vmatpush1.msra.mxu0 0.0
        %3212 = vmatprep.subr.mxu0 0.0
        %3213 = vmatpush1.msra.mxu0 0.0
        %3214 = vmatprep.subr.mxu0 0.0
        %3215 = vmatpush1.msra.mxu0 0.0
        %3216 = vmatprep.subr.mxu0 0.0
        %3217 = vmatpush1.msra.mxu0 0.0
        %3218 = vmatprep.subr.mxu0 0.0
        %3219 = vmatpush1.msra.mxu0 0.0
        %3220 = vmatprep.subr.mxu0 0.0
        %3221 = vmatpush1.msra.mxu0 0.0
        %3222 = vmatprep.subr.mxu0 0.0
        %3223 = vmatpush1.msra.mxu0 0.0
        %3224 = vmatprep.subr.mxu0 0.0
        %3225 = vmatpush1.msra.mxu0 0.0
        %3226 = vmatprep.mubr.f32.mxu0 0.0
        %3227 = vmatmul.mubr.f32.gmra.mrb[0].mxu0 %v3139
        %v3228 = vpop.f32.mrb[0].mxu0
        %v3229 = vadd.f32 0.0, %v3228
        %v3230 = vpop.f32.mrb[0].mxu0
        %v3231 = vadd.f32 0.0, %v3230
        %3232 = vmatprep.mubr.f32.mxu0 0.0
        %3233 = vmatmul.mubr.f32.gmra.mrb[0].mxu0 %v3142
        %v3234 = vpop.f32.mrb[0].mxu0
        %v3235 = vadd.f32 0.0, %v3234
        %v3236 = vpop.f32.mrb[0].mxu0
        %v3237 = vadd.f32 0.0, %v3236
        %3238 = vmatprep.mubr.f32.mxu0 0.0
        %3239 = vmatmul.mubr.f32.gmra.mrb[0].mxu0 %v3145
        %v3240 = vpop.f32.mrb[0].mxu0
        %v3241 = vadd.f32 0.0, %v3240
        %v3242 = vpop.f32.mrb[0].mxu0
        %v3243 = vadd.f32 0.0, %v3242
        %3244 = vmatprep.mubr.f32.mxu0 0.0
        %3245 = vmatmul.mubr.f32.gmra.mrb[0].mxu0 %v3148
        %v3246 = vpop.f32.mrb[0].mxu0
        %v3247 = vadd.f32 0.0, %v3246
        %v3248 = vpop.f32.mrb[0].mxu0
        %v3249 = vadd.f32 0.0, %v3248
        %3250 = vmatprep.mubr.f32.mxu0 0.0
        %3251 = vmatmul.mubr.f32.gmra.mrb[0].mxu0 %v3151
        %v3252 = vpop.f32.mrb[0].mxu0
        %v3253 = vadd.f32 0.0, %v3252
        %v3254 = vpop.f32.mrb[0].mxu0
        %v3255 = vadd.f32 0.0, %v3254
        %3256 = vmatprep.mubr.f32.mxu0 0.0
        %3257 = vmatmul.mubr.f32.gmra.mrb[0].mxu0 %v3154
        %v3258 = vpop.f32.mrb[0].mxu0
        %v3259 = vadd.f32 0.0, %v3258
        %v3260 = vpop.f32.mrb[0].mxu0
        %v3261 = vadd.f32 0.0, %v3260
        %3262 = vmatprep.mubr.f32.mxu0 0.0
        %3263 = vmatmul.mubr.f32.gmra.mrb[0].mxu0 %v3157
        %v3264 = vpop.f32.mrb[0].mxu0
        %v3265 = vadd.f32 0.0, %v3264
        %v3266 = vpop.f32.mrb[0].mxu0
        %v3267 = vadd.f32 0.0, %v3266
        %3268 = vmatprep.mubr.f32.mxu0 0.0
        %3269 = vmatmul.mubr.f32.gmra.mrb[0].mxu0 %v3160
        %v3270 = vpop.f32.mrb[0].mxu0
        %v3271 = vadd.f32 0.0, %v3270
        %v3272 = vpop.f32.mrb[0].mxu0
        %v3273 = vadd.f32 0.0, %v3272
        %3274 = vdwg.mxu0
        %3275 = vmatprep.subr.mxu0 %v3100
        %3276 = vmatpush1.msra.mxu0 %v3099
        %3277 = vmatprep.subr.mxu0 %v3104
        %3278 = vmatpush1.msra.mxu0 %v3103
        %3279 = vmatprep.subr.mxu0 %v3108
        %3280 = vmatpush1.msra.mxu0 %v3107
        %3281 = vmatprep.subr.mxu0 %v3112
        %3282 = vmatpush1.msra.mxu0 %v3111
        %3283 = vmatprep.subr.mxu0 0.0
        %3284 = vmatpush1.msra.mxu0 0.0
        %3285 = vmatprep.subr.mxu0 0.0
        %3286 = vmatpush1.msra.mxu0 0.0
        %3287 = vmatprep.subr.mxu0 0.0
        %3288 = vmatpush1.msra.mxu0 0.0
        %3289 = vmatprep.subr.mxu0 0.0
        %3290 = vmatpush1.msra.mxu0 0.0
        %3291 = vmatprep.subr.mxu0 0.0
        %3292 = vmatpush1.msra.mxu0 0.0
        %3293 = vmatprep.subr.mxu0 0.0
        %3294 = vmatpush1.msra.mxu0 0.0
        %3295 = vmatprep.subr.mxu0 0.0
        %3296 = vmatpush1.msra.mxu0 0.0
        %3297 = vmatprep.subr.mxu0 0.0
        %3298 = vmatpush1.msra.mxu0 0.0
        %3299 = vmatprep.subr.mxu0 0.0
        %3300 = vmatpush1.msra.mxu0 0.0
        %3301 = vmatprep.subr.mxu0 0.0
        %3302 = vmatpush1.msra.mxu0 0.0
        %3303 = vmatprep.subr.mxu0 0.0
        %3304 = vmatpush1.msra.mxu0 0.0
        %3305 = vmatprep.subr.mxu0 0.0
        %3306 = vmatpush1.msra.mxu0 0.0
        %3307 = vmatprep.subr.mxu0 0.0
        %3308 = vmatpush1.msra.mxu0 0.0
        %3309 = vmatprep.subr.mxu0 0.0
        %3310 = vmatpush1.msra.mxu0 0.0
        %3311 = vmatprep.subr.mxu0 0.0
        %3312 = vmatpush1.msra.mxu0 0.0
        %3313 = vmatprep.subr.mxu0 0.0
        %3314 = vmatpush1.msra.mxu0 0.0
        %3315 = vmatprep.subr.mxu0 0.0
        %3316 = vmatpush1.msra.mxu0 0.0
        %3317 = vmatprep.subr.mxu0 0.0
        %3318 = vmatpush1.msra.mxu0 0.0
        %3319 = vmatprep.subr.mxu0 0.0
        %3320 = vmatpush1.msra.mxu0 0.0
        %3321 = vmatprep.subr.mxu0 0.0
        %3322 = vmatpush1.msra.mxu0 0.0
        %3323 = vmatprep.subr.mxu0 0.0
        %3324 = vmatpush1.msra.mxu0 0.0
        %3325 = vmatprep.subr.mxu0 0.0
        %3326 = vmatpush1.msra.mxu0 0.0
        %3327 = vmatprep.subr.mxu0 0.0
        %3328 = vmatpush1.msra.mxu0 0.0
        %3329 = vmatprep.subr.mxu0 0.0
        %3330 = vmatpush1.msra.mxu0 0.0
        %3331 = vmatprep.subr.mxu0 0.0
        %3332 = vmatpush1.msra.mxu0 0.0
        %3333 = vmatprep.subr.mxu0 0.0
        %3334 = vmatpush1.msra.mxu0 0.0
        %3335 = vmatprep.subr.mxu0 0.0
        %3336 = vmatpush1.msra.mxu0 0.0
        %3337 = vmatprep.subr.mxu0 0.0
        %3338 = vmatpush1.msra.mxu0 0.0
        %3339 = vmatprep.mubr.f32.mxu0 0.0
        %3340 = vmatmul.mubr.f32.gmra.mrb[0].mxu0 %v3139
        %v3341 = vpop.f32.mrb[0].mxu0
        %v3342 = vadd.f32 0.0, %v3341
        %v3343 = vpop.f32.mrb[0].mxu0
        %v3344 = vadd.f32 0.0, %v3343
        %3345 = vmatprep.mubr.f32.mxu0 0.0
        %3346 = vmatmul.mubr.f32.gmra.mrb[0].mxu0 %v3142
        %v3347 = vpop.f32.mrb[0].mxu0
        %v3348 = vadd.f32 0.0, %v3347
        %v3349 = vpop.f32.mrb[0].mxu0
        %v3350 = vadd.f32 0.0, %v3349
        %3351 = vmatprep.mubr.f32.mxu0 0.0
        %3352 = vmatmul.mubr.f32.gmra.mrb[0].mxu0 %v3145
        %v3353 = vpop.f32.mrb[0].mxu0
        %v3354 = vadd.f32 0.0, %v3353
        %v3355 = vpop.f32.mrb[0].mxu0
        %v3356 = vadd.f32 0.0, %v3355
        %3357 = vmatprep.mubr.f32.mxu0 0.0
        %3358 = vmatmul.mubr.f32.gmra.mrb[0].mxu0 %v3148
        %v3359 = vpop.f32.mrb[0].mxu0
        %v3360 = vadd.f32 0.0, %v3359
        %v3361 = vpop.f32.mrb[0].mxu0
        %v3362 = vadd.f32 0.0, %v3361
        %3363 = vmatprep.mubr.f32.mxu0 0.0
        %3364 = vmatmul.mubr.f32.gmra.mrb[0].mxu0 %v3151
        %v3365 = vpop.f32.mrb[0].mxu0
        %v3366 = vadd.f32 0.0, %v3365
        %v3367 = vpop.f32.mrb[0].mxu0
        %v3368 = vadd.f32 0.0, %v3367
        %3369 = vmatprep.mubr.f32.mxu0 0.0
        %3370 = vmatmul.mubr.f32.gmra.mrb[0].mxu0 %v3154
        %v3371 = vpop.f32.mrb[0].mxu0
        %v3372 = vadd.f32 0.0, %v3371
        %v3373 = vpop.f32.mrb[0].mxu0
        %v3374 = vadd.f32 0.0, %v3373
        %3375 = vmatprep.mubr.f32.mxu0 0.0
        %3376 = vmatmul.mubr.f32.gmra.mrb[0].mxu0 %v3157
        %v3377 = vpop.f32.mrb[0].mxu0
        %v3378 = vadd.f32 0.0, %v3377
        %v3379 = vpop.f32.mrb[0].mxu0
        %v3380 = vadd.f32 0.0, %v3379
        %3381 = vmatprep.mubr.f32.mxu0 0.0
        %3382 = vmatmul.mubr.f32.gmra.mrb[0].mxu0 %v3160
        %v3383 = vpop.f32.mrb[0].mxu0
        %v3384 = vadd.f32 0.0, %v3383
        %v3385 = vpop.f32.mrb[0].mxu0
        %v3386 = vadd.f32 0.0, %v3385
        %3387 = vdwg.mxu0
        %v3388 = vmul.f32 %v3253, 0.5
        %v3389 = vmul.f32 %v3255, 0.5
        %v3390 = vmul.f32 %v3366, 0.5
        %v3391 = vmul.f32 %v3368, 0.5
        %v3392 = vmul.f32 %v3259, 0.5
        %v3393 = vmul.f32 %v3261, 0.5
        %v3394 = vmul.f32 %v3372, 0.5
        %v3395 = vmul.f32 %v3374, 0.5
        %v3396 = vmul.f32 %v3265, 0.5
        %v3397 = vmul.f32 %v3267, 0.5
        %v3398 = vmul.f32 %v3378, 0.5
        %v3399 = vmul.f32 %v3380, 0.5
        %v3400 = vmul.f32 %v3271, 0.5
        %v3401 = vmul.f32 %v3273, 0.5
        %v3402 = vmul.f32 %v3384, 0.5
        %v3403 = vmul.f32 %v3386, 0.5
        %v3404 = vtanh.pop %v3388
        %v3405 = vtanh.pop %v3389
        %v3406 = vtanh.pop %v3390
        %v3407 = vtanh.pop %v3391
        %v3408 = vtanh.pop %v3392
        %v3409 = vtanh.pop %v3393
        %v3410 = vtanh.pop %v3394
        %v3411 = vtanh.pop %v3395
        %v3412 = vtanh.pop %v3396
        %v3413 = vtanh.pop %v3397
        %v3414 = vtanh.pop %v3398
        %v3415 = vtanh.pop %v3399
        %v3416 = vtanh.pop %v3400
        %v3417 = vtanh.pop %v3401
        %v3418 = vtanh.pop %v3402
        %v3419 = vtanh.pop %v3403
        %v3420 = vmul.f32 %v3404, 0.5
        %v3421 = vmul.f32 %v3405, 0.5
        %v3422 = vmul.f32 %v3406, 0.5
        %v3423 = vmul.f32 %v3407, 0.5
        %v3424 = vmul.f32 %v3408, 0.5
        %v3425 = vmul.f32 %v3409, 0.5
        %v3426 = vmul.f32 %v3410, 0.5
        %v3427 = vmul.f32 %v3411, 0.5
        %v3428 = vmul.f32 %v3412, 0.5
        %v3429 = vmul.f32 %v3413, 0.5
        %v3430 = vmul.f32 %v3414, 0.5
        %v3431 = vmul.f32 %v3415, 0.5
        %v3432 = vmul.f32 %v3416, 0.5
        %v3433 = vmul.f32 %v3417, 0.5
        %v3434 = vmul.f32 %v3418, 0.5
        %v3435 = vmul.f32 %v3419, 0.5
        %v3436 = vadd.f32 %v3420, 0.5
        %v3437 = vadd.f32 %v3421, 0.5
        %v3438 = vadd.f32 %v3422, 0.5
        %v3439 = vadd.f32 %v3423, 0.5
        %v3440 = vadd.f32 %v3424, 0.5
        %v3441 = vadd.f32 %v3425, 0.5
        %v3442 = vadd.f32 %v3426, 0.5
        %v3443 = vadd.f32 %v3427, 0.5
        %v3444 = vadd.f32 %v3428, 0.5
        %v3445 = vadd.f32 %v3429, 0.5
        %v3446 = vadd.f32 %v3430, 0.5
        %v3447 = vadd.f32 %v3431, 0.5
        %v3448 = vadd.f32 %v3432, 0.5
        %v3449 = vadd.f32 %v3433, 0.5
        %v3450 = vadd.f32 %v3434, 0.5
        %v3451 = vadd.f32 %v3435, 0.5
        %v3452 = vmul.f32 %v3229, %v3436
        %v3453 = vmul.f32 %v3231, %v3437
        %v3454 = vmul.f32 %v3342, %v3438
        %v3455 = vmul.f32 %v3344, %v3439
        %v3456 = vmul.f32 %v3235, %v3440
        %v3457 = vmul.f32 %v3237, %v3441
        %v3458 = vmul.f32 %v3348, %v3442
        %v3459 = vmul.f32 %v3350, %v3443
        %v3460 = vmul.f32 %v3241, %v3444
        %v3461 = vmul.f32 %v3243, %v3445
        %v3462 = vmul.f32 %v3354, %v3446
        %v3463 = vmul.f32 %v3356, %v3447
        %v3464 = vmul.f32 %v3247, %v3448
        %v3465 = vmul.f32 %v3249, %v3449
        %v3466 = vmul.f32 %v3360, %v3450
        %v3467 = vmul.f32 %v3362, %v3451
        %v3468 = vadd.f32 %v3113, %v3452
        %v3469 = vadd.f32 %v3114, %v3453
        %v3470 = vadd.f32 %v3115, %v3454
        %v3471 = vadd.f32 %v3116, %v3455
        %v3472 = vadd.f32 %v3117, %v3456
        %v3473 = vadd.f32 %v3118, %v3457
        %v3474 = vadd.f32 %v3119, %v3458
        %v3475 = vadd.f32 %v3120, %v3459
        %v3476 = vadd.f32 %v3121, %v3460
        %v3477 = vadd.f32 %v3122, %v3461
        %v3478 = vadd.f32 %v3123, %v3462
        %v3479 = vadd.f32 %v3124, %v3463
        %v3480 = vadd.f32 %v3125, %v3464
        %v3481 = vadd.f32 %v3126, %v3465
        %v3482 = vadd.f32 %v3127, %v3466
        %v3483 = vadd.f32 %v3128, %v3467
        %v3484 = vmax.f32 %v3468, 0.0
        %v3485 = vmax.f32 %v3469, 0.0
        %v3486 = vmax.f32 %v3470, 0.0
        %v3487 = vmax.f32 %v3471, 0.0
        %v3488 = vmax.f32 %v3472, 0.0
        %v3489 = vmax.f32 %v3473, 0.0
        %v3490 = vmax.f32 %v3474, 0.0
        %v3491 = vmax.f32 %v3475, 0.0
        %v3492 = vadd.f32 %v3484, 0.0
        %v3493 = vadd.f32 %v3485, 0.0
        %v3494 = vadd.f32 %v3486, 0.0
        %v3495 = vadd.f32 %v3487, 0.0
        %v3496 = vadd.f32 %v3488, 0.0
        %v3497 = vadd.f32 %v3489, 0.0
        %v3498 = vadd.f32 %v3490, 0.0
        %v3499 = vadd.f32 %v3491, 0.0
        %v3500 = vsub.f32 1.3, %v2082
        %v3501 = vsub.f32 1.3, %v2083
        %v3502 = vsub.f32 1.3, %v2084
        %v3503 = vsub.f32 1.3, %v2085
        %v3504 = vsub.f32 1.3, %v2086
        %v3505 = vsub.f32 1.3, %v2087
        %v3506 = vsub.f32 1.3, %v2088
        %v3507 = vsub.f32 1.3, %v2089
        %s3508 = scalar_lea.vmem %s5, 16
        %v3509 = vld [vmem:[%s3508] sm:$0xff]
        %v3510 = vld [vmem:[%s3508 + $0x8] sm:$0xff]
        %v3512 = vsel %vm378, %v3509, 0
        %v3515 = vsel %vm378, %v3510, 0
        %3517 = vmatprep.subr.mxu0 %v3477
        %3518 = vmatpush1.msra.mxu0 %v3476
        %3519 = vmatprep.subr.mxu0 %v3481
        %3520 = vmatpush1.msra.mxu0 %v3480
        %3521 = vmatprep.subr.mxu0 0.0
        %3522 = vmatpush1.msra.mxu0 0.0
        %3523 = vmatprep.subr.mxu0 0.0
        %3524 = vmatpush1.msra.mxu0 0.0
        %3525 = vmatprep.subr.mxu0 0.0
        %3526 = vmatpush1.msra.mxu0 0.0
        %3527 = vmatprep.subr.mxu0 0.0
        %3528 = vmatpush1.msra.mxu0 0.0
        %3529 = vmatprep.subr.mxu0 0.0
        %3530 = vmatpush1.msra.mxu0 0.0
        %3531 = vmatprep.subr.mxu0 0.0
        %3532 = vmatpush1.msra.mxu0 0.0
        %3533 = vmatprep.subr.mxu0 0.0
        %3534 = vmatpush1.msra.mxu0 0.0
        %3535 = vmatprep.subr.mxu0 0.0
        %3536 = vmatpush1.msra.mxu0 0.0
        %3537 = vmatprep.subr.mxu0 0.0
        %3538 = vmatpush1.msra.mxu0 0.0
        %3539 = vmatprep.subr.mxu0 0.0
        %3540 = vmatpush1.msra.mxu0 0.0
        %3541 = vmatprep.subr.mxu0 0.0
        %3542 = vmatpush1.msra.mxu0 0.0
        %3543 = vmatprep.subr.mxu0 0.0
        %3544 = vmatpush1.msra.mxu0 0.0
        %3545 = vmatprep.subr.mxu0 0.0
        %3546 = vmatpush1.msra.mxu0 0.0
        %3547 = vmatprep.subr.mxu0 0.0
        %3548 = vmatpush1.msra.mxu0 0.0
        %3549 = vmatprep.subr.mxu0 0.0
        %3550 = vmatpush1.msra.mxu0 0.0
        %3551 = vmatprep.subr.mxu0 0.0
        %3552 = vmatpush1.msra.mxu0 0.0
        %3553 = vmatprep.subr.mxu0 0.0
        %3554 = vmatpush1.msra.mxu0 0.0
        %3555 = vmatprep.subr.mxu0 0.0
        %3556 = vmatpush1.msra.mxu0 0.0
        %3557 = vmatprep.subr.mxu0 0.0
        %3558 = vmatpush1.msra.mxu0 0.0
        %3559 = vmatprep.subr.mxu0 0.0
        %3560 = vmatpush1.msra.mxu0 0.0
        %3561 = vmatprep.subr.mxu0 0.0
        %3562 = vmatpush1.msra.mxu0 0.0
        %3563 = vmatprep.subr.mxu0 0.0
        %3564 = vmatpush1.msra.mxu0 0.0
        %3565 = vmatprep.subr.mxu0 0.0
        %3566 = vmatpush1.msra.mxu0 0.0
        %3567 = vmatprep.subr.mxu0 0.0
        %3568 = vmatpush1.msra.mxu0 0.0
        %3569 = vmatprep.subr.mxu0 0.0
        %3570 = vmatpush1.msra.mxu0 0.0
        %3571 = vmatprep.subr.mxu0 0.0
        %3572 = vmatpush1.msra.mxu0 0.0
        %3573 = vmatprep.subr.mxu0 0.0
        %3574 = vmatpush1.msra.mxu0 0.0
        %3575 = vmatprep.subr.mxu0 0.0
        %3576 = vmatpush1.msra.mxu0 0.0
        %3577 = vmatprep.subr.mxu0 0.0
        %3578 = vmatpush1.msra.mxu0 0.0
        %3579 = vmatprep.subr.mxu0 0.0
        %3580 = vmatpush1.msra.mxu0 0.0
        %3581 = vmatprep.mubr.f32.mxu0 0.0
        %3582 = vmatmul.mubr.f32.gmra.mrb[0].mxu0 %v3512
        %v3583 = vpop.f32.mrb[0].mxu0
        %v3584 = vadd.f32 0.0, %v3583
        %v3585 = vpop.f32.mrb[0].mxu0
        %v3586 = vadd.f32 0.0, %v3585
        %3587 = vmatprep.mubr.f32.mxu0 0.0
        %3588 = vmatmul.mubr.f32.gmra.mrb[0].mxu0 %v3515
        %v3589 = vpop.f32.mrb[0].mxu0
        %v3590 = vadd.f32 0.0, %v3589
        %v3591 = vpop.f32.mrb[0].mxu0
        %v3592 = vadd.f32 0.0, %v3591
        %3593 = vdwg.mxu0
        %3594 = vmatprep.subr.mxu0 %v3479
        %3595 = vmatpush1.msra.mxu0 %v3478
        %3596 = vmatprep.subr.mxu0 %v3483
        %3597 = vmatpush1.msra.mxu0 %v3482
        %3598 = vmatprep.subr.mxu0 0.0
        %3599 = vmatpush1.msra.mxu0 0.0
        %3600 = vmatprep.subr.mxu0 0.0
        %3601 = vmatpush1.msra.mxu0 0.0
        %3602 = vmatprep.subr.mxu0 0.0
        %3603 = vmatpush1.msra.mxu0 0.0
        %3604 = vmatprep.subr.mxu0 0.0
        %3605 = vmatpush1.msra.mxu0 0.0
        %3606 = vmatprep.subr.mxu0 0.0
        %3607 = vmatpush1.msra.mxu0 0.0
        %3608 = vmatprep.subr.mxu0 0.0
        %3609 = vmatpush1.msra.mxu0 0.0
        %3610 = vmatprep.subr.mxu0 0.0
        %3611 = vmatpush1.msra.mxu0 0.0
        %3612 = vmatprep.subr.mxu0 0.0
        %3613 = vmatpush1.msra.mxu0 0.0
        %3614 = vmatprep.subr.mxu0 0.0
        %3615 = vmatpush1.msra.mxu0 0.0
        %3616 = vmatprep.subr.mxu0 0.0
        %3617 = vmatpush1.msra.mxu0 0.0
        %3618 = vmatprep.subr.mxu0 0.0
        %3619 = vmatpush1.msra.mxu0 0.0
        %3620 = vmatprep.subr.mxu0 0.0
        %3621 = vmatpush1.msra.mxu0 0.0
        %3622 = vmatprep.subr.mxu0 0.0
        %3623 = vmatpush1.msra.mxu0 0.0
        %3624 = vmatprep.subr.mxu0 0.0
        %3625 = vmatpush1.msra.mxu0 0.0
        %3626 = vmatprep.subr.mxu0 0.0
        %3627 = vmatpush1.msra.mxu0 0.0
        %3628 = vmatprep.subr.mxu0 0.0
        %3629 = vmatpush1.msra.mxu0 0.0
        %3630 = vmatprep.subr.mxu0 0.0
        %3631 = vmatpush1.msra.mxu0 0.0
        %3632 = vmatprep.subr.mxu0 0.0
        %3633 = vmatpush1.msra.mxu0 0.0
        %3634 = vmatprep.subr.mxu0 0.0
        %3635 = vmatpush1.msra.mxu0 0.0
        %3636 = vmatprep.subr.mxu0 0.0
        %3637 = vmatpush1.msra.mxu0 0.0
        %3638 = vmatprep.subr.mxu0 0.0
        %3639 = vmatpush1.msra.mxu0 0.0
        %3640 = vmatprep.subr.mxu0 0.0
        %3641 = vmatpush1.msra.mxu0 0.0
        %3642 = vmatprep.subr.mxu0 0.0
        %3643 = vmatpush1.msra.mxu0 0.0
        %3644 = vmatprep.subr.mxu0 0.0
        %3645 = vmatpush1.msra.mxu0 0.0
        %3646 = vmatprep.subr.mxu0 0.0
        %3647 = vmatpush1.msra.mxu0 0.0
        %3648 = vmatprep.subr.mxu0 0.0
        %3649 = vmatpush1.msra.mxu0 0.0
        %3650 = vmatprep.subr.mxu0 0.0
        %3651 = vmatpush1.msra.mxu0 0.0
        %3652 = vmatprep.subr.mxu0 0.0
        %3653 = vmatpush1.msra.mxu0 0.0
        %3654 = vmatprep.subr.mxu0 0.0
        %3655 = vmatpush1.msra.mxu0 0.0
        %3656 = vmatprep.subr.mxu0 0.0
        %3657 = vmatpush1.msra.mxu0 0.0
        %3658 = vmatprep.mubr.f32.mxu0 0.0
        %3659 = vmatmul.mubr.f32.gmra.mrb[0].mxu0 %v3512
        %v3660 = vpop.f32.mrb[0].mxu0
        %v3661 = vadd.f32 0.0, %v3660
        %v3662 = vpop.f32.mrb[0].mxu0
        %v3663 = vadd.f32 0.0, %v3662
        %3664 = vmatprep.mubr.f32.mxu0 0.0
        %3665 = vmatmul.mubr.f32.gmra.mrb[0].mxu0 %v3515
        %v3666 = vpop.f32.mrb[0].mxu0
        %v3667 = vadd.f32 0.0, %v3666
        %v3668 = vpop.f32.mrb[0].mxu0
        %v3669 = vadd.f32 0.0, %v3668
        %3670 = vdwg.mxu0
        %s3671 = scalar_lea.vmem %s1, 48
        %v3672 = vld [vmem:[%s3671] sm:$0xff]
        %v3673 = vld [vmem:[%s3671 + $0x8] sm:$0xff]
        %s3674 = scalar_lea.vmem %s1, 96
        %v3675 = vld [vmem:[%s3674] sm:$0xff]
        %v3676 = vld [vmem:[%s3674 + $0x8] sm:$0xff]
        %v3677 = vadd.f32 %v3584, %v3586
        %v3678 = vadd.f32 %v3677, %v3661
        %v3679 = vadd.f32 %v3678, %v3663
        %3680 = vadd.xlane.f32.xlu0 %v3679
        %v3681 = vpop.xlane.xlu0 %3680
        %v3682 = vadd.f32 %v3590, %v3592
        %v3683 = vadd.f32 %v3682, %v3667
        %v3684 = vadd.f32 %v3683, %v3669
        %3685 = vadd.xlane.f32.xlu0 %v3684
        %v3686 = vpop.xlane.xlu0 %3685
        %v3687 = vmul.f32 %v3681, %v1919
        %v3688 = vmul.f32 %v3686, %v1919
        %v3689 = vsub.f32 %v3584, %v3687
        %v3690 = vsub.f32 %v3586, %v3687
        %v3691 = vsub.f32 %v3661, %v3687
        %v3692 = vsub.f32 %v3663, %v3687
        %v3693 = vsub.f32 %v3590, %v3688
        %v3694 = vsub.f32 %v3592, %v3688
        %v3695 = vsub.f32 %v3667, %v3688
        %v3696 = vsub.f32 %v3669, %v3688
        %v3697 = vmul.f32 %v3689, %v3689
        %v3698 = vmul.f32 %v3690, %v3690
        %v3699 = vmul.f32 %v3691, %v3691
        %v3700 = vmul.f32 %v3692, %v3692
        %v3701 = vmul.f32 %v3693, %v3693
        %v3702 = vmul.f32 %v3694, %v3694
        %v3703 = vmul.f32 %v3695, %v3695
        %v3704 = vmul.f32 %v3696, %v3696
        %v3705 = vadd.f32 %v3697, %v3698
        %v3706 = vadd.f32 %v3705, %v3699
        %v3707 = vadd.f32 %v3706, %v3700
        %3708 = vadd.xlane.f32.xlu0 %v3707
        %v3709 = vpop.xlane.xlu0 %3708
        %v3710 = vadd.f32 %v3701, %v3702
        %v3711 = vadd.f32 %v3710, %v3703
        %v3712 = vadd.f32 %v3711, %v3704
        %3713 = vadd.xlane.f32.xlu0 %v3712
        %v3714 = vpop.xlane.xlu0 %3713
        %v3715 = vmul.f32 %v3709, %v1919
        %v3716 = vmul.f32 %v3714, %v1919
        %v3717 = vadd.f32 %v3715, 1e-05
        %v3718 = vadd.f32 %v3716, 1e-05
        %v3719 = vrsqrt.pop %v3717
        %v3720 = vrsqrt.pop %v3718
        %v3721 = vmul.f32 %v3689, %v3719
        %v3722 = vmul.f32 %v3690, %v3719
        %v3723 = vmul.f32 %v3691, %v3719
        %v3724 = vmul.f32 %v3692, %v3719
        %v3725 = vmul.f32 %v3693, %v3720
        %v3726 = vmul.f32 %v3694, %v3720
        %v3727 = vmul.f32 %v3695, %v3720
        %v3728 = vmul.f32 %v3696, %v3720
        %3730 = vset.pattern.permute.xlu0 0
        %3731 = vperm.xlu0 %3730, %v3672
        %v3732 = vpop.permute.xlu0 %3731
        %3735 = vset.pattern.permute.xlu0 0
        %3736 = vperm.xlu0 %3735, %v3673
        %v3737 = vpop.permute.xlu0 %3736
        %v3739 = vmul.f32 %v3721, %v3732
        %v3740 = vmul.f32 %v3722, %v3732
        %v3741 = vmul.f32 %v3723, %v3732
        %v3742 = vmul.f32 %v3724, %v3732
        %v3743 = vmul.f32 %v3725, %v3737
        %v3744 = vmul.f32 %v3726, %v3737
        %v3745 = vmul.f32 %v3727, %v3737
        %v3746 = vmul.f32 %v3728, %v3737
        %3748 = vset.pattern.permute.xlu0 0
        %3749 = vperm.xlu0 %3748, %v3675
        %v3750 = vpop.permute.xlu0 %3749
        %3753 = vset.pattern.permute.xlu0 0
        %3754 = vperm.xlu0 %3753, %v3676
        %v3755 = vpop.permute.xlu0 %3754
        %v3757 = vadd.f32 %v3739, %v3750
        %v3758 = vadd.f32 %v3740, %v3750
        %v3759 = vadd.f32 %v3741, %v3750
        %v3760 = vadd.f32 %v3742, %v3750
        %v3761 = vadd.f32 %v3743, %v3755
        %v3762 = vadd.f32 %v3744, %v3755
        %v3763 = vadd.f32 %v3745, %v3755
        %v3764 = vadd.f32 %v3746, %v3755
        %v3765 = vmul.f32 %v3500, %v3757
        %v3766 = vmul.f32 %v3501, %v3758
        %v3767 = vmul.f32 %v3502, %v3759
        %v3768 = vmul.f32 %v3503, %v3760
        %v3769 = vmul.f32 %v3504, %v3761
        %v3770 = vmul.f32 %v3505, %v3762
        %v3771 = vmul.f32 %v3506, %v3763
        %v3772 = vmul.f32 %v3507, %v3764
        %v3773 = vmax.f32 %v3765, %v3769
        %v3774 = vrot.slane %v3773, 4
        %v3775 = vmax.f32 %v3773, %v3774
        %v3776 = vrot.slane %v3775, 2
        %v3777 = vmax.f32 %v3775, %v3776
        %v3778 = vrot.slane %v3777, 1
        %v3779 = vmax.f32 %v3777, %v3778
        %v3780 = vmax.f32 %v3766, %v3770
        %v3781 = vrot.slane %v3780, 4
        %v3782 = vmax.f32 %v3780, %v3781
        %v3783 = vrot.slane %v3782, 2
        %v3784 = vmax.f32 %v3782, %v3783
        %v3785 = vrot.slane %v3784, 1
        %v3786 = vmax.f32 %v3784, %v3785
        %v3787 = vmax.f32 %v3767, %v3771
        %v3788 = vrot.slane %v3787, 4
        %v3789 = vmax.f32 %v3787, %v3788
        %v3790 = vrot.slane %v3789, 2
        %v3791 = vmax.f32 %v3789, %v3790
        %v3792 = vrot.slane %v3791, 1
        %v3793 = vmax.f32 %v3791, %v3792
        %v3794 = vmax.f32 %v3768, %v3772
        %v3795 = vrot.slane %v3794, 4
        %v3796 = vmax.f32 %v3794, %v3795
        %v3797 = vrot.slane %v3796, 2
        %v3798 = vmax.f32 %v3796, %v3797
        %v3799 = vrot.slane %v3798, 1
        %v3800 = vmax.f32 %v3798, %v3799
        %v3801 = vsub.f32 %v3765, %v3779
        %v3802 = vsub.f32 %v3766, %v3786
        %v3803 = vsub.f32 %v3767, %v3793
        %v3804 = vsub.f32 %v3768, %v3800
        %v3805 = vsub.f32 %v3769, %v3779
        %v3806 = vsub.f32 %v3770, %v3786
        %v3807 = vsub.f32 %v3771, %v3793
        %v3808 = vsub.f32 %v3772, %v3800
        %v3809 = vmul.f32 %v3801, 1.442695
        %v3810 = vpow.pop %v3809
        %v3811 = vmul.f32 %v3802, 1.442695
        %v3812 = vpow.pop %v3811
        %v3813 = vmul.f32 %v3803, 1.442695
        %v3814 = vpow.pop %v3813
        %v3815 = vmul.f32 %v3804, 1.442695
        %v3816 = vpow.pop %v3815
        %v3817 = vmul.f32 %v3805, 1.442695
        %v3818 = vpow.pop %v3817
        %v3819 = vmul.f32 %v3806, 1.442695
        %v3820 = vpow.pop %v3819
        %v3821 = vmul.f32 %v3807, 1.442695
        %v3822 = vpow.pop %v3821
        %v3823 = vmul.f32 %v3808, 1.442695
        %v3824 = vpow.pop %v3823
        %v3825 = vadd.f32 %v3810, %v3818
        %v3826 = vrot.slane %v3825, 4
        %v3827 = vadd.f32 %v3825, %v3826
        %v3828 = vrot.slane %v3827, 2
        %v3829 = vadd.f32 %v3827, %v3828
        %v3830 = vrot.slane %v3829, 1
        %v3831 = vadd.f32 %v3829, %v3830
        %v3832 = vadd.f32 %v3812, %v3820
        %v3833 = vrot.slane %v3832, 4
        %v3834 = vadd.f32 %v3832, %v3833
        %v3835 = vrot.slane %v3834, 2
        %v3836 = vadd.f32 %v3834, %v3835
        %v3837 = vrot.slane %v3836, 1
        %v3838 = vadd.f32 %v3836, %v3837
        %v3839 = vadd.f32 %v3814, %v3822
        %v3840 = vrot.slane %v3839, 4
        %v3841 = vadd.f32 %v3839, %v3840
        %v3842 = vrot.slane %v3841, 2
        %v3843 = vadd.f32 %v3841, %v3842
        %v3844 = vrot.slane %v3843, 1
        %v3845 = vadd.f32 %v3843, %v3844
        %v3846 = vadd.f32 %v3816, %v3824
        %v3847 = vrot.slane %v3846, 4
        %v3848 = vadd.f32 %v3846, %v3847
        %v3849 = vrot.slane %v3848, 2
        %v3850 = vadd.f32 %v3848, %v3849
        %v3851 = vrot.slane %v3850, 1
        %v3852 = vadd.f32 %v3850, %v3851
        %v3853 = vrcp.pop %v3831
        %v3854 = vrcp.pop %v3838
        %v3855 = vrcp.pop %v3845
        %v3856 = vrcp.pop %v3852
        %v3857 = vmul.f32 %v3810, %v3853
        %v3858 = vmul.f32 %v3812, %v3854
        %v3859 = vmul.f32 %v3814, %v3855
        %v3860 = vmul.f32 %v3816, %v3856
        %v3861 = vmul.f32 %v3818, %v3853
        %v3862 = vmul.f32 %v3820, %v3854
        %v3863 = vmul.f32 %v3822, %v3855
        %v3864 = vmul.f32 %v3824, %v3856
        %v3865 = vmul.f32 %v3857, %v354
        %v3866 = vmul.f32 %v3858, %v355
        %v3867 = vmul.f32 %v3859, %v356
        %v3868 = vmul.f32 %v3860, %v357
        %v3869 = vmul.f32 %v3861, %v358
        %v3870 = vmul.f32 %v3862, %v359
        %v3871 = vmul.f32 %v3863, %v360
        %v3872 = vmul.f32 %v3864, %v361
        %3873 = vmatprep.subr.mxu0 %v3866
        %3874 = vmatpush1.msra.mxu0 %v3865
        %3875 = vmatprep.subr.mxu0 %v3870
        %3876 = vmatpush1.msra.mxu0 %v3869
        %3877 = vmatprep.subr.mxu0 0.0
        %3878 = vmatpush1.msra.mxu0 0.0
        %3879 = vmatprep.subr.mxu0 0.0
        %3880 = vmatpush1.msra.mxu0 0.0
        %3881 = vmatprep.subr.mxu0 0.0
        %3882 = vmatpush1.msra.mxu0 0.0
        %3883 = vmatprep.subr.mxu0 0.0
        %3884 = vmatpush1.msra.mxu0 0.0
        %3885 = vmatprep.subr.mxu0 0.0
        %3886 = vmatpush1.msra.mxu0 0.0
        %3887 = vmatprep.subr.mxu0 0.0
        %3888 = vmatpush1.msra.mxu0 0.0
        %3889 = vmatprep.subr.mxu0 0.0
        %3890 = vmatpush1.msra.mxu0 0.0
        %3891 = vmatprep.subr.mxu0 0.0
        %3892 = vmatpush1.msra.mxu0 0.0
        %3893 = vmatprep.subr.mxu0 0.0
        %3894 = vmatpush1.msra.mxu0 0.0
        %3895 = vmatprep.subr.mxu0 0.0
        %3896 = vmatpush1.msra.mxu0 0.0
        %3897 = vmatprep.subr.mxu0 0.0
        %3898 = vmatpush1.msra.mxu0 0.0
        %3899 = vmatprep.subr.mxu0 0.0
        %3900 = vmatpush1.msra.mxu0 0.0
        %3901 = vmatprep.subr.mxu0 0.0
        %3902 = vmatpush1.msra.mxu0 0.0
        %3903 = vmatprep.subr.mxu0 0.0
        %3904 = vmatpush1.msra.mxu0 0.0
        %3905 = vmatprep.subr.mxu0 0.0
        %3906 = vmatpush1.msra.mxu0 0.0
        %3907 = vmatprep.subr.mxu0 0.0
        %3908 = vmatpush1.msra.mxu0 0.0
        %3909 = vmatprep.subr.mxu0 0.0
        %3910 = vmatpush1.msra.mxu0 0.0
        %3911 = vmatprep.subr.mxu0 0.0
        %3912 = vmatpush1.msra.mxu0 0.0
        %3913 = vmatprep.subr.mxu0 0.0
        %3914 = vmatpush1.msra.mxu0 0.0
        %3915 = vmatprep.subr.mxu0 0.0
        %3916 = vmatpush1.msra.mxu0 0.0
        %3917 = vmatprep.subr.mxu0 0.0
        %3918 = vmatpush1.msra.mxu0 0.0
        %3919 = vmatprep.subr.mxu0 0.0
        %3920 = vmatpush1.msra.mxu0 0.0
        %3921 = vmatprep.subr.mxu0 0.0
        %3922 = vmatpush1.msra.mxu0 0.0
        %3923 = vmatprep.subr.mxu0 0.0
        %3924 = vmatpush1.msra.mxu0 0.0
        %3925 = vmatprep.subr.mxu0 0.0
        %3926 = vmatpush1.msra.mxu0 0.0
        %3927 = vmatprep.subr.mxu0 0.0
        %3928 = vmatpush1.msra.mxu0 0.0
        %3929 = vmatprep.subr.mxu0 0.0
        %3930 = vmatpush1.msra.mxu0 0.0
        %3931 = vmatprep.subr.mxu0 0.0
        %3932 = vmatpush1.msra.mxu0 0.0
        %3933 = vmatprep.subr.mxu0 0.0
        %3934 = vmatpush1.msra.mxu0 0.0
        %3935 = vmatprep.subr.mxu0 0.0
        %3936 = vmatpush1.msra.mxu0 0.0
        %3937 = vmatprep.mubr.f32.mxu0 0.0
        %3938 = vmatmul.mubr.f32.gmra.mrb[0].mxu0 %v380
        %v3939 = vpop.f32.mrb[0].mxu0
        %v3940 = vadd.f32 0.0, %v3939
        %v3941 = vpop.f32.mrb[0].mxu0
        %v3942 = vadd.f32 0.0, %v3941
        %3943 = vmatprep.mubr.f32.mxu0 0.0
        %3944 = vmatmul.mubr.f32.gmra.mrb[0].mxu0 %v383
        %v3945 = vpop.f32.mrb[0].mxu0
        %v3946 = vadd.f32 0.0, %v3945
        %v3947 = vpop.f32.mrb[0].mxu0
        %v3948 = vadd.f32 0.0, %v3947
        %3949 = vmatprep.mubr.f32.mxu0 0.0
        %3950 = vmatmul.mubr.f32.gmra.mrb[0].mxu0 %v386
        %v3951 = vpop.f32.mrb[0].mxu0
        %v3952 = vadd.f32 0.0, %v3951
        %v3953 = vpop.f32.mrb[0].mxu0
        %v3954 = vadd.f32 0.0, %v3953
        %3955 = vmatprep.mubr.f32.mxu0 0.0
        %3956 = vmatmul.mubr.f32.gmra.mrb[0].mxu0 %v389
        %v3957 = vpop.f32.mrb[0].mxu0
        %v3958 = vadd.f32 0.0, %v3957
        %v3959 = vpop.f32.mrb[0].mxu0
        %v3960 = vadd.f32 0.0, %v3959
        %3961 = vmatprep.mubr.f32.mxu0 0.0
        %3962 = vmatmul.mubr.f32.gmra.mrb[0].mxu0 %v392
        %v3963 = vpop.f32.mrb[0].mxu0
        %v3964 = vadd.f32 0.0, %v3963
        %v3965 = vpop.f32.mrb[0].mxu0
        %v3966 = vadd.f32 0.0, %v3965
        %3967 = vmatprep.mubr.f32.mxu0 0.0
        %3968 = vmatmul.mubr.f32.gmra.mrb[0].mxu0 %v395
        %v3969 = vpop.f32.mrb[0].mxu0
        %v3970 = vadd.f32 0.0, %v3969
        %v3971 = vpop.f32.mrb[0].mxu0
        %v3972 = vadd.f32 0.0, %v3971
        %3973 = vmatprep.mubr.f32.mxu0 0.0
        %3974 = vmatmul.mubr.f32.gmra.mrb[0].mxu0 %v398
        %v3975 = vpop.f32.mrb[0].mxu0
        %v3976 = vadd.f32 0.0, %v3975
        %v3977 = vpop.f32.mrb[0].mxu0
        %v3978 = vadd.f32 0.0, %v3977
        %3979 = vmatprep.mubr.f32.mxu0 0.0
        %3980 = vmatmul.mubr.f32.gmra.mrb[0].mxu0 %v401
        %v3981 = vpop.f32.mrb[0].mxu0
        %v3982 = vadd.f32 0.0, %v3981
        %v3983 = vpop.f32.mrb[0].mxu0
        %v3984 = vadd.f32 0.0, %v3983
        %3985 = vdwg.mxu0
        %3986 = vmatprep.subr.mxu0 %v3868
        %3987 = vmatpush1.msra.mxu0 %v3867
        %3988 = vmatprep.subr.mxu0 %v3872
        %3989 = vmatpush1.msra.mxu0 %v3871
        %3990 = vmatprep.subr.mxu0 0.0
        %3991 = vmatpush1.msra.mxu0 0.0
        %3992 = vmatprep.subr.mxu0 0.0
        %3993 = vmatpush1.msra.mxu0 0.0
        %3994 = vmatprep.subr.mxu0 0.0
        %3995 = vmatpush1.msra.mxu0 0.0
        %3996 = vmatprep.subr.mxu0 0.0
        %3997 = vmatpush1.msra.mxu0 0.0
        %3998 = vmatprep.subr.mxu0 0.0
        %3999 = vmatpush1.msra.mxu0 0.0
        %4000 = vmatprep.subr.mxu0 0.0
        %4001 = vmatpush1.msra.mxu0 0.0
        %4002 = vmatprep.subr.mxu0 0.0
        %4003 = vmatpush1.msra.mxu0 0.0
        %4004 = vmatprep.subr.mxu0 0.0
        %4005 = vmatpush1.msra.mxu0 0.0
        %4006 = vmatprep.subr.mxu0 0.0
        %4007 = vmatpush1.msra.mxu0 0.0
        %4008 = vmatprep.subr.mxu0 0.0
        %4009 = vmatpush1.msra.mxu0 0.0
        %4010 = vmatprep.subr.mxu0 0.0
        %4011 = vmatpush1.msra.mxu0 0.0
        %4012 = vmatprep.subr.mxu0 0.0
        %4013 = vmatpush1.msra.mxu0 0.0
        %4014 = vmatprep.subr.mxu0 0.0
        %4015 = vmatpush1.msra.mxu0 0.0
        %4016 = vmatprep.subr.mxu0 0.0
        %4017 = vmatpush1.msra.mxu0 0.0
        %4018 = vmatprep.subr.mxu0 0.0
        %4019 = vmatpush1.msra.mxu0 0.0
        %4020 = vmatprep.subr.mxu0 0.0
        %4021 = vmatpush1.msra.mxu0 0.0
        %4022 = vmatprep.subr.mxu0 0.0
        %4023 = vmatpush1.msra.mxu0 0.0
        %4024 = vmatprep.subr.mxu0 0.0
        %4025 = vmatpush1.msra.mxu0 0.0
        %4026 = vmatprep.subr.mxu0 0.0
        %4027 = vmatpush1.msra.mxu0 0.0
        %4028 = vmatprep.subr.mxu0 0.0
        %4029 = vmatpush1.msra.mxu0 0.0
        %4030 = vmatprep.subr.mxu0 0.0
        %4031 = vmatpush1.msra.mxu0 0.0
        %4032 = vmatprep.subr.mxu0 0.0
        %4033 = vmatpush1.msra.mxu0 0.0
        %4034 = vmatprep.subr.mxu0 0.0
        %4035 = vmatpush1.msra.mxu0 0.0
        %4036 = vmatprep.subr.mxu0 0.0
        %4037 = vmatpush1.msra.mxu0 0.0
        %4038 = vmatprep.subr.mxu0 0.0
        %4039 = vmatpush1.msra.mxu0 0.0
        %4040 = vmatprep.subr.mxu0 0.0
        %4041 = vmatpush1.msra.mxu0 0.0
        %4042 = vmatprep.subr.mxu0 0.0
        %4043 = vmatpush1.msra.mxu0 0.0
        %4044 = vmatprep.subr.mxu0 0.0
        %4045 = vmatpush1.msra.mxu0 0.0
        %4046 = vmatprep.subr.mxu0 0.0
        %4047 = vmatpush1.msra.mxu0 0.0
        %4048 = vmatprep.subr.mxu0 0.0
        %4049 = vmatpush1.msra.mxu0 0.0
        %4050 = vmatprep.mubr.f32.mxu0 0.0
        %4051 = vmatmul.mubr.f32.gmra.mrb[0].mxu0 %v380
        %v4052 = vpop.f32.mrb[0].mxu0
        %v4053 = vadd.f32 0.0, %v4052
        %v4054 = vpop.f32.mrb[0].mxu0
        %v4055 = vadd.f32 0.0, %v4054
        %4056 = vmatprep.mubr.f32.mxu0 0.0
        %4057 = vmatmul.mubr.f32.gmra.mrb[0].mxu0 %v383
        %v4058 = vpop.f32.mrb[0].mxu0
        %v4059 = vadd.f32 0.0, %v4058
        %v4060 = vpop.f32.mrb[0].mxu0
        %v4061 = vadd.f32 0.0, %v4060
        %4062 = vmatprep.mubr.f32.mxu0 0.0
        %4063 = vmatmul.mubr.f32.gmra.mrb[0].mxu0 %v386
        %v4064 = vpop.f32.mrb[0].mxu0
        %v4065 = vadd.f32 0.0, %v4064
        %v4066 = vpop.f32.mrb[0].mxu0
        %v4067 = vadd.f32 0.0, %v4066
        %4068 = vmatprep.mubr.f32.mxu0 0.0
        %4069 = vmatmul.mubr.f32.gmra.mrb[0].mxu0 %v389
        %v4070 = vpop.f32.mrb[0].mxu0
        %v4071 = vadd.f32 0.0, %v4070
        %v4072 = vpop.f32.mrb[0].mxu0
        %v4073 = vadd.f32 0.0, %v4072
        %4074 = vmatprep.mubr.f32.mxu0 0.0
        %4075 = vmatmul.mubr.f32.gmra.mrb[0].mxu0 %v392
        %v4076 = vpop.f32.mrb[0].mxu0
        %v4077 = vadd.f32 0.0, %v4076
        %v4078 = vpop.f32.mrb[0].mxu0
        %v4079 = vadd.f32 0.0, %v4078
        %4080 = vmatprep.mubr.f32.mxu0 0.0
        %4081 = vmatmul.mubr.f32.gmra.mrb[0].mxu0 %v395
        %v4082 = vpop.f32.mrb[0].mxu0
        %v4083 = vadd.f32 0.0, %v4082
        %v4084 = vpop.f32.mrb[0].mxu0
        %v4085 = vadd.f32 0.0, %v4084
        %4086 = vmatprep.mubr.f32.mxu0 0.0
        %4087 = vmatmul.mubr.f32.gmra.mrb[0].mxu0 %v398
        %v4088 = vpop.f32.mrb[0].mxu0
        %v4089 = vadd.f32 0.0, %v4088
        %v4090 = vpop.f32.mrb[0].mxu0
        %v4091 = vadd.f32 0.0, %v4090
        %4092 = vmatprep.mubr.f32.mxu0 0.0
        %4093 = vmatmul.mubr.f32.gmra.mrb[0].mxu0 %v401
        %v4094 = vpop.f32.mrb[0].mxu0
        %v4095 = vadd.f32 0.0, %v4094
        %v4096 = vpop.f32.mrb[0].mxu0
        %v4097 = vadd.f32 0.0, %v4096
        %4098 = vdwg.mxu0
        %v4099 = vmul.f32 %v3964, 0.5
        %v4100 = vmul.f32 %v3966, 0.5
        %v4101 = vmul.f32 %v4077, 0.5
        %v4102 = vmul.f32 %v4079, 0.5
        %v4103 = vmul.f32 %v3970, 0.5
        %v4104 = vmul.f32 %v3972, 0.5
        %v4105 = vmul.f32 %v4083, 0.5
        %v4106 = vmul.f32 %v4085, 0.5
        %v4107 = vmul.f32 %v3976, 0.5
        %v4108 = vmul.f32 %v3978, 0.5
        %v4109 = vmul.f32 %v4089, 0.5
        %v4110 = vmul.f32 %v4091, 0.5
        %v4111 = vmul.f32 %v3982, 0.5
        %v4112 = vmul.f32 %v3984, 0.5
        %v4113 = vmul.f32 %v4095, 0.5
        %v4114 = vmul.f32 %v4097, 0.5
        %v4115 = vtanh.pop %v4099
        %v4116 = vtanh.pop %v4100
        %v4117 = vtanh.pop %v4101
        %v4118 = vtanh.pop %v4102
        %v4119 = vtanh.pop %v4103
        %v4120 = vtanh.pop %v4104
        %v4121 = vtanh.pop %v4105
        %v4122 = vtanh.pop %v4106
        %v4123 = vtanh.pop %v4107
        %v4124 = vtanh.pop %v4108
        %v4125 = vtanh.pop %v4109
        %v4126 = vtanh.pop %v4110
        %v4127 = vtanh.pop %v4111
        %v4128 = vtanh.pop %v4112
        %v4129 = vtanh.pop %v4113
        %v4130 = vtanh.pop %v4114
        %v4131 = vmul.f32 %v4115, 0.5
        %v4132 = vmul.f32 %v4116, 0.5
        %v4133 = vmul.f32 %v4117, 0.5
        %v4134 = vmul.f32 %v4118, 0.5
        %v4135 = vmul.f32 %v4119, 0.5
        %v4136 = vmul.f32 %v4120, 0.5
        %v4137 = vmul.f32 %v4121, 0.5
        %v4138 = vmul.f32 %v4122, 0.5
        %v4139 = vmul.f32 %v4123, 0.5
        %v4140 = vmul.f32 %v4124, 0.5
        %v4141 = vmul.f32 %v4125, 0.5
        %v4142 = vmul.f32 %v4126, 0.5
        %v4143 = vmul.f32 %v4127, 0.5
        %v4144 = vmul.f32 %v4128, 0.5
        %v4145 = vmul.f32 %v4129, 0.5
        %v4146 = vmul.f32 %v4130, 0.5
        %v4147 = vadd.f32 %v4131, 0.5
        %v4148 = vadd.f32 %v4132, 0.5
        %v4149 = vadd.f32 %v4133, 0.5
        %v4150 = vadd.f32 %v4134, 0.5
        %v4151 = vadd.f32 %v4135, 0.5
        %v4152 = vadd.f32 %v4136, 0.5
        %v4153 = vadd.f32 %v4137, 0.5
        %v4154 = vadd.f32 %v4138, 0.5
        %v4155 = vadd.f32 %v4139, 0.5
        %v4156 = vadd.f32 %v4140, 0.5
        %v4157 = vadd.f32 %v4141, 0.5
        %v4158 = vadd.f32 %v4142, 0.5
        %v4159 = vadd.f32 %v4143, 0.5
        %v4160 = vadd.f32 %v4144, 0.5
        %v4161 = vadd.f32 %v4145, 0.5
        %v4162 = vadd.f32 %v4146, 0.5
        %v4163 = vmul.f32 %v3940, %v4147
        %v4164 = vmul.f32 %v3942, %v4148
        %v4165 = vmul.f32 %v4053, %v4149
        %v4166 = vmul.f32 %v4055, %v4150
        %v4167 = vmul.f32 %v3946, %v4151
        %v4168 = vmul.f32 %v3948, %v4152
        %v4169 = vmul.f32 %v4059, %v4153
        %v4170 = vmul.f32 %v4061, %v4154
        %v4171 = vmul.f32 %v3952, %v4155
        %v4172 = vmul.f32 %v3954, %v4156
        %v4173 = vmul.f32 %v4065, %v4157
        %v4174 = vmul.f32 %v4067, %v4158
        %v4175 = vmul.f32 %v3958, %v4159
        %v4176 = vmul.f32 %v3960, %v4160
        %v4177 = vmul.f32 %v4071, %v4161
        %v4178 = vmul.f32 %v4073, %v4162
        %v4179 = vmul.f32 %v4163, 0.70710677
        %v4180 = vmul.f32 %v4164, 0.70710677
        %v4181 = vmul.f32 %v4165, 0.70710677
        %v4182 = vmul.f32 %v4166, 0.70710677
        %v4183 = vmul.f32 %v4167, 0.70710677
        %v4184 = vmul.f32 %v4168, 0.70710677
        %v4185 = vmul.f32 %v4169, 0.70710677
        %v4186 = vmul.f32 %v4170, 0.70710677
        %v4187 = vmul.f32 %v4171, 0.70710677
        %v4188 = vmul.f32 %v4172, 0.70710677
        %v4189 = vmul.f32 %v4173, 0.70710677
        %v4190 = vmul.f32 %v4174, 0.70710677
        %v4191 = vmul.f32 %v4175, 0.70710677
        %v4192 = vmul.f32 %v4176, 0.70710677
        %v4193 = vmul.f32 %v4177, 0.70710677
        %v4194 = vmul.f32 %v4178, 0.70710677
        %4195 = vmatprep.subr.mxu0 %v4164
        %4196 = vmatpush1.msra.mxu0 %v4163
        %4197 = vmatprep.subr.mxu0 %v4168
        %4198 = vmatpush1.msra.mxu0 %v4167
        %4199 = vmatprep.subr.mxu0 %v4172
        %4200 = vmatpush1.msra.mxu0 %v4171
        %4201 = vmatprep.subr.mxu0 %v4176
        %4202 = vmatpush1.msra.mxu0 %v4175
        %4203 = vmatprep.subr.mxu0 0.0
        %4204 = vmatpush1.msra.mxu0 0.0
        %4205 = vmatprep.subr.mxu0 0.0
        %4206 = vmatpush1.msra.mxu0 0.0
        %4207 = vmatprep.subr.mxu0 0.0
        %4208 = vmatpush1.msra.mxu0 0.0
        %4209 = vmatprep.subr.mxu0 0.0
        %4210 = vmatpush1.msra.mxu0 0.0
        %4211 = vmatprep.subr.mxu0 0.0
        %4212 = vmatpush1.msra.mxu0 0.0
        %4213 = vmatprep.subr.mxu0 0.0
        %4214 = vmatpush1.msra.mxu0 0.0
        %4215 = vmatprep.subr.mxu0 0.0
        %4216 = vmatpush1.msra.mxu0 0.0
        %4217 = vmatprep.subr.mxu0 0.0
        %4218 = vmatpush1.msra.mxu0 0.0
        %4219 = vmatprep.subr.mxu0 0.0
        %4220 = vmatpush1.msra.mxu0 0.0
        %4221 = vmatprep.subr.mxu0 0.0
        %4222 = vmatpush1.msra.mxu0 0.0
        %4223 = vmatprep.subr.mxu0 0.0
        %4224 = vmatpush1.msra.mxu0 0.0
        %4225 = vmatprep.subr.mxu0 0.0
        %4226 = vmatpush1.msra.mxu0 0.0
        %4227 = vmatprep.subr.mxu0 0.0
        %4228 = vmatpush1.msra.mxu0 0.0
        %4229 = vmatprep.subr.mxu0 0.0
        %4230 = vmatpush1.msra.mxu0 0.0
        %4231 = vmatprep.subr.mxu0 0.0
        %4232 = vmatpush1.msra.mxu0 0.0
        %4233 = vmatprep.subr.mxu0 0.0
        %4234 = vmatpush1.msra.mxu0 0.0
        %4235 = vmatprep.subr.mxu0 0.0
        %4236 = vmatpush1.msra.mxu0 0.0
        %4237 = vmatprep.subr.mxu0 0.0
        %4238 = vmatpush1.msra.mxu0 0.0
        %4239 = vmatprep.subr.mxu0 0.0
        %4240 = vmatpush1.msra.mxu0 0.0
        %4241 = vmatprep.subr.mxu0 0.0
        %4242 = vmatpush1.msra.mxu0 0.0
        %4243 = vmatprep.subr.mxu0 0.0
        %4244 = vmatpush1.msra.mxu0 0.0
        %4245 = vmatprep.subr.mxu0 0.0
        %4246 = vmatpush1.msra.mxu0 0.0
        %4247 = vmatprep.subr.mxu0 0.0
        %4248 = vmatpush1.msra.mxu0 0.0
        %4249 = vmatprep.subr.mxu0 0.0
        %4250 = vmatpush1.msra.mxu0 0.0
        %4251 = vmatprep.subr.mxu0 0.0
        %4252 = vmatpush1.msra.mxu0 0.0
        %4253 = vmatprep.subr.mxu0 0.0
        %4254 = vmatpush1.msra.mxu0 0.0
        %4255 = vmatprep.subr.mxu0 0.0
        %4256 = vmatpush1.msra.mxu0 0.0
        %4257 = vmatprep.subr.mxu0 0.0
        %4258 = vmatpush1.msra.mxu0 0.0
        %4259 = vmatprep.mubr.f32.mxu0 0.0
        %4260 = vmatmul.mubr.f32.gmra.mrb[0].mxu0 %v727
        %v4261 = vpop.f32.mrb[0].mxu0
        %v4262 = vadd.f32 0.0, %v4261
        %v4263 = vpop.f32.mrb[0].mxu0
        %v4264 = vadd.f32 0.0, %v4263
        %4265 = vmatprep.mubr.f32.mxu0 0.0
        %4266 = vmatmul.mubr.f32.gmra.mrb[0].mxu0 %v730
        %v4267 = vpop.f32.mrb[0].mxu0
        %v4268 = vadd.f32 0.0, %v4267
        %v4269 = vpop.f32.mrb[0].mxu0
        %v4270 = vadd.f32 0.0, %v4269
        %4271 = vmatprep.mubr.f32.mxu0 0.0
        %4272 = vmatmul.mubr.f32.gmra.mrb[0].mxu0 %v733
        %v4273 = vpop.f32.mrb[0].mxu0
        %v4274 = vadd.f32 0.0, %v4273
        %v4275 = vpop.f32.mrb[0].mxu0
        %v4276 = vadd.f32 0.0, %v4275
        %4277 = vmatprep.mubr.f32.mxu0 0.0
        %4278 = vmatmul.mubr.f32.gmra.mrb[0].mxu0 %v736
        %v4279 = vpop.f32.mrb[0].mxu0
        %v4280 = vadd.f32 0.0, %v4279
        %v4281 = vpop.f32.mrb[0].mxu0
        %v4282 = vadd.f32 0.0, %v4281
        %4283 = vmatprep.mubr.f32.mxu0 0.0
        %4284 = vmatmul.mubr.f32.gmra.mrb[0].mxu0 %v739
        %v4285 = vpop.f32.mrb[0].mxu0
        %v4286 = vadd.f32 0.0, %v4285
        %v4287 = vpop.f32.mrb[0].mxu0
        %v4288 = vadd.f32 0.0, %v4287
        %4289 = vmatprep.mubr.f32.mxu0 0.0
        %4290 = vmatmul.mubr.f32.gmra.mrb[0].mxu0 %v742
        %v4291 = vpop.f32.mrb[0].mxu0
        %v4292 = vadd.f32 0.0, %v4291
        %v4293 = vpop.f32.mrb[0].mxu0
        %v4294 = vadd.f32 0.0, %v4293
        %4295 = vmatprep.mubr.f32.mxu0 0.0
        %4296 = vmatmul.mubr.f32.gmra.mrb[0].mxu0 %v745
        %v4297 = vpop.f32.mrb[0].mxu0
        %v4298 = vadd.f32 0.0, %v4297
        %v4299 = vpop.f32.mrb[0].mxu0
        %v4300 = vadd.f32 0.0, %v4299
        %4301 = vmatprep.mubr.f32.mxu0 0.0
        %4302 = vmatmul.mubr.f32.gmra.mrb[0].mxu0 %v748
        %v4303 = vpop.f32.mrb[0].mxu0
        %v4304 = vadd.f32 0.0, %v4303
        %v4305 = vpop.f32.mrb[0].mxu0
        %v4306 = vadd.f32 0.0, %v4305
        %4307 = vdwg.mxu0
        %4308 = vmatprep.subr.mxu0 %v4166
        %4309 = vmatpush1.msra.mxu0 %v4165
        %4310 = vmatprep.subr.mxu0 %v4170
        %4311 = vmatpush1.msra.mxu0 %v4169
        %4312 = vmatprep.subr.mxu0 %v4174
        %4313 = vmatpush1.msra.mxu0 %v4173
        %4314 = vmatprep.subr.mxu0 %v4178
        %4315 = vmatpush1.msra.mxu0 %v4177
        %4316 = vmatprep.subr.mxu0 0.0
        %4317 = vmatpush1.msra.mxu0 0.0
        %4318 = vmatprep.subr.mxu0 0.0
        %4319 = vmatpush1.msra.mxu0 0.0
        %4320 = vmatprep.subr.mxu0 0.0
        %4321 = vmatpush1.msra.mxu0 0.0
        %4322 = vmatprep.subr.mxu0 0.0
        %4323 = vmatpush1.msra.mxu0 0.0
        %4324 = vmatprep.subr.mxu0 0.0
        %4325 = vmatpush1.msra.mxu0 0.0
        %4326 = vmatprep.subr.mxu0 0.0
        %4327 = vmatpush1.msra.mxu0 0.0
        %4328 = vmatprep.subr.mxu0 0.0
        %4329 = vmatpush1.msra.mxu0 0.0
        %4330 = vmatprep.subr.mxu0 0.0
        %4331 = vmatpush1.msra.mxu0 0.0
        %4332 = vmatprep.subr.mxu0 0.0
        %4333 = vmatpush1.msra.mxu0 0.0
        %4334 = vmatprep.subr.mxu0 0.0
        %4335 = vmatpush1.msra.mxu0 0.0
        %4336 = vmatprep.subr.mxu0 0.0
        %4337 = vmatpush1.msra.mxu0 0.0
        %4338 = vmatprep.subr.mxu0 0.0
        %4339 = vmatpush1.msra.mxu0 0.0
        %4340 = vmatprep.subr.mxu0 0.0
        %4341 = vmatpush1.msra.mxu0 0.0
        %4342 = vmatprep.subr.mxu0 0.0
        %4343 = vmatpush1.msra.mxu0 0.0
        %4344 = vmatprep.subr.mxu0 0.0
        %4345 = vmatpush1.msra.mxu0 0.0
        %4346 = vmatprep.subr.mxu0 0.0
        %4347 = vmatpush1.msra.mxu0 0.0
        %4348 = vmatprep.subr.mxu0 0.0
        %4349 = vmatpush1.msra.mxu0 0.0
        %4350 = vmatprep.subr.mxu0 0.0
        %4351 = vmatpush1.msra.mxu0 0.0
        %4352 = vmatprep.subr.mxu0 0.0
        %4353 = vmatpush1.msra.mxu0 0.0
        %4354 = vmatprep.subr.mxu0 0.0
        %4355 = vmatpush1.msra.mxu0 0.0
        %4356 = vmatprep.subr.mxu0 0.0
        %4357 = vmatpush1.msra.mxu0 0.0
        %4358 = vmatprep.subr.mxu0 0.0
        %4359 = vmatpush1.msra.mxu0 0.0
        %4360 = vmatprep.subr.mxu0 0.0
        %4361 = vmatpush1.msra.mxu0 0.0
        %4362 = vmatprep.subr.mxu0 0.0
        %4363 = vmatpush1.msra.mxu0 0.0
        %4364 = vmatprep.subr.mxu0 0.0
        %4365 = vmatpush1.msra.mxu0 0.0
        %4366 = vmatprep.subr.mxu0 0.0
        %4367 = vmatpush1.msra.mxu0 0.0
        %4368 = vmatprep.subr.mxu0 0.0
        %4369 = vmatpush1.msra.mxu0 0.0
        %4370 = vmatprep.subr.mxu0 0.0
        %4371 = vmatpush1.msra.mxu0 0.0
        %4372 = vmatprep.mubr.f32.mxu0 0.0
        %4373 = vmatmul.mubr.f32.gmra.mrb[0].mxu0 %v727
        %v4374 = vpop.f32.mrb[0].mxu0
        %v4375 = vadd.f32 0.0, %v4374
        %v4376 = vpop.f32.mrb[0].mxu0
        %v4377 = vadd.f32 0.0, %v4376
        %4378 = vmatprep.mubr.f32.mxu0 0.0
        %4379 = vmatmul.mubr.f32.gmra.mrb[0].mxu0 %v730
        %v4380 = vpop.f32.mrb[0].mxu0
        %v4381 = vadd.f32 0.0, %v4380
        %v4382 = vpop.f32.mrb[0].mxu0
        %v4383 = vadd.f32 0.0, %v4382
        %4384 = vmatprep.mubr.f32.mxu0 0.0
        %4385 = vmatmul.mubr.f32.gmra.mrb[0].mxu0 %v733
        %v4386 = vpop.f32.mrb[0].mxu0
        %v4387 = vadd.f32 0.0, %v4386
        %v4388 = vpop.f32.mrb[0].mxu0
        %v4389 = vadd.f32 0.0, %v4388
        %4390 = vmatprep.mubr.f32.mxu0 0.0
        %4391 = vmatmul.mubr.f32.gmra.mrb[0].mxu0 %v736
        %v4392 = vpop.f32.mrb[0].mxu0
        %v4393 = vadd.f32 0.0, %v4392
        %v4394 = vpop.f32.mrb[0].mxu0
        %v4395 = vadd.f32 0.0, %v4394
        %4396 = vmatprep.mubr.f32.mxu0 0.0
        %4397 = vmatmul.mubr.f32.gmra.mrb[0].mxu0 %v739
        %v4398 = vpop.f32.mrb[0].mxu0
        %v4399 = vadd.f32 0.0, %v4398
        %v4400 = vpop.f32.mrb[0].mxu0
        %v4401 = vadd.f32 0.0, %v4400
        %4402 = vmatprep.mubr.f32.mxu0 0.0
        %4403 = vmatmul.mubr.f32.gmra.mrb[0].mxu0 %v742
        %v4404 = vpop.f32.mrb[0].mxu0
        %v4405 = vadd.f32 0.0, %v4404
        %v4406 = vpop.f32.mrb[0].mxu0
        %v4407 = vadd.f32 0.0, %v4406
        %4408 = vmatprep.mubr.f32.mxu0 0.0
        %4409 = vmatmul.mubr.f32.gmra.mrb[0].mxu0 %v745
        %v4410 = vpop.f32.mrb[0].mxu0
        %v4411 = vadd.f32 0.0, %v4410
        %v4412 = vpop.f32.mrb[0].mxu0
        %v4413 = vadd.f32 0.0, %v4412
        %4414 = vmatprep.mubr.f32.mxu0 0.0
        %4415 = vmatmul.mubr.f32.gmra.mrb[0].mxu0 %v748
        %v4416 = vpop.f32.mrb[0].mxu0
        %v4417 = vadd.f32 0.0, %v4416
        %v4418 = vpop.f32.mrb[0].mxu0
        %v4419 = vadd.f32 0.0, %v4418
        %4420 = vdwg.mxu0
        %v4421 = vmul.f32 %v4286, 0.5
        %v4422 = vmul.f32 %v4288, 0.5
        %v4423 = vmul.f32 %v4399, 0.5
        %v4424 = vmul.f32 %v4401, 0.5
        %v4425 = vmul.f32 %v4292, 0.5
        %v4426 = vmul.f32 %v4294, 0.5
        %v4427 = vmul.f32 %v4405, 0.5
        %v4428 = vmul.f32 %v4407, 0.5
        %v4429 = vmul.f32 %v4298, 0.5
        %v4430 = vmul.f32 %v4300, 0.5
        %v4431 = vmul.f32 %v4411, 0.5
        %v4432 = vmul.f32 %v4413, 0.5
        %v4433 = vmul.f32 %v4304, 0.5
        %v4434 = vmul.f32 %v4306, 0.5
        %v4435 = vmul.f32 %v4417, 0.5
        %v4436 = vmul.f32 %v4419, 0.5
        %v4437 = vtanh.pop %v4421
        %v4438 = vtanh.pop %v4422
        %v4439 = vtanh.pop %v4423
        %v4440 = vtanh.pop %v4424
        %v4441 = vtanh.pop %v4425
        %v4442 = vtanh.pop %v4426
        %v4443 = vtanh.pop %v4427
        %v4444 = vtanh.pop %v4428
        %v4445 = vtanh.pop %v4429
        %v4446 = vtanh.pop %v4430
        %v4447 = vtanh.pop %v4431
        %v4448 = vtanh.pop %v4432
        %v4449 = vtanh.pop %v4433
        %v4450 = vtanh.pop %v4434
        %v4451 = vtanh.pop %v4435
        %v4452 = vtanh.pop %v4436
        %v4453 = vmul.f32 %v4437, 0.5
        %v4454 = vmul.f32 %v4438, 0.5
        %v4455 = vmul.f32 %v4439, 0.5
        %v4456 = vmul.f32 %v4440, 0.5
        %v4457 = vmul.f32 %v4441, 0.5
        %v4458 = vmul.f32 %v4442, 0.5
        %v4459 = vmul.f32 %v4443, 0.5
        %v4460 = vmul.f32 %v4444, 0.5
        %v4461 = vmul.f32 %v4445, 0.5
        %v4462 = vmul.f32 %v4446, 0.5
        %v4463 = vmul.f32 %v4447, 0.5
        %v4464 = vmul.f32 %v4448, 0.5
        %v4465 = vmul.f32 %v4449, 0.5
        %v4466 = vmul.f32 %v4450, 0.5
        %v4467 = vmul.f32 %v4451, 0.5
        %v4468 = vmul.f32 %v4452, 0.5
        %v4469 = vadd.f32 %v4453, 0.5
        %v4470 = vadd.f32 %v4454, 0.5
        %v4471 = vadd.f32 %v4455, 0.5
        %v4472 = vadd.f32 %v4456, 0.5
        %v4473 = vadd.f32 %v4457, 0.5
        %v4474 = vadd.f32 %v4458, 0.5
        %v4475 = vadd.f32 %v4459, 0.5
        %v4476 = vadd.f32 %v4460, 0.5
        %v4477 = vadd.f32 %v4461, 0.5
        %v4478 = vadd.f32 %v4462, 0.5
        %v4479 = vadd.f32 %v4463, 0.5
        %v4480 = vadd.f32 %v4464, 0.5
        %v4481 = vadd.f32 %v4465, 0.5
        %v4482 = vadd.f32 %v4466, 0.5
        %v4483 = vadd.f32 %v4467, 0.5
        %v4484 = vadd.f32 %v4468, 0.5
        %v4485 = vmul.f32 %v4262, %v4469
        %v4486 = vmul.f32 %v4264, %v4470
        %v4487 = vmul.f32 %v4375, %v4471
        %v4488 = vmul.f32 %v4377, %v4472
        %v4489 = vmul.f32 %v4268, %v4473
        %v4490 = vmul.f32 %v4270, %v4474
        %v4491 = vmul.f32 %v4381, %v4475
        %v4492 = vmul.f32 %v4383, %v4476
        %v4493 = vmul.f32 %v4274, %v4477
        %v4494 = vmul.f32 %v4276, %v4478
        %v4495 = vmul.f32 %v4387, %v4479
        %v4496 = vmul.f32 %v4389, %v4480
        %v4497 = vmul.f32 %v4280, %v4481
        %v4498 = vmul.f32 %v4282, %v4482
        %v4499 = vmul.f32 %v4393, %v4483
        %v4500 = vmul.f32 %v4395, %v4484
        %v4501 = vadd.f32 %v4179, %v4485
        %v4502 = vadd.f32 %v4180, %v4486
        %v4503 = vadd.f32 %v4181, %v4487
        %v4504 = vadd.f32 %v4182, %v4488
        %v4505 = vadd.f32 %v4183, %v4489
        %v4506 = vadd.f32 %v4184, %v4490
        %v4507 = vadd.f32 %v4185, %v4491
        %v4508 = vadd.f32 %v4186, %v4492
        %v4509 = vadd.f32 %v4187, %v4493
        %v4510 = vadd.f32 %v4188, %v4494
        %v4511 = vadd.f32 %v4189, %v4495
        %v4512 = vadd.f32 %v4190, %v4496
        %v4513 = vadd.f32 %v4191, %v4497
        %v4514 = vadd.f32 %v4192, %v4498
        %v4515 = vadd.f32 %v4193, %v4499
        %v4516 = vadd.f32 %v4194, %v4500
        %v4517 = vmul.f32 %v4501, 0.70710677
        %v4518 = vmul.f32 %v4502, 0.70710677
        %v4519 = vmul.f32 %v4503, 0.70710677
        %v4520 = vmul.f32 %v4504, 0.70710677
        %v4521 = vmul.f32 %v4505, 0.70710677
        %v4522 = vmul.f32 %v4506, 0.70710677
        %v4523 = vmul.f32 %v4507, 0.70710677
        %v4524 = vmul.f32 %v4508, 0.70710677
        %v4525 = vmul.f32 %v4509, 0.70710677
        %v4526 = vmul.f32 %v4510, 0.70710677
        %v4527 = vmul.f32 %v4511, 0.70710677
        %v4528 = vmul.f32 %v4512, 0.70710677
        %v4529 = vmul.f32 %v4513, 0.70710677
        %v4530 = vmul.f32 %v4514, 0.70710677
        %v4531 = vmul.f32 %v4515, 0.70710677
        %v4532 = vmul.f32 %v4516, 0.70710677
        %s4533 = scalar_lea.vmem %s4, 256
        %v4534 = vld [vmem:[%s4533] sm:$0xff]
        %v4535 = vld [vmem:[%s4533 + $0x8] sm:$0xff]
        %v4536 = vld [vmem:[%s4533 + $0x10] sm:$0xff]
        %v4537 = vld [vmem:[%s4533 + $0x18] sm:$0xff]
        %v4538 = vld [vmem:[%s4533 + $0x20] sm:$0xff]
        %v4539 = vld [vmem:[%s4533 + $0x28] sm:$0xff]
        %v4540 = vld [vmem:[%s4533 + $0x30] sm:$0xff]
        %v4541 = vld [vmem:[%s4533 + $0x38] sm:$0xff]
        %v4543 = vsel %vm725, %v4534, 0
        %v4546 = vsel %vm725, %v4535, 0
        %v4549 = vsel %vm725, %v4536, 0
        %v4552 = vsel %vm725, %v4537, 0
        %v4555 = vsel %vm725, %v4538, 0
        %v4558 = vsel %vm725, %v4539, 0
        %v4561 = vsel %vm725, %v4540, 0
        %v4564 = vsel %vm725, %v4541, 0
        %4566 = vmatprep.subr.mxu0 %v4502
        %4567 = vmatpush1.msra.mxu0 %v4501
        %4568 = vmatprep.subr.mxu0 %v4506
        %4569 = vmatpush1.msra.mxu0 %v4505
        %4570 = vmatprep.subr.mxu0 %v4510
        %4571 = vmatpush1.msra.mxu0 %v4509
        %4572 = vmatprep.subr.mxu0 %v4514
        %4573 = vmatpush1.msra.mxu0 %v4513
        %4574 = vmatprep.subr.mxu0 0.0
        %4575 = vmatpush1.msra.mxu0 0.0
        %4576 = vmatprep.subr.mxu0 0.0
        %4577 = vmatpush1.msra.mxu0 0.0
        %4578 = vmatprep.subr.mxu0 0.0
        %4579 = vmatpush1.msra.mxu0 0.0
        %4580 = vmatprep.subr.mxu0 0.0
        %4581 = vmatpush1.msra.mxu0 0.0
        %4582 = vmatprep.subr.mxu0 0.0
        %4583 = vmatpush1.msra.mxu0 0.0
        %4584 = vmatprep.subr.mxu0 0.0
        %4585 = vmatpush1.msra.mxu0 0.0
        %4586 = vmatprep.subr.mxu0 0.0
        %4587 = vmatpush1.msra.mxu0 0.0
        %4588 = vmatprep.subr.mxu0 0.0
        %4589 = vmatpush1.msra.mxu0 0.0
        %4590 = vmatprep.subr.mxu0 0.0
        %4591 = vmatpush1.msra.mxu0 0.0
        %4592 = vmatprep.subr.mxu0 0.0
        %4593 = vmatpush1.msra.mxu0 0.0
        %4594 = vmatprep.subr.mxu0 0.0
        %4595 = vmatpush1.msra.mxu0 0.0
        %4596 = vmatprep.subr.mxu0 0.0
        %4597 = vmatpush1.msra.mxu0 0.0
        %4598 = vmatprep.subr.mxu0 0.0
        %4599 = vmatpush1.msra.mxu0 0.0
        %4600 = vmatprep.subr.mxu0 0.0
        %4601 = vmatpush1.msra.mxu0 0.0
        %4602 = vmatprep.subr.mxu0 0.0
        %4603 = vmatpush1.msra.mxu0 0.0
        %4604 = vmatprep.subr.mxu0 0.0
        %4605 = vmatpush1.msra.mxu0 0.0
        %4606 = vmatprep.subr.mxu0 0.0
        %4607 = vmatpush1.msra.mxu0 0.0
        %4608 = vmatprep.subr.mxu0 0.0
        %4609 = vmatpush1.msra.mxu0 0.0
        %4610 = vmatprep.subr.mxu0 0.0
        %4611 = vmatpush1.msra.mxu0 0.0
        %4612 = vmatprep.subr.mxu0 0.0
        %4613 = vmatpush1.msra.mxu0 0.0
        %4614 = vmatprep.subr.mxu0 0.0
        %4615 = vmatpush1.msra.mxu0 0.0
        %4616 = vmatprep.subr.mxu0 0.0
        %4617 = vmatpush1.msra.mxu0 0.0
        %4618 = vmatprep.subr.mxu0 0.0
        %4619 = vmatpush1.msra.mxu0 0.0
        %4620 = vmatprep.subr.mxu0 0.0
        %4621 = vmatpush1.msra.mxu0 0.0
        %4622 = vmatprep.subr.mxu0 0.0
        %4623 = vmatpush1.msra.mxu0 0.0
        %4624 = vmatprep.subr.mxu0 0.0
        %4625 = vmatpush1.msra.mxu0 0.0
        %4626 = vmatprep.subr.mxu0 0.0
        %4627 = vmatpush1.msra.mxu0 0.0
        %4628 = vmatprep.subr.mxu0 0.0
        %4629 = vmatpush1.msra.mxu0 0.0
        %4630 = vmatprep.mubr.f32.mxu0 0.0
        %4631 = vmatmul.mubr.f32.gmra.mrb[0].mxu0 %v4543
        %v4632 = vpop.f32.mrb[0].mxu0
        %v4633 = vadd.f32 0.0, %v4632
        %v4634 = vpop.f32.mrb[0].mxu0
        %v4635 = vadd.f32 0.0, %v4634
        %4636 = vmatprep.mubr.f32.mxu0 0.0
        %4637 = vmatmul.mubr.f32.gmra.mrb[0].mxu0 %v4546
        %v4638 = vpop.f32.mrb[0].mxu0
        %v4639 = vadd.f32 0.0, %v4638
        %v4640 = vpop.f32.mrb[0].mxu0
        %v4641 = vadd.f32 0.0, %v4640
        %4642 = vmatprep.mubr.f32.mxu0 0.0
        %4643 = vmatmul.mubr.f32.gmra.mrb[0].mxu0 %v4549
        %v4644 = vpop.f32.mrb[0].mxu0
        %v4645 = vadd.f32 0.0, %v4644
        %v4646 = vpop.f32.mrb[0].mxu0
        %v4647 = vadd.f32 0.0, %v4646
        %4648 = vmatprep.mubr.f32.mxu0 0.0
        %4649 = vmatmul.mubr.f32.gmra.mrb[0].mxu0 %v4552
        %v4650 = vpop.f32.mrb[0].mxu0
        %v4651 = vadd.f32 0.0, %v4650
        %v4652 = vpop.f32.mrb[0].mxu0
        %v4653 = vadd.f32 0.0, %v4652
        %4654 = vmatprep.mubr.f32.mxu0 0.0
        %4655 = vmatmul.mubr.f32.gmra.mrb[0].mxu0 %v4555
        %v4656 = vpop.f32.mrb[0].mxu0
        %v4657 = vadd.f32 0.0, %v4656
        %v4658 = vpop.f32.mrb[0].mxu0
        %v4659 = vadd.f32 0.0, %v4658
        %4660 = vmatprep.mubr.f32.mxu0 0.0
        %4661 = vmatmul.mubr.f32.gmra.mrb[0].mxu0 %v4558
        %v4662 = vpop.f32.mrb[0].mxu0
        %v4663 = vadd.f32 0.0, %v4662
        %v4664 = vpop.f32.mrb[0].mxu0
        %v4665 = vadd.f32 0.0, %v4664
        %4666 = vmatprep.mubr.f32.mxu0 0.0
        %4667 = vmatmul.mubr.f32.gmra.mrb[0].mxu0 %v4561
        %v4668 = vpop.f32.mrb[0].mxu0
        %v4669 = vadd.f32 0.0, %v4668
        %v4670 = vpop.f32.mrb[0].mxu0
        %v4671 = vadd.f32 0.0, %v4670
        %4672 = vmatprep.mubr.f32.mxu0 0.0
        %4673 = vmatmul.mubr.f32.gmra.mrb[0].mxu0 %v4564
        %v4674 = vpop.f32.mrb[0].mxu0
        %v4675 = vadd.f32 0.0, %v4674
        %v4676 = vpop.f32.mrb[0].mxu0
        %v4677 = vadd.f32 0.0, %v4676
        %4678 = vdwg.mxu0
        %4679 = vmatprep.subr.mxu0 %v4504
        %4680 = vmatpush1.msra.mxu0 %v4503
        %4681 = vmatprep.subr.mxu0 %v4508
        %4682 = vmatpush1.msra.mxu0 %v4507
        %4683 = vmatprep.subr.mxu0 %v4512
        %4684 = vmatpush1.msra.mxu0 %v4511
        %4685 = vmatprep.subr.mxu0 %v4516
        %4686 = vmatpush1.msra.mxu0 %v4515
        %4687 = vmatprep.subr.mxu0 0.0
        %4688 = vmatpush1.msra.mxu0 0.0
        %4689 = vmatprep.subr.mxu0 0.0
        %4690 = vmatpush1.msra.mxu0 0.0
        %4691 = vmatprep.subr.mxu0 0.0
        %4692 = vmatpush1.msra.mxu0 0.0
        %4693 = vmatprep.subr.mxu0 0.0
        %4694 = vmatpush1.msra.mxu0 0.0
        %4695 = vmatprep.subr.mxu0 0.0
        %4696 = vmatpush1.msra.mxu0 0.0
        %4697 = vmatprep.subr.mxu0 0.0
        %4698 = vmatpush1.msra.mxu0 0.0
        %4699 = vmatprep.subr.mxu0 0.0
        %4700 = vmatpush1.msra.mxu0 0.0
        %4701 = vmatprep.subr.mxu0 0.0
        %4702 = vmatpush1.msra.mxu0 0.0
        %4703 = vmatprep.subr.mxu0 0.0
        %4704 = vmatpush1.msra.mxu0 0.0
        %4705 = vmatprep.subr.mxu0 0.0
        %4706 = vmatpush1.msra.mxu0 0.0
        %4707 = vmatprep.subr.mxu0 0.0
        %4708 = vmatpush1.msra.mxu0 0.0
        %4709 = vmatprep.subr.mxu0 0.0
        %4710 = vmatpush1.msra.mxu0 0.0
        %4711 = vmatprep.subr.mxu0 0.0
        %4712 = vmatpush1.msra.mxu0 0.0
        %4713 = vmatprep.subr.mxu0 0.0
        %4714 = vmatpush1.msra.mxu0 0.0
        %4715 = vmatprep.subr.mxu0 0.0
        %4716 = vmatpush1.msra.mxu0 0.0
        %4717 = vmatprep.subr.mxu0 0.0
        %4718 = vmatpush1.msra.mxu0 0.0
        %4719 = vmatprep.subr.mxu0 0.0
        %4720 = vmatpush1.msra.mxu0 0.0
        %4721 = vmatprep.subr.mxu0 0.0
        %4722 = vmatpush1.msra.mxu0 0.0
        %4723 = vmatprep.subr.mxu0 0.0
        %4724 = vmatpush1.msra.mxu0 0.0
        %4725 = vmatprep.subr.mxu0 0.0
        %4726 = vmatpush1.msra.mxu0 0.0
        %4727 = vmatprep.subr.mxu0 0.0
        %4728 = vmatpush1.msra.mxu0 0.0
        %4729 = vmatprep.subr.mxu0 0.0
        %4730 = vmatpush1.msra.mxu0 0.0
        %4731 = vmatprep.subr.mxu0 0.0
        %4732 = vmatpush1.msra.mxu0 0.0
        %4733 = vmatprep.subr.mxu0 0.0
        %4734 = vmatpush1.msra.mxu0 0.0
        %4735 = vmatprep.subr.mxu0 0.0
        %4736 = vmatpush1.msra.mxu0 0.0
        %4737 = vmatprep.subr.mxu0 0.0
        %4738 = vmatpush1.msra.mxu0 0.0
        %4739 = vmatprep.subr.mxu0 0.0
        %4740 = vmatpush1.msra.mxu0 0.0
        %4741 = vmatprep.subr.mxu0 0.0
        %4742 = vmatpush1.msra.mxu0 0.0
        %4743 = vmatprep.mubr.f32.mxu0 0.0
        %4744 = vmatmul.mubr.f32.gmra.mrb[0].mxu0 %v4543
        %v4745 = vpop.f32.mrb[0].mxu0
        %v4746 = vadd.f32 0.0, %v4745
        %v4747 = vpop.f32.mrb[0].mxu0
        %v4748 = vadd.f32 0.0, %v4747
        %4749 = vmatprep.mubr.f32.mxu0 0.0
        %4750 = vmatmul.mubr.f32.gmra.mrb[0].mxu0 %v4546
        %v4751 = vpop.f32.mrb[0].mxu0
        %v4752 = vadd.f32 0.0, %v4751
        %v4753 = vpop.f32.mrb[0].mxu0
        %v4754 = vadd.f32 0.0, %v4753
        %4755 = vmatprep.mubr.f32.mxu0 0.0
        %4756 = vmatmul.mubr.f32.gmra.mrb[0].mxu0 %v4549
        %v4757 = vpop.f32.mrb[0].mxu0
        %v4758 = vadd.f32 0.0, %v4757
        %v4759 = vpop.f32.mrb[0].mxu0
        %v4760 = vadd.f32 0.0, %v4759
        %4761 = vmatprep.mubr.f32.mxu0 0.0
        %4762 = vmatmul.mubr.f32.gmra.mrb[0].mxu0 %v4552
        %v4763 = vpop.f32.mrb[0].mxu0
        %v4764 = vadd.f32 0.0, %v4763
        %v4765 = vpop.f32.mrb[0].mxu0
        %v4766 = vadd.f32 0.0, %v4765
        %4767 = vmatprep.mubr.f32.mxu0 0.0
        %4768 = vmatmul.mubr.f32.gmra.mrb[0].mxu0 %v4555
        %v4769 = vpop.f32.mrb[0].mxu0
        %v4770 = vadd.f32 0.0, %v4769
        %v4771 = vpop.f32.mrb[0].mxu0
        %v4772 = vadd.f32 0.0, %v4771
        %4773 = vmatprep.mubr.f32.mxu0 0.0
        %4774 = vmatmul.mubr.f32.gmra.mrb[0].mxu0 %v4558
        %v4775 = vpop.f32.mrb[0].mxu0
        %v4776 = vadd.f32 0.0, %v4775
        %v4777 = vpop.f32.mrb[0].mxu0
        %v4778 = vadd.f32 0.0, %v4777
        %4779 = vmatprep.mubr.f32.mxu0 0.0
        %4780 = vmatmul.mubr.f32.gmra.mrb[0].mxu0 %v4561
        %v4781 = vpop.f32.mrb[0].mxu0
        %v4782 = vadd.f32 0.0, %v4781
        %v4783 = vpop.f32.mrb[0].mxu0
        %v4784 = vadd.f32 0.0, %v4783
        %4785 = vmatprep.mubr.f32.mxu0 0.0
        %4786 = vmatmul.mubr.f32.gmra.mrb[0].mxu0 %v4564
        %v4787 = vpop.f32.mrb[0].mxu0
        %v4788 = vadd.f32 0.0, %v4787
        %v4789 = vpop.f32.mrb[0].mxu0
        %v4790 = vadd.f32 0.0, %v4789
        %4791 = vdwg.mxu0
        %v4792 = vmul.f32 %v4657, 0.5
        %v4793 = vmul.f32 %v4659, 0.5
        %v4794 = vmul.f32 %v4770, 0.5
        %v4795 = vmul.f32 %v4772, 0.5
        %v4796 = vmul.f32 %v4663, 0.5
        %v4797 = vmul.f32 %v4665, 0.5
        %v4798 = vmul.f32 %v4776, 0.5
        %v4799 = vmul.f32 %v4778, 0.5
        %v4800 = vmul.f32 %v4669, 0.5
        %v4801 = vmul.f32 %v4671, 0.5
        %v4802 = vmul.f32 %v4782, 0.5
        %v4803 = vmul.f32 %v4784, 0.5
        %v4804 = vmul.f32 %v4675, 0.5
        %v4805 = vmul.f32 %v4677, 0.5
        %v4806 = vmul.f32 %v4788, 0.5
        %v4807 = vmul.f32 %v4790, 0.5
        %v4808 = vtanh.pop %v4792
        %v4809 = vtanh.pop %v4793
        %v4810 = vtanh.pop %v4794
        %v4811 = vtanh.pop %v4795
        %v4812 = vtanh.pop %v4796
        %v4813 = vtanh.pop %v4797
        %v4814 = vtanh.pop %v4798
        %v4815 = vtanh.pop %v4799
        %v4816 = vtanh.pop %v4800
        %v4817 = vtanh.pop %v4801
        %v4818 = vtanh.pop %v4802
        %v4819 = vtanh.pop %v4803
        %v4820 = vtanh.pop %v4804
        %v4821 = vtanh.pop %v4805
        %v4822 = vtanh.pop %v4806
        %v4823 = vtanh.pop %v4807
        %v4824 = vmul.f32 %v4808, 0.5
        %v4825 = vmul.f32 %v4809, 0.5
        %v4826 = vmul.f32 %v4810, 0.5
        %v4827 = vmul.f32 %v4811, 0.5
        %v4828 = vmul.f32 %v4812, 0.5
        %v4829 = vmul.f32 %v4813, 0.5
        %v4830 = vmul.f32 %v4814, 0.5
        %v4831 = vmul.f32 %v4815, 0.5
        %v4832 = vmul.f32 %v4816, 0.5
        %v4833 = vmul.f32 %v4817, 0.5
        %v4834 = vmul.f32 %v4818, 0.5
        %v4835 = vmul.f32 %v4819, 0.5
        %v4836 = vmul.f32 %v4820, 0.5
        %v4837 = vmul.f32 %v4821, 0.5
        %v4838 = vmul.f32 %v4822, 0.5
        %v4839 = vmul.f32 %v4823, 0.5
        %v4840 = vadd.f32 %v4824, 0.5
        %v4841 = vadd.f32 %v4825, 0.5
        %v4842 = vadd.f32 %v4826, 0.5
        %v4843 = vadd.f32 %v4827, 0.5
        %v4844 = vadd.f32 %v4828, 0.5
        %v4845 = vadd.f32 %v4829, 0.5
        %v4846 = vadd.f32 %v4830, 0.5
        %v4847 = vadd.f32 %v4831, 0.5
        %v4848 = vadd.f32 %v4832, 0.5
        %v4849 = vadd.f32 %v4833, 0.5
        %v4850 = vadd.f32 %v4834, 0.5
        %v4851 = vadd.f32 %v4835, 0.5
        %v4852 = vadd.f32 %v4836, 0.5
        %v4853 = vadd.f32 %v4837, 0.5
        %v4854 = vadd.f32 %v4838, 0.5
        %v4855 = vadd.f32 %v4839, 0.5
        %v4856 = vmul.f32 %v4633, %v4840
        %v4857 = vmul.f32 %v4635, %v4841
        %v4858 = vmul.f32 %v4746, %v4842
        %v4859 = vmul.f32 %v4748, %v4843
        %v4860 = vmul.f32 %v4639, %v4844
        %v4861 = vmul.f32 %v4641, %v4845
        %v4862 = vmul.f32 %v4752, %v4846
        %v4863 = vmul.f32 %v4754, %v4847
        %v4864 = vmul.f32 %v4645, %v4848
        %v4865 = vmul.f32 %v4647, %v4849
        %v4866 = vmul.f32 %v4758, %v4850
        %v4867 = vmul.f32 %v4760, %v4851
        %v4868 = vmul.f32 %v4651, %v4852
        %v4869 = vmul.f32 %v4653, %v4853
        %v4870 = vmul.f32 %v4764, %v4854
        %v4871 = vmul.f32 %v4766, %v4855
        %v4872 = vadd.f32 %v4517, %v4856
        %v4873 = vadd.f32 %v4518, %v4857
        %v4874 = vadd.f32 %v4519, %v4858
        %v4875 = vadd.f32 %v4520, %v4859
        %v4876 = vadd.f32 %v4521, %v4860
        %v4877 = vadd.f32 %v4522, %v4861
        %v4878 = vadd.f32 %v4523, %v4862
        %v4879 = vadd.f32 %v4524, %v4863
        %v4880 = vadd.f32 %v4525, %v4864
        %v4881 = vadd.f32 %v4526, %v4865
        %v4882 = vadd.f32 %v4527, %v4866
        %v4883 = vadd.f32 %v4528, %v4867
        %v4884 = vadd.f32 %v4529, %v4868
        %v4885 = vadd.f32 %v4530, %v4869
        %v4886 = vadd.f32 %v4531, %v4870
        %v4887 = vadd.f32 %v4532, %v4871
        %v4888 = vmul.f32 %v4872, 0.70710677
        %v4889 = vmul.f32 %v4873, 0.70710677
        %v4890 = vmul.f32 %v4874, 0.70710677
        %v4891 = vmul.f32 %v4875, 0.70710677
        %v4892 = vmul.f32 %v4876, 0.70710677
        %v4893 = vmul.f32 %v4877, 0.70710677
        %v4894 = vmul.f32 %v4878, 0.70710677
        %v4895 = vmul.f32 %v4879, 0.70710677
        %v4896 = vmul.f32 %v4880, 0.70710677
        %v4897 = vmul.f32 %v4881, 0.70710677
        %v4898 = vmul.f32 %v4882, 0.70710677
        %v4899 = vmul.f32 %v4883, 0.70710677
        %v4900 = vmul.f32 %v4884, 0.70710677
        %v4901 = vmul.f32 %v4885, 0.70710677
        %v4902 = vmul.f32 %v4886, 0.70710677
        %v4903 = vmul.f32 %v4887, 0.70710677
        %s4904 = scalar_lea.vmem %s4, 320
        %v4905 = vld [vmem:[%s4904] sm:$0xff]
        %v4906 = vld [vmem:[%s4904 + $0x8] sm:$0xff]
        %v4907 = vld [vmem:[%s4904 + $0x10] sm:$0xff]
        %v4908 = vld [vmem:[%s4904 + $0x18] sm:$0xff]
        %v4909 = vld [vmem:[%s4904 + $0x20] sm:$0xff]
        %v4910 = vld [vmem:[%s4904 + $0x28] sm:$0xff]
        %v4911 = vld [vmem:[%s4904 + $0x30] sm:$0xff]
        %v4912 = vld [vmem:[%s4904 + $0x38] sm:$0xff]
        %v4914 = vsel %vm725, %v4905, 0
        %v4917 = vsel %vm725, %v4906, 0
        %v4920 = vsel %vm725, %v4907, 0
        %v4923 = vsel %vm725, %v4908, 0
        %v4926 = vsel %vm725, %v4909, 0
        %v4929 = vsel %vm725, %v4910, 0
        %v4932 = vsel %vm725, %v4911, 0
        %v4935 = vsel %vm725, %v4912, 0
        %4937 = vmatprep.subr.mxu0 %v4873
        %4938 = vmatpush1.msra.mxu0 %v4872
        %4939 = vmatprep.subr.mxu0 %v4877
        %4940 = vmatpush1.msra.mxu0 %v4876
        %4941 = vmatprep.subr.mxu0 %v4881
        %4942 = vmatpush1.msra.mxu0 %v4880
        %4943 = vmatprep.subr.mxu0 %v4885
        %4944 = vmatpush1.msra.mxu0 %v4884
        %4945 = vmatprep.subr.mxu0 0.0
        %4946 = vmatpush1.msra.mxu0 0.0
        %4947 = vmatprep.subr.mxu0 0.0
        %4948 = vmatpush1.msra.mxu0 0.0
        %4949 = vmatprep.subr.mxu0 0.0
        %4950 = vmatpush1.msra.mxu0 0.0
        %4951 = vmatprep.subr.mxu0 0.0
        %4952 = vmatpush1.msra.mxu0 0.0
        %4953 = vmatprep.subr.mxu0 0.0
        %4954 = vmatpush1.msra.mxu0 0.0
        %4955 = vmatprep.subr.mxu0 0.0
        %4956 = vmatpush1.msra.mxu0 0.0
        %4957 = vmatprep.subr.mxu0 0.0
        %4958 = vmatpush1.msra.mxu0 0.0
        %4959 = vmatprep.subr.mxu0 0.0
        %4960 = vmatpush1.msra.mxu0 0.0
        %4961 = vmatprep.subr.mxu0 0.0
        %4962 = vmatpush1.msra.mxu0 0.0
        %4963 = vmatprep.subr.mxu0 0.0
        %4964 = vmatpush1.msra.mxu0 0.0
        %4965 = vmatprep.subr.mxu0 0.0
        %4966 = vmatpush1.msra.mxu0 0.0
        %4967 = vmatprep.subr.mxu0 0.0
        %4968 = vmatpush1.msra.mxu0 0.0
        %4969 = vmatprep.subr.mxu0 0.0
        %4970 = vmatpush1.msra.mxu0 0.0
        %4971 = vmatprep.subr.mxu0 0.0
        %4972 = vmatpush1.msra.mxu0 0.0
        %4973 = vmatprep.subr.mxu0 0.0
        %4974 = vmatpush1.msra.mxu0 0.0
        %4975 = vmatprep.subr.mxu0 0.0
        %4976 = vmatpush1.msra.mxu0 0.0
        %4977 = vmatprep.subr.mxu0 0.0
        %4978 = vmatpush1.msra.mxu0 0.0
        %4979 = vmatprep.subr.mxu0 0.0
        %4980 = vmatpush1.msra.mxu0 0.0
        %4981 = vmatprep.subr.mxu0 0.0
        %4982 = vmatpush1.msra.mxu0 0.0
        %4983 = vmatprep.subr.mxu0 0.0
        %4984 = vmatpush1.msra.mxu0 0.0
        %4985 = vmatprep.subr.mxu0 0.0
        %4986 = vmatpush1.msra.mxu0 0.0
        %4987 = vmatprep.subr.mxu0 0.0
        %4988 = vmatpush1.msra.mxu0 0.0
        %4989 = vmatprep.subr.mxu0 0.0
        %4990 = vmatpush1.msra.mxu0 0.0
        %4991 = vmatprep.subr.mxu0 0.0
        %4992 = vmatpush1.msra.mxu0 0.0
        %4993 = vmatprep.subr.mxu0 0.0
        %4994 = vmatpush1.msra.mxu0 0.0
        %4995 = vmatprep.subr.mxu0 0.0
        %4996 = vmatpush1.msra.mxu0 0.0
        %4997 = vmatprep.subr.mxu0 0.0
        %4998 = vmatpush1.msra.mxu0 0.0
        %4999 = vmatprep.subr.mxu0 0.0
        %5000 = vmatpush1.msra.mxu0 0.0
        %5001 = vmatprep.mubr.f32.mxu0 0.0
        %5002 = vmatmul.mubr.f32.gmra.mrb[0].mxu0 %v4914
        %v5003 = vpop.f32.mrb[0].mxu0
        %v5004 = vadd.f32 0.0, %v5003
        %v5005 = vpop.f32.mrb[0].mxu0
        %v5006 = vadd.f32 0.0, %v5005
        %5007 = vmatprep.mubr.f32.mxu0 0.0
        %5008 = vmatmul.mubr.f32.gmra.mrb[0].mxu0 %v4917
        %v5009 = vpop.f32.mrb[0].mxu0
        %v5010 = vadd.f32 0.0, %v5009
        %v5011 = vpop.f32.mrb[0].mxu0
        %v5012 = vadd.f32 0.0, %v5011
        %5013 = vmatprep.mubr.f32.mxu0 0.0
        %5014 = vmatmul.mubr.f32.gmra.mrb[0].mxu0 %v4920
        %v5015 = vpop.f32.mrb[0].mxu0
        %v5016 = vadd.f32 0.0, %v5015
        %v5017 = vpop.f32.mrb[0].mxu0
        %v5018 = vadd.f32 0.0, %v5017
        %5019 = vmatprep.mubr.f32.mxu0 0.0
        %5020 = vmatmul.mubr.f32.gmra.mrb[0].mxu0 %v4923
        %v5021 = vpop.f32.mrb[0].mxu0
        %v5022 = vadd.f32 0.0, %v5021
        %v5023 = vpop.f32.mrb[0].mxu0
        %v5024 = vadd.f32 0.0, %v5023
        %5025 = vmatprep.mubr.f32.mxu0 0.0
        %5026 = vmatmul.mubr.f32.gmra.mrb[0].mxu0 %v4926
        %v5027 = vpop.f32.mrb[0].mxu0
        %v5028 = vadd.f32 0.0, %v5027
        %v5029 = vpop.f32.mrb[0].mxu0
        %v5030 = vadd.f32 0.0, %v5029
        %5031 = vmatprep.mubr.f32.mxu0 0.0
        %5032 = vmatmul.mubr.f32.gmra.mrb[0].mxu0 %v4929
        %v5033 = vpop.f32.mrb[0].mxu0
        %v5034 = vadd.f32 0.0, %v5033
        %v5035 = vpop.f32.mrb[0].mxu0
        %v5036 = vadd.f32 0.0, %v5035
        %5037 = vmatprep.mubr.f32.mxu0 0.0
        %5038 = vmatmul.mubr.f32.gmra.mrb[0].mxu0 %v4932
        %v5039 = vpop.f32.mrb[0].mxu0
        %v5040 = vadd.f32 0.0, %v5039
        %v5041 = vpop.f32.mrb[0].mxu0
        %v5042 = vadd.f32 0.0, %v5041
        %5043 = vmatprep.mubr.f32.mxu0 0.0
        %5044 = vmatmul.mubr.f32.gmra.mrb[0].mxu0 %v4935
        %v5045 = vpop.f32.mrb[0].mxu0
        %v5046 = vadd.f32 0.0, %v5045
        %v5047 = vpop.f32.mrb[0].mxu0
        %v5048 = vadd.f32 0.0, %v5047
        %5049 = vdwg.mxu0
        %5050 = vmatprep.subr.mxu0 %v4875
        %5051 = vmatpush1.msra.mxu0 %v4874
        %5052 = vmatprep.subr.mxu0 %v4879
        %5053 = vmatpush1.msra.mxu0 %v4878
        %5054 = vmatprep.subr.mxu0 %v4883
        %5055 = vmatpush1.msra.mxu0 %v4882
        %5056 = vmatprep.subr.mxu0 %v4887
        %5057 = vmatpush1.msra.mxu0 %v4886
        %5058 = vmatprep.subr.mxu0 0.0
        %5059 = vmatpush1.msra.mxu0 0.0
        %5060 = vmatprep.subr.mxu0 0.0
        %5061 = vmatpush1.msra.mxu0 0.0
        %5062 = vmatprep.subr.mxu0 0.0
        %5063 = vmatpush1.msra.mxu0 0.0
        %5064 = vmatprep.subr.mxu0 0.0
        %5065 = vmatpush1.msra.mxu0 0.0
        %5066 = vmatprep.subr.mxu0 0.0
        %5067 = vmatpush1.msra.mxu0 0.0
        %5068 = vmatprep.subr.mxu0 0.0
        %5069 = vmatpush1.msra.mxu0 0.0
        %5070 = vmatprep.subr.mxu0 0.0
        %5071 = vmatpush1.msra.mxu0 0.0
        %5072 = vmatprep.subr.mxu0 0.0
        %5073 = vmatpush1.msra.mxu0 0.0
        %5074 = vmatprep.subr.mxu0 0.0
        %5075 = vmatpush1.msra.mxu0 0.0
        %5076 = vmatprep.subr.mxu0 0.0
        %5077 = vmatpush1.msra.mxu0 0.0
        %5078 = vmatprep.subr.mxu0 0.0
        %5079 = vmatpush1.msra.mxu0 0.0
        %5080 = vmatprep.subr.mxu0 0.0
        %5081 = vmatpush1.msra.mxu0 0.0
        %5082 = vmatprep.subr.mxu0 0.0
        %5083 = vmatpush1.msra.mxu0 0.0
        %5084 = vmatprep.subr.mxu0 0.0
        %5085 = vmatpush1.msra.mxu0 0.0
        %5086 = vmatprep.subr.mxu0 0.0
        %5087 = vmatpush1.msra.mxu0 0.0
        %5088 = vmatprep.subr.mxu0 0.0
        %5089 = vmatpush1.msra.mxu0 0.0
        %5090 = vmatprep.subr.mxu0 0.0
        %5091 = vmatpush1.msra.mxu0 0.0
        %5092 = vmatprep.subr.mxu0 0.0
        %5093 = vmatpush1.msra.mxu0 0.0
        %5094 = vmatprep.subr.mxu0 0.0
        %5095 = vmatpush1.msra.mxu0 0.0
        %5096 = vmatprep.subr.mxu0 0.0
        %5097 = vmatpush1.msra.mxu0 0.0
        %5098 = vmatprep.subr.mxu0 0.0
        %5099 = vmatpush1.msra.mxu0 0.0
        %5100 = vmatprep.subr.mxu0 0.0
        %5101 = vmatpush1.msra.mxu0 0.0
        %5102 = vmatprep.subr.mxu0 0.0
        %5103 = vmatpush1.msra.mxu0 0.0
        %5104 = vmatprep.subr.mxu0 0.0
        %5105 = vmatpush1.msra.mxu0 0.0
        %5106 = vmatprep.subr.mxu0 0.0
        %5107 = vmatpush1.msra.mxu0 0.0
        %5108 = vmatprep.subr.mxu0 0.0
        %5109 = vmatpush1.msra.mxu0 0.0
        %5110 = vmatprep.subr.mxu0 0.0
        %5111 = vmatpush1.msra.mxu0 0.0
        %5112 = vmatprep.subr.mxu0 0.0
        %5113 = vmatpush1.msra.mxu0 0.0
        %5114 = vmatprep.mubr.f32.mxu0 0.0
        %5115 = vmatmul.mubr.f32.gmra.mrb[0].mxu0 %v4914
        %v5116 = vpop.f32.mrb[0].mxu0
        %v5117 = vadd.f32 0.0, %v5116
        %v5118 = vpop.f32.mrb[0].mxu0
        %v5119 = vadd.f32 0.0, %v5118
        %5120 = vmatprep.mubr.f32.mxu0 0.0
        %5121 = vmatmul.mubr.f32.gmra.mrb[0].mxu0 %v4917
        %v5122 = vpop.f32.mrb[0].mxu0
        %v5123 = vadd.f32 0.0, %v5122
        %v5124 = vpop.f32.mrb[0].mxu0
        %v5125 = vadd.f32 0.0, %v5124
        %5126 = vmatprep.mubr.f32.mxu0 0.0
        %5127 = vmatmul.mubr.f32.gmra.mrb[0].mxu0 %v4920
        %v5128 = vpop.f32.mrb[0].mxu0
        %v5129 = vadd.f32 0.0, %v5128
        %v5130 = vpop.f32.mrb[0].mxu0
        %v5131 = vadd.f32 0.0, %v5130
        %5132 = vmatprep.mubr.f32.mxu0 0.0
        %5133 = vmatmul.mubr.f32.gmra.mrb[0].mxu0 %v4923
        %v5134 = vpop.f32.mrb[0].mxu0
        %v5135 = vadd.f32 0.0, %v5134
        %v5136 = vpop.f32.mrb[0].mxu0
        %v5137 = vadd.f32 0.0, %v5136
        %5138 = vmatprep.mubr.f32.mxu0 0.0
        %5139 = vmatmul.mubr.f32.gmra.mrb[0].mxu0 %v4926
        %v5140 = vpop.f32.mrb[0].mxu0
        %v5141 = vadd.f32 0.0, %v5140
        %v5142 = vpop.f32.mrb[0].mxu0
        %v5143 = vadd.f32 0.0, %v5142
        %5144 = vmatprep.mubr.f32.mxu0 0.0
        %5145 = vmatmul.mubr.f32.gmra.mrb[0].mxu0 %v4929
        %v5146 = vpop.f32.mrb[0].mxu0
        %v5147 = vadd.f32 0.0, %v5146
        %v5148 = vpop.f32.mrb[0].mxu0
        %v5149 = vadd.f32 0.0, %v5148
        %5150 = vmatprep.mubr.f32.mxu0 0.0
        %5151 = vmatmul.mubr.f32.gmra.mrb[0].mxu0 %v4932
        %v5152 = vpop.f32.mrb[0].mxu0
        %v5153 = vadd.f32 0.0, %v5152
        %v5154 = vpop.f32.mrb[0].mxu0
        %v5155 = vadd.f32 0.0, %v5154
        %5156 = vmatprep.mubr.f32.mxu0 0.0
        %5157 = vmatmul.mubr.f32.gmra.mrb[0].mxu0 %v4935
        %v5158 = vpop.f32.mrb[0].mxu0
        %v5159 = vadd.f32 0.0, %v5158
        %v5160 = vpop.f32.mrb[0].mxu0
        %v5161 = vadd.f32 0.0, %v5160
        %5162 = vdwg.mxu0
        %v5163 = vmul.f32 %v5028, 0.5
        %v5164 = vmul.f32 %v5030, 0.5
        %v5165 = vmul.f32 %v5141, 0.5
        %v5166 = vmul.f32 %v5143, 0.5
        %v5167 = vmul.f32 %v5034, 0.5
        %v5168 = vmul.f32 %v5036, 0.5
        %v5169 = vmul.f32 %v5147, 0.5
        %v5170 = vmul.f32 %v5149, 0.5
        %v5171 = vmul.f32 %v5040, 0.5
        %v5172 = vmul.f32 %v5042, 0.5
        %v5173 = vmul.f32 %v5153, 0.5
        %v5174 = vmul.f32 %v5155, 0.5
        %v5175 = vmul.f32 %v5046, 0.5
        %v5176 = vmul.f32 %v5048, 0.5
        %v5177 = vmul.f32 %v5159, 0.5
        %v5178 = vmul.f32 %v5161, 0.5
        %v5179 = vtanh.pop %v5163
        %v5180 = vtanh.pop %v5164
        %v5181 = vtanh.pop %v5165
        %v5182 = vtanh.pop %v5166
        %v5183 = vtanh.pop %v5167
        %v5184 = vtanh.pop %v5168
        %v5185 = vtanh.pop %v5169
        %v5186 = vtanh.pop %v5170
        %v5187 = vtanh.pop %v5171
        %v5188 = vtanh.pop %v5172
        %v5189 = vtanh.pop %v5173
        %v5190 = vtanh.pop %v5174
        %v5191 = vtanh.pop %v5175
        %v5192 = vtanh.pop %v5176
        %v5193 = vtanh.pop %v5177
        %v5194 = vtanh.pop %v5178
        %v5195 = vmul.f32 %v5179, 0.5
        %v5196 = vmul.f32 %v5180, 0.5
        %v5197 = vmul.f32 %v5181, 0.5
        %v5198 = vmul.f32 %v5182, 0.5
        %v5199 = vmul.f32 %v5183, 0.5
        %v5200 = vmul.f32 %v5184, 0.5
        %v5201 = vmul.f32 %v5185, 0.5
        %v5202 = vmul.f32 %v5186, 0.5
        %v5203 = vmul.f32 %v5187, 0.5
        %v5204 = vmul.f32 %v5188, 0.5
        %v5205 = vmul.f32 %v5189, 0.5
        %v5206 = vmul.f32 %v5190, 0.5
        %v5207 = vmul.f32 %v5191, 0.5
        %v5208 = vmul.f32 %v5192, 0.5
        %v5209 = vmul.f32 %v5193, 0.5
        %v5210 = vmul.f32 %v5194, 0.5
        %v5211 = vadd.f32 %v5195, 0.5
        %v5212 = vadd.f32 %v5196, 0.5
        %v5213 = vadd.f32 %v5197, 0.5
        %v5214 = vadd.f32 %v5198, 0.5
        %v5215 = vadd.f32 %v5199, 0.5
        %v5216 = vadd.f32 %v5200, 0.5
        %v5217 = vadd.f32 %v5201, 0.5
        %v5218 = vadd.f32 %v5202, 0.5
        %v5219 = vadd.f32 %v5203, 0.5
        %v5220 = vadd.f32 %v5204, 0.5
        %v5221 = vadd.f32 %v5205, 0.5
        %v5222 = vadd.f32 %v5206, 0.5
        %v5223 = vadd.f32 %v5207, 0.5
        %v5224 = vadd.f32 %v5208, 0.5
        %v5225 = vadd.f32 %v5209, 0.5
        %v5226 = vadd.f32 %v5210, 0.5
        %v5227 = vmul.f32 %v5004, %v5211
        %v5228 = vmul.f32 %v5006, %v5212
        %v5229 = vmul.f32 %v5117, %v5213
        %v5230 = vmul.f32 %v5119, %v5214
        %v5231 = vmul.f32 %v5010, %v5215
        %v5232 = vmul.f32 %v5012, %v5216
        %v5233 = vmul.f32 %v5123, %v5217
        %v5234 = vmul.f32 %v5125, %v5218
        %v5235 = vmul.f32 %v5016, %v5219
        %v5236 = vmul.f32 %v5018, %v5220
        %v5237 = vmul.f32 %v5129, %v5221
        %v5238 = vmul.f32 %v5131, %v5222
        %v5239 = vmul.f32 %v5022, %v5223
        %v5240 = vmul.f32 %v5024, %v5224
        %v5241 = vmul.f32 %v5135, %v5225
        %v5242 = vmul.f32 %v5137, %v5226
        %v5243 = vadd.f32 %v4888, %v5227
        %v5244 = vadd.f32 %v4889, %v5228
        %v5245 = vadd.f32 %v4890, %v5229
        %v5246 = vadd.f32 %v4891, %v5230
        %v5247 = vadd.f32 %v4892, %v5231
        %v5248 = vadd.f32 %v4893, %v5232
        %v5249 = vadd.f32 %v4894, %v5233
        %v5250 = vadd.f32 %v4895, %v5234
        %v5251 = vadd.f32 %v4896, %v5235
        %v5252 = vadd.f32 %v4897, %v5236
        %v5253 = vadd.f32 %v4898, %v5237
        %v5254 = vadd.f32 %v4899, %v5238
        %v5255 = vadd.f32 %v4900, %v5239
        %v5256 = vadd.f32 %v4901, %v5240
        %v5257 = vadd.f32 %v4902, %v5241
        %v5258 = vadd.f32 %v4903, %v5242
        %v5259 = vmax.f32 %v5243, 0.0
        %v5260 = vmax.f32 %v5244, 0.0
        %v5261 = vmax.f32 %v5245, 0.0
        %v5262 = vmax.f32 %v5246, 0.0
        %v5263 = vmax.f32 %v5247, 0.0
        %v5264 = vmax.f32 %v5248, 0.0
        %v5265 = vmax.f32 %v5249, 0.0
        %v5266 = vmax.f32 %v5250, 0.0
        %v5267 = vadd.f32 %v3492, %v5259
        %v5268 = vadd.f32 %v3493, %v5260
        %v5269 = vadd.f32 %v3494, %v5261
        %v5270 = vadd.f32 %v3495, %v5262
        %v5271 = vadd.f32 %v3496, %v5263
        %v5272 = vadd.f32 %v3497, %v5264
        %v5273 = vadd.f32 %v3498, %v5265
        %v5274 = vadd.f32 %v3499, %v5266
        %v5275 = vsub.f32 1.3, %v3857
        %v5276 = vsub.f32 1.3, %v3858
        %v5277 = vsub.f32 1.3, %v3859
        %v5278 = vsub.f32 1.3, %v3860
        %v5279 = vsub.f32 1.3, %v3861
        %v5280 = vsub.f32 1.3, %v3862
        %v5281 = vsub.f32 1.3, %v3863
        %v5282 = vsub.f32 1.3, %v3864
        %v5283 = vmul.f32 %v5275, %v3500
        %v5284 = vmul.f32 %v5276, %v3501
        %v5285 = vmul.f32 %v5277, %v3502
        %v5286 = vmul.f32 %v5278, %v3503
        %v5287 = vmul.f32 %v5279, %v3504
        %v5288 = vmul.f32 %v5280, %v3505
        %v5289 = vmul.f32 %v5281, %v3506
        %v5290 = vmul.f32 %v5282, %v3507
        %s5291 = scalar_lea.vmem %s5, 32
        %v5292 = vld [vmem:[%s5291] sm:$0xff]
        %v5293 = vld [vmem:[%s5291 + $0x8] sm:$0xff]
        %v5295 = vsel %vm378, %v5292, 0
        %v5298 = vsel %vm378, %v5293, 0
        %5300 = vmatprep.subr.mxu0 %v5252
        %5301 = vmatpush1.msra.mxu0 %v5251
        %5302 = vmatprep.subr.mxu0 %v5256
        %5303 = vmatpush1.msra.mxu0 %v5255
        %5304 = vmatprep.subr.mxu0 0.0
        %5305 = vmatpush1.msra.mxu0 0.0
        %5306 = vmatprep.subr.mxu0 0.0
        %5307 = vmatpush1.msra.mxu0 0.0
        %5308 = vmatprep.subr.mxu0 0.0
        %5309 = vmatpush1.msra.mxu0 0.0
        %5310 = vmatprep.subr.mxu0 0.0
        %5311 = vmatpush1.msra.mxu0 0.0
        %5312 = vmatprep.subr.mxu0 0.0
        %5313 = vmatpush1.msra.mxu0 0.0
        %5314 = vmatprep.subr.mxu0 0.0
        %5315 = vmatpush1.msra.mxu0 0.0
        %5316 = vmatprep.subr.mxu0 0.0
        %5317 = vmatpush1.msra.mxu0 0.0
        %5318 = vmatprep.subr.mxu0 0.0
        %5319 = vmatpush1.msra.mxu0 0.0
        %5320 = vmatprep.subr.mxu0 0.0
        %5321 = vmatpush1.msra.mxu0 0.0
        %5322 = vmatprep.subr.mxu0 0.0
        %5323 = vmatpush1.msra.mxu0 0.0
        %5324 = vmatprep.subr.mxu0 0.0
        %5325 = vmatpush1.msra.mxu0 0.0
        %5326 = vmatprep.subr.mxu0 0.0
        %5327 = vmatpush1.msra.mxu0 0.0
        %5328 = vmatprep.subr.mxu0 0.0
        %5329 = vmatpush1.msra.mxu0 0.0
        %5330 = vmatprep.subr.mxu0 0.0
        %5331 = vmatpush1.msra.mxu0 0.0
        %5332 = vmatprep.subr.mxu0 0.0
        %5333 = vmatpush1.msra.mxu0 0.0
        %5334 = vmatprep.subr.mxu0 0.0
        %5335 = vmatpush1.msra.mxu0 0.0
        %5336 = vmatprep.subr.mxu0 0.0
        %5337 = vmatpush1.msra.mxu0 0.0
        %5338 = vmatprep.subr.mxu0 0.0
        %5339 = vmatpush1.msra.mxu0 0.0
        %5340 = vmatprep.subr.mxu0 0.0
        %5341 = vmatpush1.msra.mxu0 0.0
        %5342 = vmatprep.subr.mxu0 0.0
        %5343 = vmatpush1.msra.mxu0 0.0
        %5344 = vmatprep.subr.mxu0 0.0
        %5345 = vmatpush1.msra.mxu0 0.0
        %5346 = vmatprep.subr.mxu0 0.0
        %5347 = vmatpush1.msra.mxu0 0.0
        %5348 = vmatprep.subr.mxu0 0.0
        %5349 = vmatpush1.msra.mxu0 0.0
        %5350 = vmatprep.subr.mxu0 0.0
        %5351 = vmatpush1.msra.mxu0 0.0
        %5352 = vmatprep.subr.mxu0 0.0
        %5353 = vmatpush1.msra.mxu0 0.0
        %5354 = vmatprep.subr.mxu0 0.0
        %5355 = vmatpush1.msra.mxu0 0.0
        %5356 = vmatprep.subr.mxu0 0.0
        %5357 = vmatpush1.msra.mxu0 0.0
        %5358 = vmatprep.subr.mxu0 0.0
        %5359 = vmatpush1.msra.mxu0 0.0
        %5360 = vmatprep.subr.mxu0 0.0
        %5361 = vmatpush1.msra.mxu0 0.0
        %5362 = vmatprep.subr.mxu0 0.0
        %5363 = vmatpush1.msra.mxu0 0.0
        %5364 = vmatprep.mubr.f32.mxu0 0.0
        %5365 = vmatmul.mubr.f32.gmra.mrb[0].mxu0 %v5295
        %v5366 = vpop.f32.mrb[0].mxu0
        %v5367 = vadd.f32 0.0, %v5366
        %v5368 = vpop.f32.mrb[0].mxu0
        %v5369 = vadd.f32 0.0, %v5368
        %5370 = vmatprep.mubr.f32.mxu0 0.0
        %5371 = vmatmul.mubr.f32.gmra.mrb[0].mxu0 %v5298
        %v5372 = vpop.f32.mrb[0].mxu0
        %v5373 = vadd.f32 0.0, %v5372
        %v5374 = vpop.f32.mrb[0].mxu0
        %v5375 = vadd.f32 0.0, %v5374
        %5376 = vdwg.mxu0
        %5377 = vmatprep.subr.mxu0 %v5254
        %5378 = vmatpush1.msra.mxu0 %v5253
        %5379 = vmatprep.subr.mxu0 %v5258
        %5380 = vmatpush1.msra.mxu0 %v5257
        %5381 = vmatprep.subr.mxu0 0.0
        %5382 = vmatpush1.msra.mxu0 0.0
        %5383 = vmatprep.subr.mxu0 0.0
        %5384 = vmatpush1.msra.mxu0 0.0
        %5385 = vmatprep.subr.mxu0 0.0
        %5386 = vmatpush1.msra.mxu0 0.0
        %5387 = vmatprep.subr.mxu0 0.0
        %5388 = vmatpush1.msra.mxu0 0.0
        %5389 = vmatprep.subr.mxu0 0.0
        %5390 = vmatpush1.msra.mxu0 0.0
        %5391 = vmatprep.subr.mxu0 0.0
        %5392 = vmatpush1.msra.mxu0 0.0
        %5393 = vmatprep.subr.mxu0 0.0
        %5394 = vmatpush1.msra.mxu0 0.0
        %5395 = vmatprep.subr.mxu0 0.0
        %5396 = vmatpush1.msra.mxu0 0.0
        %5397 = vmatprep.subr.mxu0 0.0
        %5398 = vmatpush1.msra.mxu0 0.0
        %5399 = vmatprep.subr.mxu0 0.0
        %5400 = vmatpush1.msra.mxu0 0.0
        %5401 = vmatprep.subr.mxu0 0.0
        %5402 = vmatpush1.msra.mxu0 0.0
        %5403 = vmatprep.subr.mxu0 0.0
        %5404 = vmatpush1.msra.mxu0 0.0
        %5405 = vmatprep.subr.mxu0 0.0
        %5406 = vmatpush1.msra.mxu0 0.0
        %5407 = vmatprep.subr.mxu0 0.0
        %5408 = vmatpush1.msra.mxu0 0.0
        %5409 = vmatprep.subr.mxu0 0.0
        %5410 = vmatpush1.msra.mxu0 0.0
        %5411 = vmatprep.subr.mxu0 0.0
        %5412 = vmatpush1.msra.mxu0 0.0
        %5413 = vmatprep.subr.mxu0 0.0
        %5414 = vmatpush1.msra.mxu0 0.0
        %5415 = vmatprep.subr.mxu0 0.0
        %5416 = vmatpush1.msra.mxu0 0.0
        %5417 = vmatprep.subr.mxu0 0.0
        %5418 = vmatpush1.msra.mxu0 0.0
        %5419 = vmatprep.subr.mxu0 0.0
        %5420 = vmatpush1.msra.mxu0 0.0
        %5421 = vmatprep.subr.mxu0 0.0
        %5422 = vmatpush1.msra.mxu0 0.0
        %5423 = vmatprep.subr.mxu0 0.0
        %5424 = vmatpush1.msra.mxu0 0.0
        %5425 = vmatprep.subr.mxu0 0.0
        %5426 = vmatpush1.msra.mxu0 0.0
        %5427 = vmatprep.subr.mxu0 0.0
        %5428 = vmatpush1.msra.mxu0 0.0
        %5429 = vmatprep.subr.mxu0 0.0
        %5430 = vmatpush1.msra.mxu0 0.0
        %5431 = vmatprep.subr.mxu0 0.0
        %5432 = vmatpush1.msra.mxu0 0.0
        %5433 = vmatprep.subr.mxu0 0.0
        %5434 = vmatpush1.msra.mxu0 0.0
        %5435 = vmatprep.subr.mxu0 0.0
        %5436 = vmatpush1.msra.mxu0 0.0
        %5437 = vmatprep.subr.mxu0 0.0
        %5438 = vmatpush1.msra.mxu0 0.0
        %5439 = vmatprep.subr.mxu0 0.0
        %5440 = vmatpush1.msra.mxu0 0.0
        %5441 = vmatprep.mubr.f32.mxu0 0.0
        %5442 = vmatmul.mubr.f32.gmra.mrb[0].mxu0 %v5295
        %v5443 = vpop.f32.mrb[0].mxu0
        %v5444 = vadd.f32 0.0, %v5443
        %v5445 = vpop.f32.mrb[0].mxu0
        %v5446 = vadd.f32 0.0, %v5445
        %5447 = vmatprep.mubr.f32.mxu0 0.0
        %5448 = vmatmul.mubr.f32.gmra.mrb[0].mxu0 %v5298
        %v5449 = vpop.f32.mrb[0].mxu0
        %v5450 = vadd.f32 0.0, %v5449
        %v5451 = vpop.f32.mrb[0].mxu0
        %v5452 = vadd.f32 0.0, %v5451
        %5453 = vdwg.mxu0
        %s5454 = scalar_lea.vmem %s1, 64
        %v5455 = vld [vmem:[%s5454] sm:$0xff]
        %v5456 = vld [vmem:[%s5454 + $0x8] sm:$0xff]
        %s5457 = scalar_lea.vmem %s1, 112
        %v5458 = vld [vmem:[%s5457] sm:$0xff]
        %v5459 = vld [vmem:[%s5457 + $0x8] sm:$0xff]
        %v5460 = vadd.f32 %v5367, %v5369
        %v5461 = vadd.f32 %v5460, %v5444
        %v5462 = vadd.f32 %v5461, %v5446
        %5463 = vadd.xlane.f32.xlu0 %v5462
        %v5464 = vpop.xlane.xlu0 %5463
        %v5465 = vadd.f32 %v5373, %v5375
        %v5466 = vadd.f32 %v5465, %v5450
        %v5467 = vadd.f32 %v5466, %v5452
        %5468 = vadd.xlane.f32.xlu0 %v5467
        %v5469 = vpop.xlane.xlu0 %5468
        %v5470 = vmul.f32 %v5464, %v1919
        %v5471 = vmul.f32 %v5469, %v1919
        %v5472 = vsub.f32 %v5367, %v5470
        %v5473 = vsub.f32 %v5369, %v5470
        %v5474 = vsub.f32 %v5444, %v5470
        %v5475 = vsub.f32 %v5446, %v5470
        %v5476 = vsub.f32 %v5373, %v5471
        %v5477 = vsub.f32 %v5375, %v5471
        %v5478 = vsub.f32 %v5450, %v5471
        %v5479 = vsub.f32 %v5452, %v5471
        %v5480 = vmul.f32 %v5472, %v5472
        %v5481 = vmul.f32 %v5473, %v5473
        %v5482 = vmul.f32 %v5474, %v5474
        %v5483 = vmul.f32 %v5475, %v5475
        %v5484 = vmul.f32 %v5476, %v5476
        %v5485 = vmul.f32 %v5477, %v5477
        %v5486 = vmul.f32 %v5478, %v5478
        %v5487 = vmul.f32 %v5479, %v5479
        %v5488 = vadd.f32 %v5480, %v5481
        %v5489 = vadd.f32 %v5488, %v5482
        %v5490 = vadd.f32 %v5489, %v5483
        %5491 = vadd.xlane.f32.xlu0 %v5490
        %v5492 = vpop.xlane.xlu0 %5491
        %v5493 = vadd.f32 %v5484, %v5485
        %v5494 = vadd.f32 %v5493, %v5486
        %v5495 = vadd.f32 %v5494, %v5487
        %5496 = vadd.xlane.f32.xlu0 %v5495
        %v5497 = vpop.xlane.xlu0 %5496
        %v5498 = vmul.f32 %v5492, %v1919
        %v5499 = vmul.f32 %v5497, %v1919
        %v5500 = vadd.f32 %v5498, 1e-05
        %v5501 = vadd.f32 %v5499, 1e-05
        %v5502 = vrsqrt.pop %v5500
        %v5503 = vrsqrt.pop %v5501
        %v5504 = vmul.f32 %v5472, %v5502
        %v5505 = vmul.f32 %v5473, %v5502
        %v5506 = vmul.f32 %v5474, %v5502
        %v5507 = vmul.f32 %v5475, %v5502
        %v5508 = vmul.f32 %v5476, %v5503
        %v5509 = vmul.f32 %v5477, %v5503
        %v5510 = vmul.f32 %v5478, %v5503
        %v5511 = vmul.f32 %v5479, %v5503
        %5513 = vset.pattern.permute.xlu0 0
        %5514 = vperm.xlu0 %5513, %v5455
        %v5515 = vpop.permute.xlu0 %5514
        %5518 = vset.pattern.permute.xlu0 0
        %5519 = vperm.xlu0 %5518, %v5456
        %v5520 = vpop.permute.xlu0 %5519
        %v5522 = vmul.f32 %v5504, %v5515
        %v5523 = vmul.f32 %v5505, %v5515
        %v5524 = vmul.f32 %v5506, %v5515
        %v5525 = vmul.f32 %v5507, %v5515
        %v5526 = vmul.f32 %v5508, %v5520
        %v5527 = vmul.f32 %v5509, %v5520
        %v5528 = vmul.f32 %v5510, %v5520
        %v5529 = vmul.f32 %v5511, %v5520
        %5531 = vset.pattern.permute.xlu0 0
        %5532 = vperm.xlu0 %5531, %v5458
        %v5533 = vpop.permute.xlu0 %5532
        %5536 = vset.pattern.permute.xlu0 0
        %5537 = vperm.xlu0 %5536, %v5459
        %v5538 = vpop.permute.xlu0 %5537
        %v5540 = vadd.f32 %v5522, %v5533
        %v5541 = vadd.f32 %v5523, %v5533
        %v5542 = vadd.f32 %v5524, %v5533
        %v5543 = vadd.f32 %v5525, %v5533
        %v5544 = vadd.f32 %v5526, %v5538
        %v5545 = vadd.f32 %v5527, %v5538
        %v5546 = vadd.f32 %v5528, %v5538
        %v5547 = vadd.f32 %v5529, %v5538
        %v5548 = vmul.f32 %v5283, %v5540
        %v5549 = vmul.f32 %v5284, %v5541
        %v5550 = vmul.f32 %v5285, %v5542
        %v5551 = vmul.f32 %v5286, %v5543
        %v5552 = vmul.f32 %v5287, %v5544
        %v5553 = vmul.f32 %v5288, %v5545
        %v5554 = vmul.f32 %v5289, %v5546
        %v5555 = vmul.f32 %v5290, %v5547
        %v5556 = vmax.f32 %v5548, %v5552
        %v5557 = vrot.slane %v5556, 4
        %v5558 = vmax.f32 %v5556, %v5557
        %v5559 = vrot.slane %v5558, 2
        %v5560 = vmax.f32 %v5558, %v5559
        %v5561 = vrot.slane %v5560, 1
        %v5562 = vmax.f32 %v5560, %v5561
        %v5563 = vmax.f32 %v5549, %v5553
        %v5564 = vrot.slane %v5563, 4
        %v5565 = vmax.f32 %v5563, %v5564
        %v5566 = vrot.slane %v5565, 2
        %v5567 = vmax.f32 %v5565, %v5566
        %v5568 = vrot.slane %v5567, 1
        %v5569 = vmax.f32 %v5567, %v5568
        %v5570 = vmax.f32 %v5550, %v5554
        %v5571 = vrot.slane %v5570, 4
        %v5572 = vmax.f32 %v5570, %v5571
        %v5573 = vrot.slane %v5572, 2
        %v5574 = vmax.f32 %v5572, %v5573
        %v5575 = vrot.slane %v5574, 1
        %v5576 = vmax.f32 %v5574, %v5575
        %v5577 = vmax.f32 %v5551, %v5555
        %v5578 = vrot.slane %v5577, 4
        %v5579 = vmax.f32 %v5577, %v5578
        %v5580 = vrot.slane %v5579, 2
        %v5581 = vmax.f32 %v5579, %v5580
        %v5582 = vrot.slane %v5581, 1
        %v5583 = vmax.f32 %v5581, %v5582
        %v5584 = vsub.f32 %v5548, %v5562
        %v5585 = vsub.f32 %v5549, %v5569
        %v5586 = vsub.f32 %v5550, %v5576
        %v5587 = vsub.f32 %v5551, %v5583
        %v5588 = vsub.f32 %v5552, %v5562
        %v5589 = vsub.f32 %v5553, %v5569
        %v5590 = vsub.f32 %v5554, %v5576
        %v5591 = vsub.f32 %v5555, %v5583
        %v5592 = vmul.f32 %v5584, 1.442695
        %v5593 = vpow.pop %v5592
        %v5594 = vmul.f32 %v5585, 1.442695
        %v5595 = vpow.pop %v5594
        %v5596 = vmul.f32 %v5586, 1.442695
        %v5597 = vpow.pop %v5596
        %v5598 = vmul.f32 %v5587, 1.442695
        %v5599 = vpow.pop %v5598
        %v5600 = vmul.f32 %v5588, 1.442695
        %v5601 = vpow.pop %v5600
        %v5602 = vmul.f32 %v5589, 1.442695
        %v5603 = vpow.pop %v5602
        %v5604 = vmul.f32 %v5590, 1.442695
        %v5605 = vpow.pop %v5604
        %v5606 = vmul.f32 %v5591, 1.442695
        %v5607 = vpow.pop %v5606
        %v5608 = vadd.f32 %v5593, %v5601
        %v5609 = vrot.slane %v5608, 4
        %v5610 = vadd.f32 %v5608, %v5609
        %v5611 = vrot.slane %v5610, 2
        %v5612 = vadd.f32 %v5610, %v5611
        %v5613 = vrot.slane %v5612, 1
        %v5614 = vadd.f32 %v5612, %v5613
        %v5615 = vadd.f32 %v5595, %v5603
        %v5616 = vrot.slane %v5615, 4
        %v5617 = vadd.f32 %v5615, %v5616
        %v5618 = vrot.slane %v5617, 2
        %v5619 = vadd.f32 %v5617, %v5618
        %v5620 = vrot.slane %v5619, 1
        %v5621 = vadd.f32 %v5619, %v5620
        %v5622 = vadd.f32 %v5597, %v5605
        %v5623 = vrot.slane %v5622, 4
        %v5624 = vadd.f32 %v5622, %v5623
        %v5625 = vrot.slane %v5624, 2
        %v5626 = vadd.f32 %v5624, %v5625
        %v5627 = vrot.slane %v5626, 1
        %v5628 = vadd.f32 %v5626, %v5627
        %v5629 = vadd.f32 %v5599, %v5607
        %v5630 = vrot.slane %v5629, 4
        %v5631 = vadd.f32 %v5629, %v5630
        %v5632 = vrot.slane %v5631, 2
        %v5633 = vadd.f32 %v5631, %v5632
        %v5634 = vrot.slane %v5633, 1
        %v5635 = vadd.f32 %v5633, %v5634
        %v5636 = vrcp.pop %v5614
        %v5637 = vrcp.pop %v5621
        %v5638 = vrcp.pop %v5628
        %v5639 = vrcp.pop %v5635
        %v5640 = vmul.f32 %v5593, %v5636
        %v5641 = vmul.f32 %v5595, %v5637
        %v5642 = vmul.f32 %v5597, %v5638
        %v5643 = vmul.f32 %v5599, %v5639
        %v5644 = vmul.f32 %v5601, %v5636
        %v5645 = vmul.f32 %v5603, %v5637
        %v5646 = vmul.f32 %v5605, %v5638
        %v5647 = vmul.f32 %v5607, %v5639
        %v5648 = vmul.f32 %v5640, %v354
        %v5649 = vmul.f32 %v5641, %v355
        %v5650 = vmul.f32 %v5642, %v356
        %v5651 = vmul.f32 %v5643, %v357
        %v5652 = vmul.f32 %v5644, %v358
        %v5653 = vmul.f32 %v5645, %v359
        %v5654 = vmul.f32 %v5646, %v360
        %v5655 = vmul.f32 %v5647, %v361
        %5656 = vmatprep.subr.mxu0 %v5649
        %5657 = vmatpush1.msra.mxu0 %v5648
        %5658 = vmatprep.subr.mxu0 %v5653
        %5659 = vmatpush1.msra.mxu0 %v5652
        %5660 = vmatprep.subr.mxu0 0.0
        %5661 = vmatpush1.msra.mxu0 0.0
        %5662 = vmatprep.subr.mxu0 0.0
        %5663 = vmatpush1.msra.mxu0 0.0
        %5664 = vmatprep.subr.mxu0 0.0
        %5665 = vmatpush1.msra.mxu0 0.0
        %5666 = vmatprep.subr.mxu0 0.0
        %5667 = vmatpush1.msra.mxu0 0.0
        %5668 = vmatprep.subr.mxu0 0.0
        %5669 = vmatpush1.msra.mxu0 0.0
        %5670 = vmatprep.subr.mxu0 0.0
        %5671 = vmatpush1.msra.mxu0 0.0
        %5672 = vmatprep.subr.mxu0 0.0
        %5673 = vmatpush1.msra.mxu0 0.0
        %5674 = vmatprep.subr.mxu0 0.0
        %5675 = vmatpush1.msra.mxu0 0.0
        %5676 = vmatprep.subr.mxu0 0.0
        %5677 = vmatpush1.msra.mxu0 0.0
        %5678 = vmatprep.subr.mxu0 0.0
        %5679 = vmatpush1.msra.mxu0 0.0
        %5680 = vmatprep.subr.mxu0 0.0
        %5681 = vmatpush1.msra.mxu0 0.0
        %5682 = vmatprep.subr.mxu0 0.0
        %5683 = vmatpush1.msra.mxu0 0.0
        %5684 = vmatprep.subr.mxu0 0.0
        %5685 = vmatpush1.msra.mxu0 0.0
        %5686 = vmatprep.subr.mxu0 0.0
        %5687 = vmatpush1.msra.mxu0 0.0
        %5688 = vmatprep.subr.mxu0 0.0
        %5689 = vmatpush1.msra.mxu0 0.0
        %5690 = vmatprep.subr.mxu0 0.0
        %5691 = vmatpush1.msra.mxu0 0.0
        %5692 = vmatprep.subr.mxu0 0.0
        %5693 = vmatpush1.msra.mxu0 0.0
        %5694 = vmatprep.subr.mxu0 0.0
        %5695 = vmatpush1.msra.mxu0 0.0
        %5696 = vmatprep.subr.mxu0 0.0
        %5697 = vmatpush1.msra.mxu0 0.0
        %5698 = vmatprep.subr.mxu0 0.0
        %5699 = vmatpush1.msra.mxu0 0.0
        %5700 = vmatprep.subr.mxu0 0.0
        %5701 = vmatpush1.msra.mxu0 0.0
        %5702 = vmatprep.subr.mxu0 0.0
        %5703 = vmatpush1.msra.mxu0 0.0
        %5704 = vmatprep.subr.mxu0 0.0
        %5705 = vmatpush1.msra.mxu0 0.0
        %5706 = vmatprep.subr.mxu0 0.0
        %5707 = vmatpush1.msra.mxu0 0.0
        %5708 = vmatprep.subr.mxu0 0.0
        %5709 = vmatpush1.msra.mxu0 0.0
        %5710 = vmatprep.subr.mxu0 0.0
        %5711 = vmatpush1.msra.mxu0 0.0
        %5712 = vmatprep.subr.mxu0 0.0
        %5713 = vmatpush1.msra.mxu0 0.0
        %5714 = vmatprep.subr.mxu0 0.0
        %5715 = vmatpush1.msra.mxu0 0.0
        %5716 = vmatprep.subr.mxu0 0.0
        %5717 = vmatpush1.msra.mxu0 0.0
        %5718 = vmatprep.subr.mxu0 0.0
        %5719 = vmatpush1.msra.mxu0 0.0
        %5720 = vmatprep.mubr.f32.mxu0 0.0
        %5721 = vmatmul.mubr.f32.gmra.mrb[0].mxu0 %v380
        %v5722 = vpop.f32.mrb[0].mxu0
        %v5723 = vadd.f32 0.0, %v5722
        %v5724 = vpop.f32.mrb[0].mxu0
        %v5725 = vadd.f32 0.0, %v5724
        %5726 = vmatprep.mubr.f32.mxu0 0.0
        %5727 = vmatmul.mubr.f32.gmra.mrb[0].mxu0 %v383
        %v5728 = vpop.f32.mrb[0].mxu0
        %v5729 = vadd.f32 0.0, %v5728
        %v5730 = vpop.f32.mrb[0].mxu0
        %v5731 = vadd.f32 0.0, %v5730
        %5732 = vmatprep.mubr.f32.mxu0 0.0
        %5733 = vmatmul.mubr.f32.gmra.mrb[0].mxu0 %v386
        %v5734 = vpop.f32.mrb[0].mxu0
        %v5735 = vadd.f32 0.0, %v5734
        %v5736 = vpop.f32.mrb[0].mxu0
        %v5737 = vadd.f32 0.0, %v5736
        %5738 = vmatprep.mubr.f32.mxu0 0.0
        %5739 = vmatmul.mubr.f32.gmra.mrb[0].mxu0 %v389
        %v5740 = vpop.f32.mrb[0].mxu0
        %v5741 = vadd.f32 0.0, %v5740
        %v5742 = vpop.f32.mrb[0].mxu0
        %v5743 = vadd.f32 0.0, %v5742
        %5744 = vmatprep.mubr.f32.mxu0 0.0
        %5745 = vmatmul.mubr.f32.gmra.mrb[0].mxu0 %v392
        %v5746 = vpop.f32.mrb[0].mxu0
        %v5747 = vadd.f32 0.0, %v5746
        %v5748 = vpop.f32.mrb[0].mxu0
        %v5749 = vadd.f32 0.0, %v5748
        %5750 = vmatprep.mubr.f32.mxu0 0.0
        %5751 = vmatmul.mubr.f32.gmra.mrb[0].mxu0 %v395
        %v5752 = vpop.f32.mrb[0].mxu0
        %v5753 = vadd.f32 0.0, %v5752
        %v5754 = vpop.f32.mrb[0].mxu0
        %v5755 = vadd.f32 0.0, %v5754
        %5756 = vmatprep.mubr.f32.mxu0 0.0
        %5757 = vmatmul.mubr.f32.gmra.mrb[0].mxu0 %v398
        %v5758 = vpop.f32.mrb[0].mxu0
        %v5759 = vadd.f32 0.0, %v5758
        %v5760 = vpop.f32.mrb[0].mxu0
        %v5761 = vadd.f32 0.0, %v5760
        %5762 = vmatprep.mubr.f32.mxu0 0.0
        %5763 = vmatmul.mubr.f32.gmra.mrb[0].mxu0 %v401
        %v5764 = vpop.f32.mrb[0].mxu0
        %v5765 = vadd.f32 0.0, %v5764
        %v5766 = vpop.f32.mrb[0].mxu0
        %v5767 = vadd.f32 0.0, %v5766
        %5768 = vdwg.mxu0
        %5769 = vmatprep.subr.mxu0 %v5651
        %5770 = vmatpush1.msra.mxu0 %v5650
        %5771 = vmatprep.subr.mxu0 %v5655
        %5772 = vmatpush1.msra.mxu0 %v5654
        %5773 = vmatprep.subr.mxu0 0.0
        %5774 = vmatpush1.msra.mxu0 0.0
        %5775 = vmatprep.subr.mxu0 0.0
        %5776 = vmatpush1.msra.mxu0 0.0
        %5777 = vmatprep.subr.mxu0 0.0
        %5778 = vmatpush1.msra.mxu0 0.0
        %5779 = vmatprep.subr.mxu0 0.0
        %5780 = vmatpush1.msra.mxu0 0.0
        %5781 = vmatprep.subr.mxu0 0.0
        %5782 = vmatpush1.msra.mxu0 0.0
        %5783 = vmatprep.subr.mxu0 0.0
        %5784 = vmatpush1.msra.mxu0 0.0
        %5785 = vmatprep.subr.mxu0 0.0
        %5786 = vmatpush1.msra.mxu0 0.0
        %5787 = vmatprep.subr.mxu0 0.0
        %5788 = vmatpush1.msra.mxu0 0.0
        %5789 = vmatprep.subr.mxu0 0.0
        %5790 = vmatpush1.msra.mxu0 0.0
        %5791 = vmatprep.subr.mxu0 0.0
        %5792 = vmatpush1.msra.mxu0 0.0
        %5793 = vmatprep.subr.mxu0 0.0
        %5794 = vmatpush1.msra.mxu0 0.0
        %5795 = vmatprep.subr.mxu0 0.0
        %5796 = vmatpush1.msra.mxu0 0.0
        %5797 = vmatprep.subr.mxu0 0.0
        %5798 = vmatpush1.msra.mxu0 0.0
        %5799 = vmatprep.subr.mxu0 0.0
        %5800 = vmatpush1.msra.mxu0 0.0
        %5801 = vmatprep.subr.mxu0 0.0
        %5802 = vmatpush1.msra.mxu0 0.0
        %5803 = vmatprep.subr.mxu0 0.0
        %5804 = vmatpush1.msra.mxu0 0.0
        %5805 = vmatprep.subr.mxu0 0.0
        %5806 = vmatpush1.msra.mxu0 0.0
        %5807 = vmatprep.subr.mxu0 0.0
        %5808 = vmatpush1.msra.mxu0 0.0
        %5809 = vmatprep.subr.mxu0 0.0
        %5810 = vmatpush1.msra.mxu0 0.0
        %5811 = vmatprep.subr.mxu0 0.0
        %5812 = vmatpush1.msra.mxu0 0.0
        %5813 = vmatprep.subr.mxu0 0.0
        %5814 = vmatpush1.msra.mxu0 0.0
        %5815 = vmatprep.subr.mxu0 0.0
        %5816 = vmatpush1.msra.mxu0 0.0
        %5817 = vmatprep.subr.mxu0 0.0
        %5818 = vmatpush1.msra.mxu0 0.0
        %5819 = vmatprep.subr.mxu0 0.0
        %5820 = vmatpush1.msra.mxu0 0.0
        %5821 = vmatprep.subr.mxu0 0.0
        %5822 = vmatpush1.msra.mxu0 0.0
        %5823 = vmatprep.subr.mxu0 0.0
        %5824 = vmatpush1.msra.mxu0 0.0
        %5825 = vmatprep.subr.mxu0 0.0
        %5826 = vmatpush1.msra.mxu0 0.0
        %5827 = vmatprep.subr.mxu0 0.0
        %5828 = vmatpush1.msra.mxu0 0.0
        %5829 = vmatprep.subr.mxu0 0.0
        %5830 = vmatpush1.msra.mxu0 0.0
        %5831 = vmatprep.subr.mxu0 0.0
        %5832 = vmatpush1.msra.mxu0 0.0
        %5833 = vmatprep.mubr.f32.mxu0 0.0
        %5834 = vmatmul.mubr.f32.gmra.mrb[0].mxu0 %v380
        %v5835 = vpop.f32.mrb[0].mxu0
        %v5836 = vadd.f32 0.0, %v5835
        %v5837 = vpop.f32.mrb[0].mxu0
        %v5838 = vadd.f32 0.0, %v5837
        %5839 = vmatprep.mubr.f32.mxu0 0.0
        %5840 = vmatmul.mubr.f32.gmra.mrb[0].mxu0 %v383
        %v5841 = vpop.f32.mrb[0].mxu0
        %v5842 = vadd.f32 0.0, %v5841
        %v5843 = vpop.f32.mrb[0].mxu0
        %v5844 = vadd.f32 0.0, %v5843
        %5845 = vmatprep.mubr.f32.mxu0 0.0
        %5846 = vmatmul.mubr.f32.gmra.mrb[0].mxu0 %v386
        %v5847 = vpop.f32.mrb[0].mxu0
        %v5848 = vadd.f32 0.0, %v5847
        %v5849 = vpop.f32.mrb[0].mxu0
        %v5850 = vadd.f32 0.0, %v5849
        %5851 = vmatprep.mubr.f32.mxu0 0.0
        %5852 = vmatmul.mubr.f32.gmra.mrb[0].mxu0 %v389
        %v5853 = vpop.f32.mrb[0].mxu0
        %v5854 = vadd.f32 0.0, %v5853
        %v5855 = vpop.f32.mrb[0].mxu0
        %v5856 = vadd.f32 0.0, %v5855
        %5857 = vmatprep.mubr.f32.mxu0 0.0
        %5858 = vmatmul.mubr.f32.gmra.mrb[0].mxu0 %v392
        %v5859 = vpop.f32.mrb[0].mxu0
        %v5860 = vadd.f32 0.0, %v5859
        %v5861 = vpop.f32.mrb[0].mxu0
        %v5862 = vadd.f32 0.0, %v5861
        %5863 = vmatprep.mubr.f32.mxu0 0.0
        %5864 = vmatmul.mubr.f32.gmra.mrb[0].mxu0 %v395
        %v5865 = vpop.f32.mrb[0].mxu0
        %v5866 = vadd.f32 0.0, %v5865
        %v5867 = vpop.f32.mrb[0].mxu0
        %v5868 = vadd.f32 0.0, %v5867
        %5869 = vmatprep.mubr.f32.mxu0 0.0
        %5870 = vmatmul.mubr.f32.gmra.mrb[0].mxu0 %v398
        %v5871 = vpop.f32.mrb[0].mxu0
        %v5872 = vadd.f32 0.0, %v5871
        %v5873 = vpop.f32.mrb[0].mxu0
        %v5874 = vadd.f32 0.0, %v5873
        %5875 = vmatprep.mubr.f32.mxu0 0.0
        %5876 = vmatmul.mubr.f32.gmra.mrb[0].mxu0 %v401
        %v5877 = vpop.f32.mrb[0].mxu0
        %v5878 = vadd.f32 0.0, %v5877
        %v5879 = vpop.f32.mrb[0].mxu0
        %v5880 = vadd.f32 0.0, %v5879
        %5881 = vdwg.mxu0
        %v5882 = vmul.f32 %v5747, 0.5
        %v5883 = vmul.f32 %v5749, 0.5
        %v5884 = vmul.f32 %v5860, 0.5
        %v5885 = vmul.f32 %v5862, 0.5
        %v5886 = vmul.f32 %v5753, 0.5
        %v5887 = vmul.f32 %v5755, 0.5
        %v5888 = vmul.f32 %v5866, 0.5
        %v5889 = vmul.f32 %v5868, 0.5
        %v5890 = vmul.f32 %v5759, 0.5
        %v5891 = vmul.f32 %v5761, 0.5
        %v5892 = vmul.f32 %v5872, 0.5
        %v5893 = vmul.f32 %v5874, 0.5
        %v5894 = vmul.f32 %v5765, 0.5
        %v5895 = vmul.f32 %v5767, 0.5
        %v5896 = vmul.f32 %v5878, 0.5
        %v5897 = vmul.f32 %v5880, 0.5
        %v5898 = vtanh.pop %v5882
        %v5899 = vtanh.pop %v5883
        %v5900 = vtanh.pop %v5884
        %v5901 = vtanh.pop %v5885
        %v5902 = vtanh.pop %v5886
        %v5903 = vtanh.pop %v5887
        %v5904 = vtanh.pop %v5888
        %v5905 = vtanh.pop %v5889
        %v5906 = vtanh.pop %v5890
        %v5907 = vtanh.pop %v5891
        %v5908 = vtanh.pop %v5892
        %v5909 = vtanh.pop %v5893
        %v5910 = vtanh.pop %v5894
        %v5911 = vtanh.pop %v5895
        %v5912 = vtanh.pop %v5896
        %v5913 = vtanh.pop %v5897
        %v5914 = vmul.f32 %v5898, 0.5
        %v5915 = vmul.f32 %v5899, 0.5
        %v5916 = vmul.f32 %v5900, 0.5
        %v5917 = vmul.f32 %v5901, 0.5
        %v5918 = vmul.f32 %v5902, 0.5
        %v5919 = vmul.f32 %v5903, 0.5
        %v5920 = vmul.f32 %v5904, 0.5
        %v5921 = vmul.f32 %v5905, 0.5
        %v5922 = vmul.f32 %v5906, 0.5
        %v5923 = vmul.f32 %v5907, 0.5
        %v5924 = vmul.f32 %v5908, 0.5
        %v5925 = vmul.f32 %v5909, 0.5
        %v5926 = vmul.f32 %v5910, 0.5
        %v5927 = vmul.f32 %v5911, 0.5
        %v5928 = vmul.f32 %v5912, 0.5
        %v5929 = vmul.f32 %v5913, 0.5
        %v5930 = vadd.f32 %v5914, 0.5
        %v5931 = vadd.f32 %v5915, 0.5
        %v5932 = vadd.f32 %v5916, 0.5
        %v5933 = vadd.f32 %v5917, 0.5
        %v5934 = vadd.f32 %v5918, 0.5
        %v5935 = vadd.f32 %v5919, 0.5
        %v5936 = vadd.f32 %v5920, 0.5
        %v5937 = vadd.f32 %v5921, 0.5
        %v5938 = vadd.f32 %v5922, 0.5
        %v5939 = vadd.f32 %v5923, 0.5
        %v5940 = vadd.f32 %v5924, 0.5
        %v5941 = vadd.f32 %v5925, 0.5
        %v5942 = vadd.f32 %v5926, 0.5
        %v5943 = vadd.f32 %v5927, 0.5
        %v5944 = vadd.f32 %v5928, 0.5
        %v5945 = vadd.f32 %v5929, 0.5
        %v5946 = vmul.f32 %v5723, %v5930
        %v5947 = vmul.f32 %v5725, %v5931
        %v5948 = vmul.f32 %v5836, %v5932
        %v5949 = vmul.f32 %v5838, %v5933
        %v5950 = vmul.f32 %v5729, %v5934
        %v5951 = vmul.f32 %v5731, %v5935
        %v5952 = vmul.f32 %v5842, %v5936
        %v5953 = vmul.f32 %v5844, %v5937
        %v5954 = vmul.f32 %v5735, %v5938
        %v5955 = vmul.f32 %v5737, %v5939
        %v5956 = vmul.f32 %v5848, %v5940
        %v5957 = vmul.f32 %v5850, %v5941
        %v5958 = vmul.f32 %v5741, %v5942
        %v5959 = vmul.f32 %v5743, %v5943
        %v5960 = vmul.f32 %v5854, %v5944
        %v5961 = vmul.f32 %v5856, %v5945
        %v5962 = vmul.f32 %v5946, 0.70710677
        %v5963 = vmul.f32 %v5947, 0.70710677
        %v5964 = vmul.f32 %v5948, 0.70710677
        %v5965 = vmul.f32 %v5949, 0.70710677
        %v5966 = vmul.f32 %v5950, 0.70710677
        %v5967 = vmul.f32 %v5951, 0.70710677
        %v5968 = vmul.f32 %v5952, 0.70710677
        %v5969 = vmul.f32 %v5953, 0.70710677
        %v5970 = vmul.f32 %v5954, 0.70710677
        %v5971 = vmul.f32 %v5955, 0.70710677
        %v5972 = vmul.f32 %v5956, 0.70710677
        %v5973 = vmul.f32 %v5957, 0.70710677
        %v5974 = vmul.f32 %v5958, 0.70710677
        %v5975 = vmul.f32 %v5959, 0.70710677
        %v5976 = vmul.f32 %v5960, 0.70710677
        %v5977 = vmul.f32 %v5961, 0.70710677
        %5978 = vmatprep.subr.mxu0 %v5947
        %5979 = vmatpush1.msra.mxu0 %v5946
        %5980 = vmatprep.subr.mxu0 %v5951
        %5981 = vmatpush1.msra.mxu0 %v5950
        %5982 = vmatprep.subr.mxu0 %v5955
        %5983 = vmatpush1.msra.mxu0 %v5954
        %5984 = vmatprep.subr.mxu0 %v5959
        %5985 = vmatpush1.msra.mxu0 %v5958
        %5986 = vmatprep.subr.mxu0 0.0
        %5987 = vmatpush1.msra.mxu0 0.0
        %5988 = vmatprep.subr.mxu0 0.0
        %5989 = vmatpush1.msra.mxu0 0.0
        %5990 = vmatprep.subr.mxu0 0.0
        %5991 = vmatpush1.msra.mxu0 0.0
        %5992 = vmatprep.subr.mxu0 0.0
        %5993 = vmatpush1.msra.mxu0 0.0
        %5994 = vmatprep.subr.mxu0 0.0
        %5995 = vmatpush1.msra.mxu0 0.0
        %5996 = vmatprep.subr.mxu0 0.0
        %5997 = vmatpush1.msra.mxu0 0.0
        %5998 = vmatprep.subr.mxu0 0.0
        %5999 = vmatpush1.msra.mxu0 0.0
        %6000 = vmatprep.subr.mxu0 0.0
        %6001 = vmatpush1.msra.mxu0 0.0
        %6002 = vmatprep.subr.mxu0 0.0
        %6003 = vmatpush1.msra.mxu0 0.0
        %6004 = vmatprep.subr.mxu0 0.0
        %6005 = vmatpush1.msra.mxu0 0.0
        %6006 = vmatprep.subr.mxu0 0.0
        %6007 = vmatpush1.msra.mxu0 0.0
        %6008 = vmatprep.subr.mxu0 0.0
        %6009 = vmatpush1.msra.mxu0 0.0
        %6010 = vmatprep.subr.mxu0 0.0
        %6011 = vmatpush1.msra.mxu0 0.0
        %6012 = vmatprep.subr.mxu0 0.0
        %6013 = vmatpush1.msra.mxu0 0.0
        %6014 = vmatprep.subr.mxu0 0.0
        %6015 = vmatpush1.msra.mxu0 0.0
        %6016 = vmatprep.subr.mxu0 0.0
        %6017 = vmatpush1.msra.mxu0 0.0
        %6018 = vmatprep.subr.mxu0 0.0
        %6019 = vmatpush1.msra.mxu0 0.0
        %6020 = vmatprep.subr.mxu0 0.0
        %6021 = vmatpush1.msra.mxu0 0.0
        %6022 = vmatprep.subr.mxu0 0.0
        %6023 = vmatpush1.msra.mxu0 0.0
        %6024 = vmatprep.subr.mxu0 0.0
        %6025 = vmatpush1.msra.mxu0 0.0
        %6026 = vmatprep.subr.mxu0 0.0
        %6027 = vmatpush1.msra.mxu0 0.0
        %6028 = vmatprep.subr.mxu0 0.0
        %6029 = vmatpush1.msra.mxu0 0.0
        %6030 = vmatprep.subr.mxu0 0.0
        %6031 = vmatpush1.msra.mxu0 0.0
        %6032 = vmatprep.subr.mxu0 0.0
        %6033 = vmatpush1.msra.mxu0 0.0
        %6034 = vmatprep.subr.mxu0 0.0
        %6035 = vmatpush1.msra.mxu0 0.0
        %6036 = vmatprep.subr.mxu0 0.0
        %6037 = vmatpush1.msra.mxu0 0.0
        %6038 = vmatprep.subr.mxu0 0.0
        %6039 = vmatpush1.msra.mxu0 0.0
        %6040 = vmatprep.subr.mxu0 0.0
        %6041 = vmatpush1.msra.mxu0 0.0
        %6042 = vmatprep.mubr.f32.mxu0 0.0
        %6043 = vmatmul.mubr.f32.gmra.mrb[0].mxu0 %v727
        %v6044 = vpop.f32.mrb[0].mxu0
        %v6045 = vadd.f32 0.0, %v6044
        %v6046 = vpop.f32.mrb[0].mxu0
        %v6047 = vadd.f32 0.0, %v6046
        %6048 = vmatprep.mubr.f32.mxu0 0.0
        %6049 = vmatmul.mubr.f32.gmra.mrb[0].mxu0 %v730
        %v6050 = vpop.f32.mrb[0].mxu0
        %v6051 = vadd.f32 0.0, %v6050
        %v6052 = vpop.f32.mrb[0].mxu0
        %v6053 = vadd.f32 0.0, %v6052
        %6054 = vmatprep.mubr.f32.mxu0 0.0
        %6055 = vmatmul.mubr.f32.gmra.mrb[0].mxu0 %v733
        %v6056 = vpop.f32.mrb[0].mxu0
        %v6057 = vadd.f32 0.0, %v6056
        %v6058 = vpop.f32.mrb[0].mxu0
        %v6059 = vadd.f32 0.0, %v6058
        %6060 = vmatprep.mubr.f32.mxu0 0.0
        %6061 = vmatmul.mubr.f32.gmra.mrb[0].mxu0 %v736
        %v6062 = vpop.f32.mrb[0].mxu0
        %v6063 = vadd.f32 0.0, %v6062
        %v6064 = vpop.f32.mrb[0].mxu0
        %v6065 = vadd.f32 0.0, %v6064
        %6066 = vmatprep.mubr.f32.mxu0 0.0
        %6067 = vmatmul.mubr.f32.gmra.mrb[0].mxu0 %v739
        %v6068 = vpop.f32.mrb[0].mxu0
        %v6069 = vadd.f32 0.0, %v6068
        %v6070 = vpop.f32.mrb[0].mxu0
        %v6071 = vadd.f32 0.0, %v6070
        %6072 = vmatprep.mubr.f32.mxu0 0.0
        %6073 = vmatmul.mubr.f32.gmra.mrb[0].mxu0 %v742
        %v6074 = vpop.f32.mrb[0].mxu0
        %v6075 = vadd.f32 0.0, %v6074
        %v6076 = vpop.f32.mrb[0].mxu0
        %v6077 = vadd.f32 0.0, %v6076
        %6078 = vmatprep.mubr.f32.mxu0 0.0
        %6079 = vmatmul.mubr.f32.gmra.mrb[0].mxu0 %v745
        %v6080 = vpop.f32.mrb[0].mxu0
        %v6081 = vadd.f32 0.0, %v6080
        %v6082 = vpop.f32.mrb[0].mxu0
        %v6083 = vadd.f32 0.0, %v6082
        %6084 = vmatprep.mubr.f32.mxu0 0.0
        %6085 = vmatmul.mubr.f32.gmra.mrb[0].mxu0 %v748
        %v6086 = vpop.f32.mrb[0].mxu0
        %v6087 = vadd.f32 0.0, %v6086
        %v6088 = vpop.f32.mrb[0].mxu0
        %v6089 = vadd.f32 0.0, %v6088
        %6090 = vdwg.mxu0
        %6091 = vmatprep.subr.mxu0 %v5949
        %6092 = vmatpush1.msra.mxu0 %v5948
        %6093 = vmatprep.subr.mxu0 %v5953
        %6094 = vmatpush1.msra.mxu0 %v5952
        %6095 = vmatprep.subr.mxu0 %v5957
        %6096 = vmatpush1.msra.mxu0 %v5956
        %6097 = vmatprep.subr.mxu0 %v5961
        %6098 = vmatpush1.msra.mxu0 %v5960
        %6099 = vmatprep.subr.mxu0 0.0
        %6100 = vmatpush1.msra.mxu0 0.0
        %6101 = vmatprep.subr.mxu0 0.0
        %6102 = vmatpush1.msra.mxu0 0.0
        %6103 = vmatprep.subr.mxu0 0.0
        %6104 = vmatpush1.msra.mxu0 0.0
        %6105 = vmatprep.subr.mxu0 0.0
        %6106 = vmatpush1.msra.mxu0 0.0
        %6107 = vmatprep.subr.mxu0 0.0
        %6108 = vmatpush1.msra.mxu0 0.0
        %6109 = vmatprep.subr.mxu0 0.0
        %6110 = vmatpush1.msra.mxu0 0.0
        %6111 = vmatprep.subr.mxu0 0.0
        %6112 = vmatpush1.msra.mxu0 0.0
        %6113 = vmatprep.subr.mxu0 0.0
        %6114 = vmatpush1.msra.mxu0 0.0
        %6115 = vmatprep.subr.mxu0 0.0
        %6116 = vmatpush1.msra.mxu0 0.0
        %6117 = vmatprep.subr.mxu0 0.0
        %6118 = vmatpush1.msra.mxu0 0.0
        %6119 = vmatprep.subr.mxu0 0.0
        %6120 = vmatpush1.msra.mxu0 0.0
        %6121 = vmatprep.subr.mxu0 0.0
        %6122 = vmatpush1.msra.mxu0 0.0
        %6123 = vmatprep.subr.mxu0 0.0
        %6124 = vmatpush1.msra.mxu0 0.0
        %6125 = vmatprep.subr.mxu0 0.0
        %6126 = vmatpush1.msra.mxu0 0.0
        %6127 = vmatprep.subr.mxu0 0.0
        %6128 = vmatpush1.msra.mxu0 0.0
        %6129 = vmatprep.subr.mxu0 0.0
        %6130 = vmatpush1.msra.mxu0 0.0
        %6131 = vmatprep.subr.mxu0 0.0
        %6132 = vmatpush1.msra.mxu0 0.0
        %6133 = vmatprep.subr.mxu0 0.0
        %6134 = vmatpush1.msra.mxu0 0.0
        %6135 = vmatprep.subr.mxu0 0.0
        %6136 = vmatpush1.msra.mxu0 0.0
        %6137 = vmatprep.subr.mxu0 0.0
        %6138 = vmatpush1.msra.mxu0 0.0
        %6139 = vmatprep.subr.mxu0 0.0
        %6140 = vmatpush1.msra.mxu0 0.0
        %6141 = vmatprep.subr.mxu0 0.0
        %6142 = vmatpush1.msra.mxu0 0.0
        %6143 = vmatprep.subr.mxu0 0.0
        %6144 = vmatpush1.msra.mxu0 0.0
        %6145 = vmatprep.subr.mxu0 0.0
        %6146 = vmatpush1.msra.mxu0 0.0
        %6147 = vmatprep.subr.mxu0 0.0
        %6148 = vmatpush1.msra.mxu0 0.0
        %6149 = vmatprep.subr.mxu0 0.0
        %6150 = vmatpush1.msra.mxu0 0.0
        %6151 = vmatprep.subr.mxu0 0.0
        %6152 = vmatpush1.msra.mxu0 0.0
        %6153 = vmatprep.subr.mxu0 0.0
        %6154 = vmatpush1.msra.mxu0 0.0
        %6155 = vmatprep.mubr.f32.mxu0 0.0
        %6156 = vmatmul.mubr.f32.gmra.mrb[0].mxu0 %v727
        %v6157 = vpop.f32.mrb[0].mxu0
        %v6158 = vadd.f32 0.0, %v6157
        %v6159 = vpop.f32.mrb[0].mxu0
        %v6160 = vadd.f32 0.0, %v6159
        %6161 = vmatprep.mubr.f32.mxu0 0.0
        %6162 = vmatmul.mubr.f32.gmra.mrb[0].mxu0 %v730
        %v6163 = vpop.f32.mrb[0].mxu0
        %v6164 = vadd.f32 0.0, %v6163
        %v6165 = vpop.f32.mrb[0].mxu0
        %v6166 = vadd.f32 0.0, %v6165
        %6167 = vmatprep.mubr.f32.mxu0 0.0
        %6168 = vmatmul.mubr.f32.gmra.mrb[0].mxu0 %v733
        %v6169 = vpop.f32.mrb[0].mxu0
        %v6170 = vadd.f32 0.0, %v6169
        %v6171 = vpop.f32.mrb[0].mxu0
        %v6172 = vadd.f32 0.0, %v6171
        %6173 = vmatprep.mubr.f32.mxu0 0.0
        %6174 = vmatmul.mubr.f32.gmra.mrb[0].mxu0 %v736
        %v6175 = vpop.f32.mrb[0].mxu0
        %v6176 = vadd.f32 0.0, %v6175
        %v6177 = vpop.f32.mrb[0].mxu0
        %v6178 = vadd.f32 0.0, %v6177
        %6179 = vmatprep.mubr.f32.mxu0 0.0
        %6180 = vmatmul.mubr.f32.gmra.mrb[0].mxu0 %v739
        %v6181 = vpop.f32.mrb[0].mxu0
        %v6182 = vadd.f32 0.0, %v6181
        %v6183 = vpop.f32.mrb[0].mxu0
        %v6184 = vadd.f32 0.0, %v6183
        %6185 = vmatprep.mubr.f32.mxu0 0.0
        %6186 = vmatmul.mubr.f32.gmra.mrb[0].mxu0 %v742
        %v6187 = vpop.f32.mrb[0].mxu0
        %v6188 = vadd.f32 0.0, %v6187
        %v6189 = vpop.f32.mrb[0].mxu0
        %v6190 = vadd.f32 0.0, %v6189
        %6191 = vmatprep.mubr.f32.mxu0 0.0
        %6192 = vmatmul.mubr.f32.gmra.mrb[0].mxu0 %v745
        %v6193 = vpop.f32.mrb[0].mxu0
        %v6194 = vadd.f32 0.0, %v6193
        %v6195 = vpop.f32.mrb[0].mxu0
        %v6196 = vadd.f32 0.0, %v6195
        %6197 = vmatprep.mubr.f32.mxu0 0.0
        %6198 = vmatmul.mubr.f32.gmra.mrb[0].mxu0 %v748
        %v6199 = vpop.f32.mrb[0].mxu0
        %v6200 = vadd.f32 0.0, %v6199
        %v6201 = vpop.f32.mrb[0].mxu0
        %v6202 = vadd.f32 0.0, %v6201
        %6203 = vdwg.mxu0
        %v6204 = vmul.f32 %v6069, 0.5
        %v6205 = vmul.f32 %v6071, 0.5
        %v6206 = vmul.f32 %v6182, 0.5
        %v6207 = vmul.f32 %v6184, 0.5
        %v6208 = vmul.f32 %v6075, 0.5
        %v6209 = vmul.f32 %v6077, 0.5
        %v6210 = vmul.f32 %v6188, 0.5
        %v6211 = vmul.f32 %v6190, 0.5
        %v6212 = vmul.f32 %v6081, 0.5
        %v6213 = vmul.f32 %v6083, 0.5
        %v6214 = vmul.f32 %v6194, 0.5
        %v6215 = vmul.f32 %v6196, 0.5
        %v6216 = vmul.f32 %v6087, 0.5
        %v6217 = vmul.f32 %v6089, 0.5
        %v6218 = vmul.f32 %v6200, 0.5
        %v6219 = vmul.f32 %v6202, 0.5
        %v6220 = vtanh.pop %v6204
        %v6221 = vtanh.pop %v6205
        %v6222 = vtanh.pop %v6206
        %v6223 = vtanh.pop %v6207
        %v6224 = vtanh.pop %v6208
        %v6225 = vtanh.pop %v6209
        %v6226 = vtanh.pop %v6210
        %v6227 = vtanh.pop %v6211
        %v6228 = vtanh.pop %v6212
        %v6229 = vtanh.pop %v6213
        %v6230 = vtanh.pop %v6214
        %v6231 = vtanh.pop %v6215
        %v6232 = vtanh.pop %v6216
        %v6233 = vtanh.pop %v6217
        %v6234 = vtanh.pop %v6218
        %v6235 = vtanh.pop %v6219
        %v6236 = vmul.f32 %v6220, 0.5
        %v6237 = vmul.f32 %v6221, 0.5
        %v6238 = vmul.f32 %v6222, 0.5
        %v6239 = vmul.f32 %v6223, 0.5
        %v6240 = vmul.f32 %v6224, 0.5
        %v6241 = vmul.f32 %v6225, 0.5
        %v6242 = vmul.f32 %v6226, 0.5
        %v6243 = vmul.f32 %v6227, 0.5
        %v6244 = vmul.f32 %v6228, 0.5
        %v6245 = vmul.f32 %v6229, 0.5
        %v6246 = vmul.f32 %v6230, 0.5
        %v6247 = vmul.f32 %v6231, 0.5
        %v6248 = vmul.f32 %v6232, 0.5
        %v6249 = vmul.f32 %v6233, 0.5
        %v6250 = vmul.f32 %v6234, 0.5
        %v6251 = vmul.f32 %v6235, 0.5
        %v6252 = vadd.f32 %v6236, 0.5
        %v6253 = vadd.f32 %v6237, 0.5
        %v6254 = vadd.f32 %v6238, 0.5
        %v6255 = vadd.f32 %v6239, 0.5
        %v6256 = vadd.f32 %v6240, 0.5
        %v6257 = vadd.f32 %v6241, 0.5
        %v6258 = vadd.f32 %v6242, 0.5
        %v6259 = vadd.f32 %v6243, 0.5
        %v6260 = vadd.f32 %v6244, 0.5
        %v6261 = vadd.f32 %v6245, 0.5
        %v6262 = vadd.f32 %v6246, 0.5
        %v6263 = vadd.f32 %v6247, 0.5
        %v6264 = vadd.f32 %v6248, 0.5
        %v6265 = vadd.f32 %v6249, 0.5
        %v6266 = vadd.f32 %v6250, 0.5
        %v6267 = vadd.f32 %v6251, 0.5
        %v6268 = vmul.f32 %v6045, %v6252
        %v6269 = vmul.f32 %v6047, %v6253
        %v6270 = vmul.f32 %v6158, %v6254
        %v6271 = vmul.f32 %v6160, %v6255
        %v6272 = vmul.f32 %v6051, %v6256
        %v6273 = vmul.f32 %v6053, %v6257
        %v6274 = vmul.f32 %v6164, %v6258
        %v6275 = vmul.f32 %v6166, %v6259
        %v6276 = vmul.f32 %v6057, %v6260
        %v6277 = vmul.f32 %v6059, %v6261
        %v6278 = vmul.f32 %v6170, %v6262
        %v6279 = vmul.f32 %v6172, %v6263
        %v6280 = vmul.f32 %v6063, %v6264
        %v6281 = vmul.f32 %v6065, %v6265
        %v6282 = vmul.f32 %v6176, %v6266
        %v6283 = vmul.f32 %v6178, %v6267
        %v6284 = vadd.f32 %v5962, %v6268
        %v6285 = vadd.f32 %v5963, %v6269
        %v6286 = vadd.f32 %v5964, %v6270
        %v6287 = vadd.f32 %v5965, %v6271
        %v6288 = vadd.f32 %v5966, %v6272
        %v6289 = vadd.f32 %v5967, %v6273
        %v6290 = vadd.f32 %v5968, %v6274
        %v6291 = vadd.f32 %v5969, %v6275
        %v6292 = vadd.f32 %v5970, %v6276
        %v6293 = vadd.f32 %v5971, %v6277
        %v6294 = vadd.f32 %v5972, %v6278
        %v6295 = vadd.f32 %v5973, %v6279
        %v6296 = vadd.f32 %v5974, %v6280
        %v6297 = vadd.f32 %v5975, %v6281
        %v6298 = vadd.f32 %v5976, %v6282
        %v6299 = vadd.f32 %v5977, %v6283
        %v6300 = vmul.f32 %v6284, 0.70710677
        %v6301 = vmul.f32 %v6285, 0.70710677
        %v6302 = vmul.f32 %v6286, 0.70710677
        %v6303 = vmul.f32 %v6287, 0.70710677
        %v6304 = vmul.f32 %v6288, 0.70710677
        %v6305 = vmul.f32 %v6289, 0.70710677
        %v6306 = vmul.f32 %v6290, 0.70710677
        %v6307 = vmul.f32 %v6291, 0.70710677
        %v6308 = vmul.f32 %v6292, 0.70710677
        %v6309 = vmul.f32 %v6293, 0.70710677
        %v6310 = vmul.f32 %v6294, 0.70710677
        %v6311 = vmul.f32 %v6295, 0.70710677
        %v6312 = vmul.f32 %v6296, 0.70710677
        %v6313 = vmul.f32 %v6297, 0.70710677
        %v6314 = vmul.f32 %v6298, 0.70710677
        %v6315 = vmul.f32 %v6299, 0.70710677
        %s6316 = scalar_lea.vmem %s4, 384
        %v6317 = vld [vmem:[%s6316] sm:$0xff]
        %v6318 = vld [vmem:[%s6316 + $0x8] sm:$0xff]
        %v6319 = vld [vmem:[%s6316 + $0x10] sm:$0xff]
        %v6320 = vld [vmem:[%s6316 + $0x18] sm:$0xff]
        %v6321 = vld [vmem:[%s6316 + $0x20] sm:$0xff]
        %v6322 = vld [vmem:[%s6316 + $0x28] sm:$0xff]
        %v6323 = vld [vmem:[%s6316 + $0x30] sm:$0xff]
        %v6324 = vld [vmem:[%s6316 + $0x38] sm:$0xff]
        %v6326 = vsel %vm725, %v6317, 0
        %v6329 = vsel %vm725, %v6318, 0
        %v6332 = vsel %vm725, %v6319, 0
        %v6335 = vsel %vm725, %v6320, 0
        %v6338 = vsel %vm725, %v6321, 0
        %v6341 = vsel %vm725, %v6322, 0
        %v6344 = vsel %vm725, %v6323, 0
        %v6347 = vsel %vm725, %v6324, 0
        %6349 = vmatprep.subr.mxu0 %v6285
        %6350 = vmatpush1.msra.mxu0 %v6284
        %6351 = vmatprep.subr.mxu0 %v6289
        %6352 = vmatpush1.msra.mxu0 %v6288
        %6353 = vmatprep.subr.mxu0 %v6293
        %6354 = vmatpush1.msra.mxu0 %v6292
        %6355 = vmatprep.subr.mxu0 %v6297
        %6356 = vmatpush1.msra.mxu0 %v6296
        %6357 = vmatprep.subr.mxu0 0.0
        %6358 = vmatpush1.msra.mxu0 0.0
        %6359 = vmatprep.subr.mxu0 0.0
        %6360 = vmatpush1.msra.mxu0 0.0
        %6361 = vmatprep.subr.mxu0 0.0
        %6362 = vmatpush1.msra.mxu0 0.0
        %6363 = vmatprep.subr.mxu0 0.0
        %6364 = vmatpush1.msra.mxu0 0.0
        %6365 = vmatprep.subr.mxu0 0.0
        %6366 = vmatpush1.msra.mxu0 0.0
        %6367 = vmatprep.subr.mxu0 0.0
        %6368 = vmatpush1.msra.mxu0 0.0
        %6369 = vmatprep.subr.mxu0 0.0
        %6370 = vmatpush1.msra.mxu0 0.0
        %6371 = vmatprep.subr.mxu0 0.0
        %6372 = vmatpush1.msra.mxu0 0.0
        %6373 = vmatprep.subr.mxu0 0.0
        %6374 = vmatpush1.msra.mxu0 0.0
        %6375 = vmatprep.subr.mxu0 0.0
        %6376 = vmatpush1.msra.mxu0 0.0
        %6377 = vmatprep.subr.mxu0 0.0
        %6378 = vmatpush1.msra.mxu0 0.0
        %6379 = vmatprep.subr.mxu0 0.0
        %6380 = vmatpush1.msra.mxu0 0.0
        %6381 = vmatprep.subr.mxu0 0.0
        %6382 = vmatpush1.msra.mxu0 0.0
        %6383 = vmatprep.subr.mxu0 0.0
        %6384 = vmatpush1.msra.mxu0 0.0
        %6385 = vmatprep.subr.mxu0 0.0
        %6386 = vmatpush1.msra.mxu0 0.0
        %6387 = vmatprep.subr.mxu0 0.0
        %6388 = vmatpush1.msra.mxu0 0.0
        %6389 = vmatprep.subr.mxu0 0.0
        %6390 = vmatpush1.msra.mxu0 0.0
        %6391 = vmatprep.subr.mxu0 0.0
        %6392 = vmatpush1.msra.mxu0 0.0
        %6393 = vmatprep.subr.mxu0 0.0
        %6394 = vmatpush1.msra.mxu0 0.0
        %6395 = vmatprep.subr.mxu0 0.0
        %6396 = vmatpush1.msra.mxu0 0.0
        %6397 = vmatprep.subr.mxu0 0.0
        %6398 = vmatpush1.msra.mxu0 0.0
        %6399 = vmatprep.subr.mxu0 0.0
        %6400 = vmatpush1.msra.mxu0 0.0
        %6401 = vmatprep.subr.mxu0 0.0
        %6402 = vmatpush1.msra.mxu0 0.0
        %6403 = vmatprep.subr.mxu0 0.0
        %6404 = vmatpush1.msra.mxu0 0.0
        %6405 = vmatprep.subr.mxu0 0.0
        %6406 = vmatpush1.msra.mxu0 0.0
        %6407 = vmatprep.subr.mxu0 0.0
        %6408 = vmatpush1.msra.mxu0 0.0
        %6409 = vmatprep.subr.mxu0 0.0
        %6410 = vmatpush1.msra.mxu0 0.0
        %6411 = vmatprep.subr.mxu0 0.0
        %6412 = vmatpush1.msra.mxu0 0.0
        %6413 = vmatprep.mubr.f32.mxu0 0.0
        %6414 = vmatmul.mubr.f32.gmra.mrb[0].mxu0 %v6326
        %v6415 = vpop.f32.mrb[0].mxu0
        %v6416 = vadd.f32 0.0, %v6415
        %v6417 = vpop.f32.mrb[0].mxu0
        %v6418 = vadd.f32 0.0, %v6417
        %6419 = vmatprep.mubr.f32.mxu0 0.0
        %6420 = vmatmul.mubr.f32.gmra.mrb[0].mxu0 %v6329
        %v6421 = vpop.f32.mrb[0].mxu0
        %v6422 = vadd.f32 0.0, %v6421
        %v6423 = vpop.f32.mrb[0].mxu0
        %v6424 = vadd.f32 0.0, %v6423
        %6425 = vmatprep.mubr.f32.mxu0 0.0
        %6426 = vmatmul.mubr.f32.gmra.mrb[0].mxu0 %v6332
        %v6427 = vpop.f32.mrb[0].mxu0
        %v6428 = vadd.f32 0.0, %v6427
        %v6429 = vpop.f32.mrb[0].mxu0
        %v6430 = vadd.f32 0.0, %v6429
        %6431 = vmatprep.mubr.f32.mxu0 0.0
        %6432 = vmatmul.mubr.f32.gmra.mrb[0].mxu0 %v6335
        %v6433 = vpop.f32.mrb[0].mxu0
        %v6434 = vadd.f32 0.0, %v6433
        %v6435 = vpop.f32.mrb[0].mxu0
        %v6436 = vadd.f32 0.0, %v6435
        %6437 = vmatprep.mubr.f32.mxu0 0.0
        %6438 = vmatmul.mubr.f32.gmra.mrb[0].mxu0 %v6338
        %v6439 = vpop.f32.mrb[0].mxu0
        %v6440 = vadd.f32 0.0, %v6439
        %v6441 = vpop.f32.mrb[0].mxu0
        %v6442 = vadd.f32 0.0, %v6441
        %6443 = vmatprep.mubr.f32.mxu0 0.0
        %6444 = vmatmul.mubr.f32.gmra.mrb[0].mxu0 %v6341
        %v6445 = vpop.f32.mrb[0].mxu0
        %v6446 = vadd.f32 0.0, %v6445
        %v6447 = vpop.f32.mrb[0].mxu0
        %v6448 = vadd.f32 0.0, %v6447
        %6449 = vmatprep.mubr.f32.mxu0 0.0
        %6450 = vmatmul.mubr.f32.gmra.mrb[0].mxu0 %v6344
        %v6451 = vpop.f32.mrb[0].mxu0
        %v6452 = vadd.f32 0.0, %v6451
        %v6453 = vpop.f32.mrb[0].mxu0
        %v6454 = vadd.f32 0.0, %v6453
        %6455 = vmatprep.mubr.f32.mxu0 0.0
        %6456 = vmatmul.mubr.f32.gmra.mrb[0].mxu0 %v6347
        %v6457 = vpop.f32.mrb[0].mxu0
        %v6458 = vadd.f32 0.0, %v6457
        %v6459 = vpop.f32.mrb[0].mxu0
        %v6460 = vadd.f32 0.0, %v6459
        %6461 = vdwg.mxu0
        %6462 = vmatprep.subr.mxu0 %v6287
        %6463 = vmatpush1.msra.mxu0 %v6286
        %6464 = vmatprep.subr.mxu0 %v6291
        %6465 = vmatpush1.msra.mxu0 %v6290
        %6466 = vmatprep.subr.mxu0 %v6295
        %6467 = vmatpush1.msra.mxu0 %v6294
        %6468 = vmatprep.subr.mxu0 %v6299
        %6469 = vmatpush1.msra.mxu0 %v6298
        %6470 = vmatprep.subr.mxu0 0.0
        %6471 = vmatpush1.msra.mxu0 0.0
        %6472 = vmatprep.subr.mxu0 0.0
        %6473 = vmatpush1.msra.mxu0 0.0
        %6474 = vmatprep.subr.mxu0 0.0
        %6475 = vmatpush1.msra.mxu0 0.0
        %6476 = vmatprep.subr.mxu0 0.0
        %6477 = vmatpush1.msra.mxu0 0.0
        %6478 = vmatprep.subr.mxu0 0.0
        %6479 = vmatpush1.msra.mxu0 0.0
        %6480 = vmatprep.subr.mxu0 0.0
        %6481 = vmatpush1.msra.mxu0 0.0
        %6482 = vmatprep.subr.mxu0 0.0
        %6483 = vmatpush1.msra.mxu0 0.0
        %6484 = vmatprep.subr.mxu0 0.0
        %6485 = vmatpush1.msra.mxu0 0.0
        %6486 = vmatprep.subr.mxu0 0.0
        %6487 = vmatpush1.msra.mxu0 0.0
        %6488 = vmatprep.subr.mxu0 0.0
        %6489 = vmatpush1.msra.mxu0 0.0
        %6490 = vmatprep.subr.mxu0 0.0
        %6491 = vmatpush1.msra.mxu0 0.0
        %6492 = vmatprep.subr.mxu0 0.0
        %6493 = vmatpush1.msra.mxu0 0.0
        %6494 = vmatprep.subr.mxu0 0.0
        %6495 = vmatpush1.msra.mxu0 0.0
        %6496 = vmatprep.subr.mxu0 0.0
        %6497 = vmatpush1.msra.mxu0 0.0
        %6498 = vmatprep.subr.mxu0 0.0
        %6499 = vmatpush1.msra.mxu0 0.0
        %6500 = vmatprep.subr.mxu0 0.0
        %6501 = vmatpush1.msra.mxu0 0.0
        %6502 = vmatprep.subr.mxu0 0.0
        %6503 = vmatpush1.msra.mxu0 0.0
        %6504 = vmatprep.subr.mxu0 0.0
        %6505 = vmatpush1.msra.mxu0 0.0
        %6506 = vmatprep.subr.mxu0 0.0
        %6507 = vmatpush1.msra.mxu0 0.0
        %6508 = vmatprep.subr.mxu0 0.0
        %6509 = vmatpush1.msra.mxu0 0.0
        %6510 = vmatprep.subr.mxu0 0.0
        %6511 = vmatpush1.msra.mxu0 0.0
        %6512 = vmatprep.subr.mxu0 0.0
        %6513 = vmatpush1.msra.mxu0 0.0
        %6514 = vmatprep.subr.mxu0 0.0
        %6515 = vmatpush1.msra.mxu0 0.0
        %6516 = vmatprep.subr.mxu0 0.0
        %6517 = vmatpush1.msra.mxu0 0.0
        %6518 = vmatprep.subr.mxu0 0.0
        %6519 = vmatpush1.msra.mxu0 0.0
        %6520 = vmatprep.subr.mxu0 0.0
        %6521 = vmatpush1.msra.mxu0 0.0
        %6522 = vmatprep.subr.mxu0 0.0
        %6523 = vmatpush1.msra.mxu0 0.0
        %6524 = vmatprep.subr.mxu0 0.0
        %6525 = vmatpush1.msra.mxu0 0.0
        %6526 = vmatprep.mubr.f32.mxu0 0.0
        %6527 = vmatmul.mubr.f32.gmra.mrb[0].mxu0 %v6326
        %v6528 = vpop.f32.mrb[0].mxu0
        %v6529 = vadd.f32 0.0, %v6528
        %v6530 = vpop.f32.mrb[0].mxu0
        %v6531 = vadd.f32 0.0, %v6530
        %6532 = vmatprep.mubr.f32.mxu0 0.0
        %6533 = vmatmul.mubr.f32.gmra.mrb[0].mxu0 %v6329
        %v6534 = vpop.f32.mrb[0].mxu0
        %v6535 = vadd.f32 0.0, %v6534
        %v6536 = vpop.f32.mrb[0].mxu0
        %v6537 = vadd.f32 0.0, %v6536
        %6538 = vmatprep.mubr.f32.mxu0 0.0
        %6539 = vmatmul.mubr.f32.gmra.mrb[0].mxu0 %v6332
        %v6540 = vpop.f32.mrb[0].mxu0
        %v6541 = vadd.f32 0.0, %v6540
        %v6542 = vpop.f32.mrb[0].mxu0
        %v6543 = vadd.f32 0.0, %v6542
        %6544 = vmatprep.mubr.f32.mxu0 0.0
        %6545 = vmatmul.mubr.f32.gmra.mrb[0].mxu0 %v6335
        %v6546 = vpop.f32.mrb[0].mxu0
        %v6547 = vadd.f32 0.0, %v6546
        %v6548 = vpop.f32.mrb[0].mxu0
        %v6549 = vadd.f32 0.0, %v6548
        %6550 = vmatprep.mubr.f32.mxu0 0.0
        %6551 = vmatmul.mubr.f32.gmra.mrb[0].mxu0 %v6338
        %v6552 = vpop.f32.mrb[0].mxu0
        %v6553 = vadd.f32 0.0, %v6552
        %v6554 = vpop.f32.mrb[0].mxu0
        %v6555 = vadd.f32 0.0, %v6554
        %6556 = vmatprep.mubr.f32.mxu0 0.0
        %6557 = vmatmul.mubr.f32.gmra.mrb[0].mxu0 %v6341
        %v6558 = vpop.f32.mrb[0].mxu0
        %v6559 = vadd.f32 0.0, %v6558
        %v6560 = vpop.f32.mrb[0].mxu0
        %v6561 = vadd.f32 0.0, %v6560
        %6562 = vmatprep.mubr.f32.mxu0 0.0
        %6563 = vmatmul.mubr.f32.gmra.mrb[0].mxu0 %v6344
        %v6564 = vpop.f32.mrb[0].mxu0
        %v6565 = vadd.f32 0.0, %v6564
        %v6566 = vpop.f32.mrb[0].mxu0
        %v6567 = vadd.f32 0.0, %v6566
        %6568 = vmatprep.mubr.f32.mxu0 0.0
        %6569 = vmatmul.mubr.f32.gmra.mrb[0].mxu0 %v6347
        %v6570 = vpop.f32.mrb[0].mxu0
        %v6571 = vadd.f32 0.0, %v6570
        %v6572 = vpop.f32.mrb[0].mxu0
        %v6573 = vadd.f32 0.0, %v6572
        %6574 = vdwg.mxu0
        %v6575 = vmul.f32 %v6440, 0.5
        %v6576 = vmul.f32 %v6442, 0.5
        %v6577 = vmul.f32 %v6553, 0.5
        %v6578 = vmul.f32 %v6555, 0.5
        %v6579 = vmul.f32 %v6446, 0.5
        %v6580 = vmul.f32 %v6448, 0.5
        %v6581 = vmul.f32 %v6559, 0.5
        %v6582 = vmul.f32 %v6561, 0.5
        %v6583 = vmul.f32 %v6452, 0.5
        %v6584 = vmul.f32 %v6454, 0.5
        %v6585 = vmul.f32 %v6565, 0.5
        %v6586 = vmul.f32 %v6567, 0.5
        %v6587 = vmul.f32 %v6458, 0.5
        %v6588 = vmul.f32 %v6460, 0.5
        %v6589 = vmul.f32 %v6571, 0.5
        %v6590 = vmul.f32 %v6573, 0.5
        %v6591 = vtanh.pop %v6575
        %v6592 = vtanh.pop %v6576
        %v6593 = vtanh.pop %v6577
        %v6594 = vtanh.pop %v6578
        %v6595 = vtanh.pop %v6579
        %v6596 = vtanh.pop %v6580
        %v6597 = vtanh.pop %v6581
        %v6598 = vtanh.pop %v6582
        %v6599 = vtanh.pop %v6583
        %v6600 = vtanh.pop %v6584
        %v6601 = vtanh.pop %v6585
        %v6602 = vtanh.pop %v6586
        %v6603 = vtanh.pop %v6587
        %v6604 = vtanh.pop %v6588
        %v6605 = vtanh.pop %v6589
        %v6606 = vtanh.pop %v6590
        %v6607 = vmul.f32 %v6591, 0.5
        %v6608 = vmul.f32 %v6592, 0.5
        %v6609 = vmul.f32 %v6593, 0.5
        %v6610 = vmul.f32 %v6594, 0.5
        %v6611 = vmul.f32 %v6595, 0.5
        %v6612 = vmul.f32 %v6596, 0.5
        %v6613 = vmul.f32 %v6597, 0.5
        %v6614 = vmul.f32 %v6598, 0.5
        %v6615 = vmul.f32 %v6599, 0.5
        %v6616 = vmul.f32 %v6600, 0.5
        %v6617 = vmul.f32 %v6601, 0.5
        %v6618 = vmul.f32 %v6602, 0.5
        %v6619 = vmul.f32 %v6603, 0.5
        %v6620 = vmul.f32 %v6604, 0.5
        %v6621 = vmul.f32 %v6605, 0.5
        %v6622 = vmul.f32 %v6606, 0.5
        %v6623 = vadd.f32 %v6607, 0.5
        %v6624 = vadd.f32 %v6608, 0.5
        %v6625 = vadd.f32 %v6609, 0.5
        %v6626 = vadd.f32 %v6610, 0.5
        %v6627 = vadd.f32 %v6611, 0.5
        %v6628 = vadd.f32 %v6612, 0.5
        %v6629 = vadd.f32 %v6613, 0.5
        %v6630 = vadd.f32 %v6614, 0.5
        %v6631 = vadd.f32 %v6615, 0.5
        %v6632 = vadd.f32 %v6616, 0.5
        %v6633 = vadd.f32 %v6617, 0.5
        %v6634 = vadd.f32 %v6618, 0.5
        %v6635 = vadd.f32 %v6619, 0.5
        %v6636 = vadd.f32 %v6620, 0.5
        %v6637 = vadd.f32 %v6621, 0.5
        %v6638 = vadd.f32 %v6622, 0.5
        %v6639 = vmul.f32 %v6416, %v6623
        %v6640 = vmul.f32 %v6418, %v6624
        %v6641 = vmul.f32 %v6529, %v6625
        %v6642 = vmul.f32 %v6531, %v6626
        %v6643 = vmul.f32 %v6422, %v6627
        %v6644 = vmul.f32 %v6424, %v6628
        %v6645 = vmul.f32 %v6535, %v6629
        %v6646 = vmul.f32 %v6537, %v6630
        %v6647 = vmul.f32 %v6428, %v6631
        %v6648 = vmul.f32 %v6430, %v6632
        %v6649 = vmul.f32 %v6541, %v6633
        %v6650 = vmul.f32 %v6543, %v6634
        %v6651 = vmul.f32 %v6434, %v6635
        %v6652 = vmul.f32 %v6436, %v6636
        %v6653 = vmul.f32 %v6547, %v6637
        %v6654 = vmul.f32 %v6549, %v6638
        %v6655 = vadd.f32 %v6300, %v6639
        %v6656 = vadd.f32 %v6301, %v6640
        %v6657 = vadd.f32 %v6302, %v6641
        %v6658 = vadd.f32 %v6303, %v6642
        %v6659 = vadd.f32 %v6304, %v6643
        %v6660 = vadd.f32 %v6305, %v6644
        %v6661 = vadd.f32 %v6306, %v6645
        %v6662 = vadd.f32 %v6307, %v6646
        %v6663 = vadd.f32 %v6308, %v6647
        %v6664 = vadd.f32 %v6309, %v6648
        %v6665 = vadd.f32 %v6310, %v6649
        %v6666 = vadd.f32 %v6311, %v6650
        %v6667 = vadd.f32 %v6312, %v6651
        %v6668 = vadd.f32 %v6313, %v6652
        %v6669 = vadd.f32 %v6314, %v6653
        %v6670 = vadd.f32 %v6315, %v6654
        %v6671 = vmul.f32 %v6655, 0.70710677
        %v6672 = vmul.f32 %v6656, 0.70710677
        %v6673 = vmul.f32 %v6657, 0.70710677
        %v6674 = vmul.f32 %v6658, 0.70710677
        %v6675 = vmul.f32 %v6659, 0.70710677
        %v6676 = vmul.f32 %v6660, 0.70710677
        %v6677 = vmul.f32 %v6661, 0.70710677
        %v6678 = vmul.f32 %v6662, 0.70710677
        %s6679 = scalar_lea.vmem %s4, 448
        %v6680 = vld [vmem:[%s6679] sm:$0xff]
        %v6681 = vld [vmem:[%s6679 + $0x8] sm:$0xff]
        %v6682 = vld [vmem:[%s6679 + $0x10] sm:$0xff]
        %v6683 = vld [vmem:[%s6679 + $0x18] sm:$0xff]
        %v6684 = vld [vmem:[%s6679 + $0x20] sm:$0xff]
        %v6685 = vld [vmem:[%s6679 + $0x28] sm:$0xff]
        %v6686 = vld [vmem:[%s6679 + $0x30] sm:$0xff]
        %v6687 = vld [vmem:[%s6679 + $0x38] sm:$0xff]
        %v6689 = vsel %vm725, %v6680, 0
        %v6692 = vsel %vm725, %v6681, 0
        %v6695 = vsel %vm725, %v6682, 0
        %v6698 = vsel %vm725, %v6683, 0
        %v6701 = vsel %vm725, %v6684, 0
        %v6704 = vsel %vm725, %v6685, 0
        %v6707 = vsel %vm725, %v6686, 0
        %v6710 = vsel %vm725, %v6687, 0
        %6712 = vmatprep.subr.mxu0 %v6656
        %6713 = vmatpush1.msra.mxu0 %v6655
        %6714 = vmatprep.subr.mxu0 %v6660
        %6715 = vmatpush1.msra.mxu0 %v6659
        %6716 = vmatprep.subr.mxu0 %v6664
        %6717 = vmatpush1.msra.mxu0 %v6663
        %6718 = vmatprep.subr.mxu0 %v6668
        %6719 = vmatpush1.msra.mxu0 %v6667
        %6720 = vmatprep.subr.mxu0 0.0
        %6721 = vmatpush1.msra.mxu0 0.0
        %6722 = vmatprep.subr.mxu0 0.0
        %6723 = vmatpush1.msra.mxu0 0.0
        %6724 = vmatprep.subr.mxu0 0.0
        %6725 = vmatpush1.msra.mxu0 0.0
        %6726 = vmatprep.subr.mxu0 0.0
        %6727 = vmatpush1.msra.mxu0 0.0
        %6728 = vmatprep.subr.mxu0 0.0
        %6729 = vmatpush1.msra.mxu0 0.0
        %6730 = vmatprep.subr.mxu0 0.0
        %6731 = vmatpush1.msra.mxu0 0.0
        %6732 = vmatprep.subr.mxu0 0.0
        %6733 = vmatpush1.msra.mxu0 0.0
        %6734 = vmatprep.subr.mxu0 0.0
        %6735 = vmatpush1.msra.mxu0 0.0
        %6736 = vmatprep.subr.mxu0 0.0
        %6737 = vmatpush1.msra.mxu0 0.0
        %6738 = vmatprep.subr.mxu0 0.0
        %6739 = vmatpush1.msra.mxu0 0.0
        %6740 = vmatprep.subr.mxu0 0.0
        %6741 = vmatpush1.msra.mxu0 0.0
        %6742 = vmatprep.subr.mxu0 0.0
        %6743 = vmatpush1.msra.mxu0 0.0
        %6744 = vmatprep.subr.mxu0 0.0
        %6745 = vmatpush1.msra.mxu0 0.0
        %6746 = vmatprep.subr.mxu0 0.0
        %6747 = vmatpush1.msra.mxu0 0.0
        %6748 = vmatprep.subr.mxu0 0.0
        %6749 = vmatpush1.msra.mxu0 0.0
        %6750 = vmatprep.subr.mxu0 0.0
        %6751 = vmatpush1.msra.mxu0 0.0
        %6752 = vmatprep.subr.mxu0 0.0
        %6753 = vmatpush1.msra.mxu0 0.0
        %6754 = vmatprep.subr.mxu0 0.0
        %6755 = vmatpush1.msra.mxu0 0.0
        %6756 = vmatprep.subr.mxu0 0.0
        %6757 = vmatpush1.msra.mxu0 0.0
        %6758 = vmatprep.subr.mxu0 0.0
        %6759 = vmatpush1.msra.mxu0 0.0
        %6760 = vmatprep.subr.mxu0 0.0
        %6761 = vmatpush1.msra.mxu0 0.0
        %6762 = vmatprep.subr.mxu0 0.0
        %6763 = vmatpush1.msra.mxu0 0.0
        %6764 = vmatprep.subr.mxu0 0.0
        %6765 = vmatpush1.msra.mxu0 0.0
        %6766 = vmatprep.subr.mxu0 0.0
        %6767 = vmatpush1.msra.mxu0 0.0
        %6768 = vmatprep.subr.mxu0 0.0
        %6769 = vmatpush1.msra.mxu0 0.0
        %6770 = vmatprep.subr.mxu0 0.0
        %6771 = vmatpush1.msra.mxu0 0.0
        %6772 = vmatprep.subr.mxu0 0.0
        %6773 = vmatpush1.msra.mxu0 0.0
        %6774 = vmatprep.subr.mxu0 0.0
        %6775 = vmatpush1.msra.mxu0 0.0
        %6776 = vmatprep.mubr.f32.mxu0 0.0
        %6777 = vmatmul.mubr.f32.gmra.mrb[0].mxu0 %v6689
        %v6778 = vpop.f32.mrb[0].mxu0
        %v6779 = vadd.f32 0.0, %v6778
        %v6780 = vpop.f32.mrb[0].mxu0
        %v6781 = vadd.f32 0.0, %v6780
        %6782 = vmatprep.mubr.f32.mxu0 0.0
        %6783 = vmatmul.mubr.f32.gmra.mrb[0].mxu0 %v6692
        %v6784 = vpop.f32.mrb[0].mxu0
        %v6785 = vadd.f32 0.0, %v6784
        %v6786 = vpop.f32.mrb[0].mxu0
        %v6787 = vadd.f32 0.0, %v6786
        %6788 = vmatprep.mubr.f32.mxu0 0.0
        %6789 = vmatmul.mubr.f32.gmra.mrb[0].mxu0 %v6695
        %v6790 = vpop.f32.mrb[0].mxu0
        %v6791 = vpop.f32.mrb[0].mxu0
        %6792 = vmatprep.mubr.f32.mxu0 0.0
        %6793 = vmatmul.mubr.f32.gmra.mrb[0].mxu0 %v6698
        %v6794 = vpop.f32.mrb[0].mxu0
        %v6795 = vpop.f32.mrb[0].mxu0
        %6796 = vmatprep.mubr.f32.mxu0 0.0
        %6797 = vmatmul.mubr.f32.gmra.mrb[0].mxu0 %v6701
        %v6798 = vpop.f32.mrb[0].mxu0
        %v6799 = vadd.f32 0.0, %v6798
        %v6800 = vpop.f32.mrb[0].mxu0
        %v6801 = vadd.f32 0.0, %v6800
        %6802 = vmatprep.mubr.f32.mxu0 0.0
        %6803 = vmatmul.mubr.f32.gmra.mrb[0].mxu0 %v6704
        %v6804 = vpop.f32.mrb[0].mxu0
        %v6805 = vadd.f32 0.0, %v6804
        %v6806 = vpop.f32.mrb[0].mxu0
        %v6807 = vadd.f32 0.0, %v6806
        %6808 = vmatprep.mubr.f32.mxu0 0.0
        %6809 = vmatmul.mubr.f32.gmra.mrb[0].mxu0 %v6707
        %v6810 = vpop.f32.mrb[0].mxu0
        %v6811 = vpop.f32.mrb[0].mxu0
        %6812 = vmatprep.mubr.f32.mxu0 0.0
        %6813 = vmatmul.mubr.f32.gmra.mrb[0].mxu0 %v6710
        %v6814 = vpop.f32.mrb[0].mxu0
        %v6815 = vpop.f32.mrb[0].mxu0
        %6816 = vdwg.mxu0
        %6817 = vmatprep.subr.mxu0 %v6658
        %6818 = vmatpush1.msra.mxu0 %v6657
        %6819 = vmatprep.subr.mxu0 %v6662
        %6820 = vmatpush1.msra.mxu0 %v6661
        %6821 = vmatprep.subr.mxu0 %v6666
        %6822 = vmatpush1.msra.mxu0 %v6665
        %6823 = vmatprep.subr.mxu0 %v6670
        %6824 = vmatpush1.msra.mxu0 %v6669
        %6825 = vmatprep.subr.mxu0 0.0
        %6826 = vmatpush1.msra.mxu0 0.0
        %6827 = vmatprep.subr.mxu0 0.0
        %6828 = vmatpush1.msra.mxu0 0.0
        %6829 = vmatprep.subr.mxu0 0.0
        %6830 = vmatpush1.msra.mxu0 0.0
        %6831 = vmatprep.subr.mxu0 0.0
        %6832 = vmatpush1.msra.mxu0 0.0
        %6833 = vmatprep.subr.mxu0 0.0
        %6834 = vmatpush1.msra.mxu0 0.0
        %6835 = vmatprep.subr.mxu0 0.0
        %6836 = vmatpush1.msra.mxu0 0.0
        %6837 = vmatprep.subr.mxu0 0.0
        %6838 = vmatpush1.msra.mxu0 0.0
        %6839 = vmatprep.subr.mxu0 0.0
        %6840 = vmatpush1.msra.mxu0 0.0
        %6841 = vmatprep.subr.mxu0 0.0
        %6842 = vmatpush1.msra.mxu0 0.0
        %6843 = vmatprep.subr.mxu0 0.0
        %6844 = vmatpush1.msra.mxu0 0.0
        %6845 = vmatprep.subr.mxu0 0.0
        %6846 = vmatpush1.msra.mxu0 0.0
        %6847 = vmatprep.subr.mxu0 0.0
        %6848 = vmatpush1.msra.mxu0 0.0
        %6849 = vmatprep.subr.mxu0 0.0
        %6850 = vmatpush1.msra.mxu0 0.0
        %6851 = vmatprep.subr.mxu0 0.0
        %6852 = vmatpush1.msra.mxu0 0.0
        %6853 = vmatprep.subr.mxu0 0.0
        %6854 = vmatpush1.msra.mxu0 0.0
        %6855 = vmatprep.subr.mxu0 0.0
        %6856 = vmatpush1.msra.mxu0 0.0
        %6857 = vmatprep.subr.mxu0 0.0
        %6858 = vmatpush1.msra.mxu0 0.0
        %6859 = vmatprep.subr.mxu0 0.0
        %6860 = vmatpush1.msra.mxu0 0.0
        %6861 = vmatprep.subr.mxu0 0.0
        %6862 = vmatpush1.msra.mxu0 0.0
        %6863 = vmatprep.subr.mxu0 0.0
        %6864 = vmatpush1.msra.mxu0 0.0
        %6865 = vmatprep.subr.mxu0 0.0
        %6866 = vmatpush1.msra.mxu0 0.0
        %6867 = vmatprep.subr.mxu0 0.0
        %6868 = vmatpush1.msra.mxu0 0.0
        %6869 = vmatprep.subr.mxu0 0.0
        %6870 = vmatpush1.msra.mxu0 0.0
        %6871 = vmatprep.subr.mxu0 0.0
        %6872 = vmatpush1.msra.mxu0 0.0
        %6873 = vmatprep.subr.mxu0 0.0
        %6874 = vmatpush1.msra.mxu0 0.0
        %6875 = vmatprep.subr.mxu0 0.0
        %6876 = vmatpush1.msra.mxu0 0.0
        %6877 = vmatprep.subr.mxu0 0.0
        %6878 = vmatpush1.msra.mxu0 0.0
        %6879 = vmatprep.subr.mxu0 0.0
        %6880 = vmatpush1.msra.mxu0 0.0
        %6881 = vmatprep.mubr.f32.mxu0 0.0
        %6882 = vmatmul.mubr.f32.gmra.mrb[0].mxu0 %v6689
        %v6883 = vpop.f32.mrb[0].mxu0
        %v6884 = vadd.f32 0.0, %v6883
        %v6885 = vpop.f32.mrb[0].mxu0
        %v6886 = vadd.f32 0.0, %v6885
        %6887 = vmatprep.mubr.f32.mxu0 0.0
        %6888 = vmatmul.mubr.f32.gmra.mrb[0].mxu0 %v6692
        %v6889 = vpop.f32.mrb[0].mxu0
        %v6890 = vadd.f32 0.0, %v6889
        %v6891 = vpop.f32.mrb[0].mxu0
        %v6892 = vadd.f32 0.0, %v6891
        %6893 = vmatprep.mubr.f32.mxu0 0.0
        %6894 = vmatmul.mubr.f32.gmra.mrb[0].mxu0 %v6695
        %v6895 = vpop.f32.mrb[0].mxu0
        %v6896 = vpop.f32.mrb[0].mxu0
        %6897 = vmatprep.mubr.f32.mxu0 0.0
        %6898 = vmatmul.mubr.f32.gmra.mrb[0].mxu0 %v6698
        %v6899 = vpop.f32.mrb[0].mxu0
        %v6900 = vpop.f32.mrb[0].mxu0
        %6901 = vmatprep.mubr.f32.mxu0 0.0
        %6902 = vmatmul.mubr.f32.gmra.mrb[0].mxu0 %v6701
        %v6903 = vpop.f32.mrb[0].mxu0
        %v6904 = vadd.f32 0.0, %v6903
        %v6905 = vpop.f32.mrb[0].mxu0
        %v6906 = vadd.f32 0.0, %v6905
        %6907 = vmatprep.mubr.f32.mxu0 0.0
        %6908 = vmatmul.mubr.f32.gmra.mrb[0].mxu0 %v6704
        %v6909 = vpop.f32.mrb[0].mxu0
        %v6910 = vadd.f32 0.0, %v6909
        %v6911 = vpop.f32.mrb[0].mxu0
        %v6912 = vadd.f32 0.0, %v6911
        %6913 = vmatprep.mubr.f32.mxu0 0.0
        %6914 = vmatmul.mubr.f32.gmra.mrb[0].mxu0 %v6707
        %v6915 = vpop.f32.mrb[0].mxu0
        %v6916 = vpop.f32.mrb[0].mxu0
        %6917 = vmatprep.mubr.f32.mxu0 0.0
        %6918 = vmatmul.mubr.f32.gmra.mrb[0].mxu0 %v6710
        %v6919 = vpop.f32.mrb[0].mxu0
        %v6920 = vpop.f32.mrb[0].mxu0
        %6921 = vdwg.mxu0
        %v6922 = vmul.f32 %v6799, 0.5
        %v6923 = vmul.f32 %v6801, 0.5
        %v6924 = vmul.f32 %v6904, 0.5
        %v6925 = vmul.f32 %v6906, 0.5
        %v6926 = vmul.f32 %v6805, 0.5
        %v6927 = vmul.f32 %v6807, 0.5
        %v6928 = vmul.f32 %v6910, 0.5
        %v6929 = vmul.f32 %v6912, 0.5
        %v6930 = vtanh.pop %v6922
        %v6931 = vtanh.pop %v6923
        %v6932 = vtanh.pop %v6924
        %v6933 = vtanh.pop %v6925
        %v6934 = vtanh.pop %v6926
        %v6935 = vtanh.pop %v6927
        %v6936 = vtanh.pop %v6928
        %v6937 = vtanh.pop %v6929
        %v6938 = vmul.f32 %v6930, 0.5
        %v6939 = vmul.f32 %v6931, 0.5
        %v6940 = vmul.f32 %v6932, 0.5
        %v6941 = vmul.f32 %v6933, 0.5
        %v6942 = vmul.f32 %v6934, 0.5
        %v6943 = vmul.f32 %v6935, 0.5
        %v6944 = vmul.f32 %v6936, 0.5
        %v6945 = vmul.f32 %v6937, 0.5
        %v6946 = vadd.f32 %v6938, 0.5
        %v6947 = vadd.f32 %v6939, 0.5
        %v6948 = vadd.f32 %v6940, 0.5
        %v6949 = vadd.f32 %v6941, 0.5
        %v6950 = vadd.f32 %v6942, 0.5
        %v6951 = vadd.f32 %v6943, 0.5
        %v6952 = vadd.f32 %v6944, 0.5
        %v6953 = vadd.f32 %v6945, 0.5
        %v6954 = vmul.f32 %v6779, %v6946
        %v6955 = vmul.f32 %v6781, %v6947
        %v6956 = vmul.f32 %v6884, %v6948
        %v6957 = vmul.f32 %v6886, %v6949
        %v6958 = vmul.f32 %v6785, %v6950
        %v6959 = vmul.f32 %v6787, %v6951
        %v6960 = vmul.f32 %v6890, %v6952
        %v6961 = vmul.f32 %v6892, %v6953
        %v6962 = vadd.f32 %v6671, %v6954
        %v6963 = vadd.f32 %v6672, %v6955
        %v6964 = vadd.f32 %v6673, %v6956
        %v6965 = vadd.f32 %v6674, %v6957
        %v6966 = vadd.f32 %v6675, %v6958
        %v6967 = vadd.f32 %v6676, %v6959
        %v6968 = vadd.f32 %v6677, %v6960
        %v6969 = vadd.f32 %v6678, %v6961
        %v6970 = vmax.f32 %v6962, 0.0
        %v6971 = vmax.f32 %v6963, 0.0
        %v6972 = vmax.f32 %v6964, 0.0
        %v6973 = vmax.f32 %v6965, 0.0
        %v6974 = vmax.f32 %v6966, 0.0
        %v6975 = vmax.f32 %v6967, 0.0
        %v6976 = vmax.f32 %v6968, 0.0
        %v6977 = vmax.f32 %v6969, 0.0
        %v6978 = vadd.f32 %v5267, %v6970
        %v6979 = vadd.f32 %v5268, %v6971
        %v6980 = vadd.f32 %v5269, %v6972
        %v6981 = vadd.f32 %v5270, %v6973
        %v6982 = vadd.f32 %v5271, %v6974
        %v6983 = vadd.f32 %v5272, %v6975
        %v6984 = vadd.f32 %v5273, %v6976
        %v6985 = vadd.f32 %v5274, %v6977
        %v6986 = vld [vmem:[%s6] sm:$0xff]
        %s6987 = scalar_lea.vmem %s1, 128
        %v6988 = vld [vmem:[%s6987] sm:$0xff]
        %6990 = vset.pattern.permute.xlu0 0
        %6991 = vperm.xlu0 %6990, %v6988
        %v6992 = vpop.permute.xlu0 %6991
        %v6995 = vsel %vm378, %v6986, 0
        %6997 = vmatprep.subr.mxu0 %v6979
        %6998 = vmatpush1.msra.mxu0 %v6978
        %6999 = vmatprep.subr.mxu0 %v6983
        %7000 = vmatpush1.msra.mxu0 %v6982
        %7001 = vmatprep.subr.mxu0 0.0
        %7002 = vmatpush1.msra.mxu0 0.0
        %7003 = vmatprep.subr.mxu0 0.0
        %7004 = vmatpush1.msra.mxu0 0.0
        %7005 = vmatprep.subr.mxu0 0.0
        %7006 = vmatpush1.msra.mxu0 0.0
        %7007 = vmatprep.subr.mxu0 0.0
        %7008 = vmatpush1.msra.mxu0 0.0
        %7009 = vmatprep.subr.mxu0 0.0
        %7010 = vmatpush1.msra.mxu0 0.0
        %7011 = vmatprep.subr.mxu0 0.0
        %7012 = vmatpush1.msra.mxu0 0.0
        %7013 = vmatprep.subr.mxu0 0.0
        %7014 = vmatpush1.msra.mxu0 0.0
        %7015 = vmatprep.subr.mxu0 0.0
        %7016 = vmatpush1.msra.mxu0 0.0
        %7017 = vmatprep.subr.mxu0 0.0
        %7018 = vmatpush1.msra.mxu0 0.0
        %7019 = vmatprep.subr.mxu0 0.0
        %7020 = vmatpush1.msra.mxu0 0.0
        %7021 = vmatprep.subr.mxu0 0.0
        %7022 = vmatpush1.msra.mxu0 0.0
        %7023 = vmatprep.subr.mxu0 0.0
        %7024 = vmatpush1.msra.mxu0 0.0
        %7025 = vmatprep.subr.mxu0 0.0
        %7026 = vmatpush1.msra.mxu0 0.0
        %7027 = vmatprep.subr.mxu0 0.0
        %7028 = vmatpush1.msra.mxu0 0.0
        %7029 = vmatprep.subr.mxu0 0.0
        %7030 = vmatpush1.msra.mxu0 0.0
        %7031 = vmatprep.subr.mxu0 0.0
        %7032 = vmatpush1.msra.mxu0 0.0
        %7033 = vmatprep.subr.mxu0 0.0
        %7034 = vmatpush1.msra.mxu0 0.0
        %7035 = vmatprep.subr.mxu0 0.0
        %7036 = vmatpush1.msra.mxu0 0.0
        %7037 = vmatprep.subr.mxu0 0.0
        %7038 = vmatpush1.msra.mxu0 0.0
        %7039 = vmatprep.subr.mxu0 0.0
        %7040 = vmatpush1.msra.mxu0 0.0
        %7041 = vmatprep.subr.mxu0 0.0
        %7042 = vmatpush1.msra.mxu0 0.0
        %7043 = vmatprep.subr.mxu0 0.0
        %7044 = vmatpush1.msra.mxu0 0.0
        %7045 = vmatprep.subr.mxu0 0.0
        %7046 = vmatpush1.msra.mxu0 0.0
        %7047 = vmatprep.subr.mxu0 0.0
        %7048 = vmatpush1.msra.mxu0 0.0
        %7049 = vmatprep.subr.mxu0 0.0
        %7050 = vmatpush1.msra.mxu0 0.0
        %7051 = vmatprep.subr.mxu0 0.0
        %7052 = vmatpush1.msra.mxu0 0.0
        %7053 = vmatprep.subr.mxu0 0.0
        %7054 = vmatpush1.msra.mxu0 0.0
        %7055 = vmatprep.subr.mxu0 0.0
        %7056 = vmatpush1.msra.mxu0 0.0
        %7057 = vmatprep.subr.mxu0 0.0
        %7058 = vmatpush1.msra.mxu0 0.0
        %7059 = vmatprep.subr.mxu0 0.0
        %7060 = vmatpush1.msra.mxu0 0.0
        %7061 = vmatprep.mubr.f32.mxu0 0.0
        %7062 = vmatmul.mubr.f32.gmra.mrb[0].mxu0 %v6995
        %v7063 = vpop.f32.mrb[0].mxu0
        %v7064 = vadd.f32 %v6992, %v7063
        %v7065 = vpop.f32.mrb[0].mxu0
        %v7066 = vadd.f32 %v6992, %v7065
        %7067 = vdwg.mxu0
        %7068 = vmatprep.subr.mxu0 %v6981
        %7069 = vmatpush1.msra.mxu0 %v6980
        %7070 = vmatprep.subr.mxu0 %v6985
        %7071 = vmatpush1.msra.mxu0 %v6984
        %7072 = vmatprep.subr.mxu0 0.0
        %7073 = vmatpush1.msra.mxu0 0.0
        %7074 = vmatprep.subr.mxu0 0.0
        %7075 = vmatpush1.msra.mxu0 0.0
        %7076 = vmatprep.subr.mxu0 0.0
        %7077 = vmatpush1.msra.mxu0 0.0
        %7078 = vmatprep.subr.mxu0 0.0
        %7079 = vmatpush1.msra.mxu0 0.0
        %7080 = vmatprep.subr.mxu0 0.0
        %7081 = vmatpush1.msra.mxu0 0.0
        %7082 = vmatprep.subr.mxu0 0.0
        %7083 = vmatpush1.msra.mxu0 0.0
        %7084 = vmatprep.subr.mxu0 0.0
        %7085 = vmatpush1.msra.mxu0 0.0
        %7086 = vmatprep.subr.mxu0 0.0
        %7087 = vmatpush1.msra.mxu0 0.0
        %7088 = vmatprep.subr.mxu0 0.0
        %7089 = vmatpush1.msra.mxu0 0.0
        %7090 = vmatprep.subr.mxu0 0.0
        %7091 = vmatpush1.msra.mxu0 0.0
        %7092 = vmatprep.subr.mxu0 0.0
        %7093 = vmatpush1.msra.mxu0 0.0
        %7094 = vmatprep.subr.mxu0 0.0
        %7095 = vmatpush1.msra.mxu0 0.0
        %7096 = vmatprep.subr.mxu0 0.0
        %7097 = vmatpush1.msra.mxu0 0.0
        %7098 = vmatprep.subr.mxu0 0.0
        %7099 = vmatpush1.msra.mxu0 0.0
        %7100 = vmatprep.subr.mxu0 0.0
        %7101 = vmatpush1.msra.mxu0 0.0
        %7102 = vmatprep.subr.mxu0 0.0
        %7103 = vmatpush1.msra.mxu0 0.0
        %7104 = vmatprep.subr.mxu0 0.0
        %7105 = vmatpush1.msra.mxu0 0.0
        %7106 = vmatprep.subr.mxu0 0.0
        %7107 = vmatpush1.msra.mxu0 0.0
        %7108 = vmatprep.subr.mxu0 0.0
        %7109 = vmatpush1.msra.mxu0 0.0
        %7110 = vmatprep.subr.mxu0 0.0
        %7111 = vmatpush1.msra.mxu0 0.0
        %7112 = vmatprep.subr.mxu0 0.0
        %7113 = vmatpush1.msra.mxu0 0.0
        %7114 = vmatprep.subr.mxu0 0.0
        %7115 = vmatpush1.msra.mxu0 0.0
        %7116 = vmatprep.subr.mxu0 0.0
        %7117 = vmatpush1.msra.mxu0 0.0
        %7118 = vmatprep.subr.mxu0 0.0
        %7119 = vmatpush1.msra.mxu0 0.0
        %7120 = vmatprep.subr.mxu0 0.0
        %7121 = vmatpush1.msra.mxu0 0.0
        %7122 = vmatprep.subr.mxu0 0.0
        %7123 = vmatpush1.msra.mxu0 0.0
        %7124 = vmatprep.subr.mxu0 0.0
        %7125 = vmatpush1.msra.mxu0 0.0
        %7126 = vmatprep.subr.mxu0 0.0
        %7127 = vmatpush1.msra.mxu0 0.0
        %7128 = vmatprep.subr.mxu0 0.0
        %7129 = vmatpush1.msra.mxu0 0.0
        %7130 = vmatprep.subr.mxu0 0.0
        %7131 = vmatpush1.msra.mxu0 0.0
        %7132 = vmatprep.mubr.f32.mxu0 0.0
        %7133 = vmatmul.mubr.f32.gmra.mrb[0].mxu0 %v6995
        %v7134 = vpop.f32.mrb[0].mxu0
        %v7135 = vadd.f32 %v6992, %v7134
        %v7136 = vpop.f32.mrb[0].mxu0
        %v7137 = vadd.f32 %v6992, %v7136
        %7138 = vdwg.mxu0
        %7139 = vst [vmem:[%s310] sm:$0xff] %v7064
        %7140 = vst [vmem:[%s310 + $0x8] sm:$0xff] %v7066
        %7141 = vst [vmem:[%s310 + $0x10] sm:$0xff] %v7135
        %7142 = vst [vmem:[%s310 + $0x18] sm:$0xff] %v7137
        %s7143 = sand.u32 %s181, 1
        %s7144 = scalar_lea.sflag [#allocation4], %s7143
        %s7145 = sand.u32 %s181, 1
        %s7146 = smul.addr %s7145, 32
        %s7147 = scalar_lea.vmem [#allocation3], %s7146
        // Predicated region
        $region72: #{tabnet_forward.1} parent=66 // pred_check
          %p7148 = pneg %p191
        $region73: #{tabnet_forward.1} parent=66 // pred_check_branch
          %7150 = sbr.rel (%p7148) target = $region75
        $region74: #{tabnet_forward.1} parent=66 // pred_region
          %s7151 = smul.u32 4, %s21
          %s7153 = ssub.s32 512, 512
          %7154 = vsyncadd %s7144, %s7153
          %s7155 = smul.addr %s7151, 128
          %s7156 = scalar_lea.hbm %s7, %s7155
          %s7158 = sshll.u32 %s7147, 4
          %s7159 = int_to_ptr.vmem [resolvable:$true] %s7158
          %7161 = dma.vmem_to_hbm [thread:$0]  %s7159, 512, %s7156, %s7144
        $region75: #{tabnet_forward.1} parent=66 // pred_fallthru
          _
      $region67: #{tabnet_forward.1} parent=5 // pred_fallthru
        _
      %p7162 = scmp.le.s32.totalorder 2, %s16
      // Predicated region
      $region76: #{tabnet_forward.1} parent=5 // pred_check
        %p7163 = pneg %p7162
      $region77: #{tabnet_forward.1} parent=5 // pred_check_branch
        %7165 = sbr.rel (%p7163) target = $region79
      $region78: #{tabnet_forward.1} parent=5 // pred_region
        %s7166 = ssub.s32 %s16, 2
        // Predicated region
        $region80: #{tabnet_forward.1} parent=78 // pred_check
          %p7167 = pneg %p197
        $region81: #{tabnet_forward.1} parent=78 // pred_check_branch
          %7169 = sbr.rel (%p7167) target = $region83
        $region82: #{tabnet_forward.1} parent=78 // pred_region
          %s7170 = sand.u32 %s182, 1
          %s7171 = scalar_lea.sflag [#allocation4], %s7170
          %s7172 = sand.u32 %s182, 1
          %s7173 = smul.addr %s7172, 32
          %s7174 = scalar_lea.vmem [#allocation3], %s7173
          %7175 = dma.done %s7171, 512
        $region83: #{tabnet_forward.1} parent=78 // pred_fallthru
          _
      $region79: #{tabnet_forward.1} parent=5 // pred_fallthru
        _
    $region6: #{tabnet_forward.1} parent=1 // loop_footer
      %s20 = sadd.s32 1, %s16
    $region7: #{tabnet_forward.1} parent=1 // loop_footer_branch
      %15 = sbr.rel target = $region3
    $region8: #{tabnet_forward.1} parent=1 // loop_exit
      _
    %7176 = vsyncpa [#allocation4], 1
    %s7177 = scalar_lea.sflag [#allocation4], 1
    %7178 = vsyncpa %s7177, 1

</llo_original>
